<compile_context>
chip_gen: v6e
topology: v6e:2x2x1
jax: 0.10.0
libtpu: 0.0.40
codegen_flags: <defaults>
</compile_context>

<pallas_src>
import functools

import numpy as np
import jax
import jax.numpy as jnp
from jax.experimental import pallas as pl
from jax.experimental.pallas import tpu as pltpu


# (name, stride, padding, has_bn) -- mirrors DCGAN_Generator.__init__
_LAYER_CFG = (
    ("conv1", 1, 0, True),    # ConvTranspose2d(nz, 128, 3, s=1, p=0) + BN + ReLU
    ("conv2", 2, 0, True),    # ConvTranspose2d(128, 64, 3, s=2, p=0) + BN + ReLU
    ("conv3", 2, 0, True),    # ConvTranspose2d(64,  32, 3, s=2, p=0) + BN + ReLU
    ("conv4", 2, 2, False),   # ConvTranspose2d(32,  nc, 3, s=2, p=2) + tanh
)


def _round_up(x, m):
    return (x + m - 1) // m * m


# ---------------------------------------------------------------------------
# In-kernel helpers (trace-time Python, fully static shapes).
# ---------------------------------------------------------------------------
def _bn_relu(y, g_ref, b_ref, ow, cnt):
    """Training-mode BatchNorm2d (gamma/beta, eps=1e-5) + ReLU.

    y: (R, Wstore) f32 activation; valid columns [0, ow*C) laid out (ox, c)
    with c minor; padded columns (if any) are exactly zero and stay zero.
    Channel sums use lane-slice adds; broadcast uses lane concatenation
    (no pool/bcast matmuls).  Two-pass variance.
    """
    c = g_ref.shape[1]
    valid = ow * c
    pad_w = y.shape[1] - valid
    zpad = [jnp.zeros((1, pad_w), jnp.float32)] if pad_w else []
    inv_cnt = 1.0 / float(cnt)

    rowsum = jnp.sum(y, axis=0, keepdims=True)                     # (1, Wstore)
    s1 = rowsum[:, 0:c]
    for ox in range(1, ow):
        s1 = s1 + rowsum[:, ox * c:(ox + 1) * c]
    mean_c = s1 * inv_cnt                                          # (1, C)

    mean_b = jnp.concatenate([mean_c] * ow + zpad, axis=1)         # (1, Wstore)
    d = y - mean_b                                                 # pad cols stay 0
    sqsum = jnp.sum(d * d, axis=0, keepdims=True)
    s2 = sqsum[:, 0:c]
    for ox in range(1, ow):
        s2 = s2 + sqsum[:, ox * c:(ox + 1) * c]
    var_c = s2 * inv_cnt                                           # biased, two-pass

    scale_c = g_ref[...] * jax.lax.rsqrt(var_c + 1e-5)             # (1, C)
    shift_c = b_ref[...] - mean_c * scale_c
    scale_b = jnp.concatenate([scale_c] * ow + zpad, axis=1)
    shift_b = jnp.concatenate([shift_c] * ow + zpad, axis=1)
    return jnp.maximum(y * scale_b + shift_b, 0.0)                 # pad cols stay 0


def _scatter_rows(t_ref, y_ref, n_batch, hin, oh, stride, pad, wpad):
    """ky row scatter on the VPU/store path (statically unrolled, O(batch)).

    t_ref: (N*Hin, 3*wpad) column-contraction result, ky blocks 128-aligned.
    y_ref: (N*OH, wpad) scatter-added output (every row gets >=1 contribution).
    """
    for n in range(n_batch):
        for oy in range(oh):
            acc = None
            for ky in range(3):
                num = oy + pad - ky
                if num % stride != 0:
                    continue
                iy = num // stride
                if 0 <= iy < hin:
                    row = t_ref[n * hin + iy:n * hin + iy + 1,
                                ky * wpad:(ky + 1) * wpad]
                    acc = row if acc is None else acc + row
            y_ref[n * oh + oy:n * oh + oy + 1, :] = acc


# ---------------------------------------------------------------------------
# Fused Pallas kernel: whole generator in one invocation, VMEM resident.
# ---------------------------------------------------------------------------
def _dcgan_kernel(a1_ref, w1_ref, g1_ref, be1_ref,
                  b1c2_ref, g2_ref, be2_ref,
                  b1c3_hbm, g3_ref, be3_ref,
                  b1c4_hbm,
                  out_ref,
                  t2_ref, y2_ref, t3_ref, y3_ref, t4_ref,
                  b1c3_vmem, b1c4_vmem, dma_sem,
                  *, n_batch):
    # Prefetch conv3 / conv4 folded weights (HBM -> VMEM) under conv1/conv2.
    cp3 = pltpu.make_async_copy(b1c3_hbm, b1c3_vmem, dma_sem.at[0])
    cp4 = pltpu.make_async_copy(b1c4_hbm, b1c4_vmem, dma_sem.at[1])
    cp3.start()
    cp4.start()

    # ---- conv1: 1x1 input => single outer-product matmul, rows (n, oy).
    y1 = jnp.dot(a1_ref[...].astype(jnp.bfloat16), w1_ref[...],
                 preferred_element_type=jnp.float32)               # (N*3, 3*128)
    a1 = _bn_relu(y1, g1_ref, be1_ref, ow=3, cnt=n_batch * 9)

    # ---- conv2: 3x3 -> 7x7, one wide MXU push then VPU row scatter.
    t2_ref[...] = jnp.dot(a1.astype(jnp.bfloat16), b1c2_ref[...],
                          preferred_element_type=jnp.float32)      # (N*3, 3*512)
    _scatter_rows(t2_ref, y2_ref, n_batch, hin=3, oh=7, stride=2, pad=0, wpad=512)
    a2 = _bn_relu(y2_ref[...], g2_ref, be2_ref, ow=7, cnt=n_batch * 49)

    # ---- conv3: 7x7 -> 15x15 (weights arrive via the async copy started above).
    cp3.wait()
    t3_ref[...] = jnp.dot(a2.astype(jnp.bfloat16), b1c3_vmem[...],
                          preferred_element_type=jnp.float32)      # (N*7, 3*512)
    _scatter_rows(t3_ref, y3_ref, n_batch, hin=7, oh=15, stride=2, pad=0, wpad=512)
    a3 = _bn_relu(y3_ref[...], g3_ref, be3_ref, ow=15, cnt=n_batch * 225)

    # ---- conv4: 15x15 -> 27x27, tanh written straight into the lane-dense out.
    cp4.wait()
    t4_ref[...] = jnp.dot(a3.astype(jnp.bfloat16), b1c4_vmem[...],
                          preferred_element_type=jnp.float32)      # (N*15, 3*wpad4)
    wpad4 = t4_ref.shape[1] // 3
    for n in range(n_batch):
        for oy in range(27):
            acc = None
            for ky in range(3):
                num = oy + 2 - ky                                  # pad = 2
                if num % 2 != 0:
                    continue
                iy = num // 2
                if 0 <= iy < 15:
                    row = t4_ref[n * 15 + iy:n * 15 + iy + 1,
                                 ky * wpad4:(ky + 1) * wpad4]
                    acc = row if acc is None else acc + row
            out_ref[n * 27 + oy:n * 27 + oy + 1, :] = jnp.tanh(acc)


# ---------------------------------------------------------------------------
# Host-side (one-time) weight folding: ConvTranspose2d -> kx-folded matrices.
# Batch-independent (no O(batch^2) scatter matrices, no pool/bcast helpers).
# ---------------------------------------------------------------------------
def prepare_params(params):
    kp = {}

    # conv1: out[(n,oy),(ox,co)] = sum_ci x[n,ci] * w1[ci,co,oy,ox].
    # The wrapper builds A1 with x[n] placed in column block oy of 3*nz columns.
    w1 = np.asarray(jax.device_get(params["conv1_w"]), np.float32)   # (nz,128,3,3)
    nz, c1 = w1.shape[0], w1.shape[1]
    w1m = np.zeros((3 * nz, 3 * c1), np.float32)
    for oy in range(3):
        for ox in range(3):
            w1m[oy * nz:(oy + 1) * nz, ox * c1:(ox + 1) * c1] = w1[:, :, oy, ox]
    kp["w1"] = jnp.asarray(w1m, jnp.bfloat16)

    # conv2..conv4: B1cat[(ix,ci), ky*wpad + (ox,co)] = w[ci,co,ky,kx],
    # kx = ox - ix*stride + pad.  Rows padded to the stored activation width,
    # each ky column block padded to a 128-lane multiple (zeros).
    h = 3
    in_w = 3 * c1
    for name, stride, pad, _ in _LAYER_CFG[1:]:
        w = np.asarray(jax.device_get(params[name + "_w"]), np.float32)
        cin, cout = w.shape[0], w.shape[1]
        oh = (h - 1) * stride - 2 * pad + 3
        ow = oh
        wpad = _round_up(ow * cout, 128)
        b1 = np.zeros((in_w, 3 * wpad), np.float32)
        for ky in range(3):
            for ix in range(h):
                for ox in range(ow):
                    kx = ox - ix * stride + pad
                    if 0 <= kx < 3:
                        b1[ix * cin:(ix + 1) * cin,
                           ky * wpad + ox * cout:ky * wpad + (ox + 1) * cout] = \
                            w[:, :, ky, kx]
        kp[name + "_b1"] = jnp.asarray(b1, jnp.bfloat16)
        h, in_w = oh, wpad

    for name in ("conv1", "conv2", "conv3"):
        kp[name + "_gamma"] = jnp.asarray(
            jax.device_get(params[name + "_gamma"]), jnp.float32).reshape(1, -1)
        kp[name + "_beta"] = jnp.asarray(
            jax.device_get(params[name + "_beta"]), jnp.float32).reshape(1, -1)
    return kp


# ---------------------------------------------------------------------------
# Forward: one fused pallas_call, plus tiny layout glue outside.
# ---------------------------------------------------------------------------
def dcgan_generator_forward(x_nchw, kp, n_channel=1):
    n, nz, h0, w0 = x_nchw.shape
    assert h0 == 1 and w0 == 1, "DCGAN generator expects a 1x1 latent input"

    # conv1 operand: row (n, oy) carries x[n] in column block oy  => one matmul.
    x2 = x_nchw.reshape(n, nz).astype(jnp.float32)
    eye3 = jnp.eye(3, dtype=jnp.float32)
    a1 = (eye3[None, :, :, None] * x2[:, None, None, :]).reshape(n * 3, 3 * nz)

    wpad4 = kp["conv4_b1"].shape[1] // 3
    vmem = pl.BlockSpec(memory_space=pltpu.MemorySpace.VMEM)
    hbm = pl.BlockSpec(memory_space=pl.ANY)

    out2d = pl.pallas_call(
        functools.partial(_dcgan_kernel, n_batch=n),
        out_shape=jax.ShapeDtypeStruct((n * 27, wpad4), jnp.float32),
        in_specs=[vmem, vmem, vmem, vmem,      # a1, w1, gamma1, beta1
                  vmem, vmem, vmem,            # b1cat2, gamma2, beta2
                  hbm, vmem, vmem,             # b1cat3 (HBM), gamma3, beta3
                  hbm],                        # b1cat4 (HBM)
        out_specs=vmem,
        scratch_shapes=[
            pltpu.VMEM((n * 3, 3 * 512), jnp.float32),    # t2
            pltpu.VMEM((n * 7, 512), jnp.float32),        # y2
            pltpu.VMEM((n * 7, 3 * 512), jnp.float32),    # t3
            pltpu.VMEM((n * 15, 512), jnp.float32),       # y3
            pltpu.VMEM((n * 15, 3 * wpad4), jnp.float32), # t4
            pltpu.VMEM(kp["conv3_b1"].shape, jnp.bfloat16),
            pltpu.VMEM(kp["conv4_b1"].shape, jnp.bfloat16),
            pltpu.SemaphoreType.DMA((2,)),
        ],
        compiler_params=pltpu.CompilerParams(vmem_limit_bytes=32 * 1024 * 1024),
    )(
        a1, kp["w1"], kp["conv1_gamma"], kp["conv1_beta"],
        kp["conv2_b1"], kp["conv2_gamma"], kp["conv2_beta"],
        kp["conv3_b1"], kp["conv3_gamma"], kp["conv3_beta"],
        kp["conv4_b1"],
    )

    out = out2d[:, :27 * n_channel].reshape(n, 27, 27, n_channel)   # (N,OH,OW,nc)
    out = jnp.transpose(out, (0, 3, 1, 2))                          # NCHW
    if out.shape[-1] == 1:                                          # torch squeeze(-1)
        out = out[..., 0]
    return out


# ---------------------------------------------------------------------------
# Pure-JAX f32 reference of the PyTorch module (for in-script validation).
# ---------------------------------------------------------------------------
def _reference_forward(x_nchw, params):
    x = x_nchw.astype(jnp.float32)
    for name, stride, pad, has_bn in _LAYER_CFG:
        w = params[name + "_w"].astype(jnp.float32)        # (Cin, Cout, kH, kW)
        k = w.shape[2]
        w_conv = jnp.transpose(w, (1, 0, 2, 3))[:, :, ::-1, ::-1]   # OIHW, flipped
        x = jax.lax.conv_general_dilated(
            x, w_conv, window_strides=(1, 1),
            padding=[(k - 1 - pad, k - 1 - pad)] * 2,
            lhs_dilation=(stride, stride),
            dimension_numbers=("NCHW", "OIHW", "NCHW"))
        if has_bn:
            mean = jnp.mean(x, axis=(0, 2, 3), keepdims=True)
            var = jnp.mean((x - mean) ** 2, axis=(0, 2, 3), keepdims=True)
            g = params[name + "_gamma"].reshape(1, -1, 1, 1)
            b = params[name + "_beta"].reshape(1, -1, 1, 1)
            x = (x - mean) * jax.lax.rsqrt(var + 1e-5) * g + b
            x = jnp.maximum(x, 0.0)
        else:
            x = jnp.tanh(x)
    if x.shape[-1] == 1:
        x = x[..., 0]
    return x


# ---------------------------------------------------------------------------
# Deterministic parameter init (shapes from DCGAN_Generator.__init__)
# ---------------------------------------------------------------------------
def init_params(key, noise_dim, n_channel):
    ks = jax.random.split(key, 4)

    def convt_w(k, cin, cout):
        # PyTorch ConvTranspose2d weight layout: (Cin, Cout, kH, kW)
        return 0.05 * jax.random.normal(k, (cin, cout, 3, 3), jnp.float32)

    return {
        "conv1_w": convt_w(ks[0], noise_dim, 128),
        "conv2_w": convt_w(ks[1], 128, 64),
        "conv3_w": convt_w(ks[2], 64, 32),
        "conv4_w": convt_w(ks[3], 32, n_channel),
        "conv1_gamma": jnp.ones((1, 128), jnp.float32),
        "conv1_beta": jnp.zeros((1, 128), jnp.float32),
        "conv2_gamma": jnp.ones((1, 64), jnp.float32),
        "conv2_beta": jnp.zeros((1, 64), jnp.float32),
        "conv3_gamma": jnp.ones((1, 32), jnp.float32),
        "conv3_beta": jnp.zeros((1, 32), jnp.float32),
    }


if __name__ == "__main__":
    batch, noise_dim, n_channel = 2, 16, 1

    key = jax.random.PRNGKey(0)
    pkey, xkey = jax.random.split(key)
    params = init_params(pkey, noise_dim, n_channel)
    # DCGAN generator input: (N, noise_dim, 1, 1) noise, NCHW.
    x = jax.random.normal(xkey, (batch, noise_dim, 1, 1), jnp.float32)

    kparams = prepare_params(params)                       # host-side, once
    fwd = jax.jit(functools.partial(dcgan_generator_forward, n_channel=n_channel))
    out = fwd(x, kparams)
    jax.block_until_ready(out)

    # 1x1 -> 3x3 -> 7x7 -> 15x15 -> 27x27 ; squeeze(-1) is a no-op (27 != 1).
    assert out.shape == (batch, n_channel, 27, 27), out.shape
    assert bool(jnp.all(jnp.isfinite(out)))

    # Validate against a pure-JAX f32 reference of the torch module.
    # bf16 MXU operands bound the error well below 0.1; a scatter/index bug
    # would produce O(1) discrepancies.
    ref = _reference_forward(x, params)
    err = float(jnp.max(jnp.abs(out - ref)))
    assert err < 0.1, f"max abs err vs reference: {err}"

    print("KERNEL_OK")
</pallas_src>

<mosaic_0001>
module attributes {stable_mosaic.version = 11 : i64} {
  func.func @_dcgan_kernel(%arg0: memref<6x48xf32, #tpu.memory_space<vmem>>, %arg1: memref<48x384xbf16, #tpu.memory_space<vmem>>, %arg2: memref<1x128xf32, #tpu.memory_space<vmem>>, %arg3: memref<1x128xf32, #tpu.memory_space<vmem>>, %arg4: memref<384x1536xbf16, #tpu.memory_space<vmem>>, %arg5: memref<1x64xf32, #tpu.memory_space<vmem>>, %arg6: memref<1x64xf32, #tpu.memory_space<vmem>>, %arg7: memref<512x1536xbf16, #tpu.memory_space<any>>, %arg8: memref<1x32xf32, #tpu.memory_space<vmem>>, %arg9: memref<1x32xf32, #tpu.memory_space<vmem>>, %arg10: memref<512x384xbf16, #tpu.memory_space<any>>, %arg11: memref<54x128xf32, #tpu.memory_space<vmem>>, %arg12: memref<6x1536xf32, #tpu.memory_space<vmem>>, %arg13: memref<14x512xf32, #tpu.memory_space<vmem>>, %arg14: memref<14x1536xf32, #tpu.memory_space<vmem>>, %arg15: memref<30x512xf32, #tpu.memory_space<vmem>>, %arg16: memref<30x384xf32, #tpu.memory_space<vmem>>, %arg17: memref<512x1536xbf16, #tpu.memory_space<vmem>>, %arg18: memref<512x384xbf16, #tpu.memory_space<vmem>>, %arg19: memref<2x!tpu.dma_semaphore, #tpu.memory_space<semaphore_mem>>) attributes {dimension_semantics = [], scalar_prefetch = 0 : i64, scratch_operands = 8 : i64, tpu.core_type = #tpu.core_type<tc>} {
    %c0_i32 = arith.constant 0 : i32
    %0 = tpu.memref_slice %arg19[%c0_i32] : memref<2x!tpu.dma_semaphore, #tpu.memory_space<semaphore_mem>> -> memref<1x!tpu.dma_semaphore, #tpu.memory_space<semaphore_mem>>
    %1 = tpu.memref_squeeze %0 : memref<1x!tpu.dma_semaphore, #tpu.memory_space<semaphore_mem>> -> memref<!tpu.dma_semaphore, #tpu.memory_space<semaphore_mem>>
    tpu.enqueue_dma source(%arg7 : memref<512x1536xbf16, #tpu.memory_space<any>>) target(%arg17 : memref<512x1536xbf16, #tpu.memory_space<vmem>>) target_semaphore(%1 : memref<!tpu.dma_semaphore, #tpu.memory_space<semaphore_mem>>)
    %c1_i32 = arith.constant 1 : i32
    %2 = tpu.memref_slice %arg19[%c1_i32] : memref<2x!tpu.dma_semaphore, #tpu.memory_space<semaphore_mem>> -> memref<1x!tpu.dma_semaphore, #tpu.memory_space<semaphore_mem>>
    %3 = tpu.memref_squeeze %2 : memref<1x!tpu.dma_semaphore, #tpu.memory_space<semaphore_mem>> -> memref<!tpu.dma_semaphore, #tpu.memory_space<semaphore_mem>>
    tpu.enqueue_dma source(%arg10 : memref<512x384xbf16, #tpu.memory_space<any>>) target(%arg18 : memref<512x384xbf16, #tpu.memory_space<vmem>>) target_semaphore(%3 : memref<!tpu.dma_semaphore, #tpu.memory_space<semaphore_mem>>)
    %c0 = arith.constant 0 : index
    %c0_0 = arith.constant 0 : index
    %4 = vector.load %arg0[%c0, %c0_0] : memref<6x48xf32, #tpu.memory_space<vmem>>, vector<6x48xf32>
    %5 = arith.truncf %4 : vector<6x48xf32> to vector<6x48xbf16>
    %c0_1 = arith.constant 0 : index
    %c0_2 = arith.constant 0 : index
    %6 = vector.load %arg1[%c0_1, %c0_2] : memref<48x384xbf16, #tpu.memory_space<vmem>>, vector<48x384xbf16>
    %cst = arith.constant dense<0.000000e+00> : vector<6x384xf32>
    %7 = tpu.matmul %5, %6, %cst {dimension_numbers = #tpu.dot_dimension_numbers<[1], [0], [0], [1], [0, 0, 1, 1], [], []>} : vector<6x48xbf16>, vector<48x384xbf16>, vector<6x384xf32> -> vector<6x384xf32>
    %cst_3 = arith.constant dense<0.000000e+00> : vector<384xf32>
    %8 = vector.multi_reduction <add>, %7, %cst_3 [0] : vector<6x384xf32> to vector<384xf32>
    %9 = vector.shape_cast %8 : vector<384xf32> to vector<1x384xf32>
    %10 = vector.extract_strided_slice %9 {offsets = [0, 0], sizes = [1, 128], strides = [1, 1]} : vector<1x384xf32> to vector<1x128xf32>
    %11 = vector.extract_strided_slice %9 {offsets = [0, 128], sizes = [1, 128], strides = [1, 1]} : vector<1x384xf32> to vector<1x128xf32>
    %12 = arith.addf %10, %11 : vector<1x128xf32>
    %13 = vector.extract_strided_slice %9 {offsets = [0, 256], sizes = [1, 128], strides = [1, 1]} : vector<1x384xf32> to vector<1x128xf32>
    %14 = arith.addf %12, %13 : vector<1x128xf32>
    %cst_4 = arith.constant 0.055555556 : f32
    %15 = vector.broadcast %cst_4 : f32 to vector<1x128xf32>
    %16 = arith.mulf %14, %15 : vector<1x128xf32>
    %17 = tpu.concatenate %16, %16, %16 in 1 : vector<1x128xf32>, vector<1x128xf32>, vector<1x128xf32> -> vector<1x384xf32>
    %18 = vector.broadcast %17 : vector<1x384xf32> to vector<6x384xf32>
    %19 = arith.subf %7, %18 : vector<6x384xf32>
    %20 = arith.mulf %19, %19 : vector<6x384xf32>
    %cst_5 = arith.constant dense<0.000000e+00> : vector<384xf32>
    %21 = vector.multi_reduction <add>, %20, %cst_5 [0] : vector<6x384xf32> to vector<384xf32>
    %22 = vector.shape_cast %21 : vector<384xf32> to vector<1x384xf32>
    %23 = vector.extract_strided_slice %22 {offsets = [0, 0], sizes = [1, 128], strides = [1, 1]} : vector<1x384xf32> to vector<1x128xf32>
    %24 = vector.extract_strided_slice %22 {offsets = [0, 128], sizes = [1, 128], strides = [1, 1]} : vector<1x384xf32> to vector<1x128xf32>
    %25 = arith.addf %23, %24 : vector<1x128xf32>
    %26 = vector.extract_strided_slice %22 {offsets = [0, 256], sizes = [1, 128], strides = [1, 1]} : vector<1x384xf32> to vector<1x128xf32>
    %27 = arith.addf %25, %26 : vector<1x128xf32>
    %cst_6 = arith.constant 0.055555556 : f32
    %28 = vector.broadcast %cst_6 : f32 to vector<1x128xf32>
    %29 = arith.mulf %27, %28 : vector<1x128xf32>
    %c0_7 = arith.constant 0 : index
    %c0_8 = arith.constant 0 : index
    %30 = vector.load %arg2[%c0_7, %c0_8] : memref<1x128xf32, #tpu.memory_space<vmem>>, vector<1x128xf32>
    %cst_9 = arith.constant 9.99999974E-6 : f32
    %31 = vector.broadcast %cst_9 : f32 to vector<1x128xf32>
    %32 = arith.addf %29, %31 : vector<1x128xf32>
    %33 = math.rsqrt %32 : vector<1x128xf32>
    %34 = arith.mulf %30, %33 : vector<1x128xf32>
    %c0_10 = arith.constant 0 : index
    %c0_11 = arith.constant 0 : index
    %35 = vector.load %arg3[%c0_10, %c0_11] : memref<1x128xf32, #tpu.memory_space<vmem>>, vector<1x128xf32>
    %36 = arith.mulf %16, %34 : vector<1x128xf32>
    %37 = arith.subf %35, %36 : vector<1x128xf32>
    %38 = tpu.concatenate %34, %34, %34 in 1 : vector<1x128xf32>, vector<1x128xf32>, vector<1x128xf32> -> vector<1x384xf32>
    %39 = tpu.concatenate %37, %37, %37 in 1 : vector<1x128xf32>, vector<1x128xf32>, vector<1x128xf32> -> vector<1x384xf32>
    %40 = vector.broadcast %38 : vector<1x384xf32> to vector<6x384xf32>
    %41 = arith.mulf %7, %40 : vector<6x384xf32>
    %42 = vector.broadcast %39 : vector<1x384xf32> to vector<6x384xf32>
    %43 = arith.addf %41, %42 : vector<6x384xf32>
    %cst_12 = arith.constant 0.000000e+00 : f32
    %44 = vector.broadcast %cst_12 : f32 to vector<6x384xf32>
    %45 = arith.maximumf %43, %44 : vector<6x384xf32>
    %46 = arith.truncf %45 : vector<6x384xf32> to vector<6x384xbf16>
    %c0_13 = arith.constant 0 : index
    %c0_14 = arith.constant 0 : index
    %47 = vector.load %arg4[%c0_13, %c0_14] : memref<384x1536xbf16, #tpu.memory_space<vmem>>, vector<384x1536xbf16>
    %cst_15 = arith.constant dense<0.000000e+00> : vector<6x1536xf32>
    %48 = tpu.matmul %46, %47, %cst_15 {dimension_numbers = #tpu.dot_dimension_numbers<[1], [0], [0], [1], [0, 0, 1, 1], [], []>} : vector<6x384xbf16>, vector<384x1536xbf16>, vector<6x1536xf32> -> vector<6x1536xf32>
    %c0_16 = arith.constant 0 : index
    %c0_17 = arith.constant 0 : index
    %49 = vector.load %arg12[%c0_16, %c0_17] : memref<6x1536xf32, #tpu.memory_space<vmem>>, vector<6x1536xf32>
    tpu.vector_store %arg12[%c0_16, %c0_17], %48 {strides = array<i32>} : memref<6x1536xf32, #tpu.memory_space<vmem>>, vector<6x1536xf32>,
    %c0_18 = arith.constant 0 : index
    %c0_19 = arith.constant 0 : index
    %50 = vector.load %arg12[%c0_18, %c0_19] : memref<6x1536xf32, #tpu.memory_space<vmem>>, vector<1x512xf32>
    %c0_20 = arith.constant 0 : index
    %c0_21 = arith.constant 0 : index
    %51 = vector.load %arg13[%c0_20, %c0_21] : memref<14x512xf32, #tpu.memory_space<vmem>>, vector<1x512xf32>
    tpu.vector_store %arg13[%c0_20, %c0_21], %50 {strides = array<i32>} : memref<14x512xf32, #tpu.memory_space<vmem>>, vector<1x512xf32>,
    %c0_22 = arith.constant 0 : index
    %c512 = arith.constant 512 : index
    %52 = vector.load %arg12[%c0_22, %c512] : memref<6x1536xf32, #tpu.memory_space<vmem>>, vector<1x512xf32>
    %c1 = arith.constant 1 : index
    %c0_23 = arith.constant 0 : index
    %53 = vector.load %arg13[%c1, %c0_23] : memref<14x512xf32, #tpu.memory_space<vmem>>, vector<1x512xf32>
    tpu.vector_store %arg13[%c1, %c0_23], %52 {strides = array<i32>} : memref<14x512xf32, #tpu.memory_space<vmem>>, vector<1x512xf32>,
    %c1_24 = arith.constant 1 : index
    %c0_25 = arith.constant 0 : index
    %54 = vector.load %arg12[%c1_24, %c0_25] : memref<6x1536xf32, #tpu.memory_space<vmem>>, vector<1x512xf32>
    %c0_26 = arith.constant 0 : index
    %c1024 = arith.constant 1024 : index
    %55 = vector.load %arg12[%c0_26, %c1024] : memref<6x1536xf32, #tpu.memory_space<vmem>>, vector<1x512xf32>
    %56 = arith.addf %54, %55 : vector<1x512xf32>
    %c2 = arith.constant 2 : index
    %c0_27 = arith.constant 0 : index
    %57 = vector.load %arg13[%c2, %c0_27] : memref<14x512xf32, #tpu.memory_space<vmem>>, vector<1x512xf32>
    tpu.vector_store %arg13[%c2, %c0_27], %56 {strides = array<i32>} : memref<14x512xf32, #tpu.memory_space<vmem>>, vector<1x512xf32>,
    %c1_28 = arith.constant 1 : index
    %c512_29 = arith.constant 512 : index
    %58 = vector.load %arg12[%c1_28, %c512_29] : memref<6x1536xf32, #tpu.memory_space<vmem>>, vector<1x512xf32>
    %c3 = arith.constant 3 : index
    %c0_30 = arith.constant 0 : index
    %59 = vector.load %arg13[%c3, %c0_30] : memref<14x512xf32, #tpu.memory_space<vmem>>, vector<1x512xf32>
    tpu.vector_store %arg13[%c3, %c0_30], %58 {strides = array<i32>} : memref<14x512xf32, #tpu.memory_space<vmem>>, vector<1x512xf32>,
    %c2_31 = arith.constant 2 : index
    %c0_32 = arith.constant 0 : index
    %60 = vector.load %arg12[%c2_31, %c0_32] : memref<6x1536xf32, #tpu.memory_space<vmem>>, vector<1x512xf32>
    %c1_33 = arith.constant 1 : index
    %c1024_34 = arith.constant 1024 : index
    %61 = vector.load %arg12[%c1_33, %c1024_34] : memref<6x1536xf32, #tpu.memory_space<vmem>>, vector<1x512xf32>
    %62 = arith.addf %60, %61 : vector<1x512xf32>
    %c4 = arith.constant 4 : index
    %c0_35 = arith.constant 0 : index
    %63 = vector.load %arg13[%c4, %c0_35] : memref<14x512xf32, #tpu.memory_space<vmem>>, vector<1x512xf32>
    tpu.vector_store %arg13[%c4, %c0_35], %62 {strides = array<i32>} : memref<14x512xf32, #tpu.memory_space<vmem>>, vector<1x512xf32>,
    %c2_36 = arith.constant 2 : index
    %c512_37 = arith.constant 512 : index
    %64 = vector.load %arg12[%c2_36, %c512_37] : memref<6x1536xf32, #tpu.memory_space<vmem>>, vector<1x512xf32>
    %c5 = arith.constant 5 : index
    %c0_38 = arith.constant 0 : index
    %65 = vector.load %arg13[%c5, %c0_38] : memref<14x512xf32, #tpu.memory_space<vmem>>, vector<1x512xf32>
    tpu.vector_store %arg13[%c5, %c0_38], %64 {strides = array<i32>} : memref<14x512xf32, #tpu.memory_space<vmem>>, vector<1x512xf32>,
    %c2_39 = arith.constant 2 : index
    %c1024_40 = arith.constant 1024 : index
    %66 = vector.load %arg12[%c2_39, %c1024_40] : memref<6x1536xf32, #tpu.memory_space<vmem>>, vector<1x512xf32>
    %c6 = arith.constant 6 : index
    %c0_41 = arith.constant 0 : index
    %67 = vector.load %arg13[%c6, %c0_41] : memref<14x512xf32, #tpu.memory_space<vmem>>, vector<1x512xf32>
    tpu.vector_store %arg13[%c6, %c0_41], %66 {strides = array<i32>} : memref<14x512xf32, #tpu.memory_space<vmem>>, vector<1x512xf32>,
    %c3_42 = arith.constant 3 : index
    %c0_43 = arith.constant 0 : index
    %68 = vector.load %arg12[%c3_42, %c0_43] : memref<6x1536xf32, #tpu.memory_space<vmem>>, vector<1x512xf32>
    %c7 = arith.constant 7 : index
    %c0_44 = arith.constant 0 : index
    %69 = vector.load %arg13[%c7, %c0_44] : memref<14x512xf32, #tpu.memory_space<vmem>>, vector<1x512xf32>
    tpu.vector_store %arg13[%c7, %c0_44], %68 {strides = array<i32>} : memref<14x512xf32, #tpu.memory_space<vmem>>, vector<1x512xf32>,
    %c3_45 = arith.constant 3 : index
    %c512_46 = arith.constant 512 : index
    %70 = vector.load %arg12[%c3_45, %c512_46] : memref<6x1536xf32, #tpu.memory_space<vmem>>, vector<1x512xf32>
    %c8 = arith.constant 8 : index
    %c0_47 = arith.constant 0 : index
    %71 = vector.load %arg13[%c8, %c0_47] : memref<14x512xf32, #tpu.memory_space<vmem>>, vector<1x512xf32>
    tpu.vector_store %arg13[%c8, %c0_47], %70 {strides = array<i32>} : memref<14x512xf32, #tpu.memory_space<vmem>>, vector<1x512xf32>,
    %c4_48 = arith.constant 4 : index
    %c0_49 = arith.constant 0 : index
    %72 = vector.load %arg12[%c4_48, %c0_49] : memref<6x1536xf32, #tpu.memory_space<vmem>>, vector<1x512xf32>
    %c3_50 = arith.constant 3 : index
    %c1024_51 = arith.constant 1024 : index
    %73 = vector.load %arg12[%c3_50, %c1024_51] : memref<6x1536xf32, #tpu.memory_space<vmem>>, vector<1x512xf32>
    %74 = arith.addf %72, %73 : vector<1x512xf32>
    %c9 = arith.constant 9 : index
    %c0_52 = arith.constant 0 : index
    %75 = vector.load %arg13[%c9, %c0_52] : memref<14x512xf32, #tpu.memory_space<vmem>>, vector<1x512xf32>
    tpu.vector_store %arg13[%c9, %c0_52], %74 {strides = array<i32>} : memref<14x512xf32, #tpu.memory_space<vmem>>, vector<1x512xf32>,
    %c4_53 = arith.constant 4 : index
    %c512_54 = arith.constant 512 : index
    %76 = vector.load %arg12[%c4_53, %c512_54] : memref<6x1536xf32, #tpu.memory_space<vmem>>, vector<1x512xf32>
    %c10 = arith.constant 10 : index
    %c0_55 = arith.constant 0 : index
    %77 = vector.load %arg13[%c10, %c0_55] : memref<14x512xf32, #tpu.memory_space<vmem>>, vector<1x512xf32>
    tpu.vector_store %arg13[%c10, %c0_55], %76 {strides = array<i32>} : memref<14x512xf32, #tpu.memory_space<vmem>>, vector<1x512xf32>,
    %c5_56 = arith.constant 5 : index
    %c0_57 = arith.constant 0 : index
    %78 = vector.load %arg12[%c5_56, %c0_57] : memref<6x1536xf32, #tpu.memory_space<vmem>>, vector<1x512xf32>
    %c4_58 = arith.constant 4 : index
    %c1024_59 = arith.constant 1024 : index
    %79 = vector.load %arg12[%c4_58, %c1024_59] : memref<6x1536xf32, #tpu.memory_space<vmem>>, vector<1x512xf32>
    %80 = arith.addf %78, %79 : vector<1x512xf32>
    %c11 = arith.constant 11 : index
    %c0_60 = arith.constant 0 : index
    %81 = vector.load %arg13[%c11, %c0_60] : memref<14x512xf32, #tpu.memory_space<vmem>>, vector<1x512xf32>
    tpu.vector_store %arg13[%c11, %c0_60], %80 {strides = array<i32>} : memref<14x512xf32, #tpu.memory_space<vmem>>, vector<1x512xf32>,
    %c5_61 = arith.constant 5 : index
    %c512_62 = arith.constant 512 : index
    %82 = vector.load %arg12[%c5_61, %c512_62] : memref<6x1536xf32, #tpu.memory_space<vmem>>, vector<1x512xf32>
    %c12 = arith.constant 12 : index
    %c0_63 = arith.constant 0 : index
    %83 = vector.load %arg13[%c12, %c0_63] : memref<14x512xf32, #tpu.memory_space<vmem>>, vector<1x512xf32>
    tpu.vector_store %arg13[%c12, %c0_63], %82 {strides = array<i32>} : memref<14x512xf32, #tpu.memory_space<vmem>>, vector<1x512xf32>,
    %c5_64 = arith.constant 5 : index
    %c1024_65 = arith.constant 1024 : index
    %84 = vector.load %arg12[%c5_64, %c1024_65] : memref<6x1536xf32, #tpu.memory_space<vmem>>, vector<1x512xf32>
    %c13 = arith.constant 13 : index
    %c0_66 = arith.constant 0 : index
    %85 = vector.load %arg13[%c13, %c0_66] : memref<14x512xf32, #tpu.memory_space<vmem>>, vector<1x512xf32>
    tpu.vector_store %arg13[%c13, %c0_66], %84 {strides = array<i32>} : memref<14x512xf32, #tpu.memory_space<vmem>>, vector<1x512xf32>,
    %c0_67 = arith.constant 0 : index
    %c0_68 = arith.constant 0 : index
    %86 = vector.load %arg13[%c0_67, %c0_68] : memref<14x512xf32, #tpu.memory_space<vmem>>, vector<14x512xf32>
    %cst_69 = arith.constant 0.000000e+00 : f32
    %87 = vector.broadcast %cst_69 : f32 to vector<1x64xf32>
    %cst_70 = arith.constant dense<0.000000e+00> : vector<512xf32>
    %88 = vector.multi_reduction <add>, %86, %cst_70 [0] : vector<14x512xf32> to vector<512xf32>
    %89 = vector.shape_cast %88 : vector<512xf32> to vector<1x512xf32>
    %90 = vector.extract_strided_slice %89 {offsets = [0, 0], sizes = [1, 64], strides = [1, 1]} : vector<1x512xf32> to vector<1x64xf32>
    %91 = vector.extract_strided_slice %89 {offsets = [0, 64], sizes = [1, 64], strides = [1, 1]} : vector<1x512xf32> to vector<1x64xf32>
    %92 = arith.addf %90, %91 : vector<1x64xf32>
    %93 = vector.extract_strided_slice %89 {offsets = [0, 128], sizes = [1, 64], strides = [1, 1]} : vector<1x512xf32> to vector<1x64xf32>
    %94 = arith.addf %92, %93 : vector<1x64xf32>
    %95 = vector.extract_strided_slice %89 {offsets = [0, 192], sizes = [1, 64], strides = [1, 1]} : vector<1x512xf32> to vector<1x64xf32>
    %96 = arith.addf %94, %95 : vector<1x64xf32>
    %97 = vector.extract_strided_slice %89 {offsets = [0, 256], sizes = [1, 64], strides = [1, 1]} : vector<1x512xf32> to vector<1x64xf32>
    %98 = arith.addf %96, %97 : vector<1x64xf32>
    %99 = vector.extract_strided_slice %89 {offsets = [0, 320], sizes = [1, 64], strides = [1, 1]} : vector<1x512xf32> to vector<1x64xf32>
    %100 = arith.addf %98, %99 : vector<1x64xf32>
    %101 = vector.extract_strided_slice %89 {offsets = [0, 384], sizes = [1, 64], strides = [1, 1]} : vector<1x512xf32> to vector<1x64xf32>
    %102 = arith.addf %100, %101 : vector<1x64xf32>
    %cst_71 = arith.constant 0.0102040814 : f32
    %103 = vector.broadcast %cst_71 : f32 to vector<1x64xf32>
    %104 = arith.mulf %102, %103 : vector<1x64xf32>
    %105 = tpu.concatenate %104, %104, %104, %104, %104, %104, %104, %87 in 1 : vector<1x64xf32>, vector<1x64xf32>, vector<1x64xf32>, vector<1x64xf32>, vector<1x64xf32>, vector<1x64xf32>, vector<1x64xf32>, vector<1x64xf32> -> vector<1x512xf32>
    %106 = vector.broadcast %105 : vector<1x512xf32> to vector<14x512xf32>
    %107 = arith.subf %86, %106 : vector<14x512xf32>
    %108 = arith.mulf %107, %107 : vector<14x512xf32>
    %cst_72 = arith.constant dense<0.000000e+00> : vector<512xf32>
    %109 = vector.multi_reduction <add>, %108, %cst_72 [0] : vector<14x512xf32> to vector<512xf32>
    %110 = vector.shape_cast %109 : vector<512xf32> to vector<1x512xf32>
    %111 = vector.extract_strided_slice %110 {offsets = [0, 0], sizes = [1, 64], strides = [1, 1]} : vector<1x512xf32> to vector<1x64xf32>
    %112 = vector.extract_strided_slice %110 {offsets = [0, 64], sizes = [1, 64], strides = [1, 1]} : vector<1x512xf32> to vector<1x64xf32>
    %113 = arith.addf %111, %112 : vector<1x64xf32>
    %114 = vector.extract_strided_slice %110 {offsets = [0, 128], sizes = [1, 64], strides = [1, 1]} : vector<1x512xf32> to vector<1x64xf32>
    %115 = arith.addf %113, %114 : vector<1x64xf32>
    %116 = vector.extract_strided_slice %110 {offsets = [0, 192], sizes = [1, 64], strides = [1, 1]} : vector<1x512xf32> to vector<1x64xf32>
    %117 = arith.addf %115, %116 : vector<1x64xf32>
    %118 = vector.extract_strided_slice %110 {offsets = [0, 256], sizes = [1, 64], strides = [1, 1]} : vector<1x512xf32> to vector<1x64xf32>
    %119 = arith.addf %117, %118 : vector<1x64xf32>
    %120 = vector.extract_strided_slice %110 {offsets = [0, 320], sizes = [1, 64], strides = [1, 1]} : vector<1x512xf32> to vector<1x64xf32>
    %121 = arith.addf %119, %120 : vector<1x64xf32>
    %122 = vector.extract_strided_slice %110 {offsets = [0, 384], sizes = [1, 64], strides = [1, 1]} : vector<1x512xf32> to vector<1x64xf32>
    %123 = arith.addf %121, %122 : vector<1x64xf32>
    %cst_73 = arith.constant 0.0102040814 : f32
    %124 = vector.broadcast %cst_73 : f32 to vector<1x64xf32>
    %125 = arith.mulf %123, %124 : vector<1x64xf32>
    %c0_74 = arith.constant 0 : index
    %c0_75 = arith.constant 0 : index
    %126 = vector.load %arg5[%c0_74, %c0_75] : memref<1x64xf32, #tpu.memory_space<vmem>>, vector<1x64xf32>
    %cst_76 = arith.constant 9.99999974E-6 : f32
    %127 = vector.broadcast %cst_76 : f32 to vector<1x64xf32>
    %128 = arith.addf %125, %127 : vector<1x64xf32>
    %129 = math.rsqrt %128 : vector<1x64xf32>
    %130 = arith.mulf %126, %129 : vector<1x64xf32>
    %c0_77 = arith.constant 0 : index
    %c0_78 = arith.constant 0 : index
    %131 = vector.load %arg6[%c0_77, %c0_78] : memref<1x64xf32, #tpu.memory_space<vmem>>, vector<1x64xf32>
    %132 = arith.mulf %104, %130 : vector<1x64xf32>
    %133 = arith.subf %131, %132 : vector<1x64xf32>
    %134 = tpu.concatenate %130, %130, %130, %130, %130, %130, %130, %87 in 1 : vector<1x64xf32>, vector<1x64xf32>, vector<1x64xf32>, vector<1x64xf32>, vector<1x64xf32>, vector<1x64xf32>, vector<1x64xf32>, vector<1x64xf32> -> vector<1x512xf32>
    %135 = tpu.concatenate %133, %133, %133, %133, %133, %133, %133, %87 in 1 : vector<1x64xf32>, vector<1x64xf32>, vector<1x64xf32>, vector<1x64xf32>, vector<1x64xf32>, vector<1x64xf32>, vector<1x64xf32>, vector<1x64xf32> -> vector<1x512xf32>
    %136 = vector.broadcast %134 : vector<1x512xf32> to vector<14x512xf32>
    %137 = arith.mulf %86, %136 : vector<14x512xf32>
    %138 = vector.broadcast %135 : vector<1x512xf32> to vector<14x512xf32>
    %139 = arith.addf %137, %138 : vector<14x512xf32>
    %cst_79 = arith.constant 0.000000e+00 : f32
    %140 = vector.broadcast %cst_79 : f32 to vector<14x512xf32>
    %141 = arith.maximumf %139, %140 : vector<14x512xf32>
    %c0_i32_80 = arith.constant 0 : i32
    %142 = tpu.memref_slice %arg19[%c0_i32_80] : memref<2x!tpu.dma_semaphore, #tpu.memory_space<semaphore_mem>> -> memref<1x!tpu.dma_semaphore, #tpu.memory_space<semaphore_mem>>
    %143 = tpu.memref_squeeze %142 : memref<1x!tpu.dma_semaphore, #tpu.memory_space<semaphore_mem>> -> memref<!tpu.dma_semaphore, #tpu.memory_space<semaphore_mem>>
    tpu.wait_dma2 semaphore(%143 : memref<!tpu.dma_semaphore, #tpu.memory_space<semaphore_mem>>) src(%arg7 : memref<512x1536xbf16, #tpu.memory_space<any>>) dst(%arg17 : memref<512x1536xbf16, #tpu.memory_space<vmem>>)
    %144 = arith.truncf %141 : vector<14x512xf32> to vector<14x512xbf16>
    %c0_81 = arith.constant 0 : index
    %c0_82 = arith.constant 0 : index
    %145 = vector.load %arg17[%c0_81, %c0_82] : memref<512x1536xbf16, #tpu.memory_space<vmem>>, vector<512x1536xbf16>
    %cst_83 = arith.constant dense<0.000000e+00> : vector<14x1536xf32>
    %146 = tpu.matmul %144, %145, %cst_83 {dimension_numbers = #tpu.dot_dimension_numbers<[1], [0], [0], [1], [0, 0, 1, 1], [], []>} : vector<14x512xbf16>, vector<512x1536xbf16>, vector<14x1536xf32> -> vector<14x1536xf32>
    %c0_84 = arith.constant 0 : index
    %c0_85 = arith.constant 0 : index
    %147 = vector.load %arg14[%c0_84, %c0_85] : memref<14x1536xf32, #tpu.memory_space<vmem>>, vector<14x1536xf32>
    tpu.vector_store %arg14[%c0_84, %c0_85], %146 {strides = array<i32>} : memref<14x1536xf32, #tpu.memory_space<vmem>>, vector<14x1536xf32>,
    %c0_86 = arith.constant 0 : index
    %c0_87 = arith.constant 0 : index
    %148 = vector.load %arg14[%c0_86, %c0_87] : memref<14x1536xf32, #tpu.memory_space<vmem>>, vector<1x512xf32>
    %c0_88 = arith.constant 0 : index
    %c0_89 = arith.constant 0 : index
    %149 = vector.load %arg15[%c0_88, %c0_89] : memref<30x512xf32, #tpu.memory_space<vmem>>, vector<1x512xf32>
    tpu.vector_store %arg15[%c0_88, %c0_89], %148 {strides = array<i32>} : memref<30x512xf32, #tpu.memory_space<vmem>>, vector<1x512xf32>,
    %c0_90 = arith.constant 0 : index
    %c512_91 = arith.constant 512 : index
    %150 = vector.load %arg14[%c0_90, %c512_91] : memref<14x1536xf32, #tpu.memory_space<vmem>>, vector<1x512xf32>
    %c1_92 = arith.constant 1 : index
    %c0_93 = arith.constant 0 : index
    %151 = vector.load %arg15[%c1_92, %c0_93] : memref<30x512xf32, #tpu.memory_space<vmem>>, vector<1x512xf32>
    tpu.vector_store %arg15[%c1_92, %c0_93], %150 {strides = array<i32>} : memref<30x512xf32, #tpu.memory_space<vmem>>, vector<1x512xf32>,
    %c1_94 = arith.constant 1 : index
    %c0_95 = arith.constant 0 : index
    %152 = vector.load %arg14[%c1_94, %c0_95] : memref<14x1536xf32, #tpu.memory_space<vmem>>, vector<1x512xf32>
    %c0_96 = arith.constant 0 : index
    %c1024_97 = arith.constant 1024 : index
    %153 = vector.load %arg14[%c0_96, %c1024_97] : memref<14x1536xf32, #tpu.memory_space<vmem>>, vector<1x512xf32>
    %154 = arith.addf %152, %153 : vector<1x512xf32>
    %c2_98 = arith.constant 2 : index
    %c0_99 = arith.constant 0 : index
    %155 = vector.load %arg15[%c2_98, %c0_99] : memref<30x512xf32, #tpu.memory_space<vmem>>, vector<1x512xf32>
    tpu.vector_store %arg15[%c2_98, %c0_99], %154 {strides = array<i32>} : memref<30x512xf32, #tpu.memory_space<vmem>>, vector<1x512xf32>,
    %c1_100 = arith.constant 1 : index
    %c512_101 = arith.constant 512 : index
    %156 = vector.load %arg14[%c1_100, %c512_101] : memref<14x1536xf32, #tpu.memory_space<vmem>>, vector<1x512xf32>
    %c3_102 = arith.constant 3 : index
    %c0_103 = arith.constant 0 : index
    %157 = vector.load %arg15[%c3_102, %c0_103] : memref<30x512xf32, #tpu.memory_space<vmem>>, vector<1x512xf32>
    tpu.vector_store %arg15[%c3_102, %c0_103], %156 {strides = array<i32>} : memref<30x512xf32, #tpu.memory_space<vmem>>, vector<1x512xf32>,
    %c2_104 = arith.constant 2 : index
    %c0_105 = arith.constant 0 : index
    %158 = vector.load %arg14[%c2_104, %c0_105] : memref<14x1536xf32, #tpu.memory_space<vmem>>, vector<1x512xf32>
    %c1_106 = arith.constant 1 : index
    %c1024_107 = arith.constant 1024 : index
    %159 = vector.load %arg14[%c1_106, %c1024_107] : memref<14x1536xf32, #tpu.memory_space<vmem>>, vector<1x512xf32>
    %160 = arith.addf %158, %159 : vector<1x512xf32>
    %c4_108 = arith.constant 4 : index
    %c0_109 = arith.constant 0 : index
    %161 = vector.load %arg15[%c4_108, %c0_109] : memref<30x512xf32, #tpu.memory_space<vmem>>, vector<1x512xf32>
    tpu.vector_store %arg15[%c4_108, %c0_109], %160 {strides = array<i32>} : memref<30x512xf32, #tpu.memory_space<vmem>>, vector<1x512xf32>,
    %c2_110 = arith.constant 2 : index
    %c512_111 = arith.constant 512 : index
    %162 = vector.load %arg14[%c2_110, %c512_111] : memref<14x1536xf32, #tpu.memory_space<vmem>>, vector<1x512xf32>
    %c5_112 = arith.constant 5 : index
    %c0_113 = arith.constant 0 : index
    %163 = vector.load %arg15[%c5_112, %c0_113] : memref<30x512xf32, #tpu.memory_space<vmem>>, vector<1x512xf32>
    tpu.vector_store %arg15[%c5_112, %c0_113], %162 {strides = array<i32>} : memref<30x512xf32, #tpu.memory_space<vmem>>, vector<1x512xf32>,
    %c3_114 = arith.constant 3 : index
    %c0_115 = arith.constant 0 : index
    %164 = vector.load %arg14[%c3_114, %c0_115] : memref<14x1536xf32, #tpu.memory_space<vmem>>, vector<1x512xf32>
    %c2_116 = arith.constant 2 : index
    %c1024_117 = arith.constant 1024 : index
    %165 = vector.load %arg14[%c2_116, %c1024_117] : memref<14x1536xf32, #tpu.memory_space<vmem>>, vector<1x512xf32>
    %166 = arith.addf %164, %165 : vector<1x512xf32>
    %c6_118 = arith.constant 6 : index
    %c0_119 = arith.constant 0 : index
    %167 = vector.load %arg15[%c6_118, %c0_119] : memref<30x512xf32, #tpu.memory_space<vmem>>, vector<1x512xf32>
    tpu.vector_store %arg15[%c6_118, %c0_119], %166 {strides = array<i32>} : memref<30x512xf32, #tpu.memory_space<vmem>>, vector<1x512xf32>,
    %c3_120 = arith.constant 3 : index
    %c512_121 = arith.constant 512 : index
    %168 = vector.load %arg14[%c3_120, %c512_121] : memref<14x1536xf32, #tpu.memory_space<vmem>>, vector<1x512xf32>
    %c7_122 = arith.constant 7 : index
    %c0_123 = arith.constant 0 : index
    %169 = vector.load %arg15[%c7_122, %c0_123] : memref<30x512xf32, #tpu.memory_space<vmem>>, vector<1x512xf32>
    tpu.vector_store %arg15[%c7_122, %c0_123], %168 {strides = array<i32>} : memref<30x512xf32, #tpu.memory_space<vmem>>, vector<1x512xf32>,
    %c4_124 = arith.constant 4 : index
    %c0_125 = arith.constant 0 : index
    %170 = vector.load %arg14[%c4_124, %c0_125] : memref<14x1536xf32, #tpu.memory_space<vmem>>, vector<1x512xf32>
    %c3_126 = arith.constant 3 : index
    %c1024_127 = arith.constant 1024 : index
    %171 = vector.load %arg14[%c3_126, %c1024_127] : memref<14x1536xf32, #tpu.memory_space<vmem>>, vector<1x512xf32>
    %172 = arith.addf %170, %171 : vector<1x512xf32>
    %c8_128 = arith.constant 8 : index
    %c0_129 = arith.constant 0 : index
    %173 = vector.load %arg15[%c8_128, %c0_129] : memref<30x512xf32, #tpu.memory_space<vmem>>, vector<1x512xf32>
    tpu.vector_store %arg15[%c8_128, %c0_129], %172 {strides = array<i32>} : memref<30x512xf32, #tpu.memory_space<vmem>>, vector<1x512xf32>,
    %c4_130 = arith.constant 4 : index
    %c512_131 = arith.constant 512 : index
    %174 = vector.load %arg14[%c4_130, %c512_131] : memref<14x1536xf32, #tpu.memory_space<vmem>>, vector<1x512xf32>
    %c9_132 = arith.constant 9 : index
    %c0_133 = arith.constant 0 : index
    %175 = vector.load %arg15[%c9_132, %c0_133] : memref<30x512xf32, #tpu.memory_space<vmem>>, vector<1x512xf32>
    tpu.vector_store %arg15[%c9_132, %c0_133], %174 {strides = array<i32>} : memref<30x512xf32, #tpu.memory_space<vmem>>, vector<1x512xf32>,
    %c5_134 = arith.constant 5 : index
    %c0_135 = arith.constant 0 : index
    %176 = vector.load %arg14[%c5_134, %c0_135] : memref<14x1536xf32, #tpu.memory_space<vmem>>, vector<1x512xf32>
    %c4_136 = arith.constant 4 : index
    %c1024_137 = arith.constant 1024 : index
    %177 = vector.load %arg14[%c4_136, %c1024_137] : memref<14x1536xf32, #tpu.memory_space<vmem>>, vector<1x512xf32>
    %178 = arith.addf %176, %177 : vector<1x512xf32>
    %c10_138 = arith.constant 10 : index
    %c0_139 = arith.constant 0 : index
    %179 = vector.load %arg15[%c10_138, %c0_139] : memref<30x512xf32, #tpu.memory_space<vmem>>, vector<1x512xf32>
    tpu.vector_store %arg15[%c10_138, %c0_139], %178 {strides = array<i32>} : memref<30x512xf32, #tpu.memory_space<vmem>>, vector<1x512xf32>,
    %c5_140 = arith.constant 5 : index
    %c512_141 = arith.constant 512 : index
    %180 = vector.load %arg14[%c5_140, %c512_141] : memref<14x1536xf32, #tpu.memory_space<vmem>>, vector<1x512xf32>
    %c11_142 = arith.constant 11 : index
    %c0_143 = arith.constant 0 : index
    %181 = vector.load %arg15[%c11_142, %c0_143] : memref<30x512xf32, #tpu.memory_space<vmem>>, vector<1x512xf32>
    tpu.vector_store %arg15[%c11_142, %c0_143], %180 {strides = array<i32>} : memref<30x512xf32, #tpu.memory_space<vmem>>, vector<1x512xf32>,
    %c6_144 = arith.constant 6 : index
    %c0_145 = arith.constant 0 : index
    %182 = vector.load %arg14[%c6_144, %c0_145] : memref<14x1536xf32, #tpu.memory_space<vmem>>, vector<1x512xf32>
    %c5_146 = arith.constant 5 : index
    %c1024_147 = arith.constant 1024 : index
    %183 = vector.load %arg14[%c5_146, %c1024_147] : memref<14x1536xf32, #tpu.memory_space<vmem>>, vector<1x512xf32>
    %184 = arith.addf %182, %183 : vector<1x512xf32>
    %c12_148 = arith.constant 12 : index
    %c0_149 = arith.constant 0 : index
    %185 = vector.load %arg15[%c12_148, %c0_149] : memref<30x512xf32, #tpu.memory_space<vmem>>, vector<1x512xf32>
    tpu.vector_store %arg15[%c12_148, %c0_149], %184 {strides = array<i32>} : memref<30x512xf32, #tpu.memory_space<vmem>>, vector<1x512xf32>,
    %c6_150 = arith.constant 6 : index
    %c512_151 = arith.constant 512 : index
    %186 = vector.load %arg14[%c6_150, %c512_151] : memref<14x1536xf32, #tpu.memory_space<vmem>>, vector<1x512xf32>
    %c13_152 = arith.constant 13 : index
    %c0_153 = arith.constant 0 : index
    %187 = vector.load %arg15[%c13_152, %c0_153] : memref<30x512xf32, #tpu.memory_space<vmem>>, vector<1x512xf32>
    tpu.vector_store %arg15[%c13_152, %c0_153], %186 {strides = array<i32>} : memref<30x512xf32, #tpu.memory_space<vmem>>, vector<1x512xf32>,
    %c6_154 = arith.constant 6 : index
    %c1024_155 = arith.constant 1024 : index
    %188 = vector.load %arg14[%c6_154, %c1024_155] : memref<14x1536xf32, #tpu.memory_space<vmem>>, vector<1x512xf32>
    %c14 = arith.constant 14 : index
    %c0_156 = arith.constant 0 : index
    %189 = vector.load %arg15[%c14, %c0_156] : memref<30x512xf32, #tpu.memory_space<vmem>>, vector<1x512xf32>
    tpu.vector_store %arg15[%c14, %c0_156], %188 {strides = array<i32>} : memref<30x512xf32, #tpu.memory_space<vmem>>, vector<1x512xf32>,
    %c7_157 = arith.constant 7 : index
    %c0_158 = arith.constant 0 : index
    %190 = vector.load %arg14[%c7_157, %c0_158] : memref<14x1536xf32, #tpu.memory_space<vmem>>, vector<1x512xf32>
    %c15 = arith.constant 15 : index
    %c0_159 = arith.constant 0 : index
    %191 = vector.load %arg15[%c15, %c0_159] : memref<30x512xf32, #tpu.memory_space<vmem>>, vector<1x512xf32>
    tpu.vector_store %arg15[%c15, %c0_159], %190 {strides = array<i32>} : memref<30x512xf32, #tpu.memory_space<vmem>>, vector<1x512xf32>,
    %c7_160 = arith.constant 7 : index
    %c512_161 = arith.constant 512 : index
    %192 = vector.load %arg14[%c7_160, %c512_161] : memref<14x1536xf32, #tpu.memory_space<vmem>>, vector<1x512xf32>
    %c16 = arith.constant 16 : index
    %c0_162 = arith.constant 0 : index
    %193 = vector.load %arg15[%c16, %c0_162] : memref<30x512xf32, #tpu.memory_space<vmem>>, vector<1x512xf32>
    tpu.vector_store %arg15[%c16, %c0_162], %192 {strides = array<i32>} : memref<30x512xf32, #tpu.memory_space<vmem>>, vector<1x512xf32>,
    %c8_163 = arith.constant 8 : index
    %c0_164 = arith.constant 0 : index
    %194 = vector.load %arg14[%c8_163, %c0_164] : memref<14x1536xf32, #tpu.memory_space<vmem>>, vector<1x512xf32>
    %c7_165 = arith.constant 7 : index
    %c1024_166 = arith.constant 1024 : index
    %195 = vector.load %arg14[%c7_165, %c1024_166] : memref<14x1536xf32, #tpu.memory_space<vmem>>, vector<1x512xf32>
    %196 = arith.addf %194, %195 : vector<1x512xf32>
    %c17 = arith.constant 17 : index
    %c0_167 = arith.constant 0 : index
    %197 = vector.load %arg15[%c17, %c0_167] : memref<30x512xf32, #tpu.memory_space<vmem>>, vector<1x512xf32>
    tpu.vector_store %arg15[%c17, %c0_167], %196 {strides = array<i32>} : memref<30x512xf32, #tpu.memory_space<vmem>>, vector<1x512xf32>,
    %c8_168 = arith.constant 8 : index
    %c512_169 = arith.constant 512 : index
    %198 = vector.load %arg14[%c8_168, %c512_169] : memref<14x1536xf32, #tpu.memory_space<vmem>>, vector<1x512xf32>
    %c18 = arith.constant 18 : index
    %c0_170 = arith.constant 0 : index
    %199 = vector.load %arg15[%c18, %c0_170] : memref<30x512xf32, #tpu.memory_space<vmem>>, vector<1x512xf32>
    tpu.vector_store %arg15[%c18, %c0_170], %198 {strides = array<i32>} : memref<30x512xf32, #tpu.memory_space<vmem>>, vector<1x512xf32>,
    %c9_171 = arith.constant 9 : index
    %c0_172 = arith.constant 0 : index
    %200 = vector.load %arg14[%c9_171, %c0_172] : memref<14x1536xf32, #tpu.memory_space<vmem>>, vector<1x512xf32>
    %c8_173 = arith.constant 8 : index
    %c1024_174 = arith.constant 1024 : index
    %201 = vector.load %arg14[%c8_173, %c1024_174] : memref<14x1536xf32, #tpu.memory_space<vmem>>, vector<1x512xf32>
    %202 = arith.addf %200, %201 : vector<1x512xf32>
    %c19 = arith.constant 19 : index
    %c0_175 = arith.constant 0 : index
    %203 = vector.load %arg15[%c19, %c0_175] : memref<30x512xf32, #tpu.memory_space<vmem>>, vector<1x512xf32>
    tpu.vector_store %arg15[%c19, %c0_175], %202 {strides = array<i32>} : memref<30x512xf32, #tpu.memory_space<vmem>>, vector<1x512xf32>,
    %c9_176 = arith.constant 9 : index
    %c512_177 = arith.constant 512 : index
    %204 = vector.load %arg14[%c9_176, %c512_177] : memref<14x1536xf32, #tpu.memory_space<vmem>>, vector<1x512xf32>
    %c20 = arith.constant 20 : index
    %c0_178 = arith.constant 0 : index
    %205 = vector.load %arg15[%c20, %c0_178] : memref<30x512xf32, #tpu.memory_space<vmem>>, vector<1x512xf32>
    tpu.vector_store %arg15[%c20, %c0_178], %204 {strides = array<i32>} : memref<30x512xf32, #tpu.memory_space<vmem>>, vector<1x512xf32>,
    %c10_179 = arith.constant 10 : index
    %c0_180 = arith.constant 0 : index
    %206 = vector.load %arg14[%c10_179, %c0_180] : memref<14x1536xf32, #tpu.memory_space<vmem>>, vector<1x512xf32>
    %c9_181 = arith.constant 9 : index
    %c1024_182 = arith.constant 1024 : index
    %207 = vector.load %arg14[%c9_181, %c1024_182] : memref<14x1536xf32, #tpu.memory_space<vmem>>, vector<1x512xf32>
    %208 = arith.addf %206, %207 : vector<1x512xf32>
    %c21 = arith.constant 21 : index
    %c0_183 = arith.constant 0 : index
    %209 = vector.load %arg15[%c21, %c0_183] : memref<30x512xf32, #tpu.memory_space<vmem>>, vector<1x512xf32>
    tpu.vector_store %arg15[%c21, %c0_183], %208 {strides = array<i32>} : memref<30x512xf32, #tpu.memory_space<vmem>>, vector<1x512xf32>,
    %c10_184 = arith.constant 10 : index
    %c512_185 = arith.constant 512 : index
    %210 = vector.load %arg14[%c10_184, %c512_185] : memref<14x1536xf32, #tpu.memory_space<vmem>>, vector<1x512xf32>
    %c22 = arith.constant 22 : index
    %c0_186 = arith.constant 0 : index
    %211 = vector.load %arg15[%c22, %c0_186] : memref<30x512xf32, #tpu.memory_space<vmem>>, vector<1x512xf32>
    tpu.vector_store %arg15[%c22, %c0_186], %210 {strides = array<i32>} : memref<30x512xf32, #tpu.memory_space<vmem>>, vector<1x512xf32>,
    %c11_187 = arith.constant 11 : index
    %c0_188 = arith.constant 0 : index
    %212 = vector.load %arg14[%c11_187, %c0_188] : memref<14x1536xf32, #tpu.memory_space<vmem>>, vector<1x512xf32>
    %c10_189 = arith.constant 10 : index
    %c1024_190 = arith.constant 1024 : index
    %213 = vector.load %arg14[%c10_189, %c1024_190] : memref<14x1536xf32, #tpu.memory_space<vmem>>, vector<1x512xf32>
    %214 = arith.addf %212, %213 : vector<1x512xf32>
    %c23 = arith.constant 23 : index
    %c0_191 = arith.constant 0 : index
    %215 = vector.load %arg15[%c23, %c0_191] : memref<30x512xf32, #tpu.memory_space<vmem>>, vector<1x512xf32>
    tpu.vector_store %arg15[%c23, %c0_191], %214 {strides = array<i32>} : memref<30x512xf32, #tpu.memory_space<vmem>>, vector<1x512xf32>,
    %c11_192 = arith.constant 11 : index
    %c512_193 = arith.constant 512 : index
    %216 = vector.load %arg14[%c11_192, %c512_193] : memref<14x1536xf32, #tpu.memory_space<vmem>>, vector<1x512xf32>
    %c24 = arith.constant 24 : index
    %c0_194 = arith.constant 0 : index
    %217 = vector.load %arg15[%c24, %c0_194] : memref<30x512xf32, #tpu.memory_space<vmem>>, vector<1x512xf32>
    tpu.vector_store %arg15[%c24, %c0_194], %216 {strides = array<i32>} : memref<30x512xf32, #tpu.memory_space<vmem>>, vector<1x512xf32>,
    %c12_195 = arith.constant 12 : index
    %c0_196 = arith.constant 0 : index
    %218 = vector.load %arg14[%c12_195, %c0_196] : memref<14x1536xf32, #tpu.memory_space<vmem>>, vector<1x512xf32>
    %c11_197 = arith.constant 11 : index
    %c1024_198 = arith.constant 1024 : index
    %219 = vector.load %arg14[%c11_197, %c1024_198] : memref<14x1536xf32, #tpu.memory_space<vmem>>, vector<1x512xf32>
    %220 = arith.addf %218, %219 : vector<1x512xf32>
    %c25 = arith.constant 25 : index
    %c0_199 = arith.constant 0 : index
    %221 = vector.load %arg15[%c25, %c0_199] : memref<30x512xf32, #tpu.memory_space<vmem>>, vector<1x512xf32>
    tpu.vector_store %arg15[%c25, %c0_199], %220 {strides = array<i32>} : memref<30x512xf32, #tpu.memory_space<vmem>>, vector<1x512xf32>,
    %c12_200 = arith.constant 12 : index
    %c512_201 = arith.constant 512 : index
    %222 = vector.load %arg14[%c12_200, %c512_201] : memref<14x1536xf32, #tpu.memory_space<vmem>>, vector<1x512xf32>
    %c26 = arith.constant 26 : index
    %c0_202 = arith.constant 0 : index
    %223 = vector.load %arg15[%c26, %c0_202] : memref<30x512xf32, #tpu.memory_space<vmem>>, vector<1x512xf32>
    tpu.vector_store %arg15[%c26, %c0_202], %222 {strides = array<i32>} : memref<30x512xf32, #tpu.memory_space<vmem>>, vector<1x512xf32>,
    %c13_203 = arith.constant 13 : index
    %c0_204 = arith.constant 0 : index
    %224 = vector.load %arg14[%c13_203, %c0_204] : memref<14x1536xf32, #tpu.memory_space<vmem>>, vector<1x512xf32>
    %c12_205 = arith.constant 12 : index
    %c1024_206 = arith.constant 1024 : index
    %225 = vector.load %arg14[%c12_205, %c1024_206] : memref<14x1536xf32, #tpu.memory_space<vmem>>, vector<1x512xf32>
    %226 = arith.addf %224, %225 : vector<1x512xf32>
    %c27 = arith.constant 27 : index
    %c0_207 = arith.constant 0 : index
    %227 = vector.load %arg15[%c27, %c0_207] : memref<30x512xf32, #tpu.memory_space<vmem>>, vector<1x512xf32>
    tpu.vector_store %arg15[%c27, %c0_207], %226 {strides = array<i32>} : memref<30x512xf32, #tpu.memory_space<vmem>>, vector<1x512xf32>,
    %c13_208 = arith.constant 13 : index
    %c512_209 = arith.constant 512 : index
    %228 = vector.load %arg14[%c13_208, %c512_209] : memref<14x1536xf32, #tpu.memory_space<vmem>>, vector<1x512xf32>
    %c28 = arith.constant 28 : index
    %c0_210 = arith.constant 0 : index
    %229 = vector.load %arg15[%c28, %c0_210] : memref<30x512xf32, #tpu.memory_space<vmem>>, vector<1x512xf32>
    tpu.vector_store %arg15[%c28, %c0_210], %228 {strides = array<i32>} : memref<30x512xf32, #tpu.memory_space<vmem>>, vector<1x512xf32>,
    %c13_211 = arith.constant 13 : index
    %c1024_212 = arith.constant 1024 : index
    %230 = vector.load %arg14[%c13_211, %c1024_212] : memref<14x1536xf32, #tpu.memory_space<vmem>>, vector<1x512xf32>
    %c29 = arith.constant 29 : index
    %c0_213 = arith.constant 0 : index
    %231 = vector.load %arg15[%c29, %c0_213] : memref<30x512xf32, #tpu.memory_space<vmem>>, vector<1x512xf32>
    tpu.vector_store %arg15[%c29, %c0_213], %230 {strides = array<i32>} : memref<30x512xf32, #tpu.memory_space<vmem>>, vector<1x512xf32>,
    %c0_214 = arith.constant 0 : index
    %c0_215 = arith.constant 0 : index
    %232 = vector.load %arg15[%c0_214, %c0_215] : memref<30x512xf32, #tpu.memory_space<vmem>>, vector<30x512xf32>
    %cst_216 = arith.constant 0.000000e+00 : f32
    %233 = vector.broadcast %cst_216 : f32 to vector<1x32xf32>
    %cst_217 = arith.constant dense<0.000000e+00> : vector<512xf32>
    %234 = vector.multi_reduction <add>, %232, %cst_217 [0] : vector<30x512xf32> to vector<512xf32>
    %235 = vector.shape_cast %234 : vector<512xf32> to vector<1x512xf32>
    %236 = vector.extract_strided_slice %235 {offsets = [0, 0], sizes = [1, 32], strides = [1, 1]} : vector<1x512xf32> to vector<1x32xf32>
    %237 = vector.extract_strided_slice %235 {offsets = [0, 32], sizes = [1, 32], strides = [1, 1]} : vector<1x512xf32> to vector<1x32xf32>
    %238 = arith.addf %236, %237 : vector<1x32xf32>
    %239 = vector.extract_strided_slice %235 {offsets = [0, 64], sizes = [1, 32], strides = [1, 1]} : vector<1x512xf32> to vector<1x32xf32>
    %240 = arith.addf %238, %239 : vector<1x32xf32>
    %241 = vector.extract_strided_slice %235 {offsets = [0, 96], sizes = [1, 32], strides = [1, 1]} : vector<1x512xf32> to vector<1x32xf32>
    %242 = arith.addf %240, %241 : vector<1x32xf32>
    %243 = vector.extract_strided_slice %235 {offsets = [0, 128], sizes = [1, 32], strides = [1, 1]} : vector<1x512xf32> to vector<1x32xf32>
    %244 = arith.addf %242, %243 : vector<1x32xf32>
    %245 = vector.extract_strided_slice %235 {offsets = [0, 160], sizes = [1, 32], strides = [1, 1]} : vector<1x512xf32> to vector<1x32xf32>
    %246 = arith.addf %244, %245 : vector<1x32xf32>
    %247 = vector.extract_strided_slice %235 {offsets = [0, 192], sizes = [1, 32], strides = [1, 1]} : vector<1x512xf32> to vector<1x32xf32>
    %248 = arith.addf %246, %247 : vector<1x32xf32>
    %249 = vector.extract_strided_slice %235 {offsets = [0, 224], sizes = [1, 32], strides = [1, 1]} : vector<1x512xf32> to vector<1x32xf32>
    %250 = arith.addf %248, %249 : vector<1x32xf32>
    %251 = vector.extract_strided_slice %235 {offsets = [0, 256], sizes = [1, 32], strides = [1, 1]} : vector<1x512xf32> to vector<1x32xf32>
    %252 = arith.addf %250, %251 : vector<1x32xf32>
    %253 = vector.extract_strided_slice %235 {offsets = [0, 288], sizes = [1, 32], strides = [1, 1]} : vector<1x512xf32> to vector<1x32xf32>
    %254 = arith.addf %252, %253 : vector<1x32xf32>
    %255 = vector.extract_strided_slice %235 {offsets = [0, 320], sizes = [1, 32], strides = [1, 1]} : vector<1x512xf32> to vector<1x32xf32>
    %256 = arith.addf %254, %255 : vector<1x32xf32>
    %257 = vector.extract_strided_slice %235 {offsets = [0, 352], sizes = [1, 32], strides = [1, 1]} : vector<1x512xf32> to vector<1x32xf32>
    %258 = arith.addf %256, %257 : vector<1x32xf32>
    %259 = vector.extract_strided_slice %235 {offsets = [0, 384], sizes = [1, 32], strides = [1, 1]} : vector<1x512xf32> to vector<1x32xf32>
    %260 = arith.addf %258, %259 : vector<1x32xf32>
    %261 = vector.extract_strided_slice %235 {offsets = [0, 416], sizes = [1, 32], strides = [1, 1]} : vector<1x512xf32> to vector<1x32xf32>
    %262 = arith.addf %260, %261 : vector<1x32xf32>
    %263 = vector.extract_strided_slice %235 {offsets = [0, 448], sizes = [1, 32], strides = [1, 1]} : vector<1x512xf32> to vector<1x32xf32>
    %264 = arith.addf %262, %263 : vector<1x32xf32>
    %cst_218 = arith.constant 0.00222222228 : f32
    %265 = vector.broadcast %cst_218 : f32 to vector<1x32xf32>
    %266 = arith.mulf %264, %265 : vector<1x32xf32>
    %267 = tpu.concatenate %266, %266, %266, %266, %266, %266, %266, %266, %266, %266, %266, %266, %266, %266, %266, %233 in 1 : vector<1x32xf32>, vector<1x32xf32>, vector<1x32xf32>, vector<1x32xf32>, vector<1x32xf32>, vector<1x32xf32>, vector<1x32xf32>, vector<1x32xf32>, vector<1x32xf32>, vector<1x32xf32>, vector<1x32xf32>, vector<1x32xf32>, vector<1x32xf32>, vector<1x32xf32>, vector<1x32xf32>, vector<1x32xf32> -> vector<1x512xf32>
    %268 = vector.broadcast %267 : vector<1x512xf32> to vector<30x512xf32>
    %269 = arith.subf %232, %268 : vector<30x512xf32>
    %270 = arith.mulf %269, %269 : vector<30x512xf32>
    %cst_219 = arith.constant dense<0.000000e+00> : vector<512xf32>
    %271 = vector.multi_reduction <add>, %270, %cst_219 [0] : vector<30x512xf32> to vector<512xf32>
    %272 = vector.shape_cast %271 : vector<512xf32> to vector<1x512xf32>
    %273 = vector.extract_strided_slice %272 {offsets = [0, 0], sizes = [1, 32], strides = [1, 1]} : vector<1x512xf32> to vector<1x32xf32>
    %274 = vector.extract_strided_slice %272 {offsets = [0, 32], sizes = [1, 32], strides = [1, 1]} : vector<1x512xf32> to vector<1x32xf32>
    %275 = arith.addf %273, %274 : vector<1x32xf32>
    %276 = vector.extract_strided_slice %272 {offsets = [0, 64], sizes = [1, 32], strides = [1, 1]} : vector<1x512xf32> to vector<1x32xf32>
    %277 = arith.addf %275, %276 : vector<1x32xf32>
    %278 = vector.extract_strided_slice %272 {offsets = [0, 96], sizes = [1, 32], strides = [1, 1]} : vector<1x512xf32> to vector<1x32xf32>
    %279 = arith.addf %277, %278 : vector<1x32xf32>
    %280 = vector.extract_strided_slice %272 {offsets = [0, 128], sizes = [1, 32], strides = [1, 1]} : vector<1x512xf32> to vector<1x32xf32>
    %281 = arith.addf %279, %280 : vector<1x32xf32>
    %282 = vector.extract_strided_slice %272 {offsets = [0, 160], sizes = [1, 32], strides = [1, 1]} : vector<1x512xf32> to vector<1x32xf32>
    %283 = arith.addf %281, %282 : vector<1x32xf32>
    %284 = vector.extract_strided_slice %272 {offsets = [0, 192], sizes = [1, 32], strides = [1, 1]} : vector<1x512xf32> to vector<1x32xf32>
    %285 = arith.addf %283, %284 : vector<1x32xf32>
    %286 = vector.extract_strided_slice %272 {offsets = [0, 224], sizes = [1, 32], strides = [1, 1]} : vector<1x512xf32> to vector<1x32xf32>
    %287 = arith.addf %285, %286 : vector<1x32xf32>
    %288 = vector.extract_strided_slice %272 {offsets = [0, 256], sizes = [1, 32], strides = [1, 1]} : vector<1x512xf32> to vector<1x32xf32>
    %289 = arith.addf %287, %288 : vector<1x32xf32>
    %290 = vector.extract_strided_slice %272 {offsets = [0, 288], sizes = [1, 32], strides = [1, 1]} : vector<1x512xf32> to vector<1x32xf32>
    %291 = arith.addf %289, %290 : vector<1x32xf32>
    %292 = vector.extract_strided_slice %272 {offsets = [0, 320], sizes = [1, 32], strides = [1, 1]} : vector<1x512xf32> to vector<1x32xf32>
    %293 = arith.addf %291, %292 : vector<1x32xf32>
    %294 = vector.extract_strided_slice %272 {offsets = [0, 352], sizes = [1, 32], strides = [1, 1]} : vector<1x512xf32> to vector<1x32xf32>
    %295 = arith.addf %293, %294 : vector<1x32xf32>
    %296 = vector.extract_strided_slice %272 {offsets = [0, 384], sizes = [1, 32], strides = [1, 1]} : vector<1x512xf32> to vector<1x32xf32>
    %297 = arith.addf %295, %296 : vector<1x32xf32>
    %298 = vector.extract_strided_slice %272 {offsets = [0, 416], sizes = [1, 32], strides = [1, 1]} : vector<1x512xf32> to vector<1x32xf32>
    %299 = arith.addf %297, %298 : vector<1x32xf32>
    %300 = vector.extract_strided_slice %272 {offsets = [0, 448], sizes = [1, 32], strides = [1, 1]} : vector<1x512xf32> to vector<1x32xf32>
    %301 = arith.addf %299, %300 : vector<1x32xf32>
    %cst_220 = arith.constant 0.00222222228 : f32
    %302 = vector.broadcast %cst_220 : f32 to vector<1x32xf32>
    %303 = arith.mulf %301, %302 : vector<1x32xf32>
    %c0_221 = arith.constant 0 : index
    %c0_222 = arith.constant 0 : index
    %304 = vector.load %arg8[%c0_221, %c0_222] : memref<1x32xf32, #tpu.memory_space<vmem>>, vector<1x32xf32>
    %cst_223 = arith.constant 9.99999974E-6 : f32
    %305 = vector.broadcast %cst_223 : f32 to vector<1x32xf32>
    %306 = arith.addf %303, %305 : vector<1x32xf32>
    %307 = math.rsqrt %306 : vector<1x32xf32>
    %308 = arith.mulf %304, %307 : vector<1x32xf32>
    %c0_224 = arith.constant 0 : index
    %c0_225 = arith.constant 0 : index
    %309 = vector.load %arg9[%c0_224, %c0_225] : memref<1x32xf32, #tpu.memory_space<vmem>>, vector<1x32xf32>
    %310 = arith.mulf %266, %308 : vector<1x32xf32>
    %311 = arith.subf %309, %310 : vector<1x32xf32>
    %312 = tpu.concatenate %308, %308, %308, %308, %308, %308, %308, %308, %308, %308, %308, %308, %308, %308, %308, %233 in 1 : vector<1x32xf32>, vector<1x32xf32>, vector<1x32xf32>, vector<1x32xf32>, vector<1x32xf32>, vector<1x32xf32>, vector<1x32xf32>, vector<1x32xf32>, vector<1x32xf32>, vector<1x32xf32>, vector<1x32xf32>, vector<1x32xf32>, vector<1x32xf32>, vector<1x32xf32>, vector<1x32xf32>, vector<1x32xf32> -> vector<1x512xf32>
    %313 = tpu.concatenate %311, %311, %311, %311, %311, %311, %311, %311, %311, %311, %311, %311, %311, %311, %311, %233 in 1 : vector<1x32xf32>, vector<1x32xf32>, vector<1x32xf32>, vector<1x32xf32>, vector<1x32xf32>, vector<1x32xf32>, vector<1x32xf32>, vector<1x32xf32>, vector<1x32xf32>, vector<1x32xf32>, vector<1x32xf32>, vector<1x32xf32>, vector<1x32xf32>, vector<1x32xf32>, vector<1x32xf32>, vector<1x32xf32> -> vector<1x512xf32>
    %314 = vector.broadcast %312 : vector<1x512xf32> to vector<30x512xf32>
    %315 = arith.mulf %232, %314 : vector<30x512xf32>
    %316 = vector.broadcast %313 : vector<1x512xf32> to vector<30x512xf32>
    %317 = arith.addf %315, %316 : vector<30x512xf32>
    %cst_226 = arith.constant 0.000000e+00 : f32
    %318 = vector.broadcast %cst_226 : f32 to vector<30x512xf32>
    %319 = arith.maximumf %317, %318 : vector<30x512xf32>
    %c1_i32_227 = arith.constant 1 : i32
    %320 = tpu.memref_slice %arg19[%c1_i32_227] : memref<2x!tpu.dma_semaphore, #tpu.memory_space<semaphore_mem>> -> memref<1x!tpu.dma_semaphore, #tpu.memory_space<semaphore_mem>>
    %321 = tpu.memref_squeeze %320 : memref<1x!tpu.dma_semaphore, #tpu.memory_space<semaphore_mem>> -> memref<!tpu.dma_semaphore, #tpu.memory_space<semaphore_mem>>
    tpu.wait_dma2 semaphore(%321 : memref<!tpu.dma_semaphore, #tpu.memory_space<semaphore_mem>>) src(%arg10 : memref<512x384xbf16, #tpu.memory_space<any>>) dst(%arg18 : memref<512x384xbf16, #tpu.memory_space<vmem>>)
    %322 = arith.truncf %319 : vector<30x512xf32> to vector<30x512xbf16>
    %c0_228 = arith.constant 0 : index
    %c0_229 = arith.constant 0 : index
    %323 = vector.load %arg18[%c0_228, %c0_229] : memref<512x384xbf16, #tpu.memory_space<vmem>>, vector<512x384xbf16>
    %cst_230 = arith.constant dense<0.000000e+00> : vector<30x384xf32>
    %324 = tpu.matmul %322, %323, %cst_230 {dimension_numbers = #tpu.dot_dimension_numbers<[1], [0], [0], [1], [0, 0, 1, 1], [], []>} : vector<30x512xbf16>, vector<512x384xbf16>, vector<30x384xf32> -> vector<30x384xf32>
    %c0_231 = arith.constant 0 : index
    %c0_232 = arith.constant 0 : index
    %325 = vector.load %arg16[%c0_231, %c0_232] : memref<30x384xf32, #tpu.memory_space<vmem>>, vector<30x384xf32>
    tpu.vector_store %arg16[%c0_231, %c0_232], %324 {strides = array<i32>} : memref<30x384xf32, #tpu.memory_space<vmem>>, vector<30x384xf32>,
    %c1_233 = arith.constant 1 : index
    %c0_234 = arith.constant 0 : index
    %326 = vector.load %arg16[%c1_233, %c0_234] : memref<30x384xf32, #tpu.memory_space<vmem>>, vector<1x128xf32>
    %c0_235 = arith.constant 0 : index
    %c256 = arith.constant 256 : index
    %327 = vector.load %arg16[%c0_235, %c256] : memref<30x384xf32, #tpu.memory_space<vmem>>, vector<1x128xf32>
    %328 = arith.addf %326, %327 : vector<1x128xf32>
    %329 = math.tanh %328 : vector<1x128xf32>
    %c0_236 = arith.constant 0 : index
    %c0_237 = arith.constant 0 : index
    %330 = vector.load %arg11[%c0_236, %c0_237] : memref<54x128xf32, #tpu.memory_space<vmem>>, vector<1x128xf32>
    tpu.vector_store %arg11[%c0_236, %c0_237], %329 {strides = array<i32>} : memref<54x128xf32, #tpu.memory_space<vmem>>, vector<1x128xf32>,
    %c1_238 = arith.constant 1 : index
    %c128 = arith.constant 128 : index
    %331 = vector.load %arg16[%c1_238, %c128] : memref<30x384xf32, #tpu.memory_space<vmem>>, vector<1x128xf32>
    %332 = math.tanh %331 : vector<1x128xf32>
    %c1_239 = arith.constant 1 : index
    %c0_240 = arith.constant 0 : index
    %333 = vector.load %arg11[%c1_239, %c0_240] : memref<54x128xf32, #tpu.memory_space<vmem>>, vector<1x128xf32>
    tpu.vector_store %arg11[%c1_239, %c0_240], %332 {strides = array<i32>} : memref<54x128xf32, #tpu.memory_space<vmem>>, vector<1x128xf32>,
    %c2_241 = arith.constant 2 : index
    %c0_242 = arith.constant 0 : index
    %334 = vector.load %arg16[%c2_241, %c0_242] : memref<30x384xf32, #tpu.memory_space<vmem>>, vector<1x128xf32>
    %c1_243 = arith.constant 1 : index
    %c256_244 = arith.constant 256 : index
    %335 = vector.load %arg16[%c1_243, %c256_244] : memref<30x384xf32, #tpu.memory_space<vmem>>, vector<1x128xf32>
    %336 = arith.addf %334, %335 : vector<1x128xf32>
    %337 = math.tanh %336 : vector<1x128xf32>
    %c2_245 = arith.constant 2 : index
    %c0_246 = arith.constant 0 : index
    %338 = vector.load %arg11[%c2_245, %c0_246] : memref<54x128xf32, #tpu.memory_space<vmem>>, vector<1x128xf32>
    tpu.vector_store %arg11[%c2_245, %c0_246], %337 {strides = array<i32>} : memref<54x128xf32, #tpu.memory_space<vmem>>, vector<1x128xf32>,
    %c2_247 = arith.constant 2 : index
    %c128_248 = arith.constant 128 : index
    %339 = vector.load %arg16[%c2_247, %c128_248] : memref<30x384xf32, #tpu.memory_space<vmem>>, vector<1x128xf32>
    %340 = math.tanh %339 : vector<1x128xf32>
    %c3_249 = arith.constant 3 : index
    %c0_250 = arith.constant 0 : index
    %341 = vector.load %arg11[%c3_249, %c0_250] : memref<54x128xf32, #tpu.memory_space<vmem>>, vector<1x128xf32>
    tpu.vector_store %arg11[%c3_249, %c0_250], %340 {strides = array<i32>} : memref<54x128xf32, #tpu.memory_space<vmem>>, vector<1x128xf32>,
    %c3_251 = arith.constant 3 : index
    %c0_252 = arith.constant 0 : index
    %342 = vector.load %arg16[%c3_251, %c0_252] : memref<30x384xf32, #tpu.memory_space<vmem>>, vector<1x128xf32>
    %c2_253 = arith.constant 2 : index
    %c256_254 = arith.constant 256 : index
    %343 = vector.load %arg16[%c2_253, %c256_254] : memref<30x384xf32, #tpu.memory_space<vmem>>, vector<1x128xf32>
    %344 = arith.addf %342, %343 : vector<1x128xf32>
    %345 = math.tanh %344 : vector<1x128xf32>
    %c4_255 = arith.constant 4 : index
    %c0_256 = arith.constant 0 : index
    %346 = vector.load %arg11[%c4_255, %c0_256] : memref<54x128xf32, #tpu.memory_space<vmem>>, vector<1x128xf32>
    tpu.vector_store %arg11[%c4_255, %c0_256], %345 {strides = array<i32>} : memref<54x128xf32, #tpu.memory_space<vmem>>, vector<1x128xf32>,
    %c3_257 = arith.constant 3 : index
    %c128_258 = arith.constant 128 : index
    %347 = vector.load %arg16[%c3_257, %c128_258] : memref<30x384xf32, #tpu.memory_space<vmem>>, vector<1x128xf32>
    %348 = math.tanh %347 : vector<1x128xf32>
    %c5_259 = arith.constant 5 : index
    %c0_260 = arith.constant 0 : index
    %349 = vector.load %arg11[%c5_259, %c0_260] : memref<54x128xf32, #tpu.memory_space<vmem>>, vector<1x128xf32>
    tpu.vector_store %arg11[%c5_259, %c0_260], %348 {strides = array<i32>} : memref<54x128xf32, #tpu.memory_space<vmem>>, vector<1x128xf32>,
    %c4_261 = arith.constant 4 : index
    %c0_262 = arith.constant 0 : index
    %350 = vector.load %arg16[%c4_261, %c0_262] : memref<30x384xf32, #tpu.memory_space<vmem>>, vector<1x128xf32>
    %c3_263 = arith.constant 3 : index
    %c256_264 = arith.constant 256 : index
    %351 = vector.load %arg16[%c3_263, %c256_264] : memref<30x384xf32, #tpu.memory_space<vmem>>, vector<1x128xf32>
    %352 = arith.addf %350, %351 : vector<1x128xf32>
    %353 = math.tanh %352 : vector<1x128xf32>
    %c6_265 = arith.constant 6 : index
    %c0_266 = arith.constant 0 : index
    %354 = vector.load %arg11[%c6_265, %c0_266] : memref<54x128xf32, #tpu.memory_space<vmem>>, vector<1x128xf32>
    tpu.vector_store %arg11[%c6_265, %c0_266], %353 {strides = array<i32>} : memref<54x128xf32, #tpu.memory_space<vmem>>, vector<1x128xf32>,
    %c4_267 = arith.constant 4 : index
    %c128_268 = arith.constant 128 : index
    %355 = vector.load %arg16[%c4_267, %c128_268] : memref<30x384xf32, #tpu.memory_space<vmem>>, vector<1x128xf32>
    %356 = math.tanh %355 : vector<1x128xf32>
    %c7_269 = arith.constant 7 : index
    %c0_270 = arith.constant 0 : index
    %357 = vector.load %arg11[%c7_269, %c0_270] : memref<54x128xf32, #tpu.memory_space<vmem>>, vector<1x128xf32>
    tpu.vector_store %arg11[%c7_269, %c0_270], %356 {strides = array<i32>} : memref<54x128xf32, #tpu.memory_space<vmem>>, vector<1x128xf32>,
    %c5_271 = arith.constant 5 : index
    %c0_272 = arith.constant 0 : index
    %358 = vector.load %arg16[%c5_271, %c0_272] : memref<30x384xf32, #tpu.memory_space<vmem>>, vector<1x128xf32>
    %c4_273 = arith.constant 4 : index
    %c256_274 = arith.constant 256 : index
    %359 = vector.load %arg16[%c4_273, %c256_274] : memref<30x384xf32, #tpu.memory_space<vmem>>, vector<1x128xf32>
    %360 = arith.addf %358, %359 : vector<1x128xf32>
    %361 = math.tanh %360 : vector<1x128xf32>
    %c8_275 = arith.constant 8 : index
    %c0_276 = arith.constant 0 : index
    %362 = vector.load %arg11[%c8_275, %c0_276] : memref<54x128xf32, #tpu.memory_space<vmem>>, vector<1x128xf32>
    tpu.vector_store %arg11[%c8_275, %c0_276], %361 {strides = array<i32>} : memref<54x128xf32, #tpu.memory_space<vmem>>, vector<1x128xf32>,
    %c5_277 = arith.constant 5 : index
    %c128_278 = arith.constant 128 : index
    %363 = vector.load %arg16[%c5_277, %c128_278] : memref<30x384xf32, #tpu.memory_space<vmem>>, vector<1x128xf32>
    %364 = math.tanh %363 : vector<1x128xf32>
    %c9_279 = arith.constant 9 : index
    %c0_280 = arith.constant 0 : index
    %365 = vector.load %arg11[%c9_279, %c0_280] : memref<54x128xf32, #tpu.memory_space<vmem>>, vector<1x128xf32>
    tpu.vector_store %arg11[%c9_279, %c0_280], %364 {strides = array<i32>} : memref<54x128xf32, #tpu.memory_space<vmem>>, vector<1x128xf32>,
    %c6_281 = arith.constant 6 : index
    %c0_282 = arith.constant 0 : index
    %366 = vector.load %arg16[%c6_281, %c0_282] : memref<30x384xf32, #tpu.memory_space<vmem>>, vector<1x128xf32>
    %c5_283 = arith.constant 5 : index
    %c256_284 = arith.constant 256 : index
    %367 = vector.load %arg16[%c5_283, %c256_284] : memref<30x384xf32, #tpu.memory_space<vmem>>, vector<1x128xf32>
    %368 = arith.addf %366, %367 : vector<1x128xf32>
    %369 = math.tanh %368 : vector<1x128xf32>
    %c10_285 = arith.constant 10 : index
    %c0_286 = arith.constant 0 : index
    %370 = vector.load %arg11[%c10_285, %c0_286] : memref<54x128xf32, #tpu.memory_space<vmem>>, vector<1x128xf32>
    tpu.vector_store %arg11[%c10_285, %c0_286], %369 {strides = array<i32>} : memref<54x128xf32, #tpu.memory_space<vmem>>, vector<1x128xf32>,
    %c6_287 = arith.constant 6 : index
    %c128_288 = arith.constant 128 : index
    %371 = vector.load %arg16[%c6_287, %c128_288] : memref<30x384xf32, #tpu.memory_space<vmem>>, vector<1x128xf32>
    %372 = math.tanh %371 : vector<1x128xf32>
    %c11_289 = arith.constant 11 : index
    %c0_290 = arith.constant 0 : index
    %373 = vector.load %arg11[%c11_289, %c0_290] : memref<54x128xf32, #tpu.memory_space<vmem>>, vector<1x128xf32>
    tpu.vector_store %arg11[%c11_289, %c0_290], %372 {strides = array<i32>} : memref<54x128xf32, #tpu.memory_space<vmem>>, vector<1x128xf32>,
    %c7_291 = arith.constant 7 : index
    %c0_292 = arith.constant 0 : index
    %374 = vector.load %arg16[%c7_291, %c0_292] : memref<30x384xf32, #tpu.memory_space<vmem>>, vector<1x128xf32>
    %c6_293 = arith.constant 6 : index
    %c256_294 = arith.constant 256 : index
    %375 = vector.load %arg16[%c6_293, %c256_294] : memref<30x384xf32, #tpu.memory_space<vmem>>, vector<1x128xf32>
    %376 = arith.addf %374, %375 : vector<1x128xf32>
    %377 = math.tanh %376 : vector<1x128xf32>
    %c12_295 = arith.constant 12 : index
    %c0_296 = arith.constant 0 : index
    %378 = vector.load %arg11[%c12_295, %c0_296] : memref<54x128xf32, #tpu.memory_space<vmem>>, vector<1x128xf32>
    tpu.vector_store %arg11[%c12_295, %c0_296], %377 {strides = array<i32>} : memref<54x128xf32, #tpu.memory_space<vmem>>, vector<1x128xf32>,
    %c7_297 = arith.constant 7 : index
    %c128_298 = arith.constant 128 : index
    %379 = vector.load %arg16[%c7_297, %c128_298] : memref<30x384xf32, #tpu.memory_space<vmem>>, vector<1x128xf32>
    %380 = math.tanh %379 : vector<1x128xf32>
    %c13_299 = arith.constant 13 : index
    %c0_300 = arith.constant 0 : index
    %381 = vector.load %arg11[%c13_299, %c0_300] : memref<54x128xf32, #tpu.memory_space<vmem>>, vector<1x128xf32>
    tpu.vector_store %arg11[%c13_299, %c0_300], %380 {strides = array<i32>} : memref<54x128xf32, #tpu.memory_space<vmem>>, vector<1x128xf32>,
    %c8_301 = arith.constant 8 : index
    %c0_302 = arith.constant 0 : index
    %382 = vector.load %arg16[%c8_301, %c0_302] : memref<30x384xf32, #tpu.memory_space<vmem>>, vector<1x128xf32>
    %c7_303 = arith.constant 7 : index
    %c256_304 = arith.constant 256 : index
    %383 = vector.load %arg16[%c7_303, %c256_304] : memref<30x384xf32, #tpu.memory_space<vmem>>, vector<1x128xf32>
    %384 = arith.addf %382, %383 : vector<1x128xf32>
    %385 = math.tanh %384 : vector<1x128xf32>
    %c14_305 = arith.constant 14 : index
    %c0_306 = arith.constant 0 : index
    %386 = vector.load %arg11[%c14_305, %c0_306] : memref<54x128xf32, #tpu.memory_space<vmem>>, vector<1x128xf32>
    tpu.vector_store %arg11[%c14_305, %c0_306], %385 {strides = array<i32>} : memref<54x128xf32, #tpu.memory_space<vmem>>, vector<1x128xf32>,
    %c8_307 = arith.constant 8 : index
    %c128_308 = arith.constant 128 : index
    %387 = vector.load %arg16[%c8_307, %c128_308] : memref<30x384xf32, #tpu.memory_space<vmem>>, vector<1x128xf32>
    %388 = math.tanh %387 : vector<1x128xf32>
    %c15_309 = arith.constant 15 : index
    %c0_310 = arith.constant 0 : index
    %389 = vector.load %arg11[%c15_309, %c0_310] : memref<54x128xf32, #tpu.memory_space<vmem>>, vector<1x128xf32>
    tpu.vector_store %arg11[%c15_309, %c0_310], %388 {strides = array<i32>} : memref<54x128xf32, #tpu.memory_space<vmem>>, vector<1x128xf32>,
    %c9_311 = arith.constant 9 : index
    %c0_312 = arith.constant 0 : index
    %390 = vector.load %arg16[%c9_311, %c0_312] : memref<30x384xf32, #tpu.memory_space<vmem>>, vector<1x128xf32>
    %c8_313 = arith.constant 8 : index
    %c256_314 = arith.constant 256 : index
    %391 = vector.load %arg16[%c8_313, %c256_314] : memref<30x384xf32, #tpu.memory_space<vmem>>, vector<1x128xf32>
    %392 = arith.addf %390, %391 : vector<1x128xf32>
    %393 = math.tanh %392 : vector<1x128xf32>
    %c16_315 = arith.constant 16 : index
    %c0_316 = arith.constant 0 : index
    %394 = vector.load %arg11[%c16_315, %c0_316] : memref<54x128xf32, #tpu.memory_space<vmem>>, vector<1x128xf32>
    tpu.vector_store %arg11[%c16_315, %c0_316], %393 {strides = array<i32>} : memref<54x128xf32, #tpu.memory_space<vmem>>, vector<1x128xf32>,
    %c9_317 = arith.constant 9 : index
    %c128_318 = arith.constant 128 : index
    %395 = vector.load %arg16[%c9_317, %c128_318] : memref<30x384xf32, #tpu.memory_space<vmem>>, vector<1x128xf32>
    %396 = math.tanh %395 : vector<1x128xf32>
    %c17_319 = arith.constant 17 : index
    %c0_320 = arith.constant 0 : index
    %397 = vector.load %arg11[%c17_319, %c0_320] : memref<54x128xf32, #tpu.memory_space<vmem>>, vector<1x128xf32>
    tpu.vector_store %arg11[%c17_319, %c0_320], %396 {strides = array<i32>} : memref<54x128xf32, #tpu.memory_space<vmem>>, vector<1x128xf32>,
    %c10_321 = arith.constant 10 : index
    %c0_322 = arith.constant 0 : index
    %398 = vector.load %arg16[%c10_321, %c0_322] : memref<30x384xf32, #tpu.memory_space<vmem>>, vector<1x128xf32>
    %c9_323 = arith.constant 9 : index
    %c256_324 = arith.constant 256 : index
    %399 = vector.load %arg16[%c9_323, %c256_324] : memref<30x384xf32, #tpu.memory_space<vmem>>, vector<1x128xf32>
    %400 = arith.addf %398, %399 : vector<1x128xf32>
    %401 = math.tanh %400 : vector<1x128xf32>
    %c18_325 = arith.constant 18 : index
    %c0_326 = arith.constant 0 : index
    %402 = vector.load %arg11[%c18_325, %c0_326] : memref<54x128xf32, #tpu.memory_space<vmem>>, vector<1x128xf32>
    tpu.vector_store %arg11[%c18_325, %c0_326], %401 {strides = array<i32>} : memref<54x128xf32, #tpu.memory_space<vmem>>, vector<1x128xf32>,
    %c10_327 = arith.constant 10 : index
    %c128_328 = arith.constant 128 : index
    %403 = vector.load %arg16[%c10_327, %c128_328] : memref<30x384xf32, #tpu.memory_space<vmem>>, vector<1x128xf32>
    %404 = math.tanh %403 : vector<1x128xf32>
    %c19_329 = arith.constant 19 : index
    %c0_330 = arith.constant 0 : index
    %405 = vector.load %arg11[%c19_329, %c0_330] : memref<54x128xf32, #tpu.memory_space<vmem>>, vector<1x128xf32>
    tpu.vector_store %arg11[%c19_329, %c0_330], %404 {strides = array<i32>} : memref<54x128xf32, #tpu.memory_space<vmem>>, vector<1x128xf32>,
    %c11_331 = arith.constant 11 : index
    %c0_332 = arith.constant 0 : index
    %406 = vector.load %arg16[%c11_331, %c0_332] : memref<30x384xf32, #tpu.memory_space<vmem>>, vector<1x128xf32>
    %c10_333 = arith.constant 10 : index
    %c256_334 = arith.constant 256 : index
    %407 = vector.load %arg16[%c10_333, %c256_334] : memref<30x384xf32, #tpu.memory_space<vmem>>, vector<1x128xf32>
    %408 = arith.addf %406, %407 : vector<1x128xf32>
    %409 = math.tanh %408 : vector<1x128xf32>
    %c20_335 = arith.constant 20 : index
    %c0_336 = arith.constant 0 : index
    %410 = vector.load %arg11[%c20_335, %c0_336] : memref<54x128xf32, #tpu.memory_space<vmem>>, vector<1x128xf32>
    tpu.vector_store %arg11[%c20_335, %c0_336], %409 {strides = array<i32>} : memref<54x128xf32, #tpu.memory_space<vmem>>, vector<1x128xf32>,
    %c11_337 = arith.constant 11 : index
    %c128_338 = arith.constant 128 : index
    %411 = vector.load %arg16[%c11_337, %c128_338] : memref<30x384xf32, #tpu.memory_space<vmem>>, vector<1x128xf32>
    %412 = math.tanh %411 : vector<1x128xf32>
    %c21_339 = arith.constant 21 : index
    %c0_340 = arith.constant 0 : index
    %413 = vector.load %arg11[%c21_339, %c0_340] : memref<54x128xf32, #tpu.memory_space<vmem>>, vector<1x128xf32>
    tpu.vector_store %arg11[%c21_339, %c0_340], %412 {strides = array<i32>} : memref<54x128xf32, #tpu.memory_space<vmem>>, vector<1x128xf32>,
    %c12_341 = arith.constant 12 : index
    %c0_342 = arith.constant 0 : index
    %414 = vector.load %arg16[%c12_341, %c0_342] : memref<30x384xf32, #tpu.memory_space<vmem>>, vector<1x128xf32>
    %c11_343 = arith.constant 11 : index
    %c256_344 = arith.constant 256 : index
    %415 = vector.load %arg16[%c11_343, %c256_344] : memref<30x384xf32, #tpu.memory_space<vmem>>, vector<1x128xf32>
    %416 = arith.addf %414, %415 : vector<1x128xf32>
    %417 = math.tanh %416 : vector<1x128xf32>
    %c22_345 = arith.constant 22 : index
    %c0_346 = arith.constant 0 : index
    %418 = vector.load %arg11[%c22_345, %c0_346] : memref<54x128xf32, #tpu.memory_space<vmem>>, vector<1x128xf32>
    tpu.vector_store %arg11[%c22_345, %c0_346], %417 {strides = array<i32>} : memref<54x128xf32, #tpu.memory_space<vmem>>, vector<1x128xf32>,
    %c12_347 = arith.constant 12 : index
    %c128_348 = arith.constant 128 : index
    %419 = vector.load %arg16[%c12_347, %c128_348] : memref<30x384xf32, #tpu.memory_space<vmem>>, vector<1x128xf32>
    %420 = math.tanh %419 : vector<1x128xf32>
    %c23_349 = arith.constant 23 : index
    %c0_350 = arith.constant 0 : index
    %421 = vector.load %arg11[%c23_349, %c0_350] : memref<54x128xf32, #tpu.memory_space<vmem>>, vector<1x128xf32>
    tpu.vector_store %arg11[%c23_349, %c0_350], %420 {strides = array<i32>} : memref<54x128xf32, #tpu.memory_space<vmem>>, vector<1x128xf32>,
    %c13_351 = arith.constant 13 : index
    %c0_352 = arith.constant 0 : index
    %422 = vector.load %arg16[%c13_351, %c0_352] : memref<30x384xf32, #tpu.memory_space<vmem>>, vector<1x128xf32>
    %c12_353 = arith.constant 12 : index
    %c256_354 = arith.constant 256 : index
    %423 = vector.load %arg16[%c12_353, %c256_354] : memref<30x384xf32, #tpu.memory_space<vmem>>, vector<1x128xf32>
    %424 = arith.addf %422, %423 : vector<1x128xf32>
    %425 = math.tanh %424 : vector<1x128xf32>
    %c24_355 = arith.constant 24 : index
    %c0_356 = arith.constant 0 : index
    %426 = vector.load %arg11[%c24_355, %c0_356] : memref<54x128xf32, #tpu.memory_space<vmem>>, vector<1x128xf32>
    tpu.vector_store %arg11[%c24_355, %c0_356], %425 {strides = array<i32>} : memref<54x128xf32, #tpu.memory_space<vmem>>, vector<1x128xf32>,
    %c13_357 = arith.constant 13 : index
    %c128_358 = arith.constant 128 : index
    %427 = vector.load %arg16[%c13_357, %c128_358] : memref<30x384xf32, #tpu.memory_space<vmem>>, vector<1x128xf32>
    %428 = math.tanh %427 : vector<1x128xf32>
    %c25_359 = arith.constant 25 : index
    %c0_360 = arith.constant 0 : index
    %429 = vector.load %arg11[%c25_359, %c0_360] : memref<54x128xf32, #tpu.memory_space<vmem>>, vector<1x128xf32>
    tpu.vector_store %arg11[%c25_359, %c0_360], %428 {strides = array<i32>} : memref<54x128xf32, #tpu.memory_space<vmem>>, vector<1x128xf32>,
    %c14_361 = arith.constant 14 : index
    %c0_362 = arith.constant 0 : index
    %430 = vector.load %arg16[%c14_361, %c0_362] : memref<30x384xf32, #tpu.memory_space<vmem>>, vector<1x128xf32>
    %c13_363 = arith.constant 13 : index
    %c256_364 = arith.constant 256 : index
    %431 = vector.load %arg16[%c13_363, %c256_364] : memref<30x384xf32, #tpu.memory_space<vmem>>, vector<1x128xf32>
    %432 = arith.addf %430, %431 : vector<1x128xf32>
    %433 = math.tanh %432 : vector<1x128xf32>
    %c26_365 = arith.constant 26 : index
    %c0_366 = arith.constant 0 : index
    %434 = vector.load %arg11[%c26_365, %c0_366] : memref<54x128xf32, #tpu.memory_space<vmem>>, vector<1x128xf32>
    tpu.vector_store %arg11[%c26_365, %c0_366], %433 {strides = array<i32>} : memref<54x128xf32, #tpu.memory_space<vmem>>, vector<1x128xf32>,
    %c16_367 = arith.constant 16 : index
    %c0_368 = arith.constant 0 : index
    %435 = vector.load %arg16[%c16_367, %c0_368] : memref<30x384xf32, #tpu.memory_space<vmem>>, vector<1x128xf32>
    %c15_369 = arith.constant 15 : index
    %c256_370 = arith.constant 256 : index
    %436 = vector.load %arg16[%c15_369, %c256_370] : memref<30x384xf32, #tpu.memory_space<vmem>>, vector<1x128xf32>
    %437 = arith.addf %435, %436 : vector<1x128xf32>
    %438 = math.tanh %437 : vector<1x128xf32>
    %c27_371 = arith.constant 27 : index
    %c0_372 = arith.constant 0 : index
    %439 = vector.load %arg11[%c27_371, %c0_372] : memref<54x128xf32, #tpu.memory_space<vmem>>, vector<1x128xf32>
    tpu.vector_store %arg11[%c27_371, %c0_372], %438 {strides = array<i32>} : memref<54x128xf32, #tpu.memory_space<vmem>>, vector<1x128xf32>,
    %c16_373 = arith.constant 16 : index
    %c128_374 = arith.constant 128 : index
    %440 = vector.load %arg16[%c16_373, %c128_374] : memref<30x384xf32, #tpu.memory_space<vmem>>, vector<1x128xf32>
    %441 = math.tanh %440 : vector<1x128xf32>
    %c28_375 = arith.constant 28 : index
    %c0_376 = arith.constant 0 : index
    %442 = vector.load %arg11[%c28_375, %c0_376] : memref<54x128xf32, #tpu.memory_space<vmem>>, vector<1x128xf32>
    tpu.vector_store %arg11[%c28_375, %c0_376], %441 {strides = array<i32>} : memref<54x128xf32, #tpu.memory_space<vmem>>, vector<1x128xf32>,
    %c17_377 = arith.constant 17 : index
    %c0_378 = arith.constant 0 : index
    %443 = vector.load %arg16[%c17_377, %c0_378] : memref<30x384xf32, #tpu.memory_space<vmem>>, vector<1x128xf32>
    %c16_379 = arith.constant 16 : index
    %c256_380 = arith.constant 256 : index
    %444 = vector.load %arg16[%c16_379, %c256_380] : memref<30x384xf32, #tpu.memory_space<vmem>>, vector<1x128xf32>
    %445 = arith.addf %443, %444 : vector<1x128xf32>
    %446 = math.tanh %445 : vector<1x128xf32>
    %c29_381 = arith.constant 29 : index
    %c0_382 = arith.constant 0 : index
    %447 = vector.load %arg11[%c29_381, %c0_382] : memref<54x128xf32, #tpu.memory_space<vmem>>, vector<1x128xf32>
    tpu.vector_store %arg11[%c29_381, %c0_382], %446 {strides = array<i32>} : memref<54x128xf32, #tpu.memory_space<vmem>>, vector<1x128xf32>,
    %c17_383 = arith.constant 17 : index
    %c128_384 = arith.constant 128 : index
    %448 = vector.load %arg16[%c17_383, %c128_384] : memref<30x384xf32, #tpu.memory_space<vmem>>, vector<1x128xf32>
    %449 = math.tanh %448 : vector<1x128xf32>
    %c30 = arith.constant 30 : index
    %c0_385 = arith.constant 0 : index
    %450 = vector.load %arg11[%c30, %c0_385] : memref<54x128xf32, #tpu.memory_space<vmem>>, vector<1x128xf32>
    tpu.vector_store %arg11[%c30, %c0_385], %449 {strides = array<i32>} : memref<54x128xf32, #tpu.memory_space<vmem>>, vector<1x128xf32>,
    %c18_386 = arith.constant 18 : index
    %c0_387 = arith.constant 0 : index
    %451 = vector.load %arg16[%c18_386, %c0_387] : memref<30x384xf32, #tpu.memory_space<vmem>>, vector<1x128xf32>
    %c17_388 = arith.constant 17 : index
    %c256_389 = arith.constant 256 : index
    %452 = vector.load %arg16[%c17_388, %c256_389] : memref<30x384xf32, #tpu.memory_space<vmem>>, vector<1x128xf32>
    %453 = arith.addf %451, %452 : vector<1x128xf32>
    %454 = math.tanh %453 : vector<1x128xf32>
    %c31 = arith.constant 31 : index
    %c0_390 = arith.constant 0 : index
    %455 = vector.load %arg11[%c31, %c0_390] : memref<54x128xf32, #tpu.memory_space<vmem>>, vector<1x128xf32>
    tpu.vector_store %arg11[%c31, %c0_390], %454 {strides = array<i32>} : memref<54x128xf32, #tpu.memory_space<vmem>>, vector<1x128xf32>,
    %c18_391 = arith.constant 18 : index
    %c128_392 = arith.constant 128 : index
    %456 = vector.load %arg16[%c18_391, %c128_392] : memref<30x384xf32, #tpu.memory_space<vmem>>, vector<1x128xf32>
    %457 = math.tanh %456 : vector<1x128xf32>
    %c32 = arith.constant 32 : index
    %c0_393 = arith.constant 0 : index
    %458 = vector.load %arg11[%c32, %c0_393] : memref<54x128xf32, #tpu.memory_space<vmem>>, vector<1x128xf32>
    tpu.vector_store %arg11[%c32, %c0_393], %457 {strides = array<i32>} : memref<54x128xf32, #tpu.memory_space<vmem>>, vector<1x128xf32>,
    %c19_394 = arith.constant 19 : index
    %c0_395 = arith.constant 0 : index
    %459 = vector.load %arg16[%c19_394, %c0_395] : memref<30x384xf32, #tpu.memory_space<vmem>>, vector<1x128xf32>
    %c18_396 = arith.constant 18 : index
    %c256_397 = arith.constant 256 : index
    %460 = vector.load %arg16[%c18_396, %c256_397] : memref<30x384xf32, #tpu.memory_space<vmem>>, vector<1x128xf32>
    %461 = arith.addf %459, %460 : vector<1x128xf32>
    %462 = math.tanh %461 : vector<1x128xf32>
    %c33 = arith.constant 33 : index
    %c0_398 = arith.constant 0 : index
    %463 = vector.load %arg11[%c33, %c0_398] : memref<54x128xf32, #tpu.memory_space<vmem>>, vector<1x128xf32>
    tpu.vector_store %arg11[%c33, %c0_398], %462 {strides = array<i32>} : memref<54x128xf32, #tpu.memory_space<vmem>>, vector<1x128xf32>,
    %c19_399 = arith.constant 19 : index
    %c128_400 = arith.constant 128 : index
    %464 = vector.load %arg16[%c19_399, %c128_400] : memref<30x384xf32, #tpu.memory_space<vmem>>, vector<1x128xf32>
    %465 = math.tanh %464 : vector<1x128xf32>
    %c34 = arith.constant 34 : index
    %c0_401 = arith.constant 0 : index
    %466 = vector.load %arg11[%c34, %c0_401] : memref<54x128xf32, #tpu.memory_space<vmem>>, vector<1x128xf32>
    tpu.vector_store %arg11[%c34, %c0_401], %465 {strides = array<i32>} : memref<54x128xf32, #tpu.memory_space<vmem>>, vector<1x128xf32>,
    %c20_402 = arith.constant 20 : index
    %c0_403 = arith.constant 0 : index
    %467 = vector.load %arg16[%c20_402, %c0_403] : memref<30x384xf32, #tpu.memory_space<vmem>>, vector<1x128xf32>
    %c19_404 = arith.constant 19 : index
    %c256_405 = arith.constant 256 : index
    %468 = vector.load %arg16[%c19_404, %c256_405] : memref<30x384xf32, #tpu.memory_space<vmem>>, vector<1x128xf32>
    %469 = arith.addf %467, %468 : vector<1x128xf32>
    %470 = math.tanh %469 : vector<1x128xf32>
    %c35 = arith.constant 35 : index
    %c0_406 = arith.constant 0 : index
    %471 = vector.load %arg11[%c35, %c0_406] : memref<54x128xf32, #tpu.memory_space<vmem>>, vector<1x128xf32>
    tpu.vector_store %arg11[%c35, %c0_406], %470 {strides = array<i32>} : memref<54x128xf32, #tpu.memory_space<vmem>>, vector<1x128xf32>,
    %c20_407 = arith.constant 20 : index
    %c128_408 = arith.constant 128 : index
    %472 = vector.load %arg16[%c20_407, %c128_408] : memref<30x384xf32, #tpu.memory_space<vmem>>, vector<1x128xf32>
    %473 = math.tanh %472 : vector<1x128xf32>
    %c36 = arith.constant 36 : index
    %c0_409 = arith.constant 0 : index
    %474 = vector.load %arg11[%c36, %c0_409] : memref<54x128xf32, #tpu.memory_space<vmem>>, vector<1x128xf32>
    tpu.vector_store %arg11[%c36, %c0_409], %473 {strides = array<i32>} : memref<54x128xf32, #tpu.memory_space<vmem>>, vector<1x128xf32>,
    %c21_410 = arith.constant 21 : index
    %c0_411 = arith.constant 0 : index
    %475 = vector.load %arg16[%c21_410, %c0_411] : memref<30x384xf32, #tpu.memory_space<vmem>>, vector<1x128xf32>
    %c20_412 = arith.constant 20 : index
    %c256_413 = arith.constant 256 : index
    %476 = vector.load %arg16[%c20_412, %c256_413] : memref<30x384xf32, #tpu.memory_space<vmem>>, vector<1x128xf32>
    %477 = arith.addf %475, %476 : vector<1x128xf32>
    %478 = math.tanh %477 : vector<1x128xf32>
    %c37 = arith.constant 37 : index
    %c0_414 = arith.constant 0 : index
    %479 = vector.load %arg11[%c37, %c0_414] : memref<54x128xf32, #tpu.memory_space<vmem>>, vector<1x128xf32>
    tpu.vector_store %arg11[%c37, %c0_414], %478 {strides = array<i32>} : memref<54x128xf32, #tpu.memory_space<vmem>>, vector<1x128xf32>,
    %c21_415 = arith.constant 21 : index
    %c128_416 = arith.constant 128 : index
    %480 = vector.load %arg16[%c21_415, %c128_416] : memref<30x384xf32, #tpu.memory_space<vmem>>, vector<1x128xf32>
    %481 = math.tanh %480 : vector<1x128xf32>
    %c38 = arith.constant 38 : index
    %c0_417 = arith.constant 0 : index
    %482 = vector.load %arg11[%c38, %c0_417] : memref<54x128xf32, #tpu.memory_space<vmem>>, vector<1x128xf32>
    tpu.vector_store %arg11[%c38, %c0_417], %481 {strides = array<i32>} : memref<54x128xf32, #tpu.memory_space<vmem>>, vector<1x128xf32>,
    %c22_418 = arith.constant 22 : index
    %c0_419 = arith.constant 0 : index
    %483 = vector.load %arg16[%c22_418, %c0_419] : memref<30x384xf32, #tpu.memory_space<vmem>>, vector<1x128xf32>
    %c21_420 = arith.constant 21 : index
    %c256_421 = arith.constant 256 : index
    %484 = vector.load %arg16[%c21_420, %c256_421] : memref<30x384xf32, #tpu.memory_space<vmem>>, vector<1x128xf32>
    %485 = arith.addf %483, %484 : vector<1x128xf32>
    %486 = math.tanh %485 : vector<1x128xf32>
    %c39 = arith.constant 39 : index
    %c0_422 = arith.constant 0 : index
    %487 = vector.load %arg11[%c39, %c0_422] : memref<54x128xf32, #tpu.memory_space<vmem>>, vector<1x128xf32>
    tpu.vector_store %arg11[%c39, %c0_422], %486 {strides = array<i32>} : memref<54x128xf32, #tpu.memory_space<vmem>>, vector<1x128xf32>,
    %c22_423 = arith.constant 22 : index
    %c128_424 = arith.constant 128 : index
    %488 = vector.load %arg16[%c22_423, %c128_424] : memref<30x384xf32, #tpu.memory_space<vmem>>, vector<1x128xf32>
    %489 = math.tanh %488 : vector<1x128xf32>
    %c40 = arith.constant 40 : index
    %c0_425 = arith.constant 0 : index
    %490 = vector.load %arg11[%c40, %c0_425] : memref<54x128xf32, #tpu.memory_space<vmem>>, vector<1x128xf32>
    tpu.vector_store %arg11[%c40, %c0_425], %489 {strides = array<i32>} : memref<54x128xf32, #tpu.memory_space<vmem>>, vector<1x128xf32>,
    %c23_426 = arith.constant 23 : index
    %c0_427 = arith.constant 0 : index
    %491 = vector.load %arg16[%c23_426, %c0_427] : memref<30x384xf32, #tpu.memory_space<vmem>>, vector<1x128xf32>
    %c22_428 = arith.constant 22 : index
    %c256_429 = arith.constant 256 : index
    %492 = vector.load %arg16[%c22_428, %c256_429] : memref<30x384xf32, #tpu.memory_space<vmem>>, vector<1x128xf32>
    %493 = arith.addf %491, %492 : vector<1x128xf32>
    %494 = math.tanh %493 : vector<1x128xf32>
    %c41 = arith.constant 41 : index
    %c0_430 = arith.constant 0 : index
    %495 = vector.load %arg11[%c41, %c0_430] : memref<54x128xf32, #tpu.memory_space<vmem>>, vector<1x128xf32>
    tpu.vector_store %arg11[%c41, %c0_430], %494 {strides = array<i32>} : memref<54x128xf32, #tpu.memory_space<vmem>>, vector<1x128xf32>,
    %c23_431 = arith.constant 23 : index
    %c128_432 = arith.constant 128 : index
    %496 = vector.load %arg16[%c23_431, %c128_432] : memref<30x384xf32, #tpu.memory_space<vmem>>, vector<1x128xf32>
    %497 = math.tanh %496 : vector<1x128xf32>
    %c42 = arith.constant 42 : index
    %c0_433 = arith.constant 0 : index
    %498 = vector.load %arg11[%c42, %c0_433] : memref<54x128xf32, #tpu.memory_space<vmem>>, vector<1x128xf32>
    tpu.vector_store %arg11[%c42, %c0_433], %497 {strides = array<i32>} : memref<54x128xf32, #tpu.memory_space<vmem>>, vector<1x128xf32>,
    %c24_434 = arith.constant 24 : index
    %c0_435 = arith.constant 0 : index
    %499 = vector.load %arg16[%c24_434, %c0_435] : memref<30x384xf32, #tpu.memory_space<vmem>>, vector<1x128xf32>
    %c23_436 = arith.constant 23 : index
    %c256_437 = arith.constant 256 : index
    %500 = vector.load %arg16[%c23_436, %c256_437] : memref<30x384xf32, #tpu.memory_space<vmem>>, vector<1x128xf32>
    %501 = arith.addf %499, %500 : vector<1x128xf32>
    %502 = math.tanh %501 : vector<1x128xf32>
    %c43 = arith.constant 43 : index
    %c0_438 = arith.constant 0 : index
    %503 = vector.load %arg11[%c43, %c0_438] : memref<54x128xf32, #tpu.memory_space<vmem>>, vector<1x128xf32>
    tpu.vector_store %arg11[%c43, %c0_438], %502 {strides = array<i32>} : memref<54x128xf32, #tpu.memory_space<vmem>>, vector<1x128xf32>,
    %c24_439 = arith.constant 24 : index
    %c128_440 = arith.constant 128 : index
    %504 = vector.load %arg16[%c24_439, %c128_440] : memref<30x384xf32, #tpu.memory_space<vmem>>, vector<1x128xf32>
    %505 = math.tanh %504 : vector<1x128xf32>
    %c44 = arith.constant 44 : index
    %c0_441 = arith.constant 0 : index
    %506 = vector.load %arg11[%c44, %c0_441] : memref<54x128xf32, #tpu.memory_space<vmem>>, vector<1x128xf32>
    tpu.vector_store %arg11[%c44, %c0_441], %505 {strides = array<i32>} : memref<54x128xf32, #tpu.memory_space<vmem>>, vector<1x128xf32>,
    %c25_442 = arith.constant 25 : index
    %c0_443 = arith.constant 0 : index
    %507 = vector.load %arg16[%c25_442, %c0_443] : memref<30x384xf32, #tpu.memory_space<vmem>>, vector<1x128xf32>
    %c24_444 = arith.constant 24 : index
    %c256_445 = arith.constant 256 : index
    %508 = vector.load %arg16[%c24_444, %c256_445] : memref<30x384xf32, #tpu.memory_space<vmem>>, vector<1x128xf32>
    %509 = arith.addf %507, %508 : vector<1x128xf32>
    %510 = math.tanh %509 : vector<1x128xf32>
    %c45 = arith.constant 45 : index
    %c0_446 = arith.constant 0 : index
    %511 = vector.load %arg11[%c45, %c0_446] : memref<54x128xf32, #tpu.memory_space<vmem>>, vector<1x128xf32>
    tpu.vector_store %arg11[%c45, %c0_446], %510 {strides = array<i32>} : memref<54x128xf32, #tpu.memory_space<vmem>>, vector<1x128xf32>,
    %c25_447 = arith.constant 25 : index
    %c128_448 = arith.constant 128 : index
    %512 = vector.load %arg16[%c25_447, %c128_448] : memref<30x384xf32, #tpu.memory_space<vmem>>, vector<1x128xf32>
    %513 = math.tanh %512 : vector<1x128xf32>
    %c46 = arith.constant 46 : index
    %c0_449 = arith.constant 0 : index
    %514 = vector.load %arg11[%c46, %c0_449] : memref<54x128xf32, #tpu.memory_space<vmem>>, vector<1x128xf32>
    tpu.vector_store %arg11[%c46, %c0_449], %513 {strides = array<i32>} : memref<54x128xf32, #tpu.memory_space<vmem>>, vector<1x128xf32>,
    %c26_450 = arith.constant 26 : index
    %c0_451 = arith.constant 0 : index
    %515 = vector.load %arg16[%c26_450, %c0_451] : memref<30x384xf32, #tpu.memory_space<vmem>>, vector<1x128xf32>
    %c25_452 = arith.constant 25 : index
    %c256_453 = arith.constant 256 : index
    %516 = vector.load %arg16[%c25_452, %c256_453] : memref<30x384xf32, #tpu.memory_space<vmem>>, vector<1x128xf32>
    %517 = arith.addf %515, %516 : vector<1x128xf32>
    %518 = math.tanh %517 : vector<1x128xf32>
    %c47 = arith.constant 47 : index
    %c0_454 = arith.constant 0 : index
    %519 = vector.load %arg11[%c47, %c0_454] : memref<54x128xf32, #tpu.memory_space<vmem>>, vector<1x128xf32>
    tpu.vector_store %arg11[%c47, %c0_454], %518 {strides = array<i32>} : memref<54x128xf32, #tpu.memory_space<vmem>>, vector<1x128xf32>,
    %c26_455 = arith.constant 26 : index
    %c128_456 = arith.constant 128 : index
    %520 = vector.load %arg16[%c26_455, %c128_456] : memref<30x384xf32, #tpu.memory_space<vmem>>, vector<1x128xf32>
    %521 = math.tanh %520 : vector<1x128xf32>
    %c48 = arith.constant 48 : index
    %c0_457 = arith.constant 0 : index
    %522 = vector.load %arg11[%c48, %c0_457] : memref<54x128xf32, #tpu.memory_space<vmem>>, vector<1x128xf32>
    tpu.vector_store %arg11[%c48, %c0_457], %521 {strides = array<i32>} : memref<54x128xf32, #tpu.memory_space<vmem>>, vector<1x128xf32>,
    %c27_458 = arith.constant 27 : index
    %c0_459 = arith.constant 0 : index
    %523 = vector.load %arg16[%c27_458, %c0_459] : memref<30x384xf32, #tpu.memory_space<vmem>>, vector<1x128xf32>
    %c26_460 = arith.constant 26 : index
    %c256_461 = arith.constant 256 : index
    %524 = vector.load %arg16[%c26_460, %c256_461] : memref<30x384xf32, #tpu.memory_space<vmem>>, vector<1x128xf32>
    %525 = arith.addf %523, %524 : vector<1x128xf32>
    %526 = math.tanh %525 : vector<1x128xf32>
    %c49 = arith.constant 49 : index
    %c0_462 = arith.constant 0 : index
    %527 = vector.load %arg11[%c49, %c0_462] : memref<54x128xf32, #tpu.memory_space<vmem>>, vector<1x128xf32>
    tpu.vector_store %arg11[%c49, %c0_462], %526 {strides = array<i32>} : memref<54x128xf32, #tpu.memory_space<vmem>>, vector<1x128xf32>,
    %c27_463 = arith.constant 27 : index
    %c128_464 = arith.constant 128 : index
    %528 = vector.load %arg16[%c27_463, %c128_464] : memref<30x384xf32, #tpu.memory_space<vmem>>, vector<1x128xf32>
    %529 = math.tanh %528 : vector<1x128xf32>
    %c50 = arith.constant 50 : index
    %c0_465 = arith.constant 0 : index
    %530 = vector.load %arg11[%c50, %c0_465] : memref<54x128xf32, #tpu.memory_space<vmem>>, vector<1x128xf32>
    tpu.vector_store %arg11[%c50, %c0_465], %529 {strides = array<i32>} : memref<54x128xf32, #tpu.memory_space<vmem>>, vector<1x128xf32>,
    %c28_466 = arith.constant 28 : index
    %c0_467 = arith.constant 0 : index
    %531 = vector.load %arg16[%c28_466, %c0_467] : memref<30x384xf32, #tpu.memory_space<vmem>>, vector<1x128xf32>
    %c27_468 = arith.constant 27 : index
    %c256_469 = arith.constant 256 : index
    %532 = vector.load %arg16[%c27_468, %c256_469] : memref<30x384xf32, #tpu.memory_space<vmem>>, vector<1x128xf32>
    %533 = arith.addf %531, %532 : vector<1x128xf32>
    %534 = math.tanh %533 : vector<1x128xf32>
    %c51 = arith.constant 51 : index
    %c0_470 = arith.constant 0 : index
    %535 = vector.load %arg11[%c51, %c0_470] : memref<54x128xf32, #tpu.memory_space<vmem>>, vector<1x128xf32>
    tpu.vector_store %arg11[%c51, %c0_470], %534 {strides = array<i32>} : memref<54x128xf32, #tpu.memory_space<vmem>>, vector<1x128xf32>,
    %c28_471 = arith.constant 28 : index
    %c128_472 = arith.constant 128 : index
    %536 = vector.load %arg16[%c28_471, %c128_472] : memref<30x384xf32, #tpu.memory_space<vmem>>, vector<1x128xf32>
    %537 = math.tanh %536 : vector<1x128xf32>
    %c52 = arith.constant 52 : index
    %c0_473 = arith.constant 0 : index
    %538 = vector.load %arg11[%c52, %c0_473] : memref<54x128xf32, #tpu.memory_space<vmem>>, vector<1x128xf32>
    tpu.vector_store %arg11[%c52, %c0_473], %537 {strides = array<i32>} : memref<54x128xf32, #tpu.memory_space<vmem>>, vector<1x128xf32>,
    %c29_474 = arith.constant 29 : index
    %c0_475 = arith.constant 0 : index
    %539 = vector.load %arg16[%c29_474, %c0_475] : memref<30x384xf32, #tpu.memory_space<vmem>>, vector<1x128xf32>
    %c28_476 = arith.constant 28 : index
    %c256_477 = arith.constant 256 : index
    %540 = vector.load %arg16[%c28_476, %c256_477] : memref<30x384xf32, #tpu.memory_space<vmem>>, vector<1x128xf32>
    %541 = arith.addf %539, %540 : vector<1x128xf32>
    %542 = math.tanh %541 : vector<1x128xf32>
    %c53 = arith.constant 53 : index
    %c0_478 = arith.constant 0 : index
    %543 = vector.load %arg11[%c53, %c0_478] : memref<54x128xf32, #tpu.memory_space<vmem>>, vector<1x128xf32>
    tpu.vector_store %arg11[%c53, %c0_478], %542 {strides = array<i32>} : memref<54x128xf32, #tpu.memory_space<vmem>>, vector<1x128xf32>,
    return
  }
}

</mosaic_0001>

<llo_original>
// kernel: dcgan_generator_forward.1
$region0: #{dcgan_generator_forward.1}
  #allocation0 [shape = 'u32[]', space=smem, size = 0x4, offset = 0x4, fixed_abs, tag = 'smem constant byte address 0x4 - core index']
  #allocation1 [shape = 'u32[144,128]{1,0:T(1,128)}', space=vmem, size = 0x12000, scoped, tag = 'internal scratch']
  #allocation2 [shape = 'f32[6,1536]{1,0:T(8,128)}', space=vmem, size = 0xc000, scoped, tag = 'scratch operand']
  #allocation3 [shape = 'f32[14,512]{1,0:T(8,128)}', space=vmem, size = 0x8000, scoped, tag = 'scratch operand']
  #allocation4 [shape = 'f32[14,1536]{1,0:T(8,128)}', space=vmem, size = 0x18000, scoped, tag = 'scratch operand']
  #allocation5 [shape = 'f32[30,512]{1,0:T(8,128)}', space=vmem, size = 0x10000, scoped, tag = 'scratch operand']
  #allocation6 [shape = 'f32[30,384]{1,0:T(8,128)}', space=vmem, size = 0xc000, scoped, tag = 'scratch operand']
  #allocation7 [shape = 'bf16[512,1536]{1,0:T(8,128)(2,1)}', space=vmem, size = 0x180000, scoped, tag = 'scratch operand']
  #allocation8 [shape = 'bf16[512,384]{1,0:T(8,128)(2,1)}', space=vmem, size = 0x60000, scoped, tag = 'scratch operand']
  #allocation9 [shape = 's32[2]{0}', space=sflag, size = 0x8, scoped, tag = 'scratch operand']
  #allocation23 [shape = 's32[]', space=sflag, size = 0x4, offset = 0, fixed_abs, tag = 'sflag constant byte address 0x0 - dummy sync flag']
  #allocation24 [shape = 's32[]', space=sflag, size = 0x4, offset = 0, fixed_abs, tag = 'sflag constant byte address 0x0 - dummy sync flag']
  #allocation25 [shape = 'u32[]', space=smem, size = 0x4, offset = 0x44, fixed_abs, tag = 'smem constant byte address 0x44 - assertion arg 0']
  #allocation26 [shape = 'u32[]', space=smem, size = 0x4, offset = 0x48, fixed_abs, tag = 'smem constant byte address 0x48 - assertion arg 1']
  #allocation27 [shape = 's32[]', space=sflag, size = 0x4, offset = 0, fixed_abs, tag = 'sflag constant byte address 0x0 - dummy sync flag']
  #allocation28 [shape = 's32[]', space=sflag, size = 0x4, offset = 0, fixed_abs, tag = 'sflag constant byte address 0x0 - dummy sync flag']
  %s0 = inlined_call_operand.vmem [shape: f32[6,48], index: 0, kind: input, shape index: {}]
  %s1 = inlined_call_operand.hbm [shape: bf16[48,384], index: 1, kind: input, shape index: {}]
  %s2 = inlined_call_operand.hbm [shape: f32[1,128], index: 2, kind: input, shape index: {}]
  %s3 = inlined_call_operand.hbm [shape: f32[1,128], index: 3, kind: input, shape index: {}]
  %s4 = inlined_call_operand.hbm [shape: bf16[384,1536], index: 4, kind: input, shape index: {}]
  %s5 = inlined_call_operand.hbm [shape: f32[1,64], index: 5, kind: input, shape index: {}]
  %s6 = inlined_call_operand.hbm [shape: f32[1,64], index: 6, kind: input, shape index: {}]
  %s7 = inlined_call_operand.hbm [shape: bf16[512,1536], index: 7, kind: input, shape index: {}]
  %s8 = inlined_call_operand.hbm [shape: f32[1,32], index: 8, kind: input, shape index: {}]
  %s9 = inlined_call_operand.hbm [shape: f32[1,32], index: 9, kind: input, shape index: {}]
  %s10 = inlined_call_operand.hbm [shape: bf16[512,384], index: 10, kind: input, shape index: {}]
  %s11 = inlined_call_operand.vmem [shape: f32[54,128], index: 11, kind: output, shape index: {}]
  %s12 = sld [smem:[#allocation0]]
  $region86: #{dcgan_generator_forward.1} parent=0
    _
  %s14 = ssub.s32 1, %s12
  %s15 = scalar_select 0, %s14, %s12
  $region1: #{dcgan_generator_forward.1} parent=0
    #allocation10 [shape = 'u8[36864]{0}', space=vmem, size = 0x9000, scoped, tag = 'input window, operand 1, single buffered']
    #allocation11 [shape = 's32[1]{0}', space=sflag, size = 0x4, scoped, tag = 'scoped memory for dcgan_generator_forward.1']
    #allocation12 [shape = 'u8[512]{0}', space=vmem, size = 0x400, scoped, tag = 'input window, operand 2, single buffered']
    #allocation13 [shape = 's32[1]{0}', space=sflag, size = 0x4, scoped, tag = 'scoped memory for dcgan_generator_forward.1']
    #allocation14 [shape = 'u8[512]{0}', space=vmem, size = 0x400, scoped, tag = 'input window, operand 3, single buffered']
    #allocation15 [shape = 'u8[1179648]{0}', space=vmem, size = 0x120000, scoped, tag = 'input window, operand 4, single buffered']
    #allocation16 [shape = 's32[1]{0}', space=sflag, size = 0x4, scoped, tag = 'scoped memory for dcgan_generator_forward.1']
    #allocation17 [shape = 'u8[512]{0}', space=vmem, size = 0x400, scoped, tag = 'input window, operand 5, single buffered']
    #allocation18 [shape = 'u8[512]{0}', space=vmem, size = 0x400, scoped, tag = 'input window, operand 6, single buffered']
    #allocation19 [shape = 's32[1]{0}', space=sflag, size = 0x4, scoped, tag = 'scoped memory for dcgan_generator_forward.1']
    #allocation20 [shape = 'u8[512]{0}', space=vmem, size = 0x400, scoped, tag = 'input window, operand 8, single buffered']
    #allocation21 [shape = 'u8[512]{0}', space=vmem, size = 0x400, scoped, tag = 'input window, operand 9, single buffered']
    #allocation22 [shape = 's32[1]{0}', space=sflag, size = 0x4, scoped, tag = 'scoped memory for dcgan_generator_forward.1']
    %16 = vsyncpa [#allocation11], 0
    %17 = vsyncpa [#allocation13], 0
    %18 = vsyncpa [#allocation16], 0
    %19 = vsyncpa [#allocation19], 0
    %20 = vsyncpa [#allocation22], 0
    // Predicated region
    $region2: #{dcgan_generator_forward.1} parent=1 // pred_check
      _
    $region3: #{dcgan_generator_forward.1} parent=1 // pred_check_branch
      %22 = sbr.rel (0) target = $region5
    $region4: #{dcgan_generator_forward.1} parent=1 // pred_region
      _
    $region5: #{dcgan_generator_forward.1} parent=1 // pred_fallthru
      _
    // Predicated region
    $region6: #{dcgan_generator_forward.1} parent=1 // pred_check
      _
    $region7: #{dcgan_generator_forward.1} parent=1 // pred_check_branch
      %24 = sbr.rel (0) target = $region9
    $region8: #{dcgan_generator_forward.1} parent=1 // pred_region
      %s26 = ssub.s32 1152, 1152
      %27 = vsyncadd [#allocation11], %s26
      %s28 = sshll.u32 [#allocation10], 4
      %s29 = int_to_ptr.vmem [resolvable:$true] %s28
      %34 = dma.hbm_to_vmem [thread:$0]  %s1, 1152, %s29, [#allocation11], 192, 192, 12
    $region9: #{dcgan_generator_forward.1} parent=1 // pred_fallthru
      _
    // Predicated region
    $region10: #{dcgan_generator_forward.1} parent=1 // pred_check
      _
    $region11: #{dcgan_generator_forward.1} parent=1 // pred_check_branch
      %36 = sbr.rel (0) target = $region13
    $region12: #{dcgan_generator_forward.1} parent=1 // pred_region
      %s38 = ssub.s32 16, 16
      %39 = vsyncadd [#allocation13], %s38
      %s41 = sshll.u32 [#allocation12], 4
      %s42 = int_to_ptr.vmem [resolvable:$true] %s41
      %44 = dma.hbm_to_vmem [thread:$0]  %s2, 16, %s42, [#allocation13]
    $region13: #{dcgan_generator_forward.1} parent=1 // pred_fallthru
      _
    // Predicated region
    $region14: #{dcgan_generator_forward.1} parent=1 // pred_check
      _
    $region15: #{dcgan_generator_forward.1} parent=1 // pred_check_branch
      %46 = sbr.rel (0) target = $region17
    $region16: #{dcgan_generator_forward.1} parent=1 // pred_region
      %s48 = ssub.s32 16, 16
      %49 = vsyncadd [#allocation13], %s48
      %s51 = sshll.u32 [#allocation14], 4
      %s52 = int_to_ptr.vmem [resolvable:$true] %s51
      %54 = dma.hbm_to_vmem [thread:$0]  %s3, 16, %s52, [#allocation13]
    $region17: #{dcgan_generator_forward.1} parent=1 // pred_fallthru
      _
    // Predicated region
    $region18: #{dcgan_generator_forward.1} parent=1 // pred_check
      _
    $region19: #{dcgan_generator_forward.1} parent=1 // pred_check_branch
      %56 = sbr.rel (0) target = $region21
    $region20: #{dcgan_generator_forward.1} parent=1 // pred_region
      %s58 = ssub.s32 36864, 36864
      %59 = vsyncadd [#allocation16], %s58
      %s60 = sshll.u32 [#allocation15], 4
      %s61 = int_to_ptr.vmem [resolvable:$true] %s60
      %66 = dma.hbm_to_vmem [thread:$0]  %s4, 36864, %s61, [#allocation16], 768, 768, 48
    $region21: #{dcgan_generator_forward.1} parent=1 // pred_fallthru
      _
    // Predicated region
    $region22: #{dcgan_generator_forward.1} parent=1 // pred_check
      _
    $region23: #{dcgan_generator_forward.1} parent=1 // pred_check_branch
      %68 = sbr.rel (0) target = $region25
    $region24: #{dcgan_generator_forward.1} parent=1 // pred_region
      %s70 = ssub.s32 16, 16
      %71 = vsyncadd [#allocation16], %s70
      %s73 = sshll.u32 [#allocation17], 4
      %s74 = int_to_ptr.vmem [resolvable:$true] %s73
      %76 = dma.hbm_to_vmem [thread:$0]  %s5, 16, %s74, [#allocation16]
    $region25: #{dcgan_generator_forward.1} parent=1 // pred_fallthru
      _
    // Predicated region
    $region26: #{dcgan_generator_forward.1} parent=1 // pred_check
      _
    $region27: #{dcgan_generator_forward.1} parent=1 // pred_check_branch
      %78 = sbr.rel (0) target = $region29
    $region28: #{dcgan_generator_forward.1} parent=1 // pred_region
      %s80 = ssub.s32 16, 16
      %81 = vsyncadd [#allocation19], %s80
      %s83 = sshll.u32 [#allocation18], 4
      %s84 = int_to_ptr.vmem [resolvable:$true] %s83
      %86 = dma.hbm_to_vmem [thread:$0]  %s6, 16, %s84, [#allocation19]
    $region29: #{dcgan_generator_forward.1} parent=1 // pred_fallthru
      _
    // Predicated region
    $region30: #{dcgan_generator_forward.1} parent=1 // pred_check
      _
    $region31: #{dcgan_generator_forward.1} parent=1 // pred_check_branch
      %88 = sbr.rel (0) target = $region33
    $region32: #{dcgan_generator_forward.1} parent=1 // pred_region
      %s90 = ssub.s32 16, 16
      %91 = vsyncadd [#allocation19], %s90
      %s93 = sshll.u32 [#allocation20], 4
      %s94 = int_to_ptr.vmem [resolvable:$true] %s93
      %96 = dma.hbm_to_vmem [thread:$0]  %s8, 16, %s94, [#allocation19]
    $region33: #{dcgan_generator_forward.1} parent=1 // pred_fallthru
      _
    // Predicated region
    $region34: #{dcgan_generator_forward.1} parent=1 // pred_check
      _
    $region35: #{dcgan_generator_forward.1} parent=1 // pred_check_branch
      %98 = sbr.rel (0) target = $region37
    $region36: #{dcgan_generator_forward.1} parent=1 // pred_region
      %s100 = ssub.s32 16, 16
      %101 = vsyncadd [#allocation22], %s100
      %s103 = sshll.u32 [#allocation21], 4
      %s104 = int_to_ptr.vmem [resolvable:$true] %s103
      %106 = dma.hbm_to_vmem [thread:$0]  %s9, 16, %s104, [#allocation22]
    $region37: #{dcgan_generator_forward.1} parent=1 // pred_fallthru
      _
    // Predicated region
    $region38: #{dcgan_generator_forward.1} parent=1 // pred_check
      _
    $region39: #{dcgan_generator_forward.1} parent=1 // pred_check_branch
      %108 = sbr.rel (0) target = $region41
    $region40: #{dcgan_generator_forward.1} parent=1 // pred_region
      %109 = dma.done [#allocation11], 1152
    $region41: #{dcgan_generator_forward.1} parent=1 // pred_fallthru
      _
    // Predicated region
    $region42: #{dcgan_generator_forward.1} parent=1 // pred_check
      _
    $region43: #{dcgan_generator_forward.1} parent=1 // pred_check_branch
      %111 = sbr.rel (0) target = $region45
    $region44: #{dcgan_generator_forward.1} parent=1 // pred_region
      %112 = dma.done [#allocation13], 16
    $region45: #{dcgan_generator_forward.1} parent=1 // pred_fallthru
      _
    // Predicated region
    $region46: #{dcgan_generator_forward.1} parent=1 // pred_check
      _
    $region47: #{dcgan_generator_forward.1} parent=1 // pred_check_branch
      %114 = sbr.rel (0) target = $region49
    $region48: #{dcgan_generator_forward.1} parent=1 // pred_region
      %115 = dma.done [#allocation13], 16
    $region49: #{dcgan_generator_forward.1} parent=1 // pred_fallthru
      _
    // Predicated region
    $region50: #{dcgan_generator_forward.1} parent=1 // pred_check
      _
    $region51: #{dcgan_generator_forward.1} parent=1 // pred_check_branch
      %117 = sbr.rel (0) target = $region53
    $region52: #{dcgan_generator_forward.1} parent=1 // pred_region
      %118 = dma.done [#allocation16], 36864
    $region53: #{dcgan_generator_forward.1} parent=1 // pred_fallthru
      _
    // Predicated region
    $region54: #{dcgan_generator_forward.1} parent=1 // pred_check
      _
    $region55: #{dcgan_generator_forward.1} parent=1 // pred_check_branch
      %120 = sbr.rel (0) target = $region57
    $region56: #{dcgan_generator_forward.1} parent=1 // pred_region
      %121 = dma.done [#allocation16], 16
    $region57: #{dcgan_generator_forward.1} parent=1 // pred_fallthru
      _
    // Predicated region
    $region58: #{dcgan_generator_forward.1} parent=1 // pred_check
      _
    $region59: #{dcgan_generator_forward.1} parent=1 // pred_check_branch
      %123 = sbr.rel (0) target = $region61
    $region60: #{dcgan_generator_forward.1} parent=1 // pred_region
      %124 = dma.done [#allocation19], 16
    $region61: #{dcgan_generator_forward.1} parent=1 // pred_fallthru
      _
    // Predicated region
    $region62: #{dcgan_generator_forward.1} parent=1 // pred_check
      _
    $region63: #{dcgan_generator_forward.1} parent=1 // pred_check_branch
      %126 = sbr.rel (0) target = $region65
    $region64: #{dcgan_generator_forward.1} parent=1 // pred_region
      %127 = dma.done [#allocation19], 16
    $region65: #{dcgan_generator_forward.1} parent=1 // pred_fallthru
      _
    // Predicated region
    $region66: #{dcgan_generator_forward.1} parent=1 // pred_check
      _
    $region67: #{dcgan_generator_forward.1} parent=1 // pred_check_branch
      %129 = sbr.rel (0) target = $region69
    $region68: #{dcgan_generator_forward.1} parent=1 // pred_region
      %130 = dma.done [#allocation22], 16
    $region69: #{dcgan_generator_forward.1} parent=1 // pred_fallthru
      _
    // Predicated region
    $region70: #{dcgan_generator_forward.1} parent=1 // pred_check
      _
    $region71: #{dcgan_generator_forward.1} parent=1 // pred_check_branch
      %133 = sbr.rel target = $region73
    $region72: #{dcgan_generator_forward.1} parent=1 // pred_region
      %134 = sst [smem:[#allocation25]] [#allocation24]
      %135 = sst [smem:[#allocation26]] [#allocation23]
    $region73: #{dcgan_generator_forward.1} parent=1 // pred_fallthru
      _
    %137 = shalt.err (0)
    %s139 = sshll.u32 [#allocation7], 4
    %s140 = int_to_ptr.vmem [resolvable:$true] %s139
    %142 = dma.hbm_to_vmem [thread:$0]  %s7, 49152, %s140, [#allocation9]
    %s143 = scalar_lea.sflag [#allocation9], 1
    // Predicated region
    $region74: #{dcgan_generator_forward.1} parent=1 // pred_check
      _
    $region75: #{dcgan_generator_forward.1} parent=1 // pred_check_branch
      %145 = sbr.rel target = $region77
    $region76: #{dcgan_generator_forward.1} parent=1 // pred_region
      %146 = sst [smem:[#allocation25]] [#allocation28]
      %147 = sst [smem:[#allocation26]] [#allocation27]
    $region77: #{dcgan_generator_forward.1} parent=1 // pred_fallthru
      _
    %149 = shalt.err (0)
    %s151 = sshll.u32 [#allocation8], 4
    %s152 = int_to_ptr.vmem [resolvable:$true] %s151
    %154 = dma.hbm_to_vmem [thread:$0]  %s10, 12288, %s152, %s143
    %v155 = vld [vmem:[%s0] sm:$0x3f]
    %v156 = vpack.c.bf16 %v155, %v155
    %v157 = vld [vmem:[#allocation10] sm:$0xff]
    %v158 = vld [vmem:[#allocation10 + $0x8] sm:$0xf]
    %v159 = vld [vmem:[#allocation10 + $0xc] sm:$0xff]
    %v160 = vld [vmem:[#allocation10 + $0x14] sm:$0xf]
    %v161 = vld [vmem:[#allocation10 + $0x18] sm:$0xff]
    %v162 = vld [vmem:[#allocation10 + $0x20] sm:$0xf]
    %v163 = vld [vmem:[#allocation10 + $0x24] sm:$0xff]
    %v164 = vld [vmem:[#allocation10 + $0x2c] sm:$0xf]
    %v165 = vld [vmem:[#allocation10 + $0x30] sm:$0xff]
    %v166 = vld [vmem:[#allocation10 + $0x38] sm:$0xf]
    %v167 = vld [vmem:[#allocation10 + $0x3c] sm:$0xff]
    %v168 = vld [vmem:[#allocation10 + $0x44] sm:$0xf]
    %v181 = vunpack.c.l.b16 %v157
    %v182 = vunpack.c.h.b16 %v157
    %v183 = vunpack.c.l.b16 %v158
    %v184 = vunpack.c.l.b16 %v159
    %v185 = vunpack.c.h.b16 %v159
    %v186 = vunpack.c.l.b16 %v160
    %v187 = vunpack.c.l.b16 %v161
    %v188 = vunpack.c.h.b16 %v161
    %v189 = vunpack.c.l.b16 %v162
    %v190 = vunpack.c.l.b16 %v163
    %v191 = vunpack.c.h.b16 %v163
    %v192 = vunpack.c.l.b16 %v164
    %v193 = vunpack.c.l.b16 %v165
    %v194 = vunpack.c.h.b16 %v165
    %v195 = vunpack.c.l.b16 %v166
    %v196 = vunpack.c.l.b16 %v167
    %v197 = vunpack.c.h.b16 %v167
    %v198 = vunpack.c.l.b16 %v168
    %v199 = vpack.c.b16 %v184, %v181
    %v200 = vpack.c.b16 %v185, %v182
    %v201 = vpack.c.b16 %v186, %v183
    %v202 = vpack.c.b16 %v190, %v187
    %v203 = vpack.c.b16 %v191, %v188
    %v204 = vpack.c.b16 %v192, %v189
    %v205 = vpack.c.b16 %v196, %v193
    %v206 = vpack.c.b16 %v197, %v194
    %v207 = vpack.c.b16 %v198, %v195
    %vm217 = vcmask 392192
    %v219 = vsel %vm217, %v156, 0
    %221 = vmatprep.subr.bf16.mxu0 0
    %222 = vmatpush1.bf16.msra.mxu0 0
    %223 = vmatprep.subr.bf16.mxu0 0
    %224 = vmatpush1.bf16.msra.mxu0 0
    %225 = vmatprep.subr.bf16.mxu0 0
    %226 = vmatpush1.bf16.msra.mxu0 0
    %227 = vmatprep.subr.bf16.mxu0 0
    %228 = vmatpush1.bf16.msra.mxu0 0
    %229 = vmatprep.subr.bf16.mxu0 0
    %230 = vmatpush1.bf16.msra.mxu0 0
    %231 = vmatprep.subr.bf16.mxu0 %v206
    %232 = vmatpush1.bf16.msra.mxu0 %v205
    %233 = vmatprep.subr.bf16.mxu0 %v203
    %234 = vmatpush1.bf16.msra.mxu0 %v202
    %235 = vmatprep.subr.bf16.mxu0 %v200
    %236 = vmatpush1.bf16.msra.mxu0 %v199
    %237 = vmatprep.subr.bf16.mxu0 0
    %238 = vmatpush2.bf16.msra.mxu0 0
    %239 = vmatprep.subr.bf16.mxu0 0
    %240 = vmatpush2.bf16.msra.mxu0 0
    %241 = vmatprep.subr.bf16.mxu0 0
    %242 = vmatpush2.bf16.msra.mxu0 0
    %243 = vmatprep.subr.bf16.mxu0 0
    %244 = vmatpush2.bf16.msra.mxu0 0
    %245 = vmatprep.subr.bf16.mxu0 0
    %246 = vmatpush2.bf16.msra.mxu0 0
    %247 = vmatprep.subr.bf16.mxu0 0
    %248 = vmatpush2.bf16.msra.mxu0 0
    %249 = vmatprep.subr.bf16.mxu0 0
    %250 = vmatpush2.bf16.msra.mxu0 0
    %251 = vmatprep.subr.bf16.mxu0 0
    %252 = vmatpush2.bf16.msra.mxu0 0
    %253 = vmatprep.mubr.bf16.mxu0 0
    %254 = vmatmul.mubr.bf16.gmra.mxu0 %v219
    %v255 = vpop.f32.mrf.mxu0
    %v256 = vadd.f32 0.0, %v255
    %v257 = vpop.f32.mrf.mxu0
    %v258 = vadd.f32 0.0, %v257
    %v259 = vpop.f32.mrf.mxu0
    %v260 = vpop.f32.mrf.mxu0
    %261 = vdwg.mxu0
    %262 = vmatprep.subr.bf16.mxu0 0
    %263 = vmatpush1.bf16.msra.mxu0 0
    %264 = vmatprep.subr.bf16.mxu0 0
    %265 = vmatpush1.bf16.msra.mxu0 0
    %266 = vmatprep.subr.bf16.mxu0 0
    %267 = vmatpush1.bf16.msra.mxu0 0
    %268 = vmatprep.subr.bf16.mxu0 0
    %269 = vmatpush1.bf16.msra.mxu0 0
    %270 = vmatprep.subr.bf16.mxu0 0
    %271 = vmatpush1.bf16.msra.mxu0 0
    %272 = vmatprep.subr.bf16.mxu0 0
    %273 = vmatpush1.bf16.msra.mxu0 %v207
    %274 = vmatprep.subr.bf16.mxu0 0
    %275 = vmatpush1.bf16.msra.mxu0 %v204
    %276 = vmatprep.subr.bf16.mxu0 0
    %277 = vmatpush1.bf16.msra.mxu0 %v201
    %278 = vmatprep.subr.bf16.mxu0 0
    %279 = vmatpush2.bf16.msra.mxu0 0
    %280 = vmatprep.subr.bf16.mxu0 0
    %281 = vmatpush2.bf16.msra.mxu0 0
    %282 = vmatprep.subr.bf16.mxu0 0
    %283 = vmatpush2.bf16.msra.mxu0 0
    %284 = vmatprep.subr.bf16.mxu0 0
    %285 = vmatpush2.bf16.msra.mxu0 0
    %286 = vmatprep.subr.bf16.mxu0 0
    %287 = vmatpush2.bf16.msra.mxu0 0
    %288 = vmatprep.subr.bf16.mxu0 0
    %289 = vmatpush2.bf16.msra.mxu0 0
    %290 = vmatprep.subr.bf16.mxu0 0
    %291 = vmatpush2.bf16.msra.mxu0 0
    %292 = vmatprep.subr.bf16.mxu0 0
    %293 = vmatpush2.bf16.msra.mxu0 0
    %294 = vmatprep.mubr.bf16.mxu0 0
    %295 = vmatmul.mubr.bf16.gmra.mxu0 %v219
    %v296 = vpop.f32.mrf.mxu0
    %v297 = vadd.f32 0.0, %v296
    %v298 = vpop.f32.mrf.mxu0
    %v299 = vpop.f32.mrf.mxu0
    %v300 = vpop.f32.mrf.mxu0
    %301 = vdwg.mxu0
    %vm302 = vcmask 1045504
    %v303 = vsel %vm302, %v256, 0.0
    %v304 = vrot.slane %v303, 4
    %v305 = vadd.f32 %v303, %v304
    %v306 = vrot.slane %v305, 2
    %v307 = vadd.f32 %v305, %v306
    %v308 = vrot.slane %v307, 1
    %v309 = vadd.f32 %v307, %v308
    %v310 = vsel %vm302, %v258, 0.0
    %v311 = vrot.slane %v310, 4
    %v312 = vadd.f32 %v310, %v311
    %v313 = vrot.slane %v312, 2
    %v314 = vadd.f32 %v312, %v313
    %v315 = vrot.slane %v314, 1
    %v316 = vadd.f32 %v314, %v315
    %v317 = vsel %vm302, %v297, 0.0
    %v318 = vrot.slane %v317, 4
    %v319 = vadd.f32 %v317, %v318
    %v320 = vrot.slane %v319, 2
    %v321 = vadd.f32 %v319, %v320
    %v322 = vrot.slane %v321, 1
    %v323 = vadd.f32 %v321, %v322
    %v324 = vadd.f32 %v309, %v316
    %v325 = vadd.f32 %v324, %v323
    %v326 = vmul.f32 %v325, 0.055555556
    %v327 = vlaneseq
    %v328 = vshrl.u32 %v327, 7
    %v329 = vsub.s32 0, %v328
    %v330 = vrot.slane %v326, %v329
    %v331 = vsub.f32 %v256, %v330
    %v332 = vsub.f32 %v258, %v330
    %v333 = vsub.f32 %v297, %v330
    %v334 = vmul.f32 %v331, %v331
    %v335 = vmul.f32 %v332, %v332
    %v336 = vmul.f32 %v333, %v333
    %v337 = vsel %vm302, %v334, 0.0
    %v338 = vrot.slane %v337, 4
    %v339 = vadd.f32 %v337, %v338
    %v340 = vrot.slane %v339, 2
    %v341 = vadd.f32 %v339, %v340
    %v342 = vrot.slane %v341, 1
    %v343 = vadd.f32 %v341, %v342
    %v344 = vsel %vm302, %v335, 0.0
    %v345 = vrot.slane %v344, 4
    %v346 = vadd.f32 %v344, %v345
    %v347 = vrot.slane %v346, 2
    %v348 = vadd.f32 %v346, %v347
    %v349 = vrot.slane %v348, 1
    %v350 = vadd.f32 %v348, %v349
    %v351 = vsel %vm302, %v336, 0.0
    %v352 = vrot.slane %v351, 4
    %v353 = vadd.f32 %v351, %v352
    %v354 = vrot.slane %v353, 2
    %v355 = vadd.f32 %v353, %v354
    %v356 = vrot.slane %v355, 1
    %v357 = vadd.f32 %v355, %v356
    %v358 = vadd.f32 %v343, %v350
    %v359 = vadd.f32 %v358, %v357
    %v360 = vmul.f32 %v359, 0.055555556
    %v361 = vld [vmem:[#allocation12] sm:$0x1]
    %v362 = vadd.f32 %v360, 1e-05
    %v363 = vrsqrt.pop %v362
    %v364 = vmul.f32 %v361, %v363
    %v365 = vld [vmem:[#allocation14] sm:$0x1]
    %v366 = vmul.f32 %v326, %v364
    %v367 = vsub.f32 %v365, %v366
    %v368 = vlaneseq
    %v369 = vshrl.u32 %v368, 7
    %v370 = vsub.s32 0, %v369
    %v371 = vrot.slane %v364, %v370
    %v372 = vmul.f32 %v256, %v371
    %v373 = vmul.f32 %v258, %v371
    %v374 = vmul.f32 %v297, %v371
    %v375 = vlaneseq
    %v376 = vshrl.u32 %v375, 7
    %v377 = vsub.s32 0, %v376
    %v378 = vrot.slane %v367, %v377
    %v379 = vadd.f32 %v372, %v378
    %v380 = vadd.f32 %v373, %v378
    %v381 = vadd.f32 %v374, %v378
    %v382 = vmax.f32 %v379, 0.0
    %v383 = vmax.f32 %v380, 0.0
    %v384 = vmax.f32 %v381, 0.0
    %v385 = vpack.c.bf16 %v382, %v382
    %v386 = vpack.c.bf16 %v383, %v383
    %v387 = vpack.c.bf16 %v384, %v384
    %v388 = vld [vmem:[#allocation15] sm:$0xff]
    %v389 = vld [vmem:[#allocation15 + $0x8] sm:$0xff]
    %v390 = vld [vmem:[#allocation15 + $0x10] sm:$0xff]
    %v391 = vld [vmem:[#allocation15 + $0x18] sm:$0xff]
    %v392 = vld [vmem:[#allocation15 + $0x20] sm:$0xff]
    %v393 = vld [vmem:[#allocation15 + $0x28] sm:$0xff]
    %v394 = vld [vmem:[#allocation15 + $0x30] sm:$0xff]
    %v395 = vld [vmem:[#allocation15 + $0x38] sm:$0xff]
    %v396 = vld [vmem:[#allocation15 + $0x40] sm:$0xff]
    %v397 = vld [vmem:[#allocation15 + $0x48] sm:$0xff]
    %v398 = vld [vmem:[#allocation15 + $0x50] sm:$0xff]
    %v399 = vld [vmem:[#allocation15 + $0x58] sm:$0xff]
    %v400 = vld [vmem:[#allocation15 + $0x60] sm:$0xff]
    %v401 = vld [vmem:[#allocation15 + $0x68] sm:$0xff]
    %v402 = vld [vmem:[#allocation15 + $0x70] sm:$0xff]
    %v403 = vld [vmem:[#allocation15 + $0x78] sm:$0xff]
    %v404 = vld [vmem:[#allocation15 + $0x80] sm:$0xff]
    %v405 = vld [vmem:[#allocation15 + $0x88] sm:$0xff]
    %v406 = vld [vmem:[#allocation15 + $0x90] sm:$0xff]
    %v407 = vld [vmem:[#allocation15 + $0x98] sm:$0xff]
    %v408 = vld [vmem:[#allocation15 + $0xa0] sm:$0xff]
    %v409 = vld [vmem:[#allocation15 + $0xa8] sm:$0xff]
    %v410 = vld [vmem:[#allocation15 + $0xb0] sm:$0xff]
    %v411 = vld [vmem:[#allocation15 + $0xb8] sm:$0xff]
    %v412 = vld [vmem:[#allocation15 + $0xc0] sm:$0xff]
    %v413 = vld [vmem:[#allocation15 + $0xc8] sm:$0xff]
    %v414 = vld [vmem:[#allocation15 + $0xd0] sm:$0xff]
    %v415 = vld [vmem:[#allocation15 + $0xd8] sm:$0xff]
    %v416 = vld [vmem:[#allocation15 + $0xe0] sm:$0xff]
    %v417 = vld [vmem:[#allocation15 + $0xe8] sm:$0xff]
    %v418 = vld [vmem:[#allocation15 + $0xf0] sm:$0xff]
    %v419 = vld [vmem:[#allocation15 + $0xf8] sm:$0xff]
    %v420 = vld [vmem:[#allocation15 + $0x100] sm:$0xff]
    %v421 = vld [vmem:[#allocation15 + $0x108] sm:$0xff]
    %v422 = vld [vmem:[#allocation15 + $0x110] sm:$0xff]
    %v423 = vld [vmem:[#allocation15 + $0x118] sm:$0xff]
    %v424 = vld [vmem:[#allocation15 + $0x120] sm:$0xff]
    %v425 = vld [vmem:[#allocation15 + $0x128] sm:$0xff]
    %v426 = vld [vmem:[#allocation15 + $0x130] sm:$0xff]
    %v427 = vld [vmem:[#allocation15 + $0x138] sm:$0xff]
    %v428 = vld [vmem:[#allocation15 + $0x140] sm:$0xff]
    %v429 = vld [vmem:[#allocation15 + $0x148] sm:$0xff]
    %v430 = vld [vmem:[#allocation15 + $0x150] sm:$0xff]
    %v431 = vld [vmem:[#allocation15 + $0x158] sm:$0xff]
    %v432 = vld [vmem:[#allocation15 + $0x160] sm:$0xff]
    %v433 = vld [vmem:[#allocation15 + $0x168] sm:$0xff]
    %v434 = vld [vmem:[#allocation15 + $0x170] sm:$0xff]
    %v435 = vld [vmem:[#allocation15 + $0x178] sm:$0xff]
    %v436 = vld [vmem:[#allocation15 + $0x180] sm:$0xff]
    %v437 = vld [vmem:[#allocation15 + $0x188] sm:$0xff]
    %v438 = vld [vmem:[#allocation15 + $0x190] sm:$0xff]
    %v439 = vld [vmem:[#allocation15 + $0x198] sm:$0xff]
    %v440 = vld [vmem:[#allocation15 + $0x1a0] sm:$0xff]
    %v441 = vld [vmem:[#allocation15 + $0x1a8] sm:$0xff]
    %v442 = vld [vmem:[#allocation15 + $0x1b0] sm:$0xff]
    %v443 = vld [vmem:[#allocation15 + $0x1b8] sm:$0xff]
    %v444 = vld [vmem:[#allocation15 + $0x1c0] sm:$0xff]
    %v445 = vld [vmem:[#allocation15 + $0x1c8] sm:$0xff]
    %v446 = vld [vmem:[#allocation15 + $0x1d0] sm:$0xff]
    %v447 = vld [vmem:[#allocation15 + $0x1d8] sm:$0xff]
    %v448 = vld [vmem:[#allocation15 + $0x1e0] sm:$0xff]
    %v449 = vld [vmem:[#allocation15 + $0x1e8] sm:$0xff]
    %v450 = vld [vmem:[#allocation15 + $0x1f0] sm:$0xff]
    %v451 = vld [vmem:[#allocation15 + $0x1f8] sm:$0xff]
    %v452 = vld [vmem:[#allocation15 + $0x200] sm:$0xff]
    %v453 = vld [vmem:[#allocation15 + $0x208] sm:$0xff]
    %v454 = vld [vmem:[#allocation15 + $0x210] sm:$0xff]
    %v455 = vld [vmem:[#allocation15 + $0x218] sm:$0xff]
    %v456 = vld [vmem:[#allocation15 + $0x220] sm:$0xff]
    %v457 = vld [vmem:[#allocation15 + $0x228] sm:$0xff]
    %v458 = vld [vmem:[#allocation15 + $0x230] sm:$0xff]
    %v459 = vld [vmem:[#allocation15 + $0x238] sm:$0xff]
    %v460 = vld [vmem:[#allocation15 + $0x240] sm:$0xff]
    %v461 = vld [vmem:[#allocation15 + $0x248] sm:$0xff]
    %v462 = vld [vmem:[#allocation15 + $0x250] sm:$0xff]
    %v463 = vld [vmem:[#allocation15 + $0x258] sm:$0xff]
    %v464 = vld [vmem:[#allocation15 + $0x260] sm:$0xff]
    %v465 = vld [vmem:[#allocation15 + $0x268] sm:$0xff]
    %v466 = vld [vmem:[#allocation15 + $0x270] sm:$0xff]
    %v467 = vld [vmem:[#allocation15 + $0x278] sm:$0xff]
    %v468 = vld [vmem:[#allocation15 + $0x280] sm:$0xff]
    %v469 = vld [vmem:[#allocation15 + $0x288] sm:$0xff]
    %v470 = vld [vmem:[#allocation15 + $0x290] sm:$0xff]
    %v471 = vld [vmem:[#allocation15 + $0x298] sm:$0xff]
    %v472 = vld [vmem:[#allocation15 + $0x2a0] sm:$0xff]
    %v473 = vld [vmem:[#allocation15 + $0x2a8] sm:$0xff]
    %v474 = vld [vmem:[#allocation15 + $0x2b0] sm:$0xff]
    %v475 = vld [vmem:[#allocation15 + $0x2b8] sm:$0xff]
    %v476 = vld [vmem:[#allocation15 + $0x2c0] sm:$0xff]
    %v477 = vld [vmem:[#allocation15 + $0x2c8] sm:$0xff]
    %v478 = vld [vmem:[#allocation15 + $0x2d0] sm:$0xff]
    %v479 = vld [vmem:[#allocation15 + $0x2d8] sm:$0xff]
    %v480 = vld [vmem:[#allocation15 + $0x2e0] sm:$0xff]
    %v481 = vld [vmem:[#allocation15 + $0x2e8] sm:$0xff]
    %v482 = vld [vmem:[#allocation15 + $0x2f0] sm:$0xff]
    %v483 = vld [vmem:[#allocation15 + $0x2f8] sm:$0xff]
    %v484 = vld [vmem:[#allocation15 + $0x300] sm:$0xff]
    %v485 = vld [vmem:[#allocation15 + $0x308] sm:$0xff]
    %v486 = vld [vmem:[#allocation15 + $0x310] sm:$0xff]
    %v487 = vld [vmem:[#allocation15 + $0x318] sm:$0xff]
    %v488 = vld [vmem:[#allocation15 + $0x320] sm:$0xff]
    %v489 = vld [vmem:[#allocation15 + $0x328] sm:$0xff]
    %v490 = vld [vmem:[#allocation15 + $0x330] sm:$0xff]
    %v491 = vld [vmem:[#allocation15 + $0x338] sm:$0xff]
    %v492 = vld [vmem:[#allocation15 + $0x340] sm:$0xff]
    %v493 = vld [vmem:[#allocation15 + $0x348] sm:$0xff]
    %v494 = vld [vmem:[#allocation15 + $0x350] sm:$0xff]
    %v495 = vld [vmem:[#allocation15 + $0x358] sm:$0xff]
    %v496 = vld [vmem:[#allocation15 + $0x360] sm:$0xff]
    %v497 = vld [vmem:[#allocation15 + $0x368] sm:$0xff]
    %v498 = vld [vmem:[#allocation15 + $0x370] sm:$0xff]
    %v499 = vld [vmem:[#allocation15 + $0x378] sm:$0xff]
    %v500 = vld [vmem:[#allocation15 + $0x380] sm:$0xff]
    %v501 = vld [vmem:[#allocation15 + $0x388] sm:$0xff]
    %v502 = vld [vmem:[#allocation15 + $0x390] sm:$0xff]
    %v503 = vld [vmem:[#allocation15 + $0x398] sm:$0xff]
    %v504 = vld [vmem:[#allocation15 + $0x3a0] sm:$0xff]
    %v505 = vld [vmem:[#allocation15 + $0x3a8] sm:$0xff]
    %v506 = vld [vmem:[#allocation15 + $0x3b0] sm:$0xff]
    %v507 = vld [vmem:[#allocation15 + $0x3b8] sm:$0xff]
    %v508 = vld [vmem:[#allocation15 + $0x3c0] sm:$0xff]
    %v509 = vld [vmem:[#allocation15 + $0x3c8] sm:$0xff]
    %v510 = vld [vmem:[#allocation15 + $0x3d0] sm:$0xff]
    %v511 = vld [vmem:[#allocation15 + $0x3d8] sm:$0xff]
    %v512 = vld [vmem:[#allocation15 + $0x3e0] sm:$0xff]
    %v513 = vld [vmem:[#allocation15 + $0x3e8] sm:$0xff]
    %v514 = vld [vmem:[#allocation15 + $0x3f0] sm:$0xff]
    %v515 = vld [vmem:[#allocation15 + $0x3f8] sm:$0xff]
    %v516 = vld [vmem:[#allocation15 + $0x400] sm:$0xff]
    %v517 = vld [vmem:[#allocation15 + $0x408] sm:$0xff]
    %v518 = vld [vmem:[#allocation15 + $0x410] sm:$0xff]
    %v519 = vld [vmem:[#allocation15 + $0x418] sm:$0xff]
    %v520 = vld [vmem:[#allocation15 + $0x420] sm:$0xff]
    %v521 = vld [vmem:[#allocation15 + $0x428] sm:$0xff]
    %v522 = vld [vmem:[#allocation15 + $0x430] sm:$0xff]
    %v523 = vld [vmem:[#allocation15 + $0x438] sm:$0xff]
    %v524 = vld [vmem:[#allocation15 + $0x440] sm:$0xff]
    %v525 = vld [vmem:[#allocation15 + $0x448] sm:$0xff]
    %v526 = vld [vmem:[#allocation15 + $0x450] sm:$0xff]
    %v527 = vld [vmem:[#allocation15 + $0x458] sm:$0xff]
    %v528 = vld [vmem:[#allocation15 + $0x460] sm:$0xff]
    %v529 = vld [vmem:[#allocation15 + $0x468] sm:$0xff]
    %v530 = vld [vmem:[#allocation15 + $0x470] sm:$0xff]
    %v531 = vld [vmem:[#allocation15 + $0x478] sm:$0xff]
    %v532 = vld [vmem:[#allocation15 + $0x480] sm:$0xff]
    %v533 = vld [vmem:[#allocation15 + $0x488] sm:$0xff]
    %v534 = vld [vmem:[#allocation15 + $0x490] sm:$0xff]
    %v535 = vld [vmem:[#allocation15 + $0x498] sm:$0xff]
    %v536 = vld [vmem:[#allocation15 + $0x4a0] sm:$0xff]
    %v537 = vld [vmem:[#allocation15 + $0x4a8] sm:$0xff]
    %v538 = vld [vmem:[#allocation15 + $0x4b0] sm:$0xff]
    %v539 = vld [vmem:[#allocation15 + $0x4b8] sm:$0xff]
    %v540 = vld [vmem:[#allocation15 + $0x4c0] sm:$0xff]
    %v541 = vld [vmem:[#allocation15 + $0x4c8] sm:$0xff]
    %v542 = vld [vmem:[#allocation15 + $0x4d0] sm:$0xff]
    %v543 = vld [vmem:[#allocation15 + $0x4d8] sm:$0xff]
    %v544 = vld [vmem:[#allocation15 + $0x4e0] sm:$0xff]
    %v545 = vld [vmem:[#allocation15 + $0x4e8] sm:$0xff]
    %v546 = vld [vmem:[#allocation15 + $0x4f0] sm:$0xff]
    %v547 = vld [vmem:[#allocation15 + $0x4f8] sm:$0xff]
    %v548 = vld [vmem:[#allocation15 + $0x500] sm:$0xff]
    %v549 = vld [vmem:[#allocation15 + $0x508] sm:$0xff]
    %v550 = vld [vmem:[#allocation15 + $0x510] sm:$0xff]
    %v551 = vld [vmem:[#allocation15 + $0x518] sm:$0xff]
    %v552 = vld [vmem:[#allocation15 + $0x520] sm:$0xff]
    %v553 = vld [vmem:[#allocation15 + $0x528] sm:$0xff]
    %v554 = vld [vmem:[#allocation15 + $0x530] sm:$0xff]
    %v555 = vld [vmem:[#allocation15 + $0x538] sm:$0xff]
    %v556 = vld [vmem:[#allocation15 + $0x540] sm:$0xff]
    %v557 = vld [vmem:[#allocation15 + $0x548] sm:$0xff]
    %v558 = vld [vmem:[#allocation15 + $0x550] sm:$0xff]
    %v559 = vld [vmem:[#allocation15 + $0x558] sm:$0xff]
    %v560 = vld [vmem:[#allocation15 + $0x560] sm:$0xff]
    %v561 = vld [vmem:[#allocation15 + $0x568] sm:$0xff]
    %v562 = vld [vmem:[#allocation15 + $0x570] sm:$0xff]
    %v563 = vld [vmem:[#allocation15 + $0x578] sm:$0xff]
    %v564 = vld [vmem:[#allocation15 + $0x580] sm:$0xff]
    %v565 = vld [vmem:[#allocation15 + $0x588] sm:$0xff]
    %v566 = vld [vmem:[#allocation15 + $0x590] sm:$0xff]
    %v567 = vld [vmem:[#allocation15 + $0x598] sm:$0xff]
    %v568 = vld [vmem:[#allocation15 + $0x5a0] sm:$0xff]
    %v569 = vld [vmem:[#allocation15 + $0x5a8] sm:$0xff]
    %v570 = vld [vmem:[#allocation15 + $0x5b0] sm:$0xff]
    %v571 = vld [vmem:[#allocation15 + $0x5b8] sm:$0xff]
    %v572 = vld [vmem:[#allocation15 + $0x5c0] sm:$0xff]
    %v573 = vld [vmem:[#allocation15 + $0x5c8] sm:$0xff]
    %v574 = vld [vmem:[#allocation15 + $0x5d0] sm:$0xff]
    %v575 = vld [vmem:[#allocation15 + $0x5d8] sm:$0xff]
    %v576 = vld [vmem:[#allocation15 + $0x5e0] sm:$0xff]
    %v577 = vld [vmem:[#allocation15 + $0x5e8] sm:$0xff]
    %v578 = vld [vmem:[#allocation15 + $0x5f0] sm:$0xff]
    %v579 = vld [vmem:[#allocation15 + $0x5f8] sm:$0xff]
    %v580 = vld [vmem:[#allocation15 + $0x600] sm:$0xff]
    %v581 = vld [vmem:[#allocation15 + $0x608] sm:$0xff]
    %v582 = vld [vmem:[#allocation15 + $0x610] sm:$0xff]
    %v583 = vld [vmem:[#allocation15 + $0x618] sm:$0xff]
    %v584 = vld [vmem:[#allocation15 + $0x620] sm:$0xff]
    %v585 = vld [vmem:[#allocation15 + $0x628] sm:$0xff]
    %v586 = vld [vmem:[#allocation15 + $0x630] sm:$0xff]
    %v587 = vld [vmem:[#allocation15 + $0x638] sm:$0xff]
    %v588 = vld [vmem:[#allocation15 + $0x640] sm:$0xff]
    %v589 = vld [vmem:[#allocation15 + $0x648] sm:$0xff]
    %v590 = vld [vmem:[#allocation15 + $0x650] sm:$0xff]
    %v591 = vld [vmem:[#allocation15 + $0x658] sm:$0xff]
    %v592 = vld [vmem:[#allocation15 + $0x660] sm:$0xff]
    %v593 = vld [vmem:[#allocation15 + $0x668] sm:$0xff]
    %v594 = vld [vmem:[#allocation15 + $0x670] sm:$0xff]
    %v595 = vld [vmem:[#allocation15 + $0x678] sm:$0xff]
    %v596 = vld [vmem:[#allocation15 + $0x680] sm:$0xff]
    %v597 = vld [vmem:[#allocation15 + $0x688] sm:$0xff]
    %v598 = vld [vmem:[#allocation15 + $0x690] sm:$0xff]
    %v599 = vld [vmem:[#allocation15 + $0x698] sm:$0xff]
    %v600 = vld [vmem:[#allocation15 + $0x6a0] sm:$0xff]
    %v601 = vld [vmem:[#allocation15 + $0x6a8] sm:$0xff]
    %v602 = vld [vmem:[#allocation15 + $0x6b0] sm:$0xff]
    %v603 = vld [vmem:[#allocation15 + $0x6b8] sm:$0xff]
    %v604 = vld [vmem:[#allocation15 + $0x6c0] sm:$0xff]
    %v605 = vld [vmem:[#allocation15 + $0x6c8] sm:$0xff]
    %v606 = vld [vmem:[#allocation15 + $0x6d0] sm:$0xff]
    %v607 = vld [vmem:[#allocation15 + $0x6d8] sm:$0xff]
    %v608 = vld [vmem:[#allocation15 + $0x6e0] sm:$0xff]
    %v609 = vld [vmem:[#allocation15 + $0x6e8] sm:$0xff]
    %v610 = vld [vmem:[#allocation15 + $0x6f0] sm:$0xff]
    %v611 = vld [vmem:[#allocation15 + $0x6f8] sm:$0xff]
    %v612 = vld [vmem:[#allocation15 + $0x700] sm:$0xff]
    %v613 = vld [vmem:[#allocation15 + $0x708] sm:$0xff]
    %v614 = vld [vmem:[#allocation15 + $0x710] sm:$0xff]
    %v615 = vld [vmem:[#allocation15 + $0x718] sm:$0xff]
    %v616 = vld [vmem:[#allocation15 + $0x720] sm:$0xff]
    %v617 = vld [vmem:[#allocation15 + $0x728] sm:$0xff]
    %v618 = vld [vmem:[#allocation15 + $0x730] sm:$0xff]
    %v619 = vld [vmem:[#allocation15 + $0x738] sm:$0xff]
    %v620 = vld [vmem:[#allocation15 + $0x740] sm:$0xff]
    %v621 = vld [vmem:[#allocation15 + $0x748] sm:$0xff]
    %v622 = vld [vmem:[#allocation15 + $0x750] sm:$0xff]
    %v623 = vld [vmem:[#allocation15 + $0x758] sm:$0xff]
    %v624 = vld [vmem:[#allocation15 + $0x760] sm:$0xff]
    %v625 = vld [vmem:[#allocation15 + $0x768] sm:$0xff]
    %v626 = vld [vmem:[#allocation15 + $0x770] sm:$0xff]
    %v627 = vld [vmem:[#allocation15 + $0x778] sm:$0xff]
    %v628 = vld [vmem:[#allocation15 + $0x780] sm:$0xff]
    %v629 = vld [vmem:[#allocation15 + $0x788] sm:$0xff]
    %v630 = vld [vmem:[#allocation15 + $0x790] sm:$0xff]
    %v631 = vld [vmem:[#allocation15 + $0x798] sm:$0xff]
    %v632 = vld [vmem:[#allocation15 + $0x7a0] sm:$0xff]
    %v633 = vld [vmem:[#allocation15 + $0x7a8] sm:$0xff]
    %v634 = vld [vmem:[#allocation15 + $0x7b0] sm:$0xff]
    %v635 = vld [vmem:[#allocation15 + $0x7b8] sm:$0xff]
    %v636 = vld [vmem:[#allocation15 + $0x7c0] sm:$0xff]
    %v637 = vld [vmem:[#allocation15 + $0x7c8] sm:$0xff]
    %v638 = vld [vmem:[#allocation15 + $0x7d0] sm:$0xff]
    %v639 = vld [vmem:[#allocation15 + $0x7d8] sm:$0xff]
    %v640 = vld [vmem:[#allocation15 + $0x7e0] sm:$0xff]
    %v641 = vld [vmem:[#allocation15 + $0x7e8] sm:$0xff]
    %v642 = vld [vmem:[#allocation15 + $0x7f0] sm:$0xff]
    %v643 = vld [vmem:[#allocation15 + $0x7f8] sm:$0xff]
    %v644 = vld [vmem:[#allocation15 + $0x800] sm:$0xff]
    %v645 = vld [vmem:[#allocation15 + $0x808] sm:$0xff]
    %v646 = vld [vmem:[#allocation15 + $0x810] sm:$0xff]
    %v647 = vld [vmem:[#allocation15 + $0x818] sm:$0xff]
    %v648 = vld [vmem:[#allocation15 + $0x820] sm:$0xff]
    %v649 = vld [vmem:[#allocation15 + $0x828] sm:$0xff]
    %v650 = vld [vmem:[#allocation15 + $0x830] sm:$0xff]
    %v651 = vld [vmem:[#allocation15 + $0x838] sm:$0xff]
    %v652 = vld [vmem:[#allocation15 + $0x840] sm:$0xff]
    %v653 = vld [vmem:[#allocation15 + $0x848] sm:$0xff]
    %v654 = vld [vmem:[#allocation15 + $0x850] sm:$0xff]
    %v655 = vld [vmem:[#allocation15 + $0x858] sm:$0xff]
    %v656 = vld [vmem:[#allocation15 + $0x860] sm:$0xff]
    %v657 = vld [vmem:[#allocation15 + $0x868] sm:$0xff]
    %v658 = vld [vmem:[#allocation15 + $0x870] sm:$0xff]
    %v659 = vld [vmem:[#allocation15 + $0x878] sm:$0xff]
    %v660 = vld [vmem:[#allocation15 + $0x880] sm:$0xff]
    %v661 = vld [vmem:[#allocation15 + $0x888] sm:$0xff]
    %v662 = vld [vmem:[#allocation15 + $0x890] sm:$0xff]
    %v663 = vld [vmem:[#allocation15 + $0x898] sm:$0xff]
    %v664 = vld [vmem:[#allocation15 + $0x8a0] sm:$0xff]
    %v665 = vld [vmem:[#allocation15 + $0x8a8] sm:$0xff]
    %v666 = vld [vmem:[#allocation15 + $0x8b0] sm:$0xff]
    %v667 = vld [vmem:[#allocation15 + $0x8b8] sm:$0xff]
    %v668 = vld [vmem:[#allocation15 + $0x8c0] sm:$0xff]
    %v669 = vld [vmem:[#allocation15 + $0x8c8] sm:$0xff]
    %v670 = vld [vmem:[#allocation15 + $0x8d0] sm:$0xff]
    %v671 = vld [vmem:[#allocation15 + $0x8d8] sm:$0xff]
    %v672 = vld [vmem:[#allocation15 + $0x8e0] sm:$0xff]
    %v673 = vld [vmem:[#allocation15 + $0x8e8] sm:$0xff]
    %v674 = vld [vmem:[#allocation15 + $0x8f0] sm:$0xff]
    %v675 = vld [vmem:[#allocation15 + $0x8f8] sm:$0xff]
    %v964 = vunpack.c.l.b16 %v388
    %v965 = vunpack.c.h.b16 %v388
    %v966 = vunpack.c.l.b16 %v389
    %v967 = vunpack.c.h.b16 %v389
    %v968 = vunpack.c.l.b16 %v390
    %v969 = vunpack.c.h.b16 %v390
    %v970 = vunpack.c.l.b16 %v391
    %v971 = vunpack.c.h.b16 %v391
    %v972 = vunpack.c.l.b16 %v392
    %v973 = vunpack.c.h.b16 %v392
    %v974 = vunpack.c.l.b16 %v393
    %v975 = vunpack.c.h.b16 %v393
    %v976 = vunpack.c.l.b16 %v394
    %v977 = vunpack.c.h.b16 %v394
    %v978 = vunpack.c.l.b16 %v395
    %v979 = vunpack.c.h.b16 %v395
    %v980 = vunpack.c.l.b16 %v396
    %v981 = vunpack.c.h.b16 %v396
    %v982 = vunpack.c.l.b16 %v397
    %v983 = vunpack.c.h.b16 %v397
    %v984 = vunpack.c.l.b16 %v398
    %v985 = vunpack.c.h.b16 %v398
    %v986 = vunpack.c.l.b16 %v399
    %v987 = vunpack.c.h.b16 %v399
    %v988 = vunpack.c.l.b16 %v400
    %v989 = vunpack.c.h.b16 %v400
    %v990 = vunpack.c.l.b16 %v401
    %v991 = vunpack.c.h.b16 %v401
    %v992 = vunpack.c.l.b16 %v402
    %v993 = vunpack.c.h.b16 %v402
    %v994 = vunpack.c.l.b16 %v403
    %v995 = vunpack.c.h.b16 %v403
    %v996 = vunpack.c.l.b16 %v404
    %v997 = vunpack.c.h.b16 %v404
    %v998 = vunpack.c.l.b16 %v405
    %v999 = vunpack.c.h.b16 %v405
    %v1000 = vunpack.c.l.b16 %v406
    %v1001 = vunpack.c.h.b16 %v406
    %v1002 = vunpack.c.l.b16 %v407
    %v1003 = vunpack.c.h.b16 %v407
    %v1004 = vunpack.c.l.b16 %v408
    %v1005 = vunpack.c.h.b16 %v408
    %v1006 = vunpack.c.l.b16 %v409
    %v1007 = vunpack.c.h.b16 %v409
    %v1008 = vunpack.c.l.b16 %v410
    %v1009 = vunpack.c.h.b16 %v410
    %v1010 = vunpack.c.l.b16 %v411
    %v1011 = vunpack.c.h.b16 %v411
    %v1012 = vunpack.c.l.b16 %v412
    %v1013 = vunpack.c.h.b16 %v412
    %v1014 = vunpack.c.l.b16 %v413
    %v1015 = vunpack.c.h.b16 %v413
    %v1016 = vunpack.c.l.b16 %v414
    %v1017 = vunpack.c.h.b16 %v414
    %v1018 = vunpack.c.l.b16 %v415
    %v1019 = vunpack.c.h.b16 %v415
    %v1020 = vunpack.c.l.b16 %v416
    %v1021 = vunpack.c.h.b16 %v416
    %v1022 = vunpack.c.l.b16 %v417
    %v1023 = vunpack.c.h.b16 %v417
    %v1024 = vunpack.c.l.b16 %v418
    %v1025 = vunpack.c.h.b16 %v418
    %v1026 = vunpack.c.l.b16 %v419
    %v1027 = vunpack.c.h.b16 %v419
    %v1028 = vunpack.c.l.b16 %v420
    %v1029 = vunpack.c.h.b16 %v420
    %v1030 = vunpack.c.l.b16 %v421
    %v1031 = vunpack.c.h.b16 %v421
    %v1032 = vunpack.c.l.b16 %v422
    %v1033 = vunpack.c.h.b16 %v422
    %v1034 = vunpack.c.l.b16 %v423
    %v1035 = vunpack.c.h.b16 %v423
    %v1036 = vunpack.c.l.b16 %v424
    %v1037 = vunpack.c.h.b16 %v424
    %v1038 = vunpack.c.l.b16 %v425
    %v1039 = vunpack.c.h.b16 %v425
    %v1040 = vunpack.c.l.b16 %v426
    %v1041 = vunpack.c.h.b16 %v426
    %v1042 = vunpack.c.l.b16 %v427
    %v1043 = vunpack.c.h.b16 %v427
    %v1044 = vunpack.c.l.b16 %v428
    %v1045 = vunpack.c.h.b16 %v428
    %v1046 = vunpack.c.l.b16 %v429
    %v1047 = vunpack.c.h.b16 %v429
    %v1048 = vunpack.c.l.b16 %v430
    %v1049 = vunpack.c.h.b16 %v430
    %v1050 = vunpack.c.l.b16 %v431
    %v1051 = vunpack.c.h.b16 %v431
    %v1052 = vunpack.c.l.b16 %v432
    %v1053 = vunpack.c.h.b16 %v432
    %v1054 = vunpack.c.l.b16 %v433
    %v1055 = vunpack.c.h.b16 %v433
    %v1056 = vunpack.c.l.b16 %v434
    %v1057 = vunpack.c.h.b16 %v434
    %v1058 = vunpack.c.l.b16 %v435
    %v1059 = vunpack.c.h.b16 %v435
    %v1060 = vunpack.c.l.b16 %v436
    %v1061 = vunpack.c.h.b16 %v436
    %v1062 = vunpack.c.l.b16 %v437
    %v1063 = vunpack.c.h.b16 %v437
    %v1064 = vunpack.c.l.b16 %v438
    %v1065 = vunpack.c.h.b16 %v438
    %v1066 = vunpack.c.l.b16 %v439
    %v1067 = vunpack.c.h.b16 %v439
    %v1068 = vunpack.c.l.b16 %v440
    %v1069 = vunpack.c.h.b16 %v440
    %v1070 = vunpack.c.l.b16 %v441
    %v1071 = vunpack.c.h.b16 %v441
    %v1072 = vunpack.c.l.b16 %v442
    %v1073 = vunpack.c.h.b16 %v442
    %v1074 = vunpack.c.l.b16 %v443
    %v1075 = vunpack.c.h.b16 %v443
    %v1076 = vunpack.c.l.b16 %v444
    %v1077 = vunpack.c.h.b16 %v444
    %v1078 = vunpack.c.l.b16 %v445
    %v1079 = vunpack.c.h.b16 %v445
    %v1080 = vunpack.c.l.b16 %v446
    %v1081 = vunpack.c.h.b16 %v446
    %v1082 = vunpack.c.l.b16 %v447
    %v1083 = vunpack.c.h.b16 %v447
    %v1084 = vunpack.c.l.b16 %v448
    %v1085 = vunpack.c.h.b16 %v448
    %v1086 = vunpack.c.l.b16 %v449
    %v1087 = vunpack.c.h.b16 %v449
    %v1088 = vunpack.c.l.b16 %v450
    %v1089 = vunpack.c.h.b16 %v450
    %v1090 = vunpack.c.l.b16 %v451
    %v1091 = vunpack.c.h.b16 %v451
    %v1092 = vunpack.c.l.b16 %v452
    %v1093 = vunpack.c.h.b16 %v452
    %v1094 = vunpack.c.l.b16 %v453
    %v1095 = vunpack.c.h.b16 %v453
    %v1096 = vunpack.c.l.b16 %v454
    %v1097 = vunpack.c.h.b16 %v454
    %v1098 = vunpack.c.l.b16 %v455
    %v1099 = vunpack.c.h.b16 %v455
    %v1100 = vunpack.c.l.b16 %v456
    %v1101 = vunpack.c.h.b16 %v456
    %v1102 = vunpack.c.l.b16 %v457
    %v1103 = vunpack.c.h.b16 %v457
    %v1104 = vunpack.c.l.b16 %v458
    %v1105 = vunpack.c.h.b16 %v458
    %v1106 = vunpack.c.l.b16 %v459
    %v1107 = vunpack.c.h.b16 %v459
    %v1108 = vunpack.c.l.b16 %v460
    %v1109 = vunpack.c.h.b16 %v460
    %v1110 = vunpack.c.l.b16 %v461
    %v1111 = vunpack.c.h.b16 %v461
    %v1112 = vunpack.c.l.b16 %v462
    %v1113 = vunpack.c.h.b16 %v462
    %v1114 = vunpack.c.l.b16 %v463
    %v1115 = vunpack.c.h.b16 %v463
    %v1116 = vunpack.c.l.b16 %v464
    %v1117 = vunpack.c.h.b16 %v464
    %v1118 = vunpack.c.l.b16 %v465
    %v1119 = vunpack.c.h.b16 %v465
    %v1120 = vunpack.c.l.b16 %v466
    %v1121 = vunpack.c.h.b16 %v466
    %v1122 = vunpack.c.l.b16 %v467
    %v1123 = vunpack.c.h.b16 %v467
    %v1124 = vunpack.c.l.b16 %v468
    %v1125 = vunpack.c.h.b16 %v468
    %v1126 = vunpack.c.l.b16 %v469
    %v1127 = vunpack.c.h.b16 %v469
    %v1128 = vunpack.c.l.b16 %v470
    %v1129 = vunpack.c.h.b16 %v470
    %v1130 = vunpack.c.l.b16 %v471
    %v1131 = vunpack.c.h.b16 %v471
    %v1132 = vunpack.c.l.b16 %v472
    %v1133 = vunpack.c.h.b16 %v472
    %v1134 = vunpack.c.l.b16 %v473
    %v1135 = vunpack.c.h.b16 %v473
    %v1136 = vunpack.c.l.b16 %v474
    %v1137 = vunpack.c.h.b16 %v474
    %v1138 = vunpack.c.l.b16 %v475
    %v1139 = vunpack.c.h.b16 %v475
    %v1140 = vunpack.c.l.b16 %v476
    %v1141 = vunpack.c.h.b16 %v476
    %v1142 = vunpack.c.l.b16 %v477
    %v1143 = vunpack.c.h.b16 %v477
    %v1144 = vunpack.c.l.b16 %v478
    %v1145 = vunpack.c.h.b16 %v478
    %v1146 = vunpack.c.l.b16 %v479
    %v1147 = vunpack.c.h.b16 %v479
    %v1148 = vunpack.c.l.b16 %v480
    %v1149 = vunpack.c.h.b16 %v480
    %v1150 = vunpack.c.l.b16 %v481
    %v1151 = vunpack.c.h.b16 %v481
    %v1152 = vunpack.c.l.b16 %v482
    %v1153 = vunpack.c.h.b16 %v482
    %v1154 = vunpack.c.l.b16 %v483
    %v1155 = vunpack.c.h.b16 %v483
    %v1156 = vunpack.c.l.b16 %v484
    %v1157 = vunpack.c.h.b16 %v484
    %v1158 = vunpack.c.l.b16 %v485
    %v1159 = vunpack.c.h.b16 %v485
    %v1160 = vunpack.c.l.b16 %v486
    %v1161 = vunpack.c.h.b16 %v486
    %v1162 = vunpack.c.l.b16 %v487
    %v1163 = vunpack.c.h.b16 %v487
    %v1164 = vunpack.c.l.b16 %v488
    %v1165 = vunpack.c.h.b16 %v488
    %v1166 = vunpack.c.l.b16 %v489
    %v1167 = vunpack.c.h.b16 %v489
    %v1168 = vunpack.c.l.b16 %v490
    %v1169 = vunpack.c.h.b16 %v490
    %v1170 = vunpack.c.l.b16 %v491
    %v1171 = vunpack.c.h.b16 %v491
    %v1172 = vunpack.c.l.b16 %v492
    %v1173 = vunpack.c.h.b16 %v492
    %v1174 = vunpack.c.l.b16 %v493
    %v1175 = vunpack.c.h.b16 %v493
    %v1176 = vunpack.c.l.b16 %v494
    %v1177 = vunpack.c.h.b16 %v494
    %v1178 = vunpack.c.l.b16 %v495
    %v1179 = vunpack.c.h.b16 %v495
    %v1180 = vunpack.c.l.b16 %v496
    %v1181 = vunpack.c.h.b16 %v496
    %v1182 = vunpack.c.l.b16 %v497
    %v1183 = vunpack.c.h.b16 %v497
    %v1184 = vunpack.c.l.b16 %v498
    %v1185 = vunpack.c.h.b16 %v498
    %v1186 = vunpack.c.l.b16 %v499
    %v1187 = vunpack.c.h.b16 %v499
    %v1188 = vunpack.c.l.b16 %v500
    %v1189 = vunpack.c.h.b16 %v500
    %v1190 = vunpack.c.l.b16 %v501
    %v1191 = vunpack.c.h.b16 %v501
    %v1192 = vunpack.c.l.b16 %v502
    %v1193 = vunpack.c.h.b16 %v502
    %v1194 = vunpack.c.l.b16 %v503
    %v1195 = vunpack.c.h.b16 %v503
    %v1196 = vunpack.c.l.b16 %v504
    %v1197 = vunpack.c.h.b16 %v504
    %v1198 = vunpack.c.l.b16 %v505
    %v1199 = vunpack.c.h.b16 %v505
    %v1200 = vunpack.c.l.b16 %v506
    %v1201 = vunpack.c.h.b16 %v506
    %v1202 = vunpack.c.l.b16 %v507
    %v1203 = vunpack.c.h.b16 %v507
    %v1204 = vunpack.c.l.b16 %v508
    %v1205 = vunpack.c.h.b16 %v508
    %v1206 = vunpack.c.l.b16 %v509
    %v1207 = vunpack.c.h.b16 %v509
    %v1208 = vunpack.c.l.b16 %v510
    %v1209 = vunpack.c.h.b16 %v510
    %v1210 = vunpack.c.l.b16 %v511
    %v1211 = vunpack.c.h.b16 %v511
    %v1212 = vunpack.c.l.b16 %v512
    %v1213 = vunpack.c.h.b16 %v512
    %v1214 = vunpack.c.l.b16 %v513
    %v1215 = vunpack.c.h.b16 %v513
    %v1216 = vunpack.c.l.b16 %v514
    %v1217 = vunpack.c.h.b16 %v514
    %v1218 = vunpack.c.l.b16 %v515
    %v1219 = vunpack.c.h.b16 %v515
    %v1220 = vunpack.c.l.b16 %v516
    %v1221 = vunpack.c.h.b16 %v516
    %v1222 = vunpack.c.l.b16 %v517
    %v1223 = vunpack.c.h.b16 %v517
    %v1224 = vunpack.c.l.b16 %v518
    %v1225 = vunpack.c.h.b16 %v518
    %v1226 = vunpack.c.l.b16 %v519
    %v1227 = vunpack.c.h.b16 %v519
    %v1228 = vunpack.c.l.b16 %v520
    %v1229 = vunpack.c.h.b16 %v520
    %v1230 = vunpack.c.l.b16 %v521
    %v1231 = vunpack.c.h.b16 %v521
    %v1232 = vunpack.c.l.b16 %v522
    %v1233 = vunpack.c.h.b16 %v522
    %v1234 = vunpack.c.l.b16 %v523
    %v1235 = vunpack.c.h.b16 %v523
    %v1236 = vunpack.c.l.b16 %v524
    %v1237 = vunpack.c.h.b16 %v524
    %v1238 = vunpack.c.l.b16 %v525
    %v1239 = vunpack.c.h.b16 %v525
    %v1240 = vunpack.c.l.b16 %v526
    %v1241 = vunpack.c.h.b16 %v526
    %v1242 = vunpack.c.l.b16 %v527
    %v1243 = vunpack.c.h.b16 %v527
    %v1244 = vunpack.c.l.b16 %v528
    %v1245 = vunpack.c.h.b16 %v528
    %v1246 = vunpack.c.l.b16 %v529
    %v1247 = vunpack.c.h.b16 %v529
    %v1248 = vunpack.c.l.b16 %v530
    %v1249 = vunpack.c.h.b16 %v530
    %v1250 = vunpack.c.l.b16 %v531
    %v1251 = vunpack.c.h.b16 %v531
    %v1252 = vunpack.c.l.b16 %v532
    %v1253 = vunpack.c.h.b16 %v532
    %v1254 = vunpack.c.l.b16 %v533
    %v1255 = vunpack.c.h.b16 %v533
    %v1256 = vunpack.c.l.b16 %v534
    %v1257 = vunpack.c.h.b16 %v534
    %v1258 = vunpack.c.l.b16 %v535
    %v1259 = vunpack.c.h.b16 %v535
    %v1260 = vunpack.c.l.b16 %v536
    %v1261 = vunpack.c.h.b16 %v536
    %v1262 = vunpack.c.l.b16 %v537
    %v1263 = vunpack.c.h.b16 %v537
    %v1264 = vunpack.c.l.b16 %v538
    %v1265 = vunpack.c.h.b16 %v538
    %v1266 = vunpack.c.l.b16 %v539
    %v1267 = vunpack.c.h.b16 %v539
    %v1268 = vunpack.c.l.b16 %v540
    %v1269 = vunpack.c.h.b16 %v540
    %v1270 = vunpack.c.l.b16 %v541
    %v1271 = vunpack.c.h.b16 %v541
    %v1272 = vunpack.c.l.b16 %v542
    %v1273 = vunpack.c.h.b16 %v542
    %v1274 = vunpack.c.l.b16 %v543
    %v1275 = vunpack.c.h.b16 %v543
    %v1276 = vunpack.c.l.b16 %v544
    %v1277 = vunpack.c.h.b16 %v544
    %v1278 = vunpack.c.l.b16 %v545
    %v1279 = vunpack.c.h.b16 %v545
    %v1280 = vunpack.c.l.b16 %v546
    %v1281 = vunpack.c.h.b16 %v546
    %v1282 = vunpack.c.l.b16 %v547
    %v1283 = vunpack.c.h.b16 %v547
    %v1284 = vunpack.c.l.b16 %v548
    %v1285 = vunpack.c.h.b16 %v548
    %v1286 = vunpack.c.l.b16 %v549
    %v1287 = vunpack.c.h.b16 %v549
    %v1288 = vunpack.c.l.b16 %v550
    %v1289 = vunpack.c.h.b16 %v550
    %v1290 = vunpack.c.l.b16 %v551
    %v1291 = vunpack.c.h.b16 %v551
    %v1292 = vunpack.c.l.b16 %v552
    %v1293 = vunpack.c.h.b16 %v552
    %v1294 = vunpack.c.l.b16 %v553
    %v1295 = vunpack.c.h.b16 %v553
    %v1296 = vunpack.c.l.b16 %v554
    %v1297 = vunpack.c.h.b16 %v554
    %v1298 = vunpack.c.l.b16 %v555
    %v1299 = vunpack.c.h.b16 %v555
    %v1300 = vunpack.c.l.b16 %v556
    %v1301 = vunpack.c.h.b16 %v556
    %v1302 = vunpack.c.l.b16 %v557
    %v1303 = vunpack.c.h.b16 %v557
    %v1304 = vunpack.c.l.b16 %v558
    %v1305 = vunpack.c.h.b16 %v558
    %v1306 = vunpack.c.l.b16 %v559
    %v1307 = vunpack.c.h.b16 %v559
    %v1308 = vunpack.c.l.b16 %v560
    %v1309 = vunpack.c.h.b16 %v560
    %v1310 = vunpack.c.l.b16 %v561
    %v1311 = vunpack.c.h.b16 %v561
    %v1312 = vunpack.c.l.b16 %v562
    %v1313 = vunpack.c.h.b16 %v562
    %v1314 = vunpack.c.l.b16 %v563
    %v1315 = vunpack.c.h.b16 %v563
    %v1316 = vunpack.c.l.b16 %v564
    %v1317 = vunpack.c.h.b16 %v564
    %v1318 = vunpack.c.l.b16 %v565
    %v1319 = vunpack.c.h.b16 %v565
    %v1320 = vunpack.c.l.b16 %v566
    %v1321 = vunpack.c.h.b16 %v566
    %v1322 = vunpack.c.l.b16 %v567
    %v1323 = vunpack.c.h.b16 %v567
    %v1324 = vunpack.c.l.b16 %v568
    %v1325 = vunpack.c.h.b16 %v568
    %v1326 = vunpack.c.l.b16 %v569
    %v1327 = vunpack.c.h.b16 %v569
    %v1328 = vunpack.c.l.b16 %v570
    %v1329 = vunpack.c.h.b16 %v570
    %v1330 = vunpack.c.l.b16 %v571
    %v1331 = vunpack.c.h.b16 %v571
    %v1332 = vunpack.c.l.b16 %v572
    %v1333 = vunpack.c.h.b16 %v572
    %v1334 = vunpack.c.l.b16 %v573
    %v1335 = vunpack.c.h.b16 %v573
    %v1336 = vunpack.c.l.b16 %v574
    %v1337 = vunpack.c.h.b16 %v574
    %v1338 = vunpack.c.l.b16 %v575
    %v1339 = vunpack.c.h.b16 %v575
    %v1340 = vunpack.c.l.b16 %v576
    %v1341 = vunpack.c.h.b16 %v576
    %v1342 = vunpack.c.l.b16 %v577
    %v1343 = vunpack.c.h.b16 %v577
    %v1344 = vunpack.c.l.b16 %v578
    %v1345 = vunpack.c.h.b16 %v578
    %v1346 = vunpack.c.l.b16 %v579
    %v1347 = vunpack.c.h.b16 %v579
    %v1348 = vunpack.c.l.b16 %v580
    %v1349 = vunpack.c.h.b16 %v580
    %v1350 = vunpack.c.l.b16 %v581
    %v1351 = vunpack.c.h.b16 %v581
    %v1352 = vunpack.c.l.b16 %v582
    %v1353 = vunpack.c.h.b16 %v582
    %v1354 = vunpack.c.l.b16 %v583
    %v1355 = vunpack.c.h.b16 %v583
    %v1356 = vunpack.c.l.b16 %v584
    %v1357 = vunpack.c.h.b16 %v584
    %v1358 = vunpack.c.l.b16 %v585
    %v1359 = vunpack.c.h.b16 %v585
    %v1360 = vunpack.c.l.b16 %v586
    %v1361 = vunpack.c.h.b16 %v586
    %v1362 = vunpack.c.l.b16 %v587
    %v1363 = vunpack.c.h.b16 %v587
    %v1364 = vunpack.c.l.b16 %v588
    %v1365 = vunpack.c.h.b16 %v588
    %v1366 = vunpack.c.l.b16 %v589
    %v1367 = vunpack.c.h.b16 %v589
    %v1368 = vunpack.c.l.b16 %v590
    %v1369 = vunpack.c.h.b16 %v590
    %v1370 = vunpack.c.l.b16 %v591
    %v1371 = vunpack.c.h.b16 %v591
    %v1372 = vunpack.c.l.b16 %v592
    %v1373 = vunpack.c.h.b16 %v592
    %v1374 = vunpack.c.l.b16 %v593
    %v1375 = vunpack.c.h.b16 %v593
    %v1376 = vunpack.c.l.b16 %v594
    %v1377 = vunpack.c.h.b16 %v594
    %v1378 = vunpack.c.l.b16 %v595
    %v1379 = vunpack.c.h.b16 %v595
    %v1380 = vunpack.c.l.b16 %v596
    %v1381 = vunpack.c.h.b16 %v596
    %v1382 = vunpack.c.l.b16 %v597
    %v1383 = vunpack.c.h.b16 %v597
    %v1384 = vunpack.c.l.b16 %v598
    %v1385 = vunpack.c.h.b16 %v598
    %v1386 = vunpack.c.l.b16 %v599
    %v1387 = vunpack.c.h.b16 %v599
    %v1388 = vunpack.c.l.b16 %v600
    %v1389 = vunpack.c.h.b16 %v600
    %v1390 = vunpack.c.l.b16 %v601
    %v1391 = vunpack.c.h.b16 %v601
    %v1392 = vunpack.c.l.b16 %v602
    %v1393 = vunpack.c.h.b16 %v602
    %v1394 = vunpack.c.l.b16 %v603
    %v1395 = vunpack.c.h.b16 %v603
    %v1396 = vunpack.c.l.b16 %v604
    %v1397 = vunpack.c.h.b16 %v604
    %v1398 = vunpack.c.l.b16 %v605
    %v1399 = vunpack.c.h.b16 %v605
    %v1400 = vunpack.c.l.b16 %v606
    %v1401 = vunpack.c.h.b16 %v606
    %v1402 = vunpack.c.l.b16 %v607
    %v1403 = vunpack.c.h.b16 %v607
    %v1404 = vunpack.c.l.b16 %v608
    %v1405 = vunpack.c.h.b16 %v608
    %v1406 = vunpack.c.l.b16 %v609
    %v1407 = vunpack.c.h.b16 %v609
    %v1408 = vunpack.c.l.b16 %v610
    %v1409 = vunpack.c.h.b16 %v610
    %v1410 = vunpack.c.l.b16 %v611
    %v1411 = vunpack.c.h.b16 %v611
    %v1412 = vunpack.c.l.b16 %v612
    %v1413 = vunpack.c.h.b16 %v612
    %v1414 = vunpack.c.l.b16 %v613
    %v1415 = vunpack.c.h.b16 %v613
    %v1416 = vunpack.c.l.b16 %v614
    %v1417 = vunpack.c.h.b16 %v614
    %v1418 = vunpack.c.l.b16 %v615
    %v1419 = vunpack.c.h.b16 %v615
    %v1420 = vunpack.c.l.b16 %v616
    %v1421 = vunpack.c.h.b16 %v616
    %v1422 = vunpack.c.l.b16 %v617
    %v1423 = vunpack.c.h.b16 %v617
    %v1424 = vunpack.c.l.b16 %v618
    %v1425 = vunpack.c.h.b16 %v618
    %v1426 = vunpack.c.l.b16 %v619
    %v1427 = vunpack.c.h.b16 %v619
    %v1428 = vunpack.c.l.b16 %v620
    %v1429 = vunpack.c.h.b16 %v620
    %v1430 = vunpack.c.l.b16 %v621
    %v1431 = vunpack.c.h.b16 %v621
    %v1432 = vunpack.c.l.b16 %v622
    %v1433 = vunpack.c.h.b16 %v622
    %v1434 = vunpack.c.l.b16 %v623
    %v1435 = vunpack.c.h.b16 %v623
    %v1436 = vunpack.c.l.b16 %v624
    %v1437 = vunpack.c.h.b16 %v624
    %v1438 = vunpack.c.l.b16 %v625
    %v1439 = vunpack.c.h.b16 %v625
    %v1440 = vunpack.c.l.b16 %v626
    %v1441 = vunpack.c.h.b16 %v626
    %v1442 = vunpack.c.l.b16 %v627
    %v1443 = vunpack.c.h.b16 %v627
    %v1444 = vunpack.c.l.b16 %v628
    %v1445 = vunpack.c.h.b16 %v628
    %v1446 = vunpack.c.l.b16 %v629
    %v1447 = vunpack.c.h.b16 %v629
    %v1448 = vunpack.c.l.b16 %v630
    %v1449 = vunpack.c.h.b16 %v630
    %v1450 = vunpack.c.l.b16 %v631
    %v1451 = vunpack.c.h.b16 %v631
    %v1452 = vunpack.c.l.b16 %v632
    %v1453 = vunpack.c.h.b16 %v632
    %v1454 = vunpack.c.l.b16 %v633
    %v1455 = vunpack.c.h.b16 %v633
    %v1456 = vunpack.c.l.b16 %v634
    %v1457 = vunpack.c.h.b16 %v634
    %v1458 = vunpack.c.l.b16 %v635
    %v1459 = vunpack.c.h.b16 %v635
    %v1460 = vunpack.c.l.b16 %v636
    %v1461 = vunpack.c.h.b16 %v636
    %v1462 = vunpack.c.l.b16 %v637
    %v1463 = vunpack.c.h.b16 %v637
    %v1464 = vunpack.c.l.b16 %v638
    %v1465 = vunpack.c.h.b16 %v638
    %v1466 = vunpack.c.l.b16 %v639
    %v1467 = vunpack.c.h.b16 %v639
    %v1468 = vunpack.c.l.b16 %v640
    %v1469 = vunpack.c.h.b16 %v640
    %v1470 = vunpack.c.l.b16 %v641
    %v1471 = vunpack.c.h.b16 %v641
    %v1472 = vunpack.c.l.b16 %v642
    %v1473 = vunpack.c.h.b16 %v642
    %v1474 = vunpack.c.l.b16 %v643
    %v1475 = vunpack.c.h.b16 %v643
    %v1476 = vunpack.c.l.b16 %v644
    %v1477 = vunpack.c.h.b16 %v644
    %v1478 = vunpack.c.l.b16 %v645
    %v1479 = vunpack.c.h.b16 %v645
    %v1480 = vunpack.c.l.b16 %v646
    %v1481 = vunpack.c.h.b16 %v646
    %v1482 = vunpack.c.l.b16 %v647
    %v1483 = vunpack.c.h.b16 %v647
    %v1484 = vunpack.c.l.b16 %v648
    %v1485 = vunpack.c.h.b16 %v648
    %v1486 = vunpack.c.l.b16 %v649
    %v1487 = vunpack.c.h.b16 %v649
    %v1488 = vunpack.c.l.b16 %v650
    %v1489 = vunpack.c.h.b16 %v650
    %v1490 = vunpack.c.l.b16 %v651
    %v1491 = vunpack.c.h.b16 %v651
    %v1492 = vunpack.c.l.b16 %v652
    %v1493 = vunpack.c.h.b16 %v652
    %v1494 = vunpack.c.l.b16 %v653
    %v1495 = vunpack.c.h.b16 %v653
    %v1496 = vunpack.c.l.b16 %v654
    %v1497 = vunpack.c.h.b16 %v654
    %v1498 = vunpack.c.l.b16 %v655
    %v1499 = vunpack.c.h.b16 %v655
    %v1500 = vunpack.c.l.b16 %v656
    %v1501 = vunpack.c.h.b16 %v656
    %v1502 = vunpack.c.l.b16 %v657
    %v1503 = vunpack.c.h.b16 %v657
    %v1504 = vunpack.c.l.b16 %v658
    %v1505 = vunpack.c.h.b16 %v658
    %v1506 = vunpack.c.l.b16 %v659
    %v1507 = vunpack.c.h.b16 %v659
    %v1508 = vunpack.c.l.b16 %v660
    %v1509 = vunpack.c.h.b16 %v660
    %v1510 = vunpack.c.l.b16 %v661
    %v1511 = vunpack.c.h.b16 %v661
    %v1512 = vunpack.c.l.b16 %v662
    %v1513 = vunpack.c.h.b16 %v662
    %v1514 = vunpack.c.l.b16 %v663
    %v1515 = vunpack.c.h.b16 %v663
    %v1516 = vunpack.c.l.b16 %v664
    %v1517 = vunpack.c.h.b16 %v664
    %v1518 = vunpack.c.l.b16 %v665
    %v1519 = vunpack.c.h.b16 %v665
    %v1520 = vunpack.c.l.b16 %v666
    %v1521 = vunpack.c.h.b16 %v666
    %v1522 = vunpack.c.l.b16 %v667
    %v1523 = vunpack.c.h.b16 %v667
    %v1524 = vunpack.c.l.b16 %v668
    %v1525 = vunpack.c.h.b16 %v668
    %v1526 = vunpack.c.l.b16 %v669
    %v1527 = vunpack.c.h.b16 %v669
    %v1528 = vunpack.c.l.b16 %v670
    %v1529 = vunpack.c.h.b16 %v670
    %v1530 = vunpack.c.l.b16 %v671
    %v1531 = vunpack.c.h.b16 %v671
    %v1532 = vunpack.c.l.b16 %v672
    %v1533 = vunpack.c.h.b16 %v672
    %v1534 = vunpack.c.l.b16 %v673
    %v1535 = vunpack.c.h.b16 %v673
    %v1536 = vunpack.c.l.b16 %v674
    %v1537 = vunpack.c.h.b16 %v674
    %v1538 = vunpack.c.l.b16 %v675
    %v1539 = vunpack.c.h.b16 %v675
    %v1540 = vpack.c.b16 %v976, %v964
    %v1541 = vpack.c.b16 %v977, %v965
    %v1542 = vpack.c.b16 %v978, %v966
    %v1543 = vpack.c.b16 %v979, %v967
    %v1544 = vpack.c.b16 %v980, %v968
    %v1545 = vpack.c.b16 %v981, %v969
    %v1546 = vpack.c.b16 %v982, %v970
    %v1547 = vpack.c.b16 %v983, %v971
    %v1548 = vpack.c.b16 %v984, %v972
    %v1549 = vpack.c.b16 %v985, %v973
    %v1550 = vpack.c.b16 %v986, %v974
    %v1551 = vpack.c.b16 %v987, %v975
    %v1552 = vpack.c.b16 %v1000, %v988
    %v1553 = vpack.c.b16 %v1001, %v989
    %v1554 = vpack.c.b16 %v1002, %v990
    %v1555 = vpack.c.b16 %v1003, %v991
    %v1556 = vpack.c.b16 %v1004, %v992
    %v1557 = vpack.c.b16 %v1005, %v993
    %v1558 = vpack.c.b16 %v1006, %v994
    %v1559 = vpack.c.b16 %v1007, %v995
    %v1560 = vpack.c.b16 %v1008, %v996
    %v1561 = vpack.c.b16 %v1009, %v997
    %v1562 = vpack.c.b16 %v1010, %v998
    %v1563 = vpack.c.b16 %v1011, %v999
    %v1564 = vpack.c.b16 %v1024, %v1012
    %v1565 = vpack.c.b16 %v1025, %v1013
    %v1566 = vpack.c.b16 %v1026, %v1014
    %v1567 = vpack.c.b16 %v1027, %v1015
    %v1568 = vpack.c.b16 %v1028, %v1016
    %v1569 = vpack.c.b16 %v1029, %v1017
    %v1570 = vpack.c.b16 %v1030, %v1018
    %v1571 = vpack.c.b16 %v1031, %v1019
    %v1572 = vpack.c.b16 %v1032, %v1020
    %v1573 = vpack.c.b16 %v1033, %v1021
    %v1574 = vpack.c.b16 %v1034, %v1022
    %v1575 = vpack.c.b16 %v1035, %v1023
    %v1576 = vpack.c.b16 %v1048, %v1036
    %v1577 = vpack.c.b16 %v1049, %v1037
    %v1578 = vpack.c.b16 %v1050, %v1038
    %v1579 = vpack.c.b16 %v1051, %v1039
    %v1580 = vpack.c.b16 %v1052, %v1040
    %v1581 = vpack.c.b16 %v1053, %v1041
    %v1582 = vpack.c.b16 %v1054, %v1042
    %v1583 = vpack.c.b16 %v1055, %v1043
    %v1584 = vpack.c.b16 %v1056, %v1044
    %v1585 = vpack.c.b16 %v1057, %v1045
    %v1586 = vpack.c.b16 %v1058, %v1046
    %v1587 = vpack.c.b16 %v1059, %v1047
    %v1588 = vpack.c.b16 %v1072, %v1060
    %v1589 = vpack.c.b16 %v1073, %v1061
    %v1590 = vpack.c.b16 %v1074, %v1062
    %v1591 = vpack.c.b16 %v1075, %v1063
    %v1592 = vpack.c.b16 %v1076, %v1064
    %v1593 = vpack.c.b16 %v1077, %v1065
    %v1594 = vpack.c.b16 %v1078, %v1066
    %v1595 = vpack.c.b16 %v1079, %v1067
    %v1596 = vpack.c.b16 %v1080, %v1068
    %v1597 = vpack.c.b16 %v1081, %v1069
    %v1598 = vpack.c.b16 %v1082, %v1070
    %v1599 = vpack.c.b16 %v1083, %v1071
    %v1600 = vpack.c.b16 %v1096, %v1084
    %v1601 = vpack.c.b16 %v1097, %v1085
    %v1602 = vpack.c.b16 %v1098, %v1086
    %v1603 = vpack.c.b16 %v1099, %v1087
    %v1604 = vpack.c.b16 %v1100, %v1088
    %v1605 = vpack.c.b16 %v1101, %v1089
    %v1606 = vpack.c.b16 %v1102, %v1090
    %v1607 = vpack.c.b16 %v1103, %v1091
    %v1608 = vpack.c.b16 %v1104, %v1092
    %v1609 = vpack.c.b16 %v1105, %v1093
    %v1610 = vpack.c.b16 %v1106, %v1094
    %v1611 = vpack.c.b16 %v1107, %v1095
    %v1612 = vpack.c.b16 %v1120, %v1108
    %v1613 = vpack.c.b16 %v1121, %v1109
    %v1614 = vpack.c.b16 %v1122, %v1110
    %v1615 = vpack.c.b16 %v1123, %v1111
    %v1616 = vpack.c.b16 %v1124, %v1112
    %v1617 = vpack.c.b16 %v1125, %v1113
    %v1618 = vpack.c.b16 %v1126, %v1114
    %v1619 = vpack.c.b16 %v1127, %v1115
    %v1620 = vpack.c.b16 %v1128, %v1116
    %v1621 = vpack.c.b16 %v1129, %v1117
    %v1622 = vpack.c.b16 %v1130, %v1118
    %v1623 = vpack.c.b16 %v1131, %v1119
    %v1624 = vpack.c.b16 %v1144, %v1132
    %v1625 = vpack.c.b16 %v1145, %v1133
    %v1626 = vpack.c.b16 %v1146, %v1134
    %v1627 = vpack.c.b16 %v1147, %v1135
    %v1628 = vpack.c.b16 %v1148, %v1136
    %v1629 = vpack.c.b16 %v1149, %v1137
    %v1630 = vpack.c.b16 %v1150, %v1138
    %v1631 = vpack.c.b16 %v1151, %v1139
    %v1632 = vpack.c.b16 %v1152, %v1140
    %v1633 = vpack.c.b16 %v1153, %v1141
    %v1634 = vpack.c.b16 %v1154, %v1142
    %v1635 = vpack.c.b16 %v1155, %v1143
    %v1636 = vpack.c.b16 %v1168, %v1156
    %v1637 = vpack.c.b16 %v1169, %v1157
    %v1638 = vpack.c.b16 %v1170, %v1158
    %v1639 = vpack.c.b16 %v1171, %v1159
    %v1640 = vpack.c.b16 %v1172, %v1160
    %v1641 = vpack.c.b16 %v1173, %v1161
    %v1642 = vpack.c.b16 %v1174, %v1162
    %v1643 = vpack.c.b16 %v1175, %v1163
    %v1644 = vpack.c.b16 %v1176, %v1164
    %v1645 = vpack.c.b16 %v1177, %v1165
    %v1646 = vpack.c.b16 %v1178, %v1166
    %v1647 = vpack.c.b16 %v1179, %v1167
    %v1648 = vpack.c.b16 %v1192, %v1180
    %v1649 = vpack.c.b16 %v1193, %v1181
    %v1650 = vpack.c.b16 %v1194, %v1182
    %v1651 = vpack.c.b16 %v1195, %v1183
    %v1652 = vpack.c.b16 %v1196, %v1184
    %v1653 = vpack.c.b16 %v1197, %v1185
    %v1654 = vpack.c.b16 %v1198, %v1186
    %v1655 = vpack.c.b16 %v1199, %v1187
    %v1656 = vpack.c.b16 %v1200, %v1188
    %v1657 = vpack.c.b16 %v1201, %v1189
    %v1658 = vpack.c.b16 %v1202, %v1190
    %v1659 = vpack.c.b16 %v1203, %v1191
    %v1660 = vpack.c.b16 %v1216, %v1204
    %v1661 = vpack.c.b16 %v1217, %v1205
    %v1662 = vpack.c.b16 %v1218, %v1206
    %v1663 = vpack.c.b16 %v1219, %v1207
    %v1664 = vpack.c.b16 %v1220, %v1208
    %v1665 = vpack.c.b16 %v1221, %v1209
    %v1666 = vpack.c.b16 %v1222, %v1210
    %v1667 = vpack.c.b16 %v1223, %v1211
    %v1668 = vpack.c.b16 %v1224, %v1212
    %v1669 = vpack.c.b16 %v1225, %v1213
    %v1670 = vpack.c.b16 %v1226, %v1214
    %v1671 = vpack.c.b16 %v1227, %v1215
    %v1672 = vpack.c.b16 %v1240, %v1228
    %v1673 = vpack.c.b16 %v1241, %v1229
    %v1674 = vpack.c.b16 %v1242, %v1230
    %v1675 = vpack.c.b16 %v1243, %v1231
    %v1676 = vpack.c.b16 %v1244, %v1232
    %v1677 = vpack.c.b16 %v1245, %v1233
    %v1678 = vpack.c.b16 %v1246, %v1234
    %v1679 = vpack.c.b16 %v1247, %v1235
    %v1680 = vpack.c.b16 %v1248, %v1236
    %v1681 = vpack.c.b16 %v1249, %v1237
    %v1682 = vpack.c.b16 %v1250, %v1238
    %v1683 = vpack.c.b16 %v1251, %v1239
    %v1684 = vpack.c.b16 %v1264, %v1252
    %v1685 = vpack.c.b16 %v1265, %v1253
    %v1686 = vpack.c.b16 %v1266, %v1254
    %v1687 = vpack.c.b16 %v1267, %v1255
    %v1688 = vpack.c.b16 %v1268, %v1256
    %v1689 = vpack.c.b16 %v1269, %v1257
    %v1690 = vpack.c.b16 %v1270, %v1258
    %v1691 = vpack.c.b16 %v1271, %v1259
    %v1692 = vpack.c.b16 %v1272, %v1260
    %v1693 = vpack.c.b16 %v1273, %v1261
    %v1694 = vpack.c.b16 %v1274, %v1262
    %v1695 = vpack.c.b16 %v1275, %v1263
    %v1696 = vpack.c.b16 %v1288, %v1276
    %v1697 = vpack.c.b16 %v1289, %v1277
    %v1698 = vpack.c.b16 %v1290, %v1278
    %v1699 = vpack.c.b16 %v1291, %v1279
    %v1700 = vpack.c.b16 %v1292, %v1280
    %v1701 = vpack.c.b16 %v1293, %v1281
    %v1702 = vpack.c.b16 %v1294, %v1282
    %v1703 = vpack.c.b16 %v1295, %v1283
    %v1704 = vpack.c.b16 %v1296, %v1284
    %v1705 = vpack.c.b16 %v1297, %v1285
    %v1706 = vpack.c.b16 %v1298, %v1286
    %v1707 = vpack.c.b16 %v1299, %v1287
    %v1708 = vpack.c.b16 %v1312, %v1300
    %v1709 = vpack.c.b16 %v1313, %v1301
    %v1710 = vpack.c.b16 %v1314, %v1302
    %v1711 = vpack.c.b16 %v1315, %v1303
    %v1712 = vpack.c.b16 %v1316, %v1304
    %v1713 = vpack.c.b16 %v1317, %v1305
    %v1714 = vpack.c.b16 %v1318, %v1306
    %v1715 = vpack.c.b16 %v1319, %v1307
    %v1716 = vpack.c.b16 %v1320, %v1308
    %v1717 = vpack.c.b16 %v1321, %v1309
    %v1718 = vpack.c.b16 %v1322, %v1310
    %v1719 = vpack.c.b16 %v1323, %v1311
    %v1720 = vpack.c.b16 %v1336, %v1324
    %v1721 = vpack.c.b16 %v1337, %v1325
    %v1722 = vpack.c.b16 %v1338, %v1326
    %v1723 = vpack.c.b16 %v1339, %v1327
    %v1724 = vpack.c.b16 %v1340, %v1328
    %v1725 = vpack.c.b16 %v1341, %v1329
    %v1726 = vpack.c.b16 %v1342, %v1330
    %v1727 = vpack.c.b16 %v1343, %v1331
    %v1728 = vpack.c.b16 %v1344, %v1332
    %v1729 = vpack.c.b16 %v1345, %v1333
    %v1730 = vpack.c.b16 %v1346, %v1334
    %v1731 = vpack.c.b16 %v1347, %v1335
    %v1732 = vpack.c.b16 %v1360, %v1348
    %v1733 = vpack.c.b16 %v1361, %v1349
    %v1734 = vpack.c.b16 %v1362, %v1350
    %v1735 = vpack.c.b16 %v1363, %v1351
    %v1736 = vpack.c.b16 %v1364, %v1352
    %v1737 = vpack.c.b16 %v1365, %v1353
    %v1738 = vpack.c.b16 %v1366, %v1354
    %v1739 = vpack.c.b16 %v1367, %v1355
    %v1740 = vpack.c.b16 %v1368, %v1356
    %v1741 = vpack.c.b16 %v1369, %v1357
    %v1742 = vpack.c.b16 %v1370, %v1358
    %v1743 = vpack.c.b16 %v1371, %v1359
    %v1744 = vpack.c.b16 %v1384, %v1372
    %v1745 = vpack.c.b16 %v1385, %v1373
    %v1746 = vpack.c.b16 %v1386, %v1374
    %v1747 = vpack.c.b16 %v1387, %v1375
    %v1748 = vpack.c.b16 %v1388, %v1376
    %v1749 = vpack.c.b16 %v1389, %v1377
    %v1750 = vpack.c.b16 %v1390, %v1378
    %v1751 = vpack.c.b16 %v1391, %v1379
    %v1752 = vpack.c.b16 %v1392, %v1380
    %v1753 = vpack.c.b16 %v1393, %v1381
    %v1754 = vpack.c.b16 %v1394, %v1382
    %v1755 = vpack.c.b16 %v1395, %v1383
    %v1756 = vpack.c.b16 %v1408, %v1396
    %v1757 = vpack.c.b16 %v1409, %v1397
    %v1758 = vpack.c.b16 %v1410, %v1398
    %v1759 = vpack.c.b16 %v1411, %v1399
    %v1760 = vpack.c.b16 %v1412, %v1400
    %v1761 = vpack.c.b16 %v1413, %v1401
    %v1762 = vpack.c.b16 %v1414, %v1402
    %v1763 = vpack.c.b16 %v1415, %v1403
    %v1764 = vpack.c.b16 %v1416, %v1404
    %v1765 = vpack.c.b16 %v1417, %v1405
    %v1766 = vpack.c.b16 %v1418, %v1406
    %v1767 = vpack.c.b16 %v1419, %v1407
    %v1768 = vpack.c.b16 %v1432, %v1420
    %v1769 = vpack.c.b16 %v1433, %v1421
    %v1770 = vpack.c.b16 %v1434, %v1422
    %v1771 = vpack.c.b16 %v1435, %v1423
    %v1772 = vpack.c.b16 %v1436, %v1424
    %v1773 = vpack.c.b16 %v1437, %v1425
    %v1774 = vpack.c.b16 %v1438, %v1426
    %v1775 = vpack.c.b16 %v1439, %v1427
    %v1776 = vpack.c.b16 %v1440, %v1428
    %v1777 = vpack.c.b16 %v1441, %v1429
    %v1778 = vpack.c.b16 %v1442, %v1430
    %v1779 = vpack.c.b16 %v1443, %v1431
    %v1780 = vpack.c.b16 %v1456, %v1444
    %v1781 = vpack.c.b16 %v1457, %v1445
    %v1782 = vpack.c.b16 %v1458, %v1446
    %v1783 = vpack.c.b16 %v1459, %v1447
    %v1784 = vpack.c.b16 %v1460, %v1448
    %v1785 = vpack.c.b16 %v1461, %v1449
    %v1786 = vpack.c.b16 %v1462, %v1450
    %v1787 = vpack.c.b16 %v1463, %v1451
    %v1788 = vpack.c.b16 %v1464, %v1452
    %v1789 = vpack.c.b16 %v1465, %v1453
    %v1790 = vpack.c.b16 %v1466, %v1454
    %v1791 = vpack.c.b16 %v1467, %v1455
    %v1792 = vpack.c.b16 %v1480, %v1468
    %v1793 = vpack.c.b16 %v1481, %v1469
    %v1794 = vpack.c.b16 %v1482, %v1470
    %v1795 = vpack.c.b16 %v1483, %v1471
    %v1796 = vpack.c.b16 %v1484, %v1472
    %v1797 = vpack.c.b16 %v1485, %v1473
    %v1798 = vpack.c.b16 %v1486, %v1474
    %v1799 = vpack.c.b16 %v1487, %v1475
    %v1800 = vpack.c.b16 %v1488, %v1476
    %v1801 = vpack.c.b16 %v1489, %v1477
    %v1802 = vpack.c.b16 %v1490, %v1478
    %v1803 = vpack.c.b16 %v1491, %v1479
    %v1804 = vpack.c.b16 %v1504, %v1492
    %v1805 = vpack.c.b16 %v1505, %v1493
    %v1806 = vpack.c.b16 %v1506, %v1494
    %v1807 = vpack.c.b16 %v1507, %v1495
    %v1808 = vpack.c.b16 %v1508, %v1496
    %v1809 = vpack.c.b16 %v1509, %v1497
    %v1810 = vpack.c.b16 %v1510, %v1498
    %v1811 = vpack.c.b16 %v1511, %v1499
    %v1812 = vpack.c.b16 %v1512, %v1500
    %v1813 = vpack.c.b16 %v1513, %v1501
    %v1814 = vpack.c.b16 %v1514, %v1502
    %v1815 = vpack.c.b16 %v1515, %v1503
    %v1816 = vpack.c.b16 %v1528, %v1516
    %v1817 = vpack.c.b16 %v1529, %v1517
    %v1818 = vpack.c.b16 %v1530, %v1518
    %v1819 = vpack.c.b16 %v1531, %v1519
    %v1820 = vpack.c.b16 %v1532, %v1520
    %v1821 = vpack.c.b16 %v1533, %v1521
    %v1822 = vpack.c.b16 %v1534, %v1522
    %v1823 = vpack.c.b16 %v1535, %v1523
    %v1824 = vpack.c.b16 %v1536, %v1524
    %v1825 = vpack.c.b16 %v1537, %v1525
    %v1826 = vpack.c.b16 %v1538, %v1526
    %v1827 = vpack.c.b16 %v1539, %v1527
    %2116 = vmatprep.subr.bf16.mxu0 %v1625
    %2117 = vmatpush1.bf16.msra.mxu0 %v1624
    %2118 = vmatprep.subr.bf16.mxu0 %v1613
    %2119 = vmatpush1.bf16.msra.mxu0 %v1612
    %2120 = vmatprep.subr.bf16.mxu0 %v1601
    %2121 = vmatpush1.bf16.msra.mxu0 %v1600
    %2122 = vmatprep.subr.bf16.mxu0 %v1589
    %2123 = vmatpush1.bf16.msra.mxu0 %v1588
    %2124 = vmatprep.subr.bf16.mxu0 %v1577
    %2125 = vmatpush1.bf16.msra.mxu0 %v1576
    %2126 = vmatprep.subr.bf16.mxu0 %v1565
    %2127 = vmatpush1.bf16.msra.mxu0 %v1564
    %2128 = vmatprep.subr.bf16.mxu0 %v1553
    %2129 = vmatpush1.bf16.msra.mxu0 %v1552
    %2130 = vmatprep.subr.bf16.mxu0 %v1541
    %2131 = vmatpush1.bf16.msra.mxu0 %v1540
    %2132 = vmatprep.subr.bf16.mxu0 %v1721
    %2133 = vmatpush2.bf16.msra.mxu0 %v1720
    %2134 = vmatprep.subr.bf16.mxu0 %v1709
    %2135 = vmatpush2.bf16.msra.mxu0 %v1708
    %2136 = vmatprep.subr.bf16.mxu0 %v1697
    %2137 = vmatpush2.bf16.msra.mxu0 %v1696
    %2138 = vmatprep.subr.bf16.mxu0 %v1685
    %2139 = vmatpush2.bf16.msra.mxu0 %v1684
    %2140 = vmatprep.subr.bf16.mxu0 %v1673
    %2141 = vmatpush2.bf16.msra.mxu0 %v1672
    %2142 = vmatprep.subr.bf16.mxu0 %v1661
    %2143 = vmatpush2.bf16.msra.mxu0 %v1660
    %2144 = vmatprep.subr.bf16.mxu0 %v1649
    %2145 = vmatpush2.bf16.msra.mxu0 %v1648
    %2146 = vmatprep.subr.bf16.mxu0 %v1637
    %2147 = vmatpush2.bf16.msra.mxu0 %v1636
    %2148 = vmatprep.mubr.bf16.mxu0 %v386
    %2149 = vmatmul.mubr.bf16.gmra.mxu0 %v385
    %v2150 = vpop.f32.mrf.mxu0
    %v2151 = vadd.f32 0.0, %v2150
    %v2152 = vpop.f32.mrf.mxu0
    %v2153 = vadd.f32 0.0, %v2152
    %v2154 = vpop.f32.mrf.mxu0
    %v2155 = vpop.f32.mrf.mxu0
    %2156 = vdwg.mxu0
    %2157 = vmatprep.subr.bf16.mxu0 %v1817
    %2158 = vmatpush1.bf16.msra.mxu0 %v1816
    %2159 = vmatprep.subr.bf16.mxu0 %v1805
    %2160 = vmatpush1.bf16.msra.mxu0 %v1804
    %2161 = vmatprep.subr.bf16.mxu0 %v1793
    %2162 = vmatpush1.bf16.msra.mxu0 %v1792
    %2163 = vmatprep.subr.bf16.mxu0 %v1781
    %2164 = vmatpush1.bf16.msra.mxu0 %v1780
    %2165 = vmatprep.subr.bf16.mxu0 %v1769
    %2166 = vmatpush1.bf16.msra.mxu0 %v1768
    %2167 = vmatprep.subr.bf16.mxu0 %v1757
    %2168 = vmatpush1.bf16.msra.mxu0 %v1756
    %2169 = vmatprep.subr.bf16.mxu0 %v1745
    %2170 = vmatpush1.bf16.msra.mxu0 %v1744
    %2171 = vmatprep.subr.bf16.mxu0 %v1733
    %2172 = vmatpush1.bf16.msra.mxu0 %v1732
    %2173 = vmatprep.subr.bf16.mxu0 0
    %2174 = vmatpush2.bf16.msra.mxu0 0
    %2175 = vmatprep.subr.bf16.mxu0 0
    %2176 = vmatpush2.bf16.msra.mxu0 0
    %2177 = vmatprep.subr.bf16.mxu0 0
    %2178 = vmatpush2.bf16.msra.mxu0 0
    %2179 = vmatprep.subr.bf16.mxu0 0
    %2180 = vmatpush2.bf16.msra.mxu0 0
    %2181 = vmatprep.subr.bf16.mxu0 0
    %2182 = vmatpush2.bf16.msra.mxu0 0
    %2183 = vmatprep.subr.bf16.mxu0 0
    %2184 = vmatpush2.bf16.msra.mxu0 0
    %2185 = vmatprep.subr.bf16.mxu0 0
    %2186 = vmatpush2.bf16.msra.mxu0 0
    %2187 = vmatprep.subr.bf16.mxu0 0
    %2188 = vmatpush2.bf16.msra.mxu0 0
    %2189 = vmatprep.mubr.bf16.mxu0 0
    %2190 = vmatmul.mubr.bf16.gmra.mxu0 %v387
    %v2191 = vpop.f32.mrf.mxu0
    %v2192 = vadd.f32 %v2151, %v2191
    %v2193 = vpop.f32.mrf.mxu0
    %v2194 = vadd.f32 %v2153, %v2193
    %v2195 = vpop.f32.mrf.mxu0
    %v2196 = vpop.f32.mrf.mxu0
    %2197 = vdwg.mxu0
    %2198 = vmatprep.subr.bf16.mxu0 %v1627
    %2199 = vmatpush1.bf16.msra.mxu0 %v1626
    %2200 = vmatprep.subr.bf16.mxu0 %v1615
    %2201 = vmatpush1.bf16.msra.mxu0 %v1614
    %2202 = vmatprep.subr.bf16.mxu0 %v1603
    %2203 = vmatpush1.bf16.msra.mxu0 %v1602
    %2204 = vmatprep.subr.bf16.mxu0 %v1591
    %2205 = vmatpush1.bf16.msra.mxu0 %v1590
    %2206 = vmatprep.subr.bf16.mxu0 %v1579
    %2207 = vmatpush1.bf16.msra.mxu0 %v1578
    %2208 = vmatprep.subr.bf16.mxu0 %v1567
    %2209 = vmatpush1.bf16.msra.mxu0 %v1566
    %2210 = vmatprep.subr.bf16.mxu0 %v1555
    %2211 = vmatpush1.bf16.msra.mxu0 %v1554
    %2212 = vmatprep.subr.bf16.mxu0 %v1543
    %2213 = vmatpush1.bf16.msra.mxu0 %v1542
    %2214 = vmatprep.subr.bf16.mxu0 %v1723
    %2215 = vmatpush2.bf16.msra.mxu0 %v1722
    %2216 = vmatprep.subr.bf16.mxu0 %v1711
    %2217 = vmatpush2.bf16.msra.mxu0 %v1710
    %2218 = vmatprep.subr.bf16.mxu0 %v1699
    %2219 = vmatpush2.bf16.msra.mxu0 %v1698
    %2220 = vmatprep.subr.bf16.mxu0 %v1687
    %2221 = vmatpush2.bf16.msra.mxu0 %v1686
    %2222 = vmatprep.subr.bf16.mxu0 %v1675
    %2223 = vmatpush2.bf16.msra.mxu0 %v1674
    %2224 = vmatprep.subr.bf16.mxu0 %v1663
    %2225 = vmatpush2.bf16.msra.mxu0 %v1662
    %2226 = vmatprep.subr.bf16.mxu0 %v1651
    %2227 = vmatpush2.bf16.msra.mxu0 %v1650
    %2228 = vmatprep.subr.bf16.mxu0 %v1639
    %2229 = vmatpush2.bf16.msra.mxu0 %v1638
    %2230 = vmatprep.mubr.bf16.mxu0 %v386
    %2231 = vmatmul.mubr.bf16.gmra.mxu0 %v385
    %v2232 = vpop.f32.mrf.mxu0
    %v2233 = vadd.f32 0.0, %v2232
    %v2234 = vpop.f32.mrf.mxu0
    %v2235 = vadd.f32 0.0, %v2234
    %v2236 = vpop.f32.mrf.mxu0
    %v2237 = vpop.f32.mrf.mxu0
    %2238 = vdwg.mxu0
    %2239 = vmatprep.subr.bf16.mxu0 %v1819
    %2240 = vmatpush1.bf16.msra.mxu0 %v1818
    %2241 = vmatprep.subr.bf16.mxu0 %v1807
    %2242 = vmatpush1.bf16.msra.mxu0 %v1806
    %2243 = vmatprep.subr.bf16.mxu0 %v1795
    %2244 = vmatpush1.bf16.msra.mxu0 %v1794
    %2245 = vmatprep.subr.bf16.mxu0 %v1783
    %2246 = vmatpush1.bf16.msra.mxu0 %v1782
    %2247 = vmatprep.subr.bf16.mxu0 %v1771
    %2248 = vmatpush1.bf16.msra.mxu0 %v1770
    %2249 = vmatprep.subr.bf16.mxu0 %v1759
    %2250 = vmatpush1.bf16.msra.mxu0 %v1758
    %2251 = vmatprep.subr.bf16.mxu0 %v1747
    %2252 = vmatpush1.bf16.msra.mxu0 %v1746
    %2253 = vmatprep.subr.bf16.mxu0 %v1735
    %2254 = vmatpush1.bf16.msra.mxu0 %v1734
    %2255 = vmatprep.subr.bf16.mxu0 0
    %2256 = vmatpush2.bf16.msra.mxu0 0
    %2257 = vmatprep.subr.bf16.mxu0 0
    %2258 = vmatpush2.bf16.msra.mxu0 0
    %2259 = vmatprep.subr.bf16.mxu0 0
    %2260 = vmatpush2.bf16.msra.mxu0 0
    %2261 = vmatprep.subr.bf16.mxu0 0
    %2262 = vmatpush2.bf16.msra.mxu0 0
    %2263 = vmatprep.subr.bf16.mxu0 0
    %2264 = vmatpush2.bf16.msra.mxu0 0
    %2265 = vmatprep.subr.bf16.mxu0 0
    %2266 = vmatpush2.bf16.msra.mxu0 0
    %2267 = vmatprep.subr.bf16.mxu0 0
    %2268 = vmatpush2.bf16.msra.mxu0 0
    %2269 = vmatprep.subr.bf16.mxu0 0
    %2270 = vmatpush2.bf16.msra.mxu0 0
    %2271 = vmatprep.mubr.bf16.mxu0 0
    %2272 = vmatmul.mubr.bf16.gmra.mxu0 %v387
    %v2273 = vpop.f32.mrf.mxu0
    %v2274 = vadd.f32 %v2233, %v2273
    %v2275 = vpop.f32.mrf.mxu0
    %v2276 = vadd.f32 %v2235, %v2275
    %v2277 = vpop.f32.mrf.mxu0
    %v2278 = vpop.f32.mrf.mxu0
    %2279 = vdwg.mxu0
    %2280 = vmatprep.subr.bf16.mxu0 %v1629
    %2281 = vmatpush1.bf16.msra.mxu0 %v1628
    %2282 = vmatprep.subr.bf16.mxu0 %v1617
    %2283 = vmatpush1.bf16.msra.mxu0 %v1616
    %2284 = vmatprep.subr.bf16.mxu0 %v1605
    %2285 = vmatpush1.bf16.msra.mxu0 %v1604
    %2286 = vmatprep.subr.bf16.mxu0 %v1593
    %2287 = vmatpush1.bf16.msra.mxu0 %v1592
    %2288 = vmatprep.subr.bf16.mxu0 %v1581
    %2289 = vmatpush1.bf16.msra.mxu0 %v1580
    %2290 = vmatprep.subr.bf16.mxu0 %v1569
    %2291 = vmatpush1.bf16.msra.mxu0 %v1568
    %2292 = vmatprep.subr.bf16.mxu0 %v1557
    %2293 = vmatpush1.bf16.msra.mxu0 %v1556
    %2294 = vmatprep.subr.bf16.mxu0 %v1545
    %2295 = vmatpush1.bf16.msra.mxu0 %v1544
    %2296 = vmatprep.subr.bf16.mxu0 %v1725
    %2297 = vmatpush2.bf16.msra.mxu0 %v1724
    %2298 = vmatprep.subr.bf16.mxu0 %v1713
    %2299 = vmatpush2.bf16.msra.mxu0 %v1712
    %2300 = vmatprep.subr.bf16.mxu0 %v1701
    %2301 = vmatpush2.bf16.msra.mxu0 %v1700
    %2302 = vmatprep.subr.bf16.mxu0 %v1689
    %2303 = vmatpush2.bf16.msra.mxu0 %v1688
    %2304 = vmatprep.subr.bf16.mxu0 %v1677
    %2305 = vmatpush2.bf16.msra.mxu0 %v1676
    %2306 = vmatprep.subr.bf16.mxu0 %v1665
    %2307 = vmatpush2.bf16.msra.mxu0 %v1664
    %2308 = vmatprep.subr.bf16.mxu0 %v1653
    %2309 = vmatpush2.bf16.msra.mxu0 %v1652
    %2310 = vmatprep.subr.bf16.mxu0 %v1641
    %2311 = vmatpush2.bf16.msra.mxu0 %v1640
    %2312 = vmatprep.mubr.bf16.mxu0 %v386
    %2313 = vmatmul.mubr.bf16.gmra.mxu0 %v385
    %v2314 = vpop.f32.mrf.mxu0
    %v2315 = vadd.f32 0.0, %v2314
    %v2316 = vpop.f32.mrf.mxu0
    %v2317 = vadd.f32 0.0, %v2316
    %v2318 = vpop.f32.mrf.mxu0
    %v2319 = vpop.f32.mrf.mxu0
    %2320 = vdwg.mxu0
    %2321 = vmatprep.subr.bf16.mxu0 %v1821
    %2322 = vmatpush1.bf16.msra.mxu0 %v1820
    %2323 = vmatprep.subr.bf16.mxu0 %v1809
    %2324 = vmatpush1.bf16.msra.mxu0 %v1808
    %2325 = vmatprep.subr.bf16.mxu0 %v1797
    %2326 = vmatpush1.bf16.msra.mxu0 %v1796
    %2327 = vmatprep.subr.bf16.mxu0 %v1785
    %2328 = vmatpush1.bf16.msra.mxu0 %v1784
    %2329 = vmatprep.subr.bf16.mxu0 %v1773
    %2330 = vmatpush1.bf16.msra.mxu0 %v1772
    %2331 = vmatprep.subr.bf16.mxu0 %v1761
    %2332 = vmatpush1.bf16.msra.mxu0 %v1760
    %2333 = vmatprep.subr.bf16.mxu0 %v1749
    %2334 = vmatpush1.bf16.msra.mxu0 %v1748
    %2335 = vmatprep.subr.bf16.mxu0 %v1737
    %2336 = vmatpush1.bf16.msra.mxu0 %v1736
    %2337 = vmatprep.subr.bf16.mxu0 0
    %2338 = vmatpush2.bf16.msra.mxu0 0
    %2339 = vmatprep.subr.bf16.mxu0 0
    %2340 = vmatpush2.bf16.msra.mxu0 0
    %2341 = vmatprep.subr.bf16.mxu0 0
    %2342 = vmatpush2.bf16.msra.mxu0 0
    %2343 = vmatprep.subr.bf16.mxu0 0
    %2344 = vmatpush2.bf16.msra.mxu0 0
    %2345 = vmatprep.subr.bf16.mxu0 0
    %2346 = vmatpush2.bf16.msra.mxu0 0
    %2347 = vmatprep.subr.bf16.mxu0 0
    %2348 = vmatpush2.bf16.msra.mxu0 0
    %2349 = vmatprep.subr.bf16.mxu0 0
    %2350 = vmatpush2.bf16.msra.mxu0 0
    %2351 = vmatprep.subr.bf16.mxu0 0
    %2352 = vmatpush2.bf16.msra.mxu0 0
    %2353 = vmatprep.mubr.bf16.mxu0 0
    %2354 = vmatmul.mubr.bf16.gmra.mxu0 %v387
    %v2355 = vpop.f32.mrf.mxu0
    %v2356 = vadd.f32 %v2315, %v2355
    %v2357 = vpop.f32.mrf.mxu0
    %v2358 = vadd.f32 %v2317, %v2357
    %v2359 = vpop.f32.mrf.mxu0
    %v2360 = vpop.f32.mrf.mxu0
    %2361 = vdwg.mxu0
    %2362 = vmatprep.subr.bf16.mxu0 %v1631
    %2363 = vmatpush1.bf16.msra.mxu0 %v1630
    %2364 = vmatprep.subr.bf16.mxu0 %v1619
    %2365 = vmatpush1.bf16.msra.mxu0 %v1618
    %2366 = vmatprep.subr.bf16.mxu0 %v1607
    %2367 = vmatpush1.bf16.msra.mxu0 %v1606
    %2368 = vmatprep.subr.bf16.mxu0 %v1595
    %2369 = vmatpush1.bf16.msra.mxu0 %v1594
    %2370 = vmatprep.subr.bf16.mxu0 %v1583
    %2371 = vmatpush1.bf16.msra.mxu0 %v1582
    %2372 = vmatprep.subr.bf16.mxu0 %v1571
    %2373 = vmatpush1.bf16.msra.mxu0 %v1570
    %2374 = vmatprep.subr.bf16.mxu0 %v1559
    %2375 = vmatpush1.bf16.msra.mxu0 %v1558
    %2376 = vmatprep.subr.bf16.mxu0 %v1547
    %2377 = vmatpush1.bf16.msra.mxu0 %v1546
    %2378 = vmatprep.subr.bf16.mxu0 %v1727
    %2379 = vmatpush2.bf16.msra.mxu0 %v1726
    %2380 = vmatprep.subr.bf16.mxu0 %v1715
    %2381 = vmatpush2.bf16.msra.mxu0 %v1714
    %2382 = vmatprep.subr.bf16.mxu0 %v1703
    %2383 = vmatpush2.bf16.msra.mxu0 %v1702
    %2384 = vmatprep.subr.bf16.mxu0 %v1691
    %2385 = vmatpush2.bf16.msra.mxu0 %v1690
    %2386 = vmatprep.subr.bf16.mxu0 %v1679
    %2387 = vmatpush2.bf16.msra.mxu0 %v1678
    %2388 = vmatprep.subr.bf16.mxu0 %v1667
    %2389 = vmatpush2.bf16.msra.mxu0 %v1666
    %2390 = vmatprep.subr.bf16.mxu0 %v1655
    %2391 = vmatpush2.bf16.msra.mxu0 %v1654
    %2392 = vmatprep.subr.bf16.mxu0 %v1643
    %2393 = vmatpush2.bf16.msra.mxu0 %v1642
    %2394 = vmatprep.mubr.bf16.mxu0 %v386
    %2395 = vmatmul.mubr.bf16.gmra.mxu0 %v385
    %v2396 = vpop.f32.mrf.mxu0
    %v2397 = vadd.f32 0.0, %v2396
    %v2398 = vpop.f32.mrf.mxu0
    %v2399 = vadd.f32 0.0, %v2398
    %v2400 = vpop.f32.mrf.mxu0
    %v2401 = vpop.f32.mrf.mxu0
    %2402 = vdwg.mxu0
    %2403 = vmatprep.subr.bf16.mxu0 %v1823
    %2404 = vmatpush1.bf16.msra.mxu0 %v1822
    %2405 = vmatprep.subr.bf16.mxu0 %v1811
    %2406 = vmatpush1.bf16.msra.mxu0 %v1810
    %2407 = vmatprep.subr.bf16.mxu0 %v1799
    %2408 = vmatpush1.bf16.msra.mxu0 %v1798
    %2409 = vmatprep.subr.bf16.mxu0 %v1787
    %2410 = vmatpush1.bf16.msra.mxu0 %v1786
    %2411 = vmatprep.subr.bf16.mxu0 %v1775
    %2412 = vmatpush1.bf16.msra.mxu0 %v1774
    %2413 = vmatprep.subr.bf16.mxu0 %v1763
    %2414 = vmatpush1.bf16.msra.mxu0 %v1762
    %2415 = vmatprep.subr.bf16.mxu0 %v1751
    %2416 = vmatpush1.bf16.msra.mxu0 %v1750
    %2417 = vmatprep.subr.bf16.mxu0 %v1739
    %2418 = vmatpush1.bf16.msra.mxu0 %v1738
    %2419 = vmatprep.subr.bf16.mxu0 0
    %2420 = vmatpush2.bf16.msra.mxu0 0
    %2421 = vmatprep.subr.bf16.mxu0 0
    %2422 = vmatpush2.bf16.msra.mxu0 0
    %2423 = vmatprep.subr.bf16.mxu0 0
    %2424 = vmatpush2.bf16.msra.mxu0 0
    %2425 = vmatprep.subr.bf16.mxu0 0
    %2426 = vmatpush2.bf16.msra.mxu0 0
    %2427 = vmatprep.subr.bf16.mxu0 0
    %2428 = vmatpush2.bf16.msra.mxu0 0
    %2429 = vmatprep.subr.bf16.mxu0 0
    %2430 = vmatpush2.bf16.msra.mxu0 0
    %2431 = vmatprep.subr.bf16.mxu0 0
    %2432 = vmatpush2.bf16.msra.mxu0 0
    %2433 = vmatprep.subr.bf16.mxu0 0
    %2434 = vmatpush2.bf16.msra.mxu0 0
    %2435 = vmatprep.mubr.bf16.mxu0 0
    %2436 = vmatmul.mubr.bf16.gmra.mxu0 %v387
    %v2437 = vpop.f32.mrf.mxu0
    %v2438 = vadd.f32 %v2397, %v2437
    %v2439 = vpop.f32.mrf.mxu0
    %v2440 = vadd.f32 %v2399, %v2439
    %v2441 = vpop.f32.mrf.mxu0
    %v2442 = vpop.f32.mrf.mxu0
    %2443 = vdwg.mxu0
    %2444 = vmatprep.subr.bf16.mxu0 %v1633
    %2445 = vmatpush1.bf16.msra.mxu0 %v1632
    %2446 = vmatprep.subr.bf16.mxu0 %v1621
    %2447 = vmatpush1.bf16.msra.mxu0 %v1620
    %2448 = vmatprep.subr.bf16.mxu0 %v1609
    %2449 = vmatpush1.bf16.msra.mxu0 %v1608
    %2450 = vmatprep.subr.bf16.mxu0 %v1597
    %2451 = vmatpush1.bf16.msra.mxu0 %v1596
    %2452 = vmatprep.subr.bf16.mxu0 %v1585
    %2453 = vmatpush1.bf16.msra.mxu0 %v1584
    %2454 = vmatprep.subr.bf16.mxu0 %v1573
    %2455 = vmatpush1.bf16.msra.mxu0 %v1572
    %2456 = vmatprep.subr.bf16.mxu0 %v1561
    %2457 = vmatpush1.bf16.msra.mxu0 %v1560
    %2458 = vmatprep.subr.bf16.mxu0 %v1549
    %2459 = vmatpush1.bf16.msra.mxu0 %v1548
    %2460 = vmatprep.subr.bf16.mxu0 %v1729
    %2461 = vmatpush2.bf16.msra.mxu0 %v1728
    %2462 = vmatprep.subr.bf16.mxu0 %v1717
    %2463 = vmatpush2.bf16.msra.mxu0 %v1716
    %2464 = vmatprep.subr.bf16.mxu0 %v1705
    %2465 = vmatpush2.bf16.msra.mxu0 %v1704
    %2466 = vmatprep.subr.bf16.mxu0 %v1693
    %2467 = vmatpush2.bf16.msra.mxu0 %v1692
    %2468 = vmatprep.subr.bf16.mxu0 %v1681
    %2469 = vmatpush2.bf16.msra.mxu0 %v1680
    %2470 = vmatprep.subr.bf16.mxu0 %v1669
    %2471 = vmatpush2.bf16.msra.mxu0 %v1668
    %2472 = vmatprep.subr.bf16.mxu0 %v1657
    %2473 = vmatpush2.bf16.msra.mxu0 %v1656
    %2474 = vmatprep.subr.bf16.mxu0 %v1645
    %2475 = vmatpush2.bf16.msra.mxu0 %v1644
    %2476 = vmatprep.mubr.bf16.mxu0 %v386
    %2477 = vmatmul.mubr.bf16.gmra.mxu0 %v385
    %v2478 = vpop.f32.mrf.mxu0
    %v2479 = vadd.f32 0.0, %v2478
    %v2480 = vpop.f32.mrf.mxu0
    %v2481 = vadd.f32 0.0, %v2480
    %v2482 = vpop.f32.mrf.mxu0
    %v2483 = vpop.f32.mrf.mxu0
    %2484 = vdwg.mxu0
    %2485 = vmatprep.subr.bf16.mxu0 %v1825
    %2486 = vmatpush1.bf16.msra.mxu0 %v1824
    %2487 = vmatprep.subr.bf16.mxu0 %v1813
    %2488 = vmatpush1.bf16.msra.mxu0 %v1812
    %2489 = vmatprep.subr.bf16.mxu0 %v1801
    %2490 = vmatpush1.bf16.msra.mxu0 %v1800
    %2491 = vmatprep.subr.bf16.mxu0 %v1789
    %2492 = vmatpush1.bf16.msra.mxu0 %v1788
    %2493 = vmatprep.subr.bf16.mxu0 %v1777
    %2494 = vmatpush1.bf16.msra.mxu0 %v1776
    %2495 = vmatprep.subr.bf16.mxu0 %v1765
    %2496 = vmatpush1.bf16.msra.mxu0 %v1764
    %2497 = vmatprep.subr.bf16.mxu0 %v1753
    %2498 = vmatpush1.bf16.msra.mxu0 %v1752
    %2499 = vmatprep.subr.bf16.mxu0 %v1741
    %2500 = vmatpush1.bf16.msra.mxu0 %v1740
    %2501 = vmatprep.subr.bf16.mxu0 0
    %2502 = vmatpush2.bf16.msra.mxu0 0
    %2503 = vmatprep.subr.bf16.mxu0 0
    %2504 = vmatpush2.bf16.msra.mxu0 0
    %2505 = vmatprep.subr.bf16.mxu0 0
    %2506 = vmatpush2.bf16.msra.mxu0 0
    %2507 = vmatprep.subr.bf16.mxu0 0
    %2508 = vmatpush2.bf16.msra.mxu0 0
    %2509 = vmatprep.subr.bf16.mxu0 0
    %2510 = vmatpush2.bf16.msra.mxu0 0
    %2511 = vmatprep.subr.bf16.mxu0 0
    %2512 = vmatpush2.bf16.msra.mxu0 0
    %2513 = vmatprep.subr.bf16.mxu0 0
    %2514 = vmatpush2.bf16.msra.mxu0 0
    %2515 = vmatprep.subr.bf16.mxu0 0
    %2516 = vmatpush2.bf16.msra.mxu0 0
    %2517 = vmatprep.mubr.bf16.mxu0 0
    %2518 = vmatmul.mubr.bf16.gmra.mxu0 %v387
    %v2519 = vpop.f32.mrf.mxu0
    %v2520 = vadd.f32 %v2479, %v2519
    %v2521 = vpop.f32.mrf.mxu0
    %v2522 = vadd.f32 %v2481, %v2521
    %v2523 = vpop.f32.mrf.mxu0
    %v2524 = vpop.f32.mrf.mxu0
    %2525 = vdwg.mxu0
    %2526 = vmatprep.subr.bf16.mxu0 %v1635
    %2527 = vmatpush1.bf16.msra.mxu0 %v1634
    %2528 = vmatprep.subr.bf16.mxu0 %v1623
    %2529 = vmatpush1.bf16.msra.mxu0 %v1622
    %2530 = vmatprep.subr.bf16.mxu0 %v1611
    %2531 = vmatpush1.bf16.msra.mxu0 %v1610
    %2532 = vmatprep.subr.bf16.mxu0 %v1599
    %2533 = vmatpush1.bf16.msra.mxu0 %v1598
    %2534 = vmatprep.subr.bf16.mxu0 %v1587
    %2535 = vmatpush1.bf16.msra.mxu0 %v1586
    %2536 = vmatprep.subr.bf16.mxu0 %v1575
    %2537 = vmatpush1.bf16.msra.mxu0 %v1574
    %2538 = vmatprep.subr.bf16.mxu0 %v1563
    %2539 = vmatpush1.bf16.msra.mxu0 %v1562
    %2540 = vmatprep.subr.bf16.mxu0 %v1551
    %2541 = vmatpush1.bf16.msra.mxu0 %v1550
    %2542 = vmatprep.subr.bf16.mxu0 %v1731
    %2543 = vmatpush2.bf16.msra.mxu0 %v1730
    %2544 = vmatprep.subr.bf16.mxu0 %v1719
    %2545 = vmatpush2.bf16.msra.mxu0 %v1718
    %2546 = vmatprep.subr.bf16.mxu0 %v1707
    %2547 = vmatpush2.bf16.msra.mxu0 %v1706
    %2548 = vmatprep.subr.bf16.mxu0 %v1695
    %2549 = vmatpush2.bf16.msra.mxu0 %v1694
    %2550 = vmatprep.subr.bf16.mxu0 %v1683
    %2551 = vmatpush2.bf16.msra.mxu0 %v1682
    %2552 = vmatprep.subr.bf16.mxu0 %v1671
    %2553 = vmatpush2.bf16.msra.mxu0 %v1670
    %2554 = vmatprep.subr.bf16.mxu0 %v1659
    %2555 = vmatpush2.bf16.msra.mxu0 %v1658
    %2556 = vmatprep.subr.bf16.mxu0 %v1647
    %2557 = vmatpush2.bf16.msra.mxu0 %v1646
    %2558 = vmatprep.mubr.bf16.mxu0 %v386
    %2559 = vmatmul.mubr.bf16.gmra.mxu0 %v385
    %v2560 = vpop.f32.mrf.mxu0
    %v2561 = vadd.f32 0.0, %v2560
    %v2562 = vpop.f32.mrf.mxu0
    %v2563 = vadd.f32 0.0, %v2562
    %v2564 = vpop.f32.mrf.mxu0
    %v2565 = vpop.f32.mrf.mxu0
    %2566 = vdwg.mxu0
    %2567 = vmatprep.subr.bf16.mxu0 %v1827
    %2568 = vmatpush1.bf16.msra.mxu0 %v1826
    %2569 = vmatprep.subr.bf16.mxu0 %v1815
    %2570 = vmatpush1.bf16.msra.mxu0 %v1814
    %2571 = vmatprep.subr.bf16.mxu0 %v1803
    %2572 = vmatpush1.bf16.msra.mxu0 %v1802
    %2573 = vmatprep.subr.bf16.mxu0 %v1791
    %2574 = vmatpush1.bf16.msra.mxu0 %v1790
    %2575 = vmatprep.subr.bf16.mxu0 %v1779
    %2576 = vmatpush1.bf16.msra.mxu0 %v1778
    %2577 = vmatprep.subr.bf16.mxu0 %v1767
    %2578 = vmatpush1.bf16.msra.mxu0 %v1766
    %2579 = vmatprep.subr.bf16.mxu0 %v1755
    %2580 = vmatpush1.bf16.msra.mxu0 %v1754
    %2581 = vmatprep.subr.bf16.mxu0 %v1743
    %2582 = vmatpush1.bf16.msra.mxu0 %v1742
    %2583 = vmatprep.subr.bf16.mxu0 0
    %2584 = vmatpush2.bf16.msra.mxu0 0
    %2585 = vmatprep.subr.bf16.mxu0 0
    %2586 = vmatpush2.bf16.msra.mxu0 0
    %2587 = vmatprep.subr.bf16.mxu0 0
    %2588 = vmatpush2.bf16.msra.mxu0 0
    %2589 = vmatprep.subr.bf16.mxu0 0
    %2590 = vmatpush2.bf16.msra.mxu0 0
    %2591 = vmatprep.subr.bf16.mxu0 0
    %2592 = vmatpush2.bf16.msra.mxu0 0
    %2593 = vmatprep.subr.bf16.mxu0 0
    %2594 = vmatpush2.bf16.msra.mxu0 0
    %2595 = vmatprep.subr.bf16.mxu0 0
    %2596 = vmatpush2.bf16.msra.mxu0 0
    %2597 = vmatprep.subr.bf16.mxu0 0
    %2598 = vmatpush2.bf16.msra.mxu0 0
    %2599 = vmatprep.mubr.bf16.mxu0 0
    %2600 = vmatmul.mubr.bf16.gmra.mxu0 %v387
    %v2601 = vpop.f32.mrf.mxu0
    %v2602 = vadd.f32 %v2561, %v2601
    %v2603 = vpop.f32.mrf.mxu0
    %v2604 = vadd.f32 %v2563, %v2603
    %v2605 = vpop.f32.mrf.mxu0
    %v2606 = vpop.f32.mrf.mxu0
    %2607 = vdwg.mxu0
    %2608 = vst [vmem:[#allocation2] sm:$0x3f] %v2192
    %2609 = vst [vmem:[#allocation2 + $0x8] sm:$0x3f] %v2194
    %2610 = vst [vmem:[#allocation2 + $0x10] sm:$0x3f] %v2274
    %2611 = vst [vmem:[#allocation2 + $0x18] sm:$0x3f] %v2276
    %2612 = vst [vmem:[#allocation2 + $0x20] sm:$0x3f] %v2356
    %2613 = vst [vmem:[#allocation2 + $0x28] sm:$0x3f] %v2358
    %2614 = vst [vmem:[#allocation2 + $0x30] sm:$0x3f] %v2438
    %2615 = vst [vmem:[#allocation2 + $0x38] sm:$0x3f] %v2440
    %2616 = vst [vmem:[#allocation2 + $0x40] sm:$0x3f] %v2520
    %2617 = vst [vmem:[#allocation2 + $0x48] sm:$0x3f] %v2522
    %2618 = vst [vmem:[#allocation2 + $0x50] sm:$0x3f] %v2602
    %2619 = vst [vmem:[#allocation2 + $0x58] sm:$0x3f] %v2604
    %v2620 = vld [vmem:[#allocation2] ss:$8 sm:$0xf]
    %v2621 = vlaneseq
    %vm2622 = vcmp.ge.s32.totalorder %v2621, 0
    %vm2623 = vcmp.lt.s32.totalorder %v2621, 512
    %vm2624 = vmand %vm2622, %vm2623
    %2625 = vst.msk [vmem:[#allocation3] ss:$8 sm:$0xf] %vm2624, %v2620
    %2626 = vst.msk [vmem:[#allocation3] ss:$8 sm:$0x0] %vm2624, %v2620
    %s2627 = scalar_lea.vmem [#allocation2], 32
    %v2628 = vld [vmem:[%s2627] ss:$8 sm:$0xf]
    %s2629 = scalar_lea.vmem [#allocation3], 1
    %2630 = vst.msk [vmem:[%s2629] ss:$8 sm:$0xf] %vm2624, %v2628
    %2631 = vst.msk [vmem:[%s2629] ss:$8 sm:$0x0] %vm2624, %v2628
    %s2632 = scalar_lea.vmem [#allocation2], 1
    %v2633 = vld [vmem:[%s2632] ss:$8 sm:$0xf]
    %s2634 = scalar_lea.vmem [#allocation2], 64
    %v2635 = vld [vmem:[%s2634] ss:$8 sm:$0xf]
    %v2636 = vadd.f32 %v2633, %v2635
    %s2637 = scalar_lea.vmem [#allocation3], 2
    %2638 = vst.msk [vmem:[%s2637] ss:$8 sm:$0xf] %vm2624, %v2636
    %2639 = vst.msk [vmem:[%s2637] ss:$8 sm:$0x0] %vm2624, %v2636
    %s2640 = scalar_lea.vmem [#allocation2], 33
    %v2641 = vld [vmem:[%s2640] ss:$8 sm:$0xf]
    %s2642 = scalar_lea.vmem [#allocation3], 3
    %2643 = vst.msk [vmem:[%s2642] ss:$8 sm:$0xf] %vm2624, %v2641
    %2644 = vst.msk [vmem:[%s2642] ss:$8 sm:$0x0] %vm2624, %v2641
    %s2645 = scalar_lea.vmem [#allocation2], 2
    %v2646 = vld [vmem:[%s2645] ss:$8 sm:$0xf]
    %s2647 = scalar_lea.vmem [#allocation2], 65
    %v2648 = vld [vmem:[%s2647] ss:$8 sm:$0xf]
    %v2649 = vadd.f32 %v2646, %v2648
    %s2650 = scalar_lea.vmem [#allocation3], 4
    %2651 = vst.msk [vmem:[%s2650] ss:$8 sm:$0xf] %vm2624, %v2649
    %2652 = vst.msk [vmem:[%s2650] ss:$8 sm:$0x0] %vm2624, %v2649
    %s2653 = scalar_lea.vmem [#allocation2], 34
    %v2654 = vld [vmem:[%s2653] ss:$8 sm:$0xf]
    %s2655 = scalar_lea.vmem [#allocation3], 5
    %2656 = vst.msk [vmem:[%s2655] ss:$8 sm:$0xf] %vm2624, %v2654
    %2657 = vst.msk [vmem:[%s2655] ss:$8 sm:$0x0] %vm2624, %v2654
    %s2658 = scalar_lea.vmem [#allocation2], 66
    %v2659 = vld [vmem:[%s2658] ss:$8 sm:$0xf]
    %s2660 = scalar_lea.vmem [#allocation3], 6
    %2661 = vst.msk [vmem:[%s2660] ss:$8 sm:$0xf] %vm2624, %v2659
    %2662 = vst.msk [vmem:[%s2660] ss:$8 sm:$0x0] %vm2624, %v2659
    %s2663 = scalar_lea.vmem [#allocation2], 3
    %v2664 = vld [vmem:[%s2663] ss:$8 sm:$0xf]
    %s2665 = scalar_lea.vmem [#allocation3], 7
    %2666 = vst.msk [vmem:[%s2665] ss:$8 sm:$0xf] %vm2624, %v2664
    %2667 = vst.msk [vmem:[%s2665] ss:$8 sm:$0x0] %vm2624, %v2664
    %s2668 = scalar_lea.vmem [#allocation2], 35
    %v2669 = vld [vmem:[%s2668] ss:$8 sm:$0xf]
    %s2670 = scalar_lea.vmem [#allocation3], 32
    %2671 = vst.msk [vmem:[%s2670] ss:$8 sm:$0xf] %vm2624, %v2669
    %2672 = vst.msk [vmem:[%s2670] ss:$8 sm:$0x0] %vm2624, %v2669
    %s2673 = scalar_lea.vmem [#allocation2], 4
    %v2674 = vld [vmem:[%s2673] ss:$8 sm:$0xf]
    %s2675 = scalar_lea.vmem [#allocation2], 67
    %v2676 = vld [vmem:[%s2675] ss:$8 sm:$0xf]
    %v2677 = vadd.f32 %v2674, %v2676
    %s2678 = scalar_lea.vmem [#allocation3], 33
    %2679 = vst.msk [vmem:[%s2678] ss:$8 sm:$0xf] %vm2624, %v2677
    %2680 = vst.msk [vmem:[%s2678] ss:$8 sm:$0x0] %vm2624, %v2677
    %s2681 = scalar_lea.vmem [#allocation2], 36
    %v2682 = vld [vmem:[%s2681] ss:$8 sm:$0xf]
    %s2683 = scalar_lea.vmem [#allocation3], 34
    %2684 = vst.msk [vmem:[%s2683] ss:$8 sm:$0xf] %vm2624, %v2682
    %2685 = vst.msk [vmem:[%s2683] ss:$8 sm:$0x0] %vm2624, %v2682
    %s2686 = scalar_lea.vmem [#allocation2], 5
    %v2687 = vld [vmem:[%s2686] ss:$8 sm:$0xf]
    %s2688 = scalar_lea.vmem [#allocation2], 68
    %v2689 = vld [vmem:[%s2688] ss:$8 sm:$0xf]
    %v2690 = vadd.f32 %v2687, %v2689
    %s2691 = scalar_lea.vmem [#allocation3], 35
    %2692 = vst.msk [vmem:[%s2691] ss:$8 sm:$0xf] %vm2624, %v2690
    %2693 = vst.msk [vmem:[%s2691] ss:$8 sm:$0x0] %vm2624, %v2690
    %s2694 = scalar_lea.vmem [#allocation2], 37
    %v2695 = vld [vmem:[%s2694] ss:$8 sm:$0xf]
    %s2696 = scalar_lea.vmem [#allocation3], 36
    %2697 = vst.msk [vmem:[%s2696] ss:$8 sm:$0xf] %vm2624, %v2695
    %2698 = vst.msk [vmem:[%s2696] ss:$8 sm:$0x0] %vm2624, %v2695
    %s2699 = scalar_lea.vmem [#allocation2], 69
    %v2700 = vld [vmem:[%s2699] ss:$8 sm:$0xf]
    %s2701 = scalar_lea.vmem [#allocation3], 37
    %2702 = vst.msk [vmem:[%s2701] ss:$8 sm:$0xf] %vm2624, %v2700
    %2703 = vst.msk [vmem:[%s2701] ss:$8 sm:$0x0] %vm2624, %v2700
    %v2704 = vld [vmem:[#allocation3] sm:$0xff]
    %v2705 = vld [vmem:[#allocation3 + $0x8] sm:$0xff]
    %v2706 = vld [vmem:[#allocation3 + $0x10] sm:$0xff]
    %v2707 = vld [vmem:[#allocation3 + $0x18] sm:$0xff]
    %v2708 = vld [vmem:[#allocation3 + $0x20] sm:$0x3f]
    %v2709 = vld [vmem:[#allocation3 + $0x28] sm:$0x3f]
    %v2710 = vld [vmem:[#allocation3 + $0x30] sm:$0x3f]
    %v2711 = vld [vmem:[#allocation3 + $0x38] sm:$0x3f]
    %v2712 = vsel %vm302, %v2708, 0.0
    %v2713 = vadd.f32 %v2704, %v2712
    %v2714 = vrot.slane %v2713, 4
    %v2715 = vadd.f32 %v2713, %v2714
    %v2716 = vrot.slane %v2715, 2
    %v2717 = vadd.f32 %v2715, %v2716
    %v2718 = vrot.slane %v2717, 1
    %v2719 = vadd.f32 %v2717, %v2718
    %v2720 = vsel %vm302, %v2709, 0.0
    %v2721 = vadd.f32 %v2705, %v2720
    %v2722 = vrot.slane %v2721, 4
    %v2723 = vadd.f32 %v2721, %v2722
    %v2724 = vrot.slane %v2723, 2
    %v2725 = vadd.f32 %v2723, %v2724
    %v2726 = vrot.slane %v2725, 1
    %v2727 = vadd.f32 %v2725, %v2726
    %v2728 = vsel %vm302, %v2710, 0.0
    %v2729 = vadd.f32 %v2706, %v2728
    %v2730 = vrot.slane %v2729, 4
    %v2731 = vadd.f32 %v2729, %v2730
    %v2732 = vrot.slane %v2731, 2
    %v2733 = vadd.f32 %v2731, %v2732
    %v2734 = vrot.slane %v2733, 1
    %v2735 = vadd.f32 %v2733, %v2734
    %v2736 = vsel %vm302, %v2711, 0.0
    %v2737 = vadd.f32 %v2707, %v2736
    %v2738 = vrot.slane %v2737, 4
    %v2739 = vadd.f32 %v2737, %v2738
    %v2740 = vrot.slane %v2739, 2
    %v2741 = vadd.f32 %v2739, %v2740
    %v2742 = vrot.slane %v2741, 1
    %v2743 = vadd.f32 %v2741, %v2742
    %2745 = vrot.lane.b32.xlu0 %v2719, 64
    %v2746 = vpop.permute.xlu0 %2745
    %v2748 = vadd.f32 %v2719, %v2746
    %v2749 = vadd.f32 %v2748, %v2727
    %2751 = vrot.lane.b32.xlu0 %v2727, 64
    %v2752 = vpop.permute.xlu0 %2751
    %v2754 = vadd.f32 %v2749, %v2752
    %v2755 = vadd.f32 %v2754, %v2735
    %2757 = vrot.lane.b32.xlu0 %v2735, 64
    %v2758 = vpop.permute.xlu0 %2757
    %v2760 = vadd.f32 %v2755, %v2758
    %v2761 = vadd.f32 %v2760, %v2743
    %v2762 = vmul.f32 %v2761, 0.010204081
    %2764 = vrot.lane.b32.xlu0 %v2762, 64
    %v2765 = vpop.permute.xlu0 %2764
    %vm2767 = vcmask 523264
    %v2768 = vsel %vm2767, %v2762, %v2765
    %v2769 = vsel %vm2767, %v2762, 0.0
    %v2770 = vlaneseq
    %v2771 = vshrl.u32 %v2770, 7
    %v2772 = vsub.s32 0, %v2771
    %v2773 = vrot.slane %v2768, %v2772
    %v2774 = vlaneseq
    %v2775 = vshrl.u32 %v2774, 7
    %v2776 = vsub.s32 0, %v2775
    %v2777 = vrot.slane %v2769, %v2776
    %v2778 = vsub.f32 %v2704, %v2773
    %v2779 = vsub.f32 %v2705, %v2773
    %v2780 = vsub.f32 %v2706, %v2773
    %v2781 = vsub.f32 %v2707, %v2777
    %v2782 = vsub.f32 %v2708, %v2773
    %v2783 = vsub.f32 %v2709, %v2773
    %v2784 = vsub.f32 %v2710, %v2773
    %v2785 = vsub.f32 %v2711, %v2777
    %v2786 = vmul.f32 %v2778, %v2778
    %v2787 = vmul.f32 %v2779, %v2779
    %v2788 = vmul.f32 %v2780, %v2780
    %v2789 = vmul.f32 %v2781, %v2781
    %v2790 = vmul.f32 %v2782, %v2782
    %v2791 = vmul.f32 %v2783, %v2783
    %v2792 = vmul.f32 %v2784, %v2784
    %v2793 = vmul.f32 %v2785, %v2785
    %v2794 = vsel %vm302, %v2790, 0.0
    %v2795 = vadd.f32 %v2786, %v2794
    %v2796 = vrot.slane %v2795, 4
    %v2797 = vadd.f32 %v2795, %v2796
    %v2798 = vrot.slane %v2797, 2
    %v2799 = vadd.f32 %v2797, %v2798
    %v2800 = vrot.slane %v2799, 1
    %v2801 = vadd.f32 %v2799, %v2800
    %v2802 = vsel %vm302, %v2791, 0.0
    %v2803 = vadd.f32 %v2787, %v2802
    %v2804 = vrot.slane %v2803, 4
    %v2805 = vadd.f32 %v2803, %v2804
    %v2806 = vrot.slane %v2805, 2
    %v2807 = vadd.f32 %v2805, %v2806
    %v2808 = vrot.slane %v2807, 1
    %v2809 = vadd.f32 %v2807, %v2808
    %v2810 = vsel %vm302, %v2792, 0.0
    %v2811 = vadd.f32 %v2788, %v2810
    %v2812 = vrot.slane %v2811, 4
    %v2813 = vadd.f32 %v2811, %v2812
    %v2814 = vrot.slane %v2813, 2
    %v2815 = vadd.f32 %v2813, %v2814
    %v2816 = vrot.slane %v2815, 1
    %v2817 = vadd.f32 %v2815, %v2816
    %v2818 = vsel %vm302, %v2793, 0.0
    %v2819 = vadd.f32 %v2789, %v2818
    %v2820 = vrot.slane %v2819, 4
    %v2821 = vadd.f32 %v2819, %v2820
    %v2822 = vrot.slane %v2821, 2
    %v2823 = vadd.f32 %v2821, %v2822
    %v2824 = vrot.slane %v2823, 1
    %v2825 = vadd.f32 %v2823, %v2824
    %2827 = vrot.lane.b32.xlu0 %v2801, 64
    %v2828 = vpop.permute.xlu0 %2827
    %v2830 = vadd.f32 %v2801, %v2828
    %v2831 = vadd.f32 %v2830, %v2809
    %2833 = vrot.lane.b32.xlu0 %v2809, 64
    %v2834 = vpop.permute.xlu0 %2833
    %v2836 = vadd.f32 %v2831, %v2834
    %v2837 = vadd.f32 %v2836, %v2817
    %2839 = vrot.lane.b32.xlu0 %v2817, 64
    %v2840 = vpop.permute.xlu0 %2839
    %v2842 = vadd.f32 %v2837, %v2840
    %v2843 = vadd.f32 %v2842, %v2825
    %v2844 = vmul.f32 %v2843, 0.010204081
    %v2845 = vld [vmem:[#allocation17] sm:$0x1]
    %v2846 = vadd.f32 %v2844, 1e-05
    %v2847 = vrsqrt.pop %v2846
    %v2848 = vmul.f32 %v2845, %v2847
    %v2849 = vld [vmem:[#allocation18] sm:$0x1]
    %v2850 = vmul.f32 %v2762, %v2848
    %v2851 = vsub.f32 %v2849, %v2850
    %v2853 = vlaneseq
    %v2854 = vshrl.u32 %v2853, 7
    %v2855 = vsub.s32 0, %v2854
    %v2856 = vrot.slane %v2848, %v2855
    %2857 = vrot.lane.b32.xlu0 %v2856, 64
    %v2858 = vpop.permute.xlu0 %2857
    %v2860 = vsel %vm2767, %v2848, %v2858
    %v2861 = vsel %vm2767, %v2848, 0.0
    %v2863 = vlaneseq
    %v2864 = vshrl.u32 %v2863, 7
    %v2865 = vsub.s32 0, %v2864
    %v2866 = vrot.slane %v2851, %v2865
    %2867 = vrot.lane.b32.xlu0 %v2866, 64
    %v2868 = vpop.permute.xlu0 %2867
    %v2870 = vsel %vm2767, %v2851, %v2868
    %v2871 = vsel %vm2767, %v2851, 0.0
    %v2872 = vlaneseq
    %v2873 = vshrl.u32 %v2872, 7
    %v2874 = vsub.s32 0, %v2873
    %v2875 = vrot.slane %v2860, %v2874
    %v2876 = vlaneseq
    %v2877 = vshrl.u32 %v2876, 7
    %v2878 = vsub.s32 0, %v2877
    %v2879 = vrot.slane %v2861, %v2878
    %v2880 = vmul.f32 %v2704, %v2875
    %v2881 = vmul.f32 %v2705, %v2875
    %v2882 = vmul.f32 %v2706, %v2875
    %v2883 = vmul.f32 %v2707, %v2879
    %v2884 = vmul.f32 %v2708, %v2875
    %v2885 = vmul.f32 %v2709, %v2875
    %v2886 = vmul.f32 %v2710, %v2875
    %v2887 = vmul.f32 %v2711, %v2879
    %v2888 = vlaneseq
    %v2889 = vshrl.u32 %v2888, 7
    %v2890 = vsub.s32 0, %v2889
    %v2891 = vrot.slane %v2870, %v2890
    %v2892 = vlaneseq
    %v2893 = vshrl.u32 %v2892, 7
    %v2894 = vsub.s32 0, %v2893
    %v2895 = vrot.slane %v2871, %v2894
    %v2896 = vadd.f32 %v2880, %v2891
    %v2897 = vadd.f32 %v2881, %v2891
    %v2898 = vadd.f32 %v2882, %v2891
    %v2899 = vadd.f32 %v2883, %v2895
    %v2900 = vadd.f32 %v2884, %v2891
    %v2901 = vadd.f32 %v2885, %v2891
    %v2902 = vadd.f32 %v2886, %v2891
    %v2903 = vadd.f32 %v2887, %v2895
    %v2904 = vmax.f32 %v2896, 0.0
    %v2905 = vmax.f32 %v2897, 0.0
    %v2906 = vmax.f32 %v2898, 0.0
    %v2907 = vmax.f32 %v2899, 0.0
    %v2908 = vmax.f32 %v2900, 0.0
    %v2909 = vmax.f32 %v2901, 0.0
    %v2910 = vmax.f32 %v2902, 0.0
    %v2911 = vmax.f32 %v2903, 0.0
    %s2912 = smul.u32 4, 64
    %s2913 = smul.u32 %s2912, 12
    %s2914 = sshll.u32 %s2913, 4
    %2915 = dma.done [#allocation9], %s2914
    %v2916 = vpack.c.bf16 %v2908, %v2904
    %v2917 = vpack.c.bf16 %v2909, %v2905
    %v2918 = vpack.c.bf16 %v2910, %v2906
    %v2919 = vpack.c.bf16 %v2911, %v2907
    %v2920 = vld [vmem:[#allocation7] sm:$0xff]
    %v2921 = vld [vmem:[#allocation7 + $0x8] sm:$0xff]
    %v2922 = vld [vmem:[#allocation7 + $0x10] sm:$0xff]
    %v2923 = vld [vmem:[#allocation7 + $0x18] sm:$0xff]
    %v2924 = vld [vmem:[#allocation7 + $0x20] sm:$0xff]
    %v2925 = vld [vmem:[#allocation7 + $0x28] sm:$0xff]
    %v2926 = vld [vmem:[#allocation7 + $0x30] sm:$0xff]
    %v2927 = vld [vmem:[#allocation7 + $0x38] sm:$0xff]
    %v2928 = vld [vmem:[#allocation7 + $0x40] sm:$0xff]
    %v2929 = vld [vmem:[#allocation7 + $0x48] sm:$0xff]
    %v2930 = vld [vmem:[#allocation7 + $0x50] sm:$0xff]
    %v2931 = vld [vmem:[#allocation7 + $0x58] sm:$0xff]
    %v2932 = vld [vmem:[#allocation7 + $0x60] sm:$0xff]
    %v2933 = vld [vmem:[#allocation7 + $0x68] sm:$0xff]
    %v2934 = vld [vmem:[#allocation7 + $0x70] sm:$0xff]
    %v2935 = vld [vmem:[#allocation7 + $0x78] sm:$0xff]
    %v2936 = vld [vmem:[#allocation7 + $0x80] sm:$0xff]
    %v2937 = vld [vmem:[#allocation7 + $0x88] sm:$0xff]
    %v2938 = vld [vmem:[#allocation7 + $0x90] sm:$0xff]
    %v2939 = vld [vmem:[#allocation7 + $0x98] sm:$0xff]
    %v2940 = vld [vmem:[#allocation7 + $0xa0] sm:$0xff]
    %v2941 = vld [vmem:[#allocation7 + $0xa8] sm:$0xff]
    %v2942 = vld [vmem:[#allocation7 + $0xb0] sm:$0xff]
    %v2943 = vld [vmem:[#allocation7 + $0xb8] sm:$0xff]
    %v2944 = vld [vmem:[#allocation7 + $0xc0] sm:$0xff]
    %v2945 = vld [vmem:[#allocation7 + $0xc8] sm:$0xff]
    %v2946 = vld [vmem:[#allocation7 + $0xd0] sm:$0xff]
    %v2947 = vld [vmem:[#allocation7 + $0xd8] sm:$0xff]
    %v2948 = vld [vmem:[#allocation7 + $0xe0] sm:$0xff]
    %v2949 = vld [vmem:[#allocation7 + $0xe8] sm:$0xff]
    %v2950 = vld [vmem:[#allocation7 + $0xf0] sm:$0xff]
    %v2951 = vld [vmem:[#allocation7 + $0xf8] sm:$0xff]
    %v2952 = vld [vmem:[#allocation7 + $0x100] sm:$0xff]
    %v2953 = vld [vmem:[#allocation7 + $0x108] sm:$0xff]
    %v2954 = vld [vmem:[#allocation7 + $0x110] sm:$0xff]
    %v2955 = vld [vmem:[#allocation7 + $0x118] sm:$0xff]
    %v2956 = vld [vmem:[#allocation7 + $0x120] sm:$0xff]
    %v2957 = vld [vmem:[#allocation7 + $0x128] sm:$0xff]
    %v2958 = vld [vmem:[#allocation7 + $0x130] sm:$0xff]
    %v2959 = vld [vmem:[#allocation7 + $0x138] sm:$0xff]
    %v2960 = vld [vmem:[#allocation7 + $0x140] sm:$0xff]
    %v2961 = vld [vmem:[#allocation7 + $0x148] sm:$0xff]
    %v2962 = vld [vmem:[#allocation7 + $0x150] sm:$0xff]
    %v2963 = vld [vmem:[#allocation7 + $0x158] sm:$0xff]
    %v2964 = vld [vmem:[#allocation7 + $0x160] sm:$0xff]
    %v2965 = vld [vmem:[#allocation7 + $0x168] sm:$0xff]
    %v2966 = vld [vmem:[#allocation7 + $0x170] sm:$0xff]
    %v2967 = vld [vmem:[#allocation7 + $0x178] sm:$0xff]
    %v2968 = vld [vmem:[#allocation7 + $0x180] sm:$0xff]
    %v2969 = vld [vmem:[#allocation7 + $0x188] sm:$0xff]
    %v2970 = vld [vmem:[#allocation7 + $0x190] sm:$0xff]
    %v2971 = vld [vmem:[#allocation7 + $0x198] sm:$0xff]
    %v2972 = vld [vmem:[#allocation7 + $0x1a0] sm:$0xff]
    %v2973 = vld [vmem:[#allocation7 + $0x1a8] sm:$0xff]
    %v2974 = vld [vmem:[#allocation7 + $0x1b0] sm:$0xff]
    %v2975 = vld [vmem:[#allocation7 + $0x1b8] sm:$0xff]
    %v2976 = vld [vmem:[#allocation7 + $0x1c0] sm:$0xff]
    %v2977 = vld [vmem:[#allocation7 + $0x1c8] sm:$0xff]
    %v2978 = vld [vmem:[#allocation7 + $0x1d0] sm:$0xff]
    %v2979 = vld [vmem:[#allocation7 + $0x1d8] sm:$0xff]
    %v2980 = vld [vmem:[#allocation7 + $0x1e0] sm:$0xff]
    %v2981 = vld [vmem:[#allocation7 + $0x1e8] sm:$0xff]
    %v2982 = vld [vmem:[#allocation7 + $0x1f0] sm:$0xff]
    %v2983 = vld [vmem:[#allocation7 + $0x1f8] sm:$0xff]
    %v2984 = vld [vmem:[#allocation7 + $0x200] sm:$0xff]
    %v2985 = vld [vmem:[#allocation7 + $0x208] sm:$0xff]
    %v2986 = vld [vmem:[#allocation7 + $0x210] sm:$0xff]
    %v2987 = vld [vmem:[#allocation7 + $0x218] sm:$0xff]
    %v2988 = vld [vmem:[#allocation7 + $0x220] sm:$0xff]
    %v2989 = vld [vmem:[#allocation7 + $0x228] sm:$0xff]
    %v2990 = vld [vmem:[#allocation7 + $0x230] sm:$0xff]
    %v2991 = vld [vmem:[#allocation7 + $0x238] sm:$0xff]
    %v2992 = vld [vmem:[#allocation7 + $0x240] sm:$0xff]
    %v2993 = vld [vmem:[#allocation7 + $0x248] sm:$0xff]
    %v2994 = vld [vmem:[#allocation7 + $0x250] sm:$0xff]
    %v2995 = vld [vmem:[#allocation7 + $0x258] sm:$0xff]
    %v2996 = vld [vmem:[#allocation7 + $0x260] sm:$0xff]
    %v2997 = vld [vmem:[#allocation7 + $0x268] sm:$0xff]
    %v2998 = vld [vmem:[#allocation7 + $0x270] sm:$0xff]
    %v2999 = vld [vmem:[#allocation7 + $0x278] sm:$0xff]
    %v3000 = vld [vmem:[#allocation7 + $0x280] sm:$0xff]
    %v3001 = vld [vmem:[#allocation7 + $0x288] sm:$0xff]
    %v3002 = vld [vmem:[#allocation7 + $0x290] sm:$0xff]
    %v3003 = vld [vmem:[#allocation7 + $0x298] sm:$0xff]
    %v3004 = vld [vmem:[#allocation7 + $0x2a0] sm:$0xff]
    %v3005 = vld [vmem:[#allocation7 + $0x2a8] sm:$0xff]
    %v3006 = vld [vmem:[#allocation7 + $0x2b0] sm:$0xff]
    %v3007 = vld [vmem:[#allocation7 + $0x2b8] sm:$0xff]
    %v3008 = vld [vmem:[#allocation7 + $0x2c0] sm:$0xff]
    %v3009 = vld [vmem:[#allocation7 + $0x2c8] sm:$0xff]
    %v3010 = vld [vmem:[#allocation7 + $0x2d0] sm:$0xff]
    %v3011 = vld [vmem:[#allocation7 + $0x2d8] sm:$0xff]
    %v3012 = vld [vmem:[#allocation7 + $0x2e0] sm:$0xff]
    %v3013 = vld [vmem:[#allocation7 + $0x2e8] sm:$0xff]
    %v3014 = vld [vmem:[#allocation7 + $0x2f0] sm:$0xff]
    %v3015 = vld [vmem:[#allocation7 + $0x2f8] sm:$0xff]
    %v3016 = vld [vmem:[#allocation7 + $0x300] sm:$0xff]
    %v3017 = vld [vmem:[#allocation7 + $0x308] sm:$0xff]
    %v3018 = vld [vmem:[#allocation7 + $0x310] sm:$0xff]
    %v3019 = vld [vmem:[#allocation7 + $0x318] sm:$0xff]
    %v3020 = vld [vmem:[#allocation7 + $0x320] sm:$0xff]
    %v3021 = vld [vmem:[#allocation7 + $0x328] sm:$0xff]
    %v3022 = vld [vmem:[#allocation7 + $0x330] sm:$0xff]
    %v3023 = vld [vmem:[#allocation7 + $0x338] sm:$0xff]
    %v3024 = vld [vmem:[#allocation7 + $0x340] sm:$0xff]
    %v3025 = vld [vmem:[#allocation7 + $0x348] sm:$0xff]
    %v3026 = vld [vmem:[#allocation7 + $0x350] sm:$0xff]
    %v3027 = vld [vmem:[#allocation7 + $0x358] sm:$0xff]
    %v3028 = vld [vmem:[#allocation7 + $0x360] sm:$0xff]
    %v3029 = vld [vmem:[#allocation7 + $0x368] sm:$0xff]
    %v3030 = vld [vmem:[#allocation7 + $0x370] sm:$0xff]
    %v3031 = vld [vmem:[#allocation7 + $0x378] sm:$0xff]
    %v3032 = vld [vmem:[#allocation7 + $0x380] sm:$0xff]
    %v3033 = vld [vmem:[#allocation7 + $0x388] sm:$0xff]
    %v3034 = vld [vmem:[#allocation7 + $0x390] sm:$0xff]
    %v3035 = vld [vmem:[#allocation7 + $0x398] sm:$0xff]
    %v3036 = vld [vmem:[#allocation7 + $0x3a0] sm:$0xff]
    %v3037 = vld [vmem:[#allocation7 + $0x3a8] sm:$0xff]
    %v3038 = vld [vmem:[#allocation7 + $0x3b0] sm:$0xff]
    %v3039 = vld [vmem:[#allocation7 + $0x3b8] sm:$0xff]
    %v3040 = vld [vmem:[#allocation7 + $0x3c0] sm:$0xff]
    %v3041 = vld [vmem:[#allocation7 + $0x3c8] sm:$0xff]
    %v3042 = vld [vmem:[#allocation7 + $0x3d0] sm:$0xff]
    %v3043 = vld [vmem:[#allocation7 + $0x3d8] sm:$0xff]
    %v3044 = vld [vmem:[#allocation7 + $0x3e0] sm:$0xff]
    %v3045 = vld [vmem:[#allocation7 + $0x3e8] sm:$0xff]
    %v3046 = vld [vmem:[#allocation7 + $0x3f0] sm:$0xff]
    %v3047 = vld [vmem:[#allocation7 + $0x3f8] sm:$0xff]
    %v3048 = vld [vmem:[#allocation7 + $0x400] sm:$0xff]
    %v3049 = vld [vmem:[#allocation7 + $0x408] sm:$0xff]
    %v3050 = vld [vmem:[#allocation7 + $0x410] sm:$0xff]
    %v3051 = vld [vmem:[#allocation7 + $0x418] sm:$0xff]
    %v3052 = vld [vmem:[#allocation7 + $0x420] sm:$0xff]
    %v3053 = vld [vmem:[#allocation7 + $0x428] sm:$0xff]
    %v3054 = vld [vmem:[#allocation7 + $0x430] sm:$0xff]
    %v3055 = vld [vmem:[#allocation7 + $0x438] sm:$0xff]
    %v3056 = vld [vmem:[#allocation7 + $0x440] sm:$0xff]
    %v3057 = vld [vmem:[#allocation7 + $0x448] sm:$0xff]
    %v3058 = vld [vmem:[#allocation7 + $0x450] sm:$0xff]
    %v3059 = vld [vmem:[#allocation7 + $0x458] sm:$0xff]
    %v3060 = vld [vmem:[#allocation7 + $0x460] sm:$0xff]
    %v3061 = vld [vmem:[#allocation7 + $0x468] sm:$0xff]
    %v3062 = vld [vmem:[#allocation7 + $0x470] sm:$0xff]
    %v3063 = vld [vmem:[#allocation7 + $0x478] sm:$0xff]
    %v3064 = vld [vmem:[#allocation7 + $0x480] sm:$0xff]
    %v3065 = vld [vmem:[#allocation7 + $0x488] sm:$0xff]
    %v3066 = vld [vmem:[#allocation7 + $0x490] sm:$0xff]
    %v3067 = vld [vmem:[#allocation7 + $0x498] sm:$0xff]
    %v3068 = vld [vmem:[#allocation7 + $0x4a0] sm:$0xff]
    %v3069 = vld [vmem:[#allocation7 + $0x4a8] sm:$0xff]
    %v3070 = vld [vmem:[#allocation7 + $0x4b0] sm:$0xff]
    %v3071 = vld [vmem:[#allocation7 + $0x4b8] sm:$0xff]
    %v3072 = vld [vmem:[#allocation7 + $0x4c0] sm:$0xff]
    %v3073 = vld [vmem:[#allocation7 + $0x4c8] sm:$0xff]
    %v3074 = vld [vmem:[#allocation7 + $0x4d0] sm:$0xff]
    %v3075 = vld [vmem:[#allocation7 + $0x4d8] sm:$0xff]
    %v3076 = vld [vmem:[#allocation7 + $0x4e0] sm:$0xff]
    %v3077 = vld [vmem:[#allocation7 + $0x4e8] sm:$0xff]
    %v3078 = vld [vmem:[#allocation7 + $0x4f0] sm:$0xff]
    %v3079 = vld [vmem:[#allocation7 + $0x4f8] sm:$0xff]
    %v3080 = vld [vmem:[#allocation7 + $0x500] sm:$0xff]
    %v3081 = vld [vmem:[#allocation7 + $0x508] sm:$0xff]
    %v3082 = vld [vmem:[#allocation7 + $0x510] sm:$0xff]
    %v3083 = vld [vmem:[#allocation7 + $0x518] sm:$0xff]
    %v3084 = vld [vmem:[#allocation7 + $0x520] sm:$0xff]
    %v3085 = vld [vmem:[#allocation7 + $0x528] sm:$0xff]
    %v3086 = vld [vmem:[#allocation7 + $0x530] sm:$0xff]
    %v3087 = vld [vmem:[#allocation7 + $0x538] sm:$0xff]
    %v3088 = vld [vmem:[#allocation7 + $0x540] sm:$0xff]
    %v3089 = vld [vmem:[#allocation7 + $0x548] sm:$0xff]
    %v3090 = vld [vmem:[#allocation7 + $0x550] sm:$0xff]
    %v3091 = vld [vmem:[#allocation7 + $0x558] sm:$0xff]
    %v3092 = vld [vmem:[#allocation7 + $0x560] sm:$0xff]
    %v3093 = vld [vmem:[#allocation7 + $0x568] sm:$0xff]
    %v3094 = vld [vmem:[#allocation7 + $0x570] sm:$0xff]
    %v3095 = vld [vmem:[#allocation7 + $0x578] sm:$0xff]
    %v3096 = vld [vmem:[#allocation7 + $0x580] sm:$0xff]
    %v3097 = vld [vmem:[#allocation7 + $0x588] sm:$0xff]
    %v3098 = vld [vmem:[#allocation7 + $0x590] sm:$0xff]
    %v3099 = vld [vmem:[#allocation7 + $0x598] sm:$0xff]
    %v3100 = vld [vmem:[#allocation7 + $0x5a0] sm:$0xff]
    %v3101 = vld [vmem:[#allocation7 + $0x5a8] sm:$0xff]
    %v3102 = vld [vmem:[#allocation7 + $0x5b0] sm:$0xff]
    %v3103 = vld [vmem:[#allocation7 + $0x5b8] sm:$0xff]
    %v3104 = vld [vmem:[#allocation7 + $0x5c0] sm:$0xff]
    %v3105 = vld [vmem:[#allocation7 + $0x5c8] sm:$0xff]
    %v3106 = vld [vmem:[#allocation7 + $0x5d0] sm:$0xff]
    %v3107 = vld [vmem:[#allocation7 + $0x5d8] sm:$0xff]
    %v3108 = vld [vmem:[#allocation7 + $0x5e0] sm:$0xff]
    %v3109 = vld [vmem:[#allocation7 + $0x5e8] sm:$0xff]
    %v3110 = vld [vmem:[#allocation7 + $0x5f0] sm:$0xff]
    %v3111 = vld [vmem:[#allocation7 + $0x5f8] sm:$0xff]
    %v3112 = vld [vmem:[#allocation7 + $0x600] sm:$0xff]
    %v3113 = vld [vmem:[#allocation7 + $0x608] sm:$0xff]
    %v3114 = vld [vmem:[#allocation7 + $0x610] sm:$0xff]
    %v3115 = vld [vmem:[#allocation7 + $0x618] sm:$0xff]
    %v3116 = vld [vmem:[#allocation7 + $0x620] sm:$0xff]
    %v3117 = vld [vmem:[#allocation7 + $0x628] sm:$0xff]
    %v3118 = vld [vmem:[#allocation7 + $0x630] sm:$0xff]
    %v3119 = vld [vmem:[#allocation7 + $0x638] sm:$0xff]
    %v3120 = vld [vmem:[#allocation7 + $0x640] sm:$0xff]
    %v3121 = vld [vmem:[#allocation7 + $0x648] sm:$0xff]
    %v3122 = vld [vmem:[#allocation7 + $0x650] sm:$0xff]
    %v3123 = vld [vmem:[#allocation7 + $0x658] sm:$0xff]
    %v3124 = vld [vmem:[#allocation7 + $0x660] sm:$0xff]
    %v3125 = vld [vmem:[#allocation7 + $0x668] sm:$0xff]
    %v3126 = vld [vmem:[#allocation7 + $0x670] sm:$0xff]
    %v3127 = vld [vmem:[#allocation7 + $0x678] sm:$0xff]
    %v3128 = vld [vmem:[#allocation7 + $0x680] sm:$0xff]
    %v3129 = vld [vmem:[#allocation7 + $0x688] sm:$0xff]
    %v3130 = vld [vmem:[#allocation7 + $0x690] sm:$0xff]
    %v3131 = vld [vmem:[#allocation7 + $0x698] sm:$0xff]
    %v3132 = vld [vmem:[#allocation7 + $0x6a0] sm:$0xff]
    %v3133 = vld [vmem:[#allocation7 + $0x6a8] sm:$0xff]
    %v3134 = vld [vmem:[#allocation7 + $0x6b0] sm:$0xff]
    %v3135 = vld [vmem:[#allocation7 + $0x6b8] sm:$0xff]
    %v3136 = vld [vmem:[#allocation7 + $0x6c0] sm:$0xff]
    %v3137 = vld [vmem:[#allocation7 + $0x6c8] sm:$0xff]
    %v3138 = vld [vmem:[#allocation7 + $0x6d0] sm:$0xff]
    %v3139 = vld [vmem:[#allocation7 + $0x6d8] sm:$0xff]
    %v3140 = vld [vmem:[#allocation7 + $0x6e0] sm:$0xff]
    %v3141 = vld [vmem:[#allocation7 + $0x6e8] sm:$0xff]
    %v3142 = vld [vmem:[#allocation7 + $0x6f0] sm:$0xff]
    %v3143 = vld [vmem:[#allocation7 + $0x6f8] sm:$0xff]
    %v3144 = vld [vmem:[#allocation7 + $0x700] sm:$0xff]
    %v3145 = vld [vmem:[#allocation7 + $0x708] sm:$0xff]
    %v3146 = vld [vmem:[#allocation7 + $0x710] sm:$0xff]
    %v3147 = vld [vmem:[#allocation7 + $0x718] sm:$0xff]
    %v3148 = vld [vmem:[#allocation7 + $0x720] sm:$0xff]
    %v3149 = vld [vmem:[#allocation7 + $0x728] sm:$0xff]
    %v3150 = vld [vmem:[#allocation7 + $0x730] sm:$0xff]
    %v3151 = vld [vmem:[#allocation7 + $0x738] sm:$0xff]
    %v3152 = vld [vmem:[#allocation7 + $0x740] sm:$0xff]
    %v3153 = vld [vmem:[#allocation7 + $0x748] sm:$0xff]
    %v3154 = vld [vmem:[#allocation7 + $0x750] sm:$0xff]
    %v3155 = vld [vmem:[#allocation7 + $0x758] sm:$0xff]
    %v3156 = vld [vmem:[#allocation7 + $0x760] sm:$0xff]
    %v3157 = vld [vmem:[#allocation7 + $0x768] sm:$0xff]
    %v3158 = vld [vmem:[#allocation7 + $0x770] sm:$0xff]
    %v3159 = vld [vmem:[#allocation7 + $0x778] sm:$0xff]
    %v3160 = vld [vmem:[#allocation7 + $0x780] sm:$0xff]
    %v3161 = vld [vmem:[#allocation7 + $0x788] sm:$0xff]
    %v3162 = vld [vmem:[#allocation7 + $0x790] sm:$0xff]
    %v3163 = vld [vmem:[#allocation7 + $0x798] sm:$0xff]
    %v3164 = vld [vmem:[#allocation7 + $0x7a0] sm:$0xff]
    %v3165 = vld [vmem:[#allocation7 + $0x7a8] sm:$0xff]
    %v3166 = vld [vmem:[#allocation7 + $0x7b0] sm:$0xff]
    %v3167 = vld [vmem:[#allocation7 + $0x7b8] sm:$0xff]
    %v3168 = vld [vmem:[#allocation7 + $0x7c0] sm:$0xff]
    %v3169 = vld [vmem:[#allocation7 + $0x7c8] sm:$0xff]
    %v3170 = vld [vmem:[#allocation7 + $0x7d0] sm:$0xff]
    %v3171 = vld [vmem:[#allocation7 + $0x7d8] sm:$0xff]
    %v3172 = vld [vmem:[#allocation7 + $0x7e0] sm:$0xff]
    %v3173 = vld [vmem:[#allocation7 + $0x7e8] sm:$0xff]
    %v3174 = vld [vmem:[#allocation7 + $0x7f0] sm:$0xff]
    %v3175 = vld [vmem:[#allocation7 + $0x7f8] sm:$0xff]
    %v3176 = vld [vmem:[#allocation7 + $0x800] sm:$0xff]
    %v3177 = vld [vmem:[#allocation7 + $0x808] sm:$0xff]
    %v3178 = vld [vmem:[#allocation7 + $0x810] sm:$0xff]
    %v3179 = vld [vmem:[#allocation7 + $0x818] sm:$0xff]
    %v3180 = vld [vmem:[#allocation7 + $0x820] sm:$0xff]
    %v3181 = vld [vmem:[#allocation7 + $0x828] sm:$0xff]
    %v3182 = vld [vmem:[#allocation7 + $0x830] sm:$0xff]
    %v3183 = vld [vmem:[#allocation7 + $0x838] sm:$0xff]
    %v3184 = vld [vmem:[#allocation7 + $0x840] sm:$0xff]
    %v3185 = vld [vmem:[#allocation7 + $0x848] sm:$0xff]
    %v3186 = vld [vmem:[#allocation7 + $0x850] sm:$0xff]
    %v3187 = vld [vmem:[#allocation7 + $0x858] sm:$0xff]
    %v3188 = vld [vmem:[#allocation7 + $0x860] sm:$0xff]
    %v3189 = vld [vmem:[#allocation7 + $0x868] sm:$0xff]
    %v3190 = vld [vmem:[#allocation7 + $0x870] sm:$0xff]
    %v3191 = vld [vmem:[#allocation7 + $0x878] sm:$0xff]
    %v3192 = vld [vmem:[#allocation7 + $0x880] sm:$0xff]
    %v3193 = vld [vmem:[#allocation7 + $0x888] sm:$0xff]
    %v3194 = vld [vmem:[#allocation7 + $0x890] sm:$0xff]
    %v3195 = vld [vmem:[#allocation7 + $0x898] sm:$0xff]
    %v3196 = vld [vmem:[#allocation7 + $0x8a0] sm:$0xff]
    %v3197 = vld [vmem:[#allocation7 + $0x8a8] sm:$0xff]
    %v3198 = vld [vmem:[#allocation7 + $0x8b0] sm:$0xff]
    %v3199 = vld [vmem:[#allocation7 + $0x8b8] sm:$0xff]
    %v3200 = vld [vmem:[#allocation7 + $0x8c0] sm:$0xff]
    %v3201 = vld [vmem:[#allocation7 + $0x8c8] sm:$0xff]
    %v3202 = vld [vmem:[#allocation7 + $0x8d0] sm:$0xff]
    %v3203 = vld [vmem:[#allocation7 + $0x8d8] sm:$0xff]
    %v3204 = vld [vmem:[#allocation7 + $0x8e0] sm:$0xff]
    %v3205 = vld [vmem:[#allocation7 + $0x8e8] sm:$0xff]
    %v3206 = vld [vmem:[#allocation7 + $0x8f0] sm:$0xff]
    %v3207 = vld [vmem:[#allocation7 + $0x8f8] sm:$0xff]
    %v3208 = vld [vmem:[#allocation7 + $0x900] sm:$0xff]
    %v3209 = vld [vmem:[#allocation7 + $0x908] sm:$0xff]
    %v3210 = vld [vmem:[#allocation7 + $0x910] sm:$0xff]
    %v3211 = vld [vmem:[#allocation7 + $0x918] sm:$0xff]
    %v3212 = vld [vmem:[#allocation7 + $0x920] sm:$0xff]
    %v3213 = vld [vmem:[#allocation7 + $0x928] sm:$0xff]
    %v3214 = vld [vmem:[#allocation7 + $0x930] sm:$0xff]
    %v3215 = vld [vmem:[#allocation7 + $0x938] sm:$0xff]
    %v3216 = vld [vmem:[#allocation7 + $0x940] sm:$0xff]
    %v3217 = vld [vmem:[#allocation7 + $0x948] sm:$0xff]
    %v3218 = vld [vmem:[#allocation7 + $0x950] sm:$0xff]
    %v3219 = vld [vmem:[#allocation7 + $0x958] sm:$0xff]
    %v3220 = vld [vmem:[#allocation7 + $0x960] sm:$0xff]
    %v3221 = vld [vmem:[#allocation7 + $0x968] sm:$0xff]
    %v3222 = vld [vmem:[#allocation7 + $0x970] sm:$0xff]
    %v3223 = vld [vmem:[#allocation7 + $0x978] sm:$0xff]
    %v3224 = vld [vmem:[#allocation7 + $0x980] sm:$0xff]
    %v3225 = vld [vmem:[#allocation7 + $0x988] sm:$0xff]
    %v3226 = vld [vmem:[#allocation7 + $0x990] sm:$0xff]
    %v3227 = vld [vmem:[#allocation7 + $0x998] sm:$0xff]
    %v3228 = vld [vmem:[#allocation7 + $0x9a0] sm:$0xff]
    %v3229 = vld [vmem:[#allocation7 + $0x9a8] sm:$0xff]
    %v3230 = vld [vmem:[#allocation7 + $0x9b0] sm:$0xff]
    %v3231 = vld [vmem:[#allocation7 + $0x9b8] sm:$0xff]
    %v3232 = vld [vmem:[#allocation7 + $0x9c0] sm:$0xff]
    %v3233 = vld [vmem:[#allocation7 + $0x9c8] sm:$0xff]
    %v3234 = vld [vmem:[#allocation7 + $0x9d0] sm:$0xff]
    %v3235 = vld [vmem:[#allocation7 + $0x9d8] sm:$0xff]
    %v3236 = vld [vmem:[#allocation7 + $0x9e0] sm:$0xff]
    %v3237 = vld [vmem:[#allocation7 + $0x9e8] sm:$0xff]
    %v3238 = vld [vmem:[#allocation7 + $0x9f0] sm:$0xff]
    %v3239 = vld [vmem:[#allocation7 + $0x9f8] sm:$0xff]
    %v3240 = vld [vmem:[#allocation7 + $0xa00] sm:$0xff]
    %v3241 = vld [vmem:[#allocation7 + $0xa08] sm:$0xff]
    %v3242 = vld [vmem:[#allocation7 + $0xa10] sm:$0xff]
    %v3243 = vld [vmem:[#allocation7 + $0xa18] sm:$0xff]
    %v3244 = vld [vmem:[#allocation7 + $0xa20] sm:$0xff]
    %v3245 = vld [vmem:[#allocation7 + $0xa28] sm:$0xff]
    %v3246 = vld [vmem:[#allocation7 + $0xa30] sm:$0xff]
    %v3247 = vld [vmem:[#allocation7 + $0xa38] sm:$0xff]
    %v3248 = vld [vmem:[#allocation7 + $0xa40] sm:$0xff]
    %v3249 = vld [vmem:[#allocation7 + $0xa48] sm:$0xff]
    %v3250 = vld [vmem:[#allocation7 + $0xa50] sm:$0xff]
    %v3251 = vld [vmem:[#allocation7 + $0xa58] sm:$0xff]
    %v3252 = vld [vmem:[#allocation7 + $0xa60] sm:$0xff]
    %v3253 = vld [vmem:[#allocation7 + $0xa68] sm:$0xff]
    %v3254 = vld [vmem:[#allocation7 + $0xa70] sm:$0xff]
    %v3255 = vld [vmem:[#allocation7 + $0xa78] sm:$0xff]
    %v3256 = vld [vmem:[#allocation7 + $0xa80] sm:$0xff]
    %v3257 = vld [vmem:[#allocation7 + $0xa88] sm:$0xff]
    %v3258 = vld [vmem:[#allocation7 + $0xa90] sm:$0xff]
    %v3259 = vld [vmem:[#allocation7 + $0xa98] sm:$0xff]
    %v3260 = vld [vmem:[#allocation7 + $0xaa0] sm:$0xff]
    %v3261 = vld [vmem:[#allocation7 + $0xaa8] sm:$0xff]
    %v3262 = vld [vmem:[#allocation7 + $0xab0] sm:$0xff]
    %v3263 = vld [vmem:[#allocation7 + $0xab8] sm:$0xff]
    %v3264 = vld [vmem:[#allocation7 + $0xac0] sm:$0xff]
    %v3265 = vld [vmem:[#allocation7 + $0xac8] sm:$0xff]
    %v3266 = vld [vmem:[#allocation7 + $0xad0] sm:$0xff]
    %v3267 = vld [vmem:[#allocation7 + $0xad8] sm:$0xff]
    %v3268 = vld [vmem:[#allocation7 + $0xae0] sm:$0xff]
    %v3269 = vld [vmem:[#allocation7 + $0xae8] sm:$0xff]
    %v3270 = vld [vmem:[#allocation7 + $0xaf0] sm:$0xff]
    %v3271 = vld [vmem:[#allocation7 + $0xaf8] sm:$0xff]
    %v3272 = vld [vmem:[#allocation7 + $0xb00] sm:$0xff]
    %v3273 = vld [vmem:[#allocation7 + $0xb08] sm:$0xff]
    %v3274 = vld [vmem:[#allocation7 + $0xb10] sm:$0xff]
    %v3275 = vld [vmem:[#allocation7 + $0xb18] sm:$0xff]
    %v3276 = vld [vmem:[#allocation7 + $0xb20] sm:$0xff]
    %v3277 = vld [vmem:[#allocation7 + $0xb28] sm:$0xff]
    %v3278 = vld [vmem:[#allocation7 + $0xb30] sm:$0xff]
    %v3279 = vld [vmem:[#allocation7 + $0xb38] sm:$0xff]
    %v3280 = vld [vmem:[#allocation7 + $0xb40] sm:$0xff]
    %v3281 = vld [vmem:[#allocation7 + $0xb48] sm:$0xff]
    %v3282 = vld [vmem:[#allocation7 + $0xb50] sm:$0xff]
    %v3283 = vld [vmem:[#allocation7 + $0xb58] sm:$0xff]
    %v3284 = vld [vmem:[#allocation7 + $0xb60] sm:$0xff]
    %v3285 = vld [vmem:[#allocation7 + $0xb68] sm:$0xff]
    %v3286 = vld [vmem:[#allocation7 + $0xb70] sm:$0xff]
    %v3287 = vld [vmem:[#allocation7 + $0xb78] sm:$0xff]
    %v3288 = vld [vmem:[#allocation7 + $0xb80] sm:$0xff]
    %v3289 = vld [vmem:[#allocation7 + $0xb88] sm:$0xff]
    %v3290 = vld [vmem:[#allocation7 + $0xb90] sm:$0xff]
    %v3291 = vld [vmem:[#allocation7 + $0xb98] sm:$0xff]
    %v3292 = vld [vmem:[#allocation7 + $0xba0] sm:$0xff]
    %v3293 = vld [vmem:[#allocation7 + $0xba8] sm:$0xff]
    %v3294 = vld [vmem:[#allocation7 + $0xbb0] sm:$0xff]
    %v3295 = vld [vmem:[#allocation7 + $0xbb8] sm:$0xff]
    %v3296 = vld [vmem:[#allocation7 + $0xbc0] sm:$0xff]
    %v3297 = vld [vmem:[#allocation7 + $0xbc8] sm:$0xff]
    %v3298 = vld [vmem:[#allocation7 + $0xbd0] sm:$0xff]
    %v3299 = vld [vmem:[#allocation7 + $0xbd8] sm:$0xff]
    %v3300 = vld [vmem:[#allocation7 + $0xbe0] sm:$0xff]
    %v3301 = vld [vmem:[#allocation7 + $0xbe8] sm:$0xff]
    %v3302 = vld [vmem:[#allocation7 + $0xbf0] sm:$0xff]
    %v3303 = vld [vmem:[#allocation7 + $0xbf8] sm:$0xff]
    %v3688 = vunpack.c.l.b16 %v2920
    %v3689 = vunpack.c.h.b16 %v2920
    %v3690 = vunpack.c.l.b16 %v2921
    %v3691 = vunpack.c.h.b16 %v2921
    %v3692 = vunpack.c.l.b16 %v2922
    %v3693 = vunpack.c.h.b16 %v2922
    %v3694 = vunpack.c.l.b16 %v2923
    %v3695 = vunpack.c.h.b16 %v2923
    %v3696 = vunpack.c.l.b16 %v2924
    %v3697 = vunpack.c.h.b16 %v2924
    %v3698 = vunpack.c.l.b16 %v2925
    %v3699 = vunpack.c.h.b16 %v2925
    %v3700 = vunpack.c.l.b16 %v2926
    %v3701 = vunpack.c.h.b16 %v2926
    %v3702 = vunpack.c.l.b16 %v2927
    %v3703 = vunpack.c.h.b16 %v2927
    %v3704 = vunpack.c.l.b16 %v2928
    %v3705 = vunpack.c.h.b16 %v2928
    %v3706 = vunpack.c.l.b16 %v2929
    %v3707 = vunpack.c.h.b16 %v2929
    %v3708 = vunpack.c.l.b16 %v2930
    %v3709 = vunpack.c.h.b16 %v2930
    %v3710 = vunpack.c.l.b16 %v2931
    %v3711 = vunpack.c.h.b16 %v2931
    %v3712 = vunpack.c.l.b16 %v2932
    %v3713 = vunpack.c.h.b16 %v2932
    %v3714 = vunpack.c.l.b16 %v2933
    %v3715 = vunpack.c.h.b16 %v2933
    %v3716 = vunpack.c.l.b16 %v2934
    %v3717 = vunpack.c.h.b16 %v2934
    %v3718 = vunpack.c.l.b16 %v2935
    %v3719 = vunpack.c.h.b16 %v2935
    %v3720 = vunpack.c.l.b16 %v2936
    %v3721 = vunpack.c.h.b16 %v2936
    %v3722 = vunpack.c.l.b16 %v2937
    %v3723 = vunpack.c.h.b16 %v2937
    %v3724 = vunpack.c.l.b16 %v2938
    %v3725 = vunpack.c.h.b16 %v2938
    %v3726 = vunpack.c.l.b16 %v2939
    %v3727 = vunpack.c.h.b16 %v2939
    %v3728 = vunpack.c.l.b16 %v2940
    %v3729 = vunpack.c.h.b16 %v2940
    %v3730 = vunpack.c.l.b16 %v2941
    %v3731 = vunpack.c.h.b16 %v2941
    %v3732 = vunpack.c.l.b16 %v2942
    %v3733 = vunpack.c.h.b16 %v2942
    %v3734 = vunpack.c.l.b16 %v2943
    %v3735 = vunpack.c.h.b16 %v2943
    %v3736 = vunpack.c.l.b16 %v2944
    %v3737 = vunpack.c.h.b16 %v2944
    %v3738 = vunpack.c.l.b16 %v2945
    %v3739 = vunpack.c.h.b16 %v2945
    %v3740 = vunpack.c.l.b16 %v2946
    %v3741 = vunpack.c.h.b16 %v2946
    %v3742 = vunpack.c.l.b16 %v2947
    %v3743 = vunpack.c.h.b16 %v2947
    %v3744 = vunpack.c.l.b16 %v2948
    %v3745 = vunpack.c.h.b16 %v2948
    %v3746 = vunpack.c.l.b16 %v2949
    %v3747 = vunpack.c.h.b16 %v2949
    %v3748 = vunpack.c.l.b16 %v2950
    %v3749 = vunpack.c.h.b16 %v2950
    %v3750 = vunpack.c.l.b16 %v2951
    %v3751 = vunpack.c.h.b16 %v2951
    %v3752 = vunpack.c.l.b16 %v2952
    %v3753 = vunpack.c.h.b16 %v2952
    %v3754 = vunpack.c.l.b16 %v2953
    %v3755 = vunpack.c.h.b16 %v2953
    %v3756 = vunpack.c.l.b16 %v2954
    %v3757 = vunpack.c.h.b16 %v2954
    %v3758 = vunpack.c.l.b16 %v2955
    %v3759 = vunpack.c.h.b16 %v2955
    %v3760 = vunpack.c.l.b16 %v2956
    %v3761 = vunpack.c.h.b16 %v2956
    %v3762 = vunpack.c.l.b16 %v2957
    %v3763 = vunpack.c.h.b16 %v2957
    %v3764 = vunpack.c.l.b16 %v2958
    %v3765 = vunpack.c.h.b16 %v2958
    %v3766 = vunpack.c.l.b16 %v2959
    %v3767 = vunpack.c.h.b16 %v2959
    %v3768 = vunpack.c.l.b16 %v2960
    %v3769 = vunpack.c.h.b16 %v2960
    %v3770 = vunpack.c.l.b16 %v2961
    %v3771 = vunpack.c.h.b16 %v2961
    %v3772 = vunpack.c.l.b16 %v2962
    %v3773 = vunpack.c.h.b16 %v2962
    %v3774 = vunpack.c.l.b16 %v2963
    %v3775 = vunpack.c.h.b16 %v2963
    %v3776 = vunpack.c.l.b16 %v2964
    %v3777 = vunpack.c.h.b16 %v2964
    %v3778 = vunpack.c.l.b16 %v2965
    %v3779 = vunpack.c.h.b16 %v2965
    %v3780 = vunpack.c.l.b16 %v2966
    %v3781 = vunpack.c.h.b16 %v2966
    %v3782 = vunpack.c.l.b16 %v2967
    %v3783 = vunpack.c.h.b16 %v2967
    %v3784 = vunpack.c.l.b16 %v2968
    %v3785 = vunpack.c.h.b16 %v2968
    %v3786 = vunpack.c.l.b16 %v2969
    %v3787 = vunpack.c.h.b16 %v2969
    %v3788 = vunpack.c.l.b16 %v2970
    %v3789 = vunpack.c.h.b16 %v2970
    %v3790 = vunpack.c.l.b16 %v2971
    %v3791 = vunpack.c.h.b16 %v2971
    %v3792 = vunpack.c.l.b16 %v2972
    %v3793 = vunpack.c.h.b16 %v2972
    %v3794 = vunpack.c.l.b16 %v2973
    %v3795 = vunpack.c.h.b16 %v2973
    %v3796 = vunpack.c.l.b16 %v2974
    %v3797 = vunpack.c.h.b16 %v2974
    %v3798 = vunpack.c.l.b16 %v2975
    %v3799 = vunpack.c.h.b16 %v2975
    %v3800 = vunpack.c.l.b16 %v2976
    %v3801 = vunpack.c.h.b16 %v2976
    %v3802 = vunpack.c.l.b16 %v2977
    %v3803 = vunpack.c.h.b16 %v2977
    %v3804 = vunpack.c.l.b16 %v2978
    %v3805 = vunpack.c.h.b16 %v2978
    %v3806 = vunpack.c.l.b16 %v2979
    %v3807 = vunpack.c.h.b16 %v2979
    %v3808 = vunpack.c.l.b16 %v2980
    %v3809 = vunpack.c.h.b16 %v2980
    %v3810 = vunpack.c.l.b16 %v2981
    %v3811 = vunpack.c.h.b16 %v2981
    %v3812 = vunpack.c.l.b16 %v2982
    %v3813 = vunpack.c.h.b16 %v2982
    %v3814 = vunpack.c.l.b16 %v2983
    %v3815 = vunpack.c.h.b16 %v2983
    %v3816 = vunpack.c.l.b16 %v2984
    %v3817 = vunpack.c.h.b16 %v2984
    %v3818 = vunpack.c.l.b16 %v2985
    %v3819 = vunpack.c.h.b16 %v2985
    %v3820 = vunpack.c.l.b16 %v2986
    %v3821 = vunpack.c.h.b16 %v2986
    %v3822 = vunpack.c.l.b16 %v2987
    %v3823 = vunpack.c.h.b16 %v2987
    %v3824 = vunpack.c.l.b16 %v2988
    %v3825 = vunpack.c.h.b16 %v2988
    %v3826 = vunpack.c.l.b16 %v2989
    %v3827 = vunpack.c.h.b16 %v2989
    %v3828 = vunpack.c.l.b16 %v2990
    %v3829 = vunpack.c.h.b16 %v2990
    %v3830 = vunpack.c.l.b16 %v2991
    %v3831 = vunpack.c.h.b16 %v2991
    %v3832 = vunpack.c.l.b16 %v2992
    %v3833 = vunpack.c.h.b16 %v2992
    %v3834 = vunpack.c.l.b16 %v2993
    %v3835 = vunpack.c.h.b16 %v2993
    %v3836 = vunpack.c.l.b16 %v2994
    %v3837 = vunpack.c.h.b16 %v2994
    %v3838 = vunpack.c.l.b16 %v2995
    %v3839 = vunpack.c.h.b16 %v2995
    %v3840 = vunpack.c.l.b16 %v2996
    %v3841 = vunpack.c.h.b16 %v2996
    %v3842 = vunpack.c.l.b16 %v2997
    %v3843 = vunpack.c.h.b16 %v2997
    %v3844 = vunpack.c.l.b16 %v2998
    %v3845 = vunpack.c.h.b16 %v2998
    %v3846 = vunpack.c.l.b16 %v2999
    %v3847 = vunpack.c.h.b16 %v2999
    %v3848 = vunpack.c.l.b16 %v3000
    %v3849 = vunpack.c.h.b16 %v3000
    %v3850 = vunpack.c.l.b16 %v3001
    %v3851 = vunpack.c.h.b16 %v3001
    %v3852 = vunpack.c.l.b16 %v3002
    %v3853 = vunpack.c.h.b16 %v3002
    %v3854 = vunpack.c.l.b16 %v3003
    %v3855 = vunpack.c.h.b16 %v3003
    %v3856 = vunpack.c.l.b16 %v3004
    %v3857 = vunpack.c.h.b16 %v3004
    %v3858 = vunpack.c.l.b16 %v3005
    %v3859 = vunpack.c.h.b16 %v3005
    %v3860 = vunpack.c.l.b16 %v3006
    %v3861 = vunpack.c.h.b16 %v3006
    %v3862 = vunpack.c.l.b16 %v3007
    %v3863 = vunpack.c.h.b16 %v3007
    %v3864 = vunpack.c.l.b16 %v3008
    %v3865 = vunpack.c.h.b16 %v3008
    %v3866 = vunpack.c.l.b16 %v3009
    %v3867 = vunpack.c.h.b16 %v3009
    %v3868 = vunpack.c.l.b16 %v3010
    %v3869 = vunpack.c.h.b16 %v3010
    %v3870 = vunpack.c.l.b16 %v3011
    %v3871 = vunpack.c.h.b16 %v3011
    %v3872 = vunpack.c.l.b16 %v3012
    %v3873 = vunpack.c.h.b16 %v3012
    %v3874 = vunpack.c.l.b16 %v3013
    %v3875 = vunpack.c.h.b16 %v3013
    %v3876 = vunpack.c.l.b16 %v3014
    %v3877 = vunpack.c.h.b16 %v3014
    %v3878 = vunpack.c.l.b16 %v3015
    %v3879 = vunpack.c.h.b16 %v3015
    %v3880 = vunpack.c.l.b16 %v3016
    %v3881 = vunpack.c.h.b16 %v3016
    %v3882 = vunpack.c.l.b16 %v3017
    %v3883 = vunpack.c.h.b16 %v3017
    %v3884 = vunpack.c.l.b16 %v3018
    %v3885 = vunpack.c.h.b16 %v3018
    %v3886 = vunpack.c.l.b16 %v3019
    %v3887 = vunpack.c.h.b16 %v3019
    %v3888 = vunpack.c.l.b16 %v3020
    %v3889 = vunpack.c.h.b16 %v3020
    %v3890 = vunpack.c.l.b16 %v3021
    %v3891 = vunpack.c.h.b16 %v3021
    %v3892 = vunpack.c.l.b16 %v3022
    %v3893 = vunpack.c.h.b16 %v3022
    %v3894 = vunpack.c.l.b16 %v3023
    %v3895 = vunpack.c.h.b16 %v3023
    %v3896 = vunpack.c.l.b16 %v3024
    %v3897 = vunpack.c.h.b16 %v3024
    %v3898 = vunpack.c.l.b16 %v3025
    %v3899 = vunpack.c.h.b16 %v3025
    %v3900 = vunpack.c.l.b16 %v3026
    %v3901 = vunpack.c.h.b16 %v3026
    %v3902 = vunpack.c.l.b16 %v3027
    %v3903 = vunpack.c.h.b16 %v3027
    %v3904 = vunpack.c.l.b16 %v3028
    %v3905 = vunpack.c.h.b16 %v3028
    %v3906 = vunpack.c.l.b16 %v3029
    %v3907 = vunpack.c.h.b16 %v3029
    %v3908 = vunpack.c.l.b16 %v3030
    %v3909 = vunpack.c.h.b16 %v3030
    %v3910 = vunpack.c.l.b16 %v3031
    %v3911 = vunpack.c.h.b16 %v3031
    %v3912 = vunpack.c.l.b16 %v3032
    %v3913 = vunpack.c.h.b16 %v3032
    %v3914 = vunpack.c.l.b16 %v3033
    %v3915 = vunpack.c.h.b16 %v3033
    %v3916 = vunpack.c.l.b16 %v3034
    %v3917 = vunpack.c.h.b16 %v3034
    %v3918 = vunpack.c.l.b16 %v3035
    %v3919 = vunpack.c.h.b16 %v3035
    %v3920 = vunpack.c.l.b16 %v3036
    %v3921 = vunpack.c.h.b16 %v3036
    %v3922 = vunpack.c.l.b16 %v3037
    %v3923 = vunpack.c.h.b16 %v3037
    %v3924 = vunpack.c.l.b16 %v3038
    %v3925 = vunpack.c.h.b16 %v3038
    %v3926 = vunpack.c.l.b16 %v3039
    %v3927 = vunpack.c.h.b16 %v3039
    %v3928 = vunpack.c.l.b16 %v3040
    %v3929 = vunpack.c.h.b16 %v3040
    %v3930 = vunpack.c.l.b16 %v3041
    %v3931 = vunpack.c.h.b16 %v3041
    %v3932 = vunpack.c.l.b16 %v3042
    %v3933 = vunpack.c.h.b16 %v3042
    %v3934 = vunpack.c.l.b16 %v3043
    %v3935 = vunpack.c.h.b16 %v3043
    %v3936 = vunpack.c.l.b16 %v3044
    %v3937 = vunpack.c.h.b16 %v3044
    %v3938 = vunpack.c.l.b16 %v3045
    %v3939 = vunpack.c.h.b16 %v3045
    %v3940 = vunpack.c.l.b16 %v3046
    %v3941 = vunpack.c.h.b16 %v3046
    %v3942 = vunpack.c.l.b16 %v3047
    %v3943 = vunpack.c.h.b16 %v3047
    %v3944 = vunpack.c.l.b16 %v3048
    %v3945 = vunpack.c.h.b16 %v3048
    %v3946 = vunpack.c.l.b16 %v3049
    %v3947 = vunpack.c.h.b16 %v3049
    %v3948 = vunpack.c.l.b16 %v3050
    %v3949 = vunpack.c.h.b16 %v3050
    %v3950 = vunpack.c.l.b16 %v3051
    %v3951 = vunpack.c.h.b16 %v3051
    %v3952 = vunpack.c.l.b16 %v3052
    %v3953 = vunpack.c.h.b16 %v3052
    %v3954 = vunpack.c.l.b16 %v3053
    %v3955 = vunpack.c.h.b16 %v3053
    %v3956 = vunpack.c.l.b16 %v3054
    %v3957 = vunpack.c.h.b16 %v3054
    %v3958 = vunpack.c.l.b16 %v3055
    %v3959 = vunpack.c.h.b16 %v3055
    %v3960 = vunpack.c.l.b16 %v3056
    %v3961 = vunpack.c.h.b16 %v3056
    %v3962 = vunpack.c.l.b16 %v3057
    %v3963 = vunpack.c.h.b16 %v3057
    %v3964 = vunpack.c.l.b16 %v3058
    %v3965 = vunpack.c.h.b16 %v3058
    %v3966 = vunpack.c.l.b16 %v3059
    %v3967 = vunpack.c.h.b16 %v3059
    %v3968 = vunpack.c.l.b16 %v3060
    %v3969 = vunpack.c.h.b16 %v3060
    %v3970 = vunpack.c.l.b16 %v3061
    %v3971 = vunpack.c.h.b16 %v3061
    %v3972 = vunpack.c.l.b16 %v3062
    %v3973 = vunpack.c.h.b16 %v3062
    %v3974 = vunpack.c.l.b16 %v3063
    %v3975 = vunpack.c.h.b16 %v3063
    %v3976 = vunpack.c.l.b16 %v3064
    %v3977 = vunpack.c.h.b16 %v3064
    %v3978 = vunpack.c.l.b16 %v3065
    %v3979 = vunpack.c.h.b16 %v3065
    %v3980 = vunpack.c.l.b16 %v3066
    %v3981 = vunpack.c.h.b16 %v3066
    %v3982 = vunpack.c.l.b16 %v3067
    %v3983 = vunpack.c.h.b16 %v3067
    %v3984 = vunpack.c.l.b16 %v3068
    %v3985 = vunpack.c.h.b16 %v3068
    %v3986 = vunpack.c.l.b16 %v3069
    %v3987 = vunpack.c.h.b16 %v3069
    %v3988 = vunpack.c.l.b16 %v3070
    %v3989 = vunpack.c.h.b16 %v3070
    %v3990 = vunpack.c.l.b16 %v3071
    %v3991 = vunpack.c.h.b16 %v3071
    %v3992 = vunpack.c.l.b16 %v3072
    %v3993 = vunpack.c.h.b16 %v3072
    %v3994 = vunpack.c.l.b16 %v3073
    %v3995 = vunpack.c.h.b16 %v3073
    %v3996 = vunpack.c.l.b16 %v3074
    %v3997 = vunpack.c.h.b16 %v3074
    %v3998 = vunpack.c.l.b16 %v3075
    %v3999 = vunpack.c.h.b16 %v3075
    %v4000 = vunpack.c.l.b16 %v3076
    %v4001 = vunpack.c.h.b16 %v3076
    %v4002 = vunpack.c.l.b16 %v3077
    %v4003 = vunpack.c.h.b16 %v3077
    %v4004 = vunpack.c.l.b16 %v3078
    %v4005 = vunpack.c.h.b16 %v3078
    %v4006 = vunpack.c.l.b16 %v3079
    %v4007 = vunpack.c.h.b16 %v3079
    %v4008 = vunpack.c.l.b16 %v3080
    %v4009 = vunpack.c.h.b16 %v3080
    %v4010 = vunpack.c.l.b16 %v3081
    %v4011 = vunpack.c.h.b16 %v3081
    %v4012 = vunpack.c.l.b16 %v3082
    %v4013 = vunpack.c.h.b16 %v3082
    %v4014 = vunpack.c.l.b16 %v3083
    %v4015 = vunpack.c.h.b16 %v3083
    %v4016 = vunpack.c.l.b16 %v3084
    %v4017 = vunpack.c.h.b16 %v3084
    %v4018 = vunpack.c.l.b16 %v3085
    %v4019 = vunpack.c.h.b16 %v3085
    %v4020 = vunpack.c.l.b16 %v3086
    %v4021 = vunpack.c.h.b16 %v3086
    %v4022 = vunpack.c.l.b16 %v3087
    %v4023 = vunpack.c.h.b16 %v3087
    %v4024 = vunpack.c.l.b16 %v3088
    %v4025 = vunpack.c.h.b16 %v3088
    %v4026 = vunpack.c.l.b16 %v3089
    %v4027 = vunpack.c.h.b16 %v3089
    %v4028 = vunpack.c.l.b16 %v3090
    %v4029 = vunpack.c.h.b16 %v3090
    %v4030 = vunpack.c.l.b16 %v3091
    %v4031 = vunpack.c.h.b16 %v3091
    %v4032 = vunpack.c.l.b16 %v3092
    %v4033 = vunpack.c.h.b16 %v3092
    %v4034 = vunpack.c.l.b16 %v3093
    %v4035 = vunpack.c.h.b16 %v3093
    %v4036 = vunpack.c.l.b16 %v3094
    %v4037 = vunpack.c.h.b16 %v3094
    %v4038 = vunpack.c.l.b16 %v3095
    %v4039 = vunpack.c.h.b16 %v3095
    %v4040 = vunpack.c.l.b16 %v3096
    %v4041 = vunpack.c.h.b16 %v3096
    %v4042 = vunpack.c.l.b16 %v3097
    %v4043 = vunpack.c.h.b16 %v3097
    %v4044 = vunpack.c.l.b16 %v3098
    %v4045 = vunpack.c.h.b16 %v3098
    %v4046 = vunpack.c.l.b16 %v3099
    %v4047 = vunpack.c.h.b16 %v3099
    %v4048 = vunpack.c.l.b16 %v3100
    %v4049 = vunpack.c.h.b16 %v3100
    %v4050 = vunpack.c.l.b16 %v3101
    %v4051 = vunpack.c.h.b16 %v3101
    %v4052 = vunpack.c.l.b16 %v3102
    %v4053 = vunpack.c.h.b16 %v3102
    %v4054 = vunpack.c.l.b16 %v3103
    %v4055 = vunpack.c.h.b16 %v3103
    %v4056 = vunpack.c.l.b16 %v3104
    %v4057 = vunpack.c.h.b16 %v3104
    %v4058 = vunpack.c.l.b16 %v3105
    %v4059 = vunpack.c.h.b16 %v3105
    %v4060 = vunpack.c.l.b16 %v3106
    %v4061 = vunpack.c.h.b16 %v3106
    %v4062 = vunpack.c.l.b16 %v3107
    %v4063 = vunpack.c.h.b16 %v3107
    %v4064 = vunpack.c.l.b16 %v3108
    %v4065 = vunpack.c.h.b16 %v3108
    %v4066 = vunpack.c.l.b16 %v3109
    %v4067 = vunpack.c.h.b16 %v3109
    %v4068 = vunpack.c.l.b16 %v3110
    %v4069 = vunpack.c.h.b16 %v3110
    %v4070 = vunpack.c.l.b16 %v3111
    %v4071 = vunpack.c.h.b16 %v3111
    %v4072 = vunpack.c.l.b16 %v3112
    %v4073 = vunpack.c.h.b16 %v3112
    %v4074 = vunpack.c.l.b16 %v3113
    %v4075 = vunpack.c.h.b16 %v3113
    %v4076 = vunpack.c.l.b16 %v3114
    %v4077 = vunpack.c.h.b16 %v3114
    %v4078 = vunpack.c.l.b16 %v3115
    %v4079 = vunpack.c.h.b16 %v3115
    %v4080 = vunpack.c.l.b16 %v3116
    %v4081 = vunpack.c.h.b16 %v3116
    %v4082 = vunpack.c.l.b16 %v3117
    %v4083 = vunpack.c.h.b16 %v3117
    %v4084 = vunpack.c.l.b16 %v3118
    %v4085 = vunpack.c.h.b16 %v3118
    %v4086 = vunpack.c.l.b16 %v3119
    %v4087 = vunpack.c.h.b16 %v3119
    %v4088 = vunpack.c.l.b16 %v3120
    %v4089 = vunpack.c.h.b16 %v3120
    %v4090 = vunpack.c.l.b16 %v3121
    %v4091 = vunpack.c.h.b16 %v3121
    %v4092 = vunpack.c.l.b16 %v3122
    %v4093 = vunpack.c.h.b16 %v3122
    %v4094 = vunpack.c.l.b16 %v3123
    %v4095 = vunpack.c.h.b16 %v3123
    %v4096 = vunpack.c.l.b16 %v3124
    %v4097 = vunpack.c.h.b16 %v3124
    %v4098 = vunpack.c.l.b16 %v3125
    %v4099 = vunpack.c.h.b16 %v3125
    %v4100 = vunpack.c.l.b16 %v3126
    %v4101 = vunpack.c.h.b16 %v3126
    %v4102 = vunpack.c.l.b16 %v3127
    %v4103 = vunpack.c.h.b16 %v3127
    %v4104 = vunpack.c.l.b16 %v3128
    %v4105 = vunpack.c.h.b16 %v3128
    %v4106 = vunpack.c.l.b16 %v3129
    %v4107 = vunpack.c.h.b16 %v3129
    %v4108 = vunpack.c.l.b16 %v3130
    %v4109 = vunpack.c.h.b16 %v3130
    %v4110 = vunpack.c.l.b16 %v3131
    %v4111 = vunpack.c.h.b16 %v3131
    %v4112 = vunpack.c.l.b16 %v3132
    %v4113 = vunpack.c.h.b16 %v3132
    %v4114 = vunpack.c.l.b16 %v3133
    %v4115 = vunpack.c.h.b16 %v3133
    %v4116 = vunpack.c.l.b16 %v3134
    %v4117 = vunpack.c.h.b16 %v3134
    %v4118 = vunpack.c.l.b16 %v3135
    %v4119 = vunpack.c.h.b16 %v3135
    %v4120 = vunpack.c.l.b16 %v3136
    %v4121 = vunpack.c.h.b16 %v3136
    %v4122 = vunpack.c.l.b16 %v3137
    %v4123 = vunpack.c.h.b16 %v3137
    %v4124 = vunpack.c.l.b16 %v3138
    %v4125 = vunpack.c.h.b16 %v3138
    %v4126 = vunpack.c.l.b16 %v3139
    %v4127 = vunpack.c.h.b16 %v3139
    %v4128 = vunpack.c.l.b16 %v3140
    %v4129 = vunpack.c.h.b16 %v3140
    %v4130 = vunpack.c.l.b16 %v3141
    %v4131 = vunpack.c.h.b16 %v3141
    %v4132 = vunpack.c.l.b16 %v3142
    %v4133 = vunpack.c.h.b16 %v3142
    %v4134 = vunpack.c.l.b16 %v3143
    %v4135 = vunpack.c.h.b16 %v3143
    %v4136 = vunpack.c.l.b16 %v3144
    %v4137 = vunpack.c.h.b16 %v3144
    %v4138 = vunpack.c.l.b16 %v3145
    %v4139 = vunpack.c.h.b16 %v3145
    %v4140 = vunpack.c.l.b16 %v3146
    %v4141 = vunpack.c.h.b16 %v3146
    %v4142 = vunpack.c.l.b16 %v3147
    %v4143 = vunpack.c.h.b16 %v3147
    %v4144 = vunpack.c.l.b16 %v3148
    %v4145 = vunpack.c.h.b16 %v3148
    %v4146 = vunpack.c.l.b16 %v3149
    %v4147 = vunpack.c.h.b16 %v3149
    %v4148 = vunpack.c.l.b16 %v3150
    %v4149 = vunpack.c.h.b16 %v3150
    %v4150 = vunpack.c.l.b16 %v3151
    %v4151 = vunpack.c.h.b16 %v3151
    %v4152 = vunpack.c.l.b16 %v3152
    %v4153 = vunpack.c.h.b16 %v3152
    %v4154 = vunpack.c.l.b16 %v3153
    %v4155 = vunpack.c.h.b16 %v3153
    %v4156 = vunpack.c.l.b16 %v3154
    %v4157 = vunpack.c.h.b16 %v3154
    %v4158 = vunpack.c.l.b16 %v3155
    %v4159 = vunpack.c.h.b16 %v3155
    %v4160 = vunpack.c.l.b16 %v3156
    %v4161 = vunpack.c.h.b16 %v3156
    %v4162 = vunpack.c.l.b16 %v3157
    %v4163 = vunpack.c.h.b16 %v3157
    %v4164 = vunpack.c.l.b16 %v3158
    %v4165 = vunpack.c.h.b16 %v3158
    %v4166 = vunpack.c.l.b16 %v3159
    %v4167 = vunpack.c.h.b16 %v3159
    %v4168 = vunpack.c.l.b16 %v3160
    %v4169 = vunpack.c.h.b16 %v3160
    %v4170 = vunpack.c.l.b16 %v3161
    %v4171 = vunpack.c.h.b16 %v3161
    %v4172 = vunpack.c.l.b16 %v3162
    %v4173 = vunpack.c.h.b16 %v3162
    %v4174 = vunpack.c.l.b16 %v3163
    %v4175 = vunpack.c.h.b16 %v3163
    %v4176 = vunpack.c.l.b16 %v3164
    %v4177 = vunpack.c.h.b16 %v3164
    %v4178 = vunpack.c.l.b16 %v3165
    %v4179 = vunpack.c.h.b16 %v3165
    %v4180 = vunpack.c.l.b16 %v3166
    %v4181 = vunpack.c.h.b16 %v3166
    %v4182 = vunpack.c.l.b16 %v3167
    %v4183 = vunpack.c.h.b16 %v3167
    %v4184 = vunpack.c.l.b16 %v3168
    %v4185 = vunpack.c.h.b16 %v3168
    %v4186 = vunpack.c.l.b16 %v3169
    %v4187 = vunpack.c.h.b16 %v3169
    %v4188 = vunpack.c.l.b16 %v3170
    %v4189 = vunpack.c.h.b16 %v3170
    %v4190 = vunpack.c.l.b16 %v3171
    %v4191 = vunpack.c.h.b16 %v3171
    %v4192 = vunpack.c.l.b16 %v3172
    %v4193 = vunpack.c.h.b16 %v3172
    %v4194 = vunpack.c.l.b16 %v3173
    %v4195 = vunpack.c.h.b16 %v3173
    %v4196 = vunpack.c.l.b16 %v3174
    %v4197 = vunpack.c.h.b16 %v3174
    %v4198 = vunpack.c.l.b16 %v3175
    %v4199 = vunpack.c.h.b16 %v3175
    %v4200 = vunpack.c.l.b16 %v3176
    %v4201 = vunpack.c.h.b16 %v3176
    %v4202 = vunpack.c.l.b16 %v3177
    %v4203 = vunpack.c.h.b16 %v3177
    %v4204 = vunpack.c.l.b16 %v3178
    %v4205 = vunpack.c.h.b16 %v3178
    %v4206 = vunpack.c.l.b16 %v3179
    %v4207 = vunpack.c.h.b16 %v3179
    %v4208 = vunpack.c.l.b16 %v3180
    %v4209 = vunpack.c.h.b16 %v3180
    %v4210 = vunpack.c.l.b16 %v3181
    %v4211 = vunpack.c.h.b16 %v3181
    %v4212 = vunpack.c.l.b16 %v3182
    %v4213 = vunpack.c.h.b16 %v3182
    %v4214 = vunpack.c.l.b16 %v3183
    %v4215 = vunpack.c.h.b16 %v3183
    %v4216 = vunpack.c.l.b16 %v3184
    %v4217 = vunpack.c.h.b16 %v3184
    %v4218 = vunpack.c.l.b16 %v3185
    %v4219 = vunpack.c.h.b16 %v3185
    %v4220 = vunpack.c.l.b16 %v3186
    %v4221 = vunpack.c.h.b16 %v3186
    %v4222 = vunpack.c.l.b16 %v3187
    %v4223 = vunpack.c.h.b16 %v3187
    %v4224 = vunpack.c.l.b16 %v3188
    %v4225 = vunpack.c.h.b16 %v3188
    %v4226 = vunpack.c.l.b16 %v3189
    %v4227 = vunpack.c.h.b16 %v3189
    %v4228 = vunpack.c.l.b16 %v3190
    %v4229 = vunpack.c.h.b16 %v3190
    %v4230 = vunpack.c.l.b16 %v3191
    %v4231 = vunpack.c.h.b16 %v3191
    %v4232 = vunpack.c.l.b16 %v3192
    %v4233 = vunpack.c.h.b16 %v3192
    %v4234 = vunpack.c.l.b16 %v3193
    %v4235 = vunpack.c.h.b16 %v3193
    %v4236 = vunpack.c.l.b16 %v3194
    %v4237 = vunpack.c.h.b16 %v3194
    %v4238 = vunpack.c.l.b16 %v3195
    %v4239 = vunpack.c.h.b16 %v3195
    %v4240 = vunpack.c.l.b16 %v3196
    %v4241 = vunpack.c.h.b16 %v3196
    %v4242 = vunpack.c.l.b16 %v3197
    %v4243 = vunpack.c.h.b16 %v3197
    %v4244 = vunpack.c.l.b16 %v3198
    %v4245 = vunpack.c.h.b16 %v3198
    %v4246 = vunpack.c.l.b16 %v3199
    %v4247 = vunpack.c.h.b16 %v3199
    %v4248 = vunpack.c.l.b16 %v3200
    %v4249 = vunpack.c.h.b16 %v3200
    %v4250 = vunpack.c.l.b16 %v3201
    %v4251 = vunpack.c.h.b16 %v3201
    %v4252 = vunpack.c.l.b16 %v3202
    %v4253 = vunpack.c.h.b16 %v3202
    %v4254 = vunpack.c.l.b16 %v3203
    %v4255 = vunpack.c.h.b16 %v3203
    %v4256 = vunpack.c.l.b16 %v3204
    %v4257 = vunpack.c.h.b16 %v3204
    %v4258 = vunpack.c.l.b16 %v3205
    %v4259 = vunpack.c.h.b16 %v3205
    %v4260 = vunpack.c.l.b16 %v3206
    %v4261 = vunpack.c.h.b16 %v3206
    %v4262 = vunpack.c.l.b16 %v3207
    %v4263 = vunpack.c.h.b16 %v3207
    %v4264 = vunpack.c.l.b16 %v3208
    %v4265 = vunpack.c.h.b16 %v3208
    %v4266 = vunpack.c.l.b16 %v3209
    %v4267 = vunpack.c.h.b16 %v3209
    %v4268 = vunpack.c.l.b16 %v3210
    %v4269 = vunpack.c.h.b16 %v3210
    %v4270 = vunpack.c.l.b16 %v3211
    %v4271 = vunpack.c.h.b16 %v3211
    %v4272 = vunpack.c.l.b16 %v3212
    %v4273 = vunpack.c.h.b16 %v3212
    %v4274 = vunpack.c.l.b16 %v3213
    %v4275 = vunpack.c.h.b16 %v3213
    %v4276 = vunpack.c.l.b16 %v3214
    %v4277 = vunpack.c.h.b16 %v3214
    %v4278 = vunpack.c.l.b16 %v3215
    %v4279 = vunpack.c.h.b16 %v3215
    %v4280 = vunpack.c.l.b16 %v3216
    %v4281 = vunpack.c.h.b16 %v3216
    %v4282 = vunpack.c.l.b16 %v3217
    %v4283 = vunpack.c.h.b16 %v3217
    %v4284 = vunpack.c.l.b16 %v3218
    %v4285 = vunpack.c.h.b16 %v3218
    %v4286 = vunpack.c.l.b16 %v3219
    %v4287 = vunpack.c.h.b16 %v3219
    %v4288 = vunpack.c.l.b16 %v3220
    %v4289 = vunpack.c.h.b16 %v3220
    %v4290 = vunpack.c.l.b16 %v3221
    %v4291 = vunpack.c.h.b16 %v3221
    %v4292 = vunpack.c.l.b16 %v3222
    %v4293 = vunpack.c.h.b16 %v3222
    %v4294 = vunpack.c.l.b16 %v3223
    %v4295 = vunpack.c.h.b16 %v3223
    %v4296 = vunpack.c.l.b16 %v3224
    %v4297 = vunpack.c.h.b16 %v3224
    %v4298 = vunpack.c.l.b16 %v3225
    %v4299 = vunpack.c.h.b16 %v3225
    %v4300 = vunpack.c.l.b16 %v3226
    %v4301 = vunpack.c.h.b16 %v3226
    %v4302 = vunpack.c.l.b16 %v3227
    %v4303 = vunpack.c.h.b16 %v3227
    %v4304 = vunpack.c.l.b16 %v3228
    %v4305 = vunpack.c.h.b16 %v3228
    %v4306 = vunpack.c.l.b16 %v3229
    %v4307 = vunpack.c.h.b16 %v3229
    %v4308 = vunpack.c.l.b16 %v3230
    %v4309 = vunpack.c.h.b16 %v3230
    %v4310 = vunpack.c.l.b16 %v3231
    %v4311 = vunpack.c.h.b16 %v3231
    %v4312 = vunpack.c.l.b16 %v3232
    %v4313 = vunpack.c.h.b16 %v3232
    %v4314 = vunpack.c.l.b16 %v3233
    %v4315 = vunpack.c.h.b16 %v3233
    %v4316 = vunpack.c.l.b16 %v3234
    %v4317 = vunpack.c.h.b16 %v3234
    %v4318 = vunpack.c.l.b16 %v3235
    %v4319 = vunpack.c.h.b16 %v3235
    %v4320 = vunpack.c.l.b16 %v3236
    %v4321 = vunpack.c.h.b16 %v3236
    %v4322 = vunpack.c.l.b16 %v3237
    %v4323 = vunpack.c.h.b16 %v3237
    %v4324 = vunpack.c.l.b16 %v3238
    %v4325 = vunpack.c.h.b16 %v3238
    %v4326 = vunpack.c.l.b16 %v3239
    %v4327 = vunpack.c.h.b16 %v3239
    %v4328 = vunpack.c.l.b16 %v3240
    %v4329 = vunpack.c.h.b16 %v3240
    %v4330 = vunpack.c.l.b16 %v3241
    %v4331 = vunpack.c.h.b16 %v3241
    %v4332 = vunpack.c.l.b16 %v3242
    %v4333 = vunpack.c.h.b16 %v3242
    %v4334 = vunpack.c.l.b16 %v3243
    %v4335 = vunpack.c.h.b16 %v3243
    %v4336 = vunpack.c.l.b16 %v3244
    %v4337 = vunpack.c.h.b16 %v3244
    %v4338 = vunpack.c.l.b16 %v3245
    %v4339 = vunpack.c.h.b16 %v3245
    %v4340 = vunpack.c.l.b16 %v3246
    %v4341 = vunpack.c.h.b16 %v3246
    %v4342 = vunpack.c.l.b16 %v3247
    %v4343 = vunpack.c.h.b16 %v3247
    %v4344 = vunpack.c.l.b16 %v3248
    %v4345 = vunpack.c.h.b16 %v3248
    %v4346 = vunpack.c.l.b16 %v3249
    %v4347 = vunpack.c.h.b16 %v3249
    %v4348 = vunpack.c.l.b16 %v3250
    %v4349 = vunpack.c.h.b16 %v3250
    %v4350 = vunpack.c.l.b16 %v3251
    %v4351 = vunpack.c.h.b16 %v3251
    %v4352 = vunpack.c.l.b16 %v3252
    %v4353 = vunpack.c.h.b16 %v3252
    %v4354 = vunpack.c.l.b16 %v3253
    %v4355 = vunpack.c.h.b16 %v3253
    %v4356 = vunpack.c.l.b16 %v3254
    %v4357 = vunpack.c.h.b16 %v3254
    %v4358 = vunpack.c.l.b16 %v3255
    %v4359 = vunpack.c.h.b16 %v3255
    %v4360 = vunpack.c.l.b16 %v3256
    %v4361 = vunpack.c.h.b16 %v3256
    %v4362 = vunpack.c.l.b16 %v3257
    %v4363 = vunpack.c.h.b16 %v3257
    %v4364 = vunpack.c.l.b16 %v3258
    %v4365 = vunpack.c.h.b16 %v3258
    %v4366 = vunpack.c.l.b16 %v3259
    %v4367 = vunpack.c.h.b16 %v3259
    %v4368 = vunpack.c.l.b16 %v3260
    %v4369 = vunpack.c.h.b16 %v3260
    %v4370 = vunpack.c.l.b16 %v3261
    %v4371 = vunpack.c.h.b16 %v3261
    %v4372 = vunpack.c.l.b16 %v3262
    %v4373 = vunpack.c.h.b16 %v3262
    %v4374 = vunpack.c.l.b16 %v3263
    %v4375 = vunpack.c.h.b16 %v3263
    %v4376 = vunpack.c.l.b16 %v3264
    %v4377 = vunpack.c.h.b16 %v3264
    %v4378 = vunpack.c.l.b16 %v3265
    %v4379 = vunpack.c.h.b16 %v3265
    %v4380 = vunpack.c.l.b16 %v3266
    %v4381 = vunpack.c.h.b16 %v3266
    %v4382 = vunpack.c.l.b16 %v3267
    %v4383 = vunpack.c.h.b16 %v3267
    %v4384 = vunpack.c.l.b16 %v3268
    %v4385 = vunpack.c.h.b16 %v3268
    %v4386 = vunpack.c.l.b16 %v3269
    %v4387 = vunpack.c.h.b16 %v3269
    %v4388 = vunpack.c.l.b16 %v3270
    %v4389 = vunpack.c.h.b16 %v3270
    %v4390 = vunpack.c.l.b16 %v3271
    %v4391 = vunpack.c.h.b16 %v3271
    %v4392 = vunpack.c.l.b16 %v3272
    %v4393 = vunpack.c.h.b16 %v3272
    %v4394 = vunpack.c.l.b16 %v3273
    %v4395 = vunpack.c.h.b16 %v3273
    %v4396 = vunpack.c.l.b16 %v3274
    %v4397 = vunpack.c.h.b16 %v3274
    %v4398 = vunpack.c.l.b16 %v3275
    %v4399 = vunpack.c.h.b16 %v3275
    %v4400 = vunpack.c.l.b16 %v3276
    %v4401 = vunpack.c.h.b16 %v3276
    %v4402 = vunpack.c.l.b16 %v3277
    %v4403 = vunpack.c.h.b16 %v3277
    %v4404 = vunpack.c.l.b16 %v3278
    %v4405 = vunpack.c.h.b16 %v3278
    %v4406 = vunpack.c.l.b16 %v3279
    %v4407 = vunpack.c.h.b16 %v3279
    %v4408 = vunpack.c.l.b16 %v3280
    %v4409 = vunpack.c.h.b16 %v3280
    %v4410 = vunpack.c.l.b16 %v3281
    %v4411 = vunpack.c.h.b16 %v3281
    %v4412 = vunpack.c.l.b16 %v3282
    %v4413 = vunpack.c.h.b16 %v3282
    %v4414 = vunpack.c.l.b16 %v3283
    %v4415 = vunpack.c.h.b16 %v3283
    %v4416 = vunpack.c.l.b16 %v3284
    %v4417 = vunpack.c.h.b16 %v3284
    %v4418 = vunpack.c.l.b16 %v3285
    %v4419 = vunpack.c.h.b16 %v3285
    %v4420 = vunpack.c.l.b16 %v3286
    %v4421 = vunpack.c.h.b16 %v3286
    %v4422 = vunpack.c.l.b16 %v3287
    %v4423 = vunpack.c.h.b16 %v3287
    %v4424 = vunpack.c.l.b16 %v3288
    %v4425 = vunpack.c.h.b16 %v3288
    %v4426 = vunpack.c.l.b16 %v3289
    %v4427 = vunpack.c.h.b16 %v3289
    %v4428 = vunpack.c.l.b16 %v3290
    %v4429 = vunpack.c.h.b16 %v3290
    %v4430 = vunpack.c.l.b16 %v3291
    %v4431 = vunpack.c.h.b16 %v3291
    %v4432 = vunpack.c.l.b16 %v3292
    %v4433 = vunpack.c.h.b16 %v3292
    %v4434 = vunpack.c.l.b16 %v3293
    %v4435 = vunpack.c.h.b16 %v3293
    %v4436 = vunpack.c.l.b16 %v3294
    %v4437 = vunpack.c.h.b16 %v3294
    %v4438 = vunpack.c.l.b16 %v3295
    %v4439 = vunpack.c.h.b16 %v3295
    %v4440 = vunpack.c.l.b16 %v3296
    %v4441 = vunpack.c.h.b16 %v3296
    %v4442 = vunpack.c.l.b16 %v3297
    %v4443 = vunpack.c.h.b16 %v3297
    %v4444 = vunpack.c.l.b16 %v3298
    %v4445 = vunpack.c.h.b16 %v3298
    %v4446 = vunpack.c.l.b16 %v3299
    %v4447 = vunpack.c.h.b16 %v3299
    %v4448 = vunpack.c.l.b16 %v3300
    %v4449 = vunpack.c.h.b16 %v3300
    %v4450 = vunpack.c.l.b16 %v3301
    %v4451 = vunpack.c.h.b16 %v3301
    %v4452 = vunpack.c.l.b16 %v3302
    %v4453 = vunpack.c.h.b16 %v3302
    %v4454 = vunpack.c.l.b16 %v3303
    %v4455 = vunpack.c.h.b16 %v3303
    %v4456 = vpack.c.b16 %v3700, %v3688
    %v4457 = vpack.c.b16 %v3701, %v3689
    %v4458 = vpack.c.b16 %v3702, %v3690
    %v4459 = vpack.c.b16 %v3703, %v3691
    %v4460 = vpack.c.b16 %v3704, %v3692
    %v4461 = vpack.c.b16 %v3705, %v3693
    %v4462 = vpack.c.b16 %v3706, %v3694
    %v4463 = vpack.c.b16 %v3707, %v3695
    %v4464 = vpack.c.b16 %v3708, %v3696
    %v4465 = vpack.c.b16 %v3709, %v3697
    %v4466 = vpack.c.b16 %v3710, %v3698
    %v4467 = vpack.c.b16 %v3711, %v3699
    %v4468 = vpack.c.b16 %v3724, %v3712
    %v4469 = vpack.c.b16 %v3725, %v3713
    %v4470 = vpack.c.b16 %v3726, %v3714
    %v4471 = vpack.c.b16 %v3727, %v3715
    %v4472 = vpack.c.b16 %v3728, %v3716
    %v4473 = vpack.c.b16 %v3729, %v3717
    %v4474 = vpack.c.b16 %v3730, %v3718
    %v4475 = vpack.c.b16 %v3731, %v3719
    %v4476 = vpack.c.b16 %v3732, %v3720
    %v4477 = vpack.c.b16 %v3733, %v3721
    %v4478 = vpack.c.b16 %v3734, %v3722
    %v4479 = vpack.c.b16 %v3735, %v3723
    %v4480 = vpack.c.b16 %v3748, %v3736
    %v4481 = vpack.c.b16 %v3749, %v3737
    %v4482 = vpack.c.b16 %v3750, %v3738
    %v4483 = vpack.c.b16 %v3751, %v3739
    %v4484 = vpack.c.b16 %v3752, %v3740
    %v4485 = vpack.c.b16 %v3753, %v3741
    %v4486 = vpack.c.b16 %v3754, %v3742
    %v4487 = vpack.c.b16 %v3755, %v3743
    %v4488 = vpack.c.b16 %v3756, %v3744
    %v4489 = vpack.c.b16 %v3757, %v3745
    %v4490 = vpack.c.b16 %v3758, %v3746
    %v4491 = vpack.c.b16 %v3759, %v3747
    %v4492 = vpack.c.b16 %v3772, %v3760
    %v4493 = vpack.c.b16 %v3773, %v3761
    %v4494 = vpack.c.b16 %v3774, %v3762
    %v4495 = vpack.c.b16 %v3775, %v3763
    %v4496 = vpack.c.b16 %v3776, %v3764
    %v4497 = vpack.c.b16 %v3777, %v3765
    %v4498 = vpack.c.b16 %v3778, %v3766
    %v4499 = vpack.c.b16 %v3779, %v3767
    %v4500 = vpack.c.b16 %v3780, %v3768
    %v4501 = vpack.c.b16 %v3781, %v3769
    %v4502 = vpack.c.b16 %v3782, %v3770
    %v4503 = vpack.c.b16 %v3783, %v3771
    %v4504 = vpack.c.b16 %v3796, %v3784
    %v4505 = vpack.c.b16 %v3797, %v3785
    %v4506 = vpack.c.b16 %v3798, %v3786
    %v4507 = vpack.c.b16 %v3799, %v3787
    %v4508 = vpack.c.b16 %v3800, %v3788
    %v4509 = vpack.c.b16 %v3801, %v3789
    %v4510 = vpack.c.b16 %v3802, %v3790
    %v4511 = vpack.c.b16 %v3803, %v3791
    %v4512 = vpack.c.b16 %v3804, %v3792
    %v4513 = vpack.c.b16 %v3805, %v3793
    %v4514 = vpack.c.b16 %v3806, %v3794
    %v4515 = vpack.c.b16 %v3807, %v3795
    %v4516 = vpack.c.b16 %v3820, %v3808
    %v4517 = vpack.c.b16 %v3821, %v3809
    %v4518 = vpack.c.b16 %v3822, %v3810
    %v4519 = vpack.c.b16 %v3823, %v3811
    %v4520 = vpack.c.b16 %v3824, %v3812
    %v4521 = vpack.c.b16 %v3825, %v3813
    %v4522 = vpack.c.b16 %v3826, %v3814
    %v4523 = vpack.c.b16 %v3827, %v3815
    %v4524 = vpack.c.b16 %v3828, %v3816
    %v4525 = vpack.c.b16 %v3829, %v3817
    %v4526 = vpack.c.b16 %v3830, %v3818
    %v4527 = vpack.c.b16 %v3831, %v3819
    %v4528 = vpack.c.b16 %v3844, %v3832
    %v4529 = vpack.c.b16 %v3845, %v3833
    %v4530 = vpack.c.b16 %v3846, %v3834
    %v4531 = vpack.c.b16 %v3847, %v3835
    %v4532 = vpack.c.b16 %v3848, %v3836
    %v4533 = vpack.c.b16 %v3849, %v3837
    %v4534 = vpack.c.b16 %v3850, %v3838
    %v4535 = vpack.c.b16 %v3851, %v3839
    %v4536 = vpack.c.b16 %v3852, %v3840
    %v4537 = vpack.c.b16 %v3853, %v3841
    %v4538 = vpack.c.b16 %v3854, %v3842
    %v4539 = vpack.c.b16 %v3855, %v3843
    %v4540 = vpack.c.b16 %v3868, %v3856
    %v4541 = vpack.c.b16 %v3869, %v3857
    %v4542 = vpack.c.b16 %v3870, %v3858
    %v4543 = vpack.c.b16 %v3871, %v3859
    %v4544 = vpack.c.b16 %v3872, %v3860
    %v4545 = vpack.c.b16 %v3873, %v3861
    %v4546 = vpack.c.b16 %v3874, %v3862
    %v4547 = vpack.c.b16 %v3875, %v3863
    %v4548 = vpack.c.b16 %v3876, %v3864
    %v4549 = vpack.c.b16 %v3877, %v3865
    %v4550 = vpack.c.b16 %v3878, %v3866
    %v4551 = vpack.c.b16 %v3879, %v3867
    %v4552 = vpack.c.b16 %v3892, %v3880
    %v4553 = vpack.c.b16 %v3893, %v3881
    %v4554 = vpack.c.b16 %v3894, %v3882
    %v4555 = vpack.c.b16 %v3895, %v3883
    %v4556 = vpack.c.b16 %v3896, %v3884
    %v4557 = vpack.c.b16 %v3897, %v3885
    %v4558 = vpack.c.b16 %v3898, %v3886
    %v4559 = vpack.c.b16 %v3899, %v3887
    %v4560 = vpack.c.b16 %v3900, %v3888
    %v4561 = vpack.c.b16 %v3901, %v3889
    %v4562 = vpack.c.b16 %v3902, %v3890
    %v4563 = vpack.c.b16 %v3903, %v3891
    %v4564 = vpack.c.b16 %v3916, %v3904
    %v4565 = vpack.c.b16 %v3917, %v3905
    %v4566 = vpack.c.b16 %v3918, %v3906
    %v4567 = vpack.c.b16 %v3919, %v3907
    %v4568 = vpack.c.b16 %v3920, %v3908
    %v4569 = vpack.c.b16 %v3921, %v3909
    %v4570 = vpack.c.b16 %v3922, %v3910
    %v4571 = vpack.c.b16 %v3923, %v3911
    %v4572 = vpack.c.b16 %v3924, %v3912
    %v4573 = vpack.c.b16 %v3925, %v3913
    %v4574 = vpack.c.b16 %v3926, %v3914
    %v4575 = vpack.c.b16 %v3927, %v3915
    %v4576 = vpack.c.b16 %v3940, %v3928
    %v4577 = vpack.c.b16 %v3941, %v3929
    %v4578 = vpack.c.b16 %v3942, %v3930
    %v4579 = vpack.c.b16 %v3943, %v3931
    %v4580 = vpack.c.b16 %v3944, %v3932
    %v4581 = vpack.c.b16 %v3945, %v3933
    %v4582 = vpack.c.b16 %v3946, %v3934
    %v4583 = vpack.c.b16 %v3947, %v3935
    %v4584 = vpack.c.b16 %v3948, %v3936
    %v4585 = vpack.c.b16 %v3949, %v3937
    %v4586 = vpack.c.b16 %v3950, %v3938
    %v4587 = vpack.c.b16 %v3951, %v3939
    %v4588 = vpack.c.b16 %v3964, %v3952
    %v4589 = vpack.c.b16 %v3965, %v3953
    %v4590 = vpack.c.b16 %v3966, %v3954
    %v4591 = vpack.c.b16 %v3967, %v3955
    %v4592 = vpack.c.b16 %v3968, %v3956
    %v4593 = vpack.c.b16 %v3969, %v3957
    %v4594 = vpack.c.b16 %v3970, %v3958
    %v4595 = vpack.c.b16 %v3971, %v3959
    %v4596 = vpack.c.b16 %v3972, %v3960
    %v4597 = vpack.c.b16 %v3973, %v3961
    %v4598 = vpack.c.b16 %v3974, %v3962
    %v4599 = vpack.c.b16 %v3975, %v3963
    %v4600 = vpack.c.b16 %v3988, %v3976
    %v4601 = vpack.c.b16 %v3989, %v3977
    %v4602 = vpack.c.b16 %v3990, %v3978
    %v4603 = vpack.c.b16 %v3991, %v3979
    %v4604 = vpack.c.b16 %v3992, %v3980
    %v4605 = vpack.c.b16 %v3993, %v3981
    %v4606 = vpack.c.b16 %v3994, %v3982
    %v4607 = vpack.c.b16 %v3995, %v3983
    %v4608 = vpack.c.b16 %v3996, %v3984
    %v4609 = vpack.c.b16 %v3997, %v3985
    %v4610 = vpack.c.b16 %v3998, %v3986
    %v4611 = vpack.c.b16 %v3999, %v3987
    %v4612 = vpack.c.b16 %v4012, %v4000
    %v4613 = vpack.c.b16 %v4013, %v4001
    %v4614 = vpack.c.b16 %v4014, %v4002
    %v4615 = vpack.c.b16 %v4015, %v4003
    %v4616 = vpack.c.b16 %v4016, %v4004
    %v4617 = vpack.c.b16 %v4017, %v4005
    %v4618 = vpack.c.b16 %v4018, %v4006
    %v4619 = vpack.c.b16 %v4019, %v4007
    %v4620 = vpack.c.b16 %v4020, %v4008
    %v4621 = vpack.c.b16 %v4021, %v4009
    %v4622 = vpack.c.b16 %v4022, %v4010
    %v4623 = vpack.c.b16 %v4023, %v4011
    %v4624 = vpack.c.b16 %v4036, %v4024
    %v4625 = vpack.c.b16 %v4037, %v4025
    %v4626 = vpack.c.b16 %v4038, %v4026
    %v4627 = vpack.c.b16 %v4039, %v4027
    %v4628 = vpack.c.b16 %v4040, %v4028
    %v4629 = vpack.c.b16 %v4041, %v4029
    %v4630 = vpack.c.b16 %v4042, %v4030
    %v4631 = vpack.c.b16 %v4043, %v4031
    %v4632 = vpack.c.b16 %v4044, %v4032
    %v4633 = vpack.c.b16 %v4045, %v4033
    %v4634 = vpack.c.b16 %v4046, %v4034
    %v4635 = vpack.c.b16 %v4047, %v4035
    %v4636 = vpack.c.b16 %v4060, %v4048
    %v4637 = vpack.c.b16 %v4061, %v4049
    %v4638 = vpack.c.b16 %v4062, %v4050
    %v4639 = vpack.c.b16 %v4063, %v4051
    %v4640 = vpack.c.b16 %v4064, %v4052
    %v4641 = vpack.c.b16 %v4065, %v4053
    %v4642 = vpack.c.b16 %v4066, %v4054
    %v4643 = vpack.c.b16 %v4067, %v4055
    %v4644 = vpack.c.b16 %v4068, %v4056
    %v4645 = vpack.c.b16 %v4069, %v4057
    %v4646 = vpack.c.b16 %v4070, %v4058
    %v4647 = vpack.c.b16 %v4071, %v4059
    %v4648 = vpack.c.b16 %v4084, %v4072
    %v4649 = vpack.c.b16 %v4085, %v4073
    %v4650 = vpack.c.b16 %v4086, %v4074
    %v4651 = vpack.c.b16 %v4087, %v4075
    %v4652 = vpack.c.b16 %v4088, %v4076
    %v4653 = vpack.c.b16 %v4089, %v4077
    %v4654 = vpack.c.b16 %v4090, %v4078
    %v4655 = vpack.c.b16 %v4091, %v4079
    %v4656 = vpack.c.b16 %v4092, %v4080
    %v4657 = vpack.c.b16 %v4093, %v4081
    %v4658 = vpack.c.b16 %v4094, %v4082
    %v4659 = vpack.c.b16 %v4095, %v4083
    %v4660 = vpack.c.b16 %v4108, %v4096
    %v4661 = vpack.c.b16 %v4109, %v4097
    %v4662 = vpack.c.b16 %v4110, %v4098
    %v4663 = vpack.c.b16 %v4111, %v4099
    %v4664 = vpack.c.b16 %v4112, %v4100
    %v4665 = vpack.c.b16 %v4113, %v4101
    %v4666 = vpack.c.b16 %v4114, %v4102
    %v4667 = vpack.c.b16 %v4115, %v4103
    %v4668 = vpack.c.b16 %v4116, %v4104
    %v4669 = vpack.c.b16 %v4117, %v4105
    %v4670 = vpack.c.b16 %v4118, %v4106
    %v4671 = vpack.c.b16 %v4119, %v4107
    %v4672 = vpack.c.b16 %v4132, %v4120
    %v4673 = vpack.c.b16 %v4133, %v4121
    %v4674 = vpack.c.b16 %v4134, %v4122
    %v4675 = vpack.c.b16 %v4135, %v4123
    %v4676 = vpack.c.b16 %v4136, %v4124
    %v4677 = vpack.c.b16 %v4137, %v4125
    %v4678 = vpack.c.b16 %v4138, %v4126
    %v4679 = vpack.c.b16 %v4139, %v4127
    %v4680 = vpack.c.b16 %v4140, %v4128
    %v4681 = vpack.c.b16 %v4141, %v4129
    %v4682 = vpack.c.b16 %v4142, %v4130
    %v4683 = vpack.c.b16 %v4143, %v4131
    %v4684 = vpack.c.b16 %v4156, %v4144
    %v4685 = vpack.c.b16 %v4157, %v4145
    %v4686 = vpack.c.b16 %v4158, %v4146
    %v4687 = vpack.c.b16 %v4159, %v4147
    %v4688 = vpack.c.b16 %v4160, %v4148
    %v4689 = vpack.c.b16 %v4161, %v4149
    %v4690 = vpack.c.b16 %v4162, %v4150
    %v4691 = vpack.c.b16 %v4163, %v4151
    %v4692 = vpack.c.b16 %v4164, %v4152
    %v4693 = vpack.c.b16 %v4165, %v4153
    %v4694 = vpack.c.b16 %v4166, %v4154
    %v4695 = vpack.c.b16 %v4167, %v4155
    %v4696 = vpack.c.b16 %v4180, %v4168
    %v4697 = vpack.c.b16 %v4181, %v4169
    %v4698 = vpack.c.b16 %v4182, %v4170
    %v4699 = vpack.c.b16 %v4183, %v4171
    %v4700 = vpack.c.b16 %v4184, %v4172
    %v4701 = vpack.c.b16 %v4185, %v4173
    %v4702 = vpack.c.b16 %v4186, %v4174
    %v4703 = vpack.c.b16 %v4187, %v4175
    %v4704 = vpack.c.b16 %v4188, %v4176
    %v4705 = vpack.c.b16 %v4189, %v4177
    %v4706 = vpack.c.b16 %v4190, %v4178
    %v4707 = vpack.c.b16 %v4191, %v4179
    %v4708 = vpack.c.b16 %v4204, %v4192
    %v4709 = vpack.c.b16 %v4205, %v4193
    %v4710 = vpack.c.b16 %v4206, %v4194
    %v4711 = vpack.c.b16 %v4207, %v4195
    %v4712 = vpack.c.b16 %v4208, %v4196
    %v4713 = vpack.c.b16 %v4209, %v4197
    %v4714 = vpack.c.b16 %v4210, %v4198
    %v4715 = vpack.c.b16 %v4211, %v4199
    %v4716 = vpack.c.b16 %v4212, %v4200
    %v4717 = vpack.c.b16 %v4213, %v4201
    %v4718 = vpack.c.b16 %v4214, %v4202
    %v4719 = vpack.c.b16 %v4215, %v4203
    %v4720 = vpack.c.b16 %v4228, %v4216
    %v4721 = vpack.c.b16 %v4229, %v4217
    %v4722 = vpack.c.b16 %v4230, %v4218
    %v4723 = vpack.c.b16 %v4231, %v4219
    %v4724 = vpack.c.b16 %v4232, %v4220
    %v4725 = vpack.c.b16 %v4233, %v4221
    %v4726 = vpack.c.b16 %v4234, %v4222
    %v4727 = vpack.c.b16 %v4235, %v4223
    %v4728 = vpack.c.b16 %v4236, %v4224
    %v4729 = vpack.c.b16 %v4237, %v4225
    %v4730 = vpack.c.b16 %v4238, %v4226
    %v4731 = vpack.c.b16 %v4239, %v4227
    %v4732 = vpack.c.b16 %v4252, %v4240
    %v4733 = vpack.c.b16 %v4253, %v4241
    %v4734 = vpack.c.b16 %v4254, %v4242
    %v4735 = vpack.c.b16 %v4255, %v4243
    %v4736 = vpack.c.b16 %v4256, %v4244
    %v4737 = vpack.c.b16 %v4257, %v4245
    %v4738 = vpack.c.b16 %v4258, %v4246
    %v4739 = vpack.c.b16 %v4259, %v4247
    %v4740 = vpack.c.b16 %v4260, %v4248
    %v4741 = vpack.c.b16 %v4261, %v4249
    %v4742 = vpack.c.b16 %v4262, %v4250
    %v4743 = vpack.c.b16 %v4263, %v4251
    %v4744 = vpack.c.b16 %v4276, %v4264
    %v4745 = vpack.c.b16 %v4277, %v4265
    %v4746 = vpack.c.b16 %v4278, %v4266
    %v4747 = vpack.c.b16 %v4279, %v4267
    %v4748 = vpack.c.b16 %v4280, %v4268
    %v4749 = vpack.c.b16 %v4281, %v4269
    %v4750 = vpack.c.b16 %v4282, %v4270
    %v4751 = vpack.c.b16 %v4283, %v4271
    %v4752 = vpack.c.b16 %v4284, %v4272
    %v4753 = vpack.c.b16 %v4285, %v4273
    %v4754 = vpack.c.b16 %v4286, %v4274
    %v4755 = vpack.c.b16 %v4287, %v4275
    %v4756 = vpack.c.b16 %v4300, %v4288
    %v4757 = vpack.c.b16 %v4301, %v4289
    %v4758 = vpack.c.b16 %v4302, %v4290
    %v4759 = vpack.c.b16 %v4303, %v4291
    %v4760 = vpack.c.b16 %v4304, %v4292
    %v4761 = vpack.c.b16 %v4305, %v4293
    %v4762 = vpack.c.b16 %v4306, %v4294
    %v4763 = vpack.c.b16 %v4307, %v4295
    %v4764 = vpack.c.b16 %v4308, %v4296
    %v4765 = vpack.c.b16 %v4309, %v4297
    %v4766 = vpack.c.b16 %v4310, %v4298
    %v4767 = vpack.c.b16 %v4311, %v4299
    %v4768 = vpack.c.b16 %v4324, %v4312
    %v4769 = vpack.c.b16 %v4325, %v4313
    %v4770 = vpack.c.b16 %v4326, %v4314
    %v4771 = vpack.c.b16 %v4327, %v4315
    %v4772 = vpack.c.b16 %v4328, %v4316
    %v4773 = vpack.c.b16 %v4329, %v4317
    %v4774 = vpack.c.b16 %v4330, %v4318
    %v4775 = vpack.c.b16 %v4331, %v4319
    %v4776 = vpack.c.b16 %v4332, %v4320
    %v4777 = vpack.c.b16 %v4333, %v4321
    %v4778 = vpack.c.b16 %v4334, %v4322
    %v4779 = vpack.c.b16 %v4335, %v4323
    %v4780 = vpack.c.b16 %v4348, %v4336
    %v4781 = vpack.c.b16 %v4349, %v4337
    %v4782 = vpack.c.b16 %v4350, %v4338
    %v4783 = vpack.c.b16 %v4351, %v4339
    %v4784 = vpack.c.b16 %v4352, %v4340
    %v4785 = vpack.c.b16 %v4353, %v4341
    %v4786 = vpack.c.b16 %v4354, %v4342
    %v4787 = vpack.c.b16 %v4355, %v4343
    %v4788 = vpack.c.b16 %v4356, %v4344
    %v4789 = vpack.c.b16 %v4357, %v4345
    %v4790 = vpack.c.b16 %v4358, %v4346
    %v4791 = vpack.c.b16 %v4359, %v4347
    %v4792 = vpack.c.b16 %v4372, %v4360
    %v4793 = vpack.c.b16 %v4373, %v4361
    %v4794 = vpack.c.b16 %v4374, %v4362
    %v4795 = vpack.c.b16 %v4375, %v4363
    %v4796 = vpack.c.b16 %v4376, %v4364
    %v4797 = vpack.c.b16 %v4377, %v4365
    %v4798 = vpack.c.b16 %v4378, %v4366
    %v4799 = vpack.c.b16 %v4379, %v4367
    %v4800 = vpack.c.b16 %v4380, %v4368
    %v4801 = vpack.c.b16 %v4381, %v4369
    %v4802 = vpack.c.b16 %v4382, %v4370
    %v4803 = vpack.c.b16 %v4383, %v4371
    %v4804 = vpack.c.b16 %v4396, %v4384
    %v4805 = vpack.c.b16 %v4397, %v4385
    %v4806 = vpack.c.b16 %v4398, %v4386
    %v4807 = vpack.c.b16 %v4399, %v4387
    %v4808 = vpack.c.b16 %v4400, %v4388
    %v4809 = vpack.c.b16 %v4401, %v4389
    %v4810 = vpack.c.b16 %v4402, %v4390
    %v4811 = vpack.c.b16 %v4403, %v4391
    %v4812 = vpack.c.b16 %v4404, %v4392
    %v4813 = vpack.c.b16 %v4405, %v4393
    %v4814 = vpack.c.b16 %v4406, %v4394
    %v4815 = vpack.c.b16 %v4407, %v4395
    %v4816 = vpack.c.b16 %v4420, %v4408
    %v4817 = vpack.c.b16 %v4421, %v4409
    %v4818 = vpack.c.b16 %v4422, %v4410
    %v4819 = vpack.c.b16 %v4423, %v4411
    %v4820 = vpack.c.b16 %v4424, %v4412
    %v4821 = vpack.c.b16 %v4425, %v4413
    %v4822 = vpack.c.b16 %v4426, %v4414
    %v4823 = vpack.c.b16 %v4427, %v4415
    %v4824 = vpack.c.b16 %v4428, %v4416
    %v4825 = vpack.c.b16 %v4429, %v4417
    %v4826 = vpack.c.b16 %v4430, %v4418
    %v4827 = vpack.c.b16 %v4431, %v4419
    %v4828 = vpack.c.b16 %v4444, %v4432
    %v4829 = vpack.c.b16 %v4445, %v4433
    %v4830 = vpack.c.b16 %v4446, %v4434
    %v4831 = vpack.c.b16 %v4447, %v4435
    %v4832 = vpack.c.b16 %v4448, %v4436
    %v4833 = vpack.c.b16 %v4449, %v4437
    %v4834 = vpack.c.b16 %v4450, %v4438
    %v4835 = vpack.c.b16 %v4451, %v4439
    %v4836 = vpack.c.b16 %v4452, %v4440
    %v4837 = vpack.c.b16 %v4453, %v4441
    %v4838 = vpack.c.b16 %v4454, %v4442
    %v4839 = vpack.c.b16 %v4455, %v4443
    %5224 = vmatprep.subr.bf16.mxu0 %v4541
    %5225 = vmatpush1.bf16.msra.mxu0 %v4540
    %5226 = vmatprep.subr.bf16.mxu0 %v4529
    %5227 = vmatpush1.bf16.msra.mxu0 %v4528
    %5228 = vmatprep.subr.bf16.mxu0 %v4517
    %5229 = vmatpush1.bf16.msra.mxu0 %v4516
    %5230 = vmatprep.subr.bf16.mxu0 %v4505
    %5231 = vmatpush1.bf16.msra.mxu0 %v4504
    %5232 = vmatprep.subr.bf16.mxu0 %v4493
    %5233 = vmatpush1.bf16.msra.mxu0 %v4492
    %5234 = vmatprep.subr.bf16.mxu0 %v4481
    %5235 = vmatpush1.bf16.msra.mxu0 %v4480
    %5236 = vmatprep.subr.bf16.mxu0 %v4469
    %5237 = vmatpush1.bf16.msra.mxu0 %v4468
    %5238 = vmatprep.subr.bf16.mxu0 %v4457
    %5239 = vmatpush1.bf16.msra.mxu0 %v4456
    %5240 = vmatprep.subr.bf16.mxu0 %v4637
    %5241 = vmatpush2.bf16.msra.mxu0 %v4636
    %5242 = vmatprep.subr.bf16.mxu0 %v4625
    %5243 = vmatpush2.bf16.msra.mxu0 %v4624
    %5244 = vmatprep.subr.bf16.mxu0 %v4613
    %5245 = vmatpush2.bf16.msra.mxu0 %v4612
    %5246 = vmatprep.subr.bf16.mxu0 %v4601
    %5247 = vmatpush2.bf16.msra.mxu0 %v4600
    %5248 = vmatprep.subr.bf16.mxu0 %v4589
    %5249 = vmatpush2.bf16.msra.mxu0 %v4588
    %5250 = vmatprep.subr.bf16.mxu0 %v4577
    %5251 = vmatpush2.bf16.msra.mxu0 %v4576
    %5252 = vmatprep.subr.bf16.mxu0 %v4565
    %5253 = vmatpush2.bf16.msra.mxu0 %v4564
    %5254 = vmatprep.subr.bf16.mxu0 %v4553
    %5255 = vmatpush2.bf16.msra.mxu0 %v4552
    %5256 = vmatprep.mubr.bf16.mxu0 %v2917
    %5257 = vmatmul.mubr.bf16.gmra.mxu0 %v2916
    %v5258 = vpop.f32.mrf.mxu0
    %v5259 = vadd.f32 0.0, %v5258
    %v5260 = vpop.f32.mrf.mxu0
    %v5261 = vadd.f32 0.0, %v5260
    %v5262 = vpop.f32.mrf.mxu0
    %v5263 = vadd.f32 0.0, %v5262
    %v5264 = vpop.f32.mrf.mxu0
    %v5265 = vadd.f32 0.0, %v5264
    %5266 = vdwg.mxu0
    %5267 = vmatprep.subr.bf16.mxu0 %v4733
    %5268 = vmatpush1.bf16.msra.mxu0 %v4732
    %5269 = vmatprep.subr.bf16.mxu0 %v4721
    %5270 = vmatpush1.bf16.msra.mxu0 %v4720
    %5271 = vmatprep.subr.bf16.mxu0 %v4709
    %5272 = vmatpush1.bf16.msra.mxu0 %v4708
    %5273 = vmatprep.subr.bf16.mxu0 %v4697
    %5274 = vmatpush1.bf16.msra.mxu0 %v4696
    %5275 = vmatprep.subr.bf16.mxu0 %v4685
    %5276 = vmatpush1.bf16.msra.mxu0 %v4684
    %5277 = vmatprep.subr.bf16.mxu0 %v4673
    %5278 = vmatpush1.bf16.msra.mxu0 %v4672
    %5279 = vmatprep.subr.bf16.mxu0 %v4661
    %5280 = vmatpush1.bf16.msra.mxu0 %v4660
    %5281 = vmatprep.subr.bf16.mxu0 %v4649
    %5282 = vmatpush1.bf16.msra.mxu0 %v4648
    %5283 = vmatprep.subr.bf16.mxu0 %v4829
    %5284 = vmatpush2.bf16.msra.mxu0 %v4828
    %5285 = vmatprep.subr.bf16.mxu0 %v4817
    %5286 = vmatpush2.bf16.msra.mxu0 %v4816
    %5287 = vmatprep.subr.bf16.mxu0 %v4805
    %5288 = vmatpush2.bf16.msra.mxu0 %v4804
    %5289 = vmatprep.subr.bf16.mxu0 %v4793
    %5290 = vmatpush2.bf16.msra.mxu0 %v4792
    %5291 = vmatprep.subr.bf16.mxu0 %v4781
    %5292 = vmatpush2.bf16.msra.mxu0 %v4780
    %5293 = vmatprep.subr.bf16.mxu0 %v4769
    %5294 = vmatpush2.bf16.msra.mxu0 %v4768
    %5295 = vmatprep.subr.bf16.mxu0 %v4757
    %5296 = vmatpush2.bf16.msra.mxu0 %v4756
    %5297 = vmatprep.subr.bf16.mxu0 %v4745
    %5298 = vmatpush2.bf16.msra.mxu0 %v4744
    %5299 = vmatprep.mubr.bf16.mxu0 %v2919
    %5300 = vmatmul.mubr.bf16.gmra.mxu0 %v2918
    %v5301 = vpop.f32.mrf.mxu0
    %v5302 = vadd.f32 %v5259, %v5301
    %v5303 = vpop.f32.mrf.mxu0
    %v5304 = vadd.f32 %v5261, %v5303
    %v5305 = vpop.f32.mrf.mxu0
    %v5306 = vadd.f32 %v5263, %v5305
    %v5307 = vpop.f32.mrf.mxu0
    %v5308 = vadd.f32 %v5265, %v5307
    %5309 = vdwg.mxu0
    %5310 = vmatprep.subr.bf16.mxu0 %v4543
    %5311 = vmatpush1.bf16.msra.mxu0 %v4542
    %5312 = vmatprep.subr.bf16.mxu0 %v4531
    %5313 = vmatpush1.bf16.msra.mxu0 %v4530
    %5314 = vmatprep.subr.bf16.mxu0 %v4519
    %5315 = vmatpush1.bf16.msra.mxu0 %v4518
    %5316 = vmatprep.subr.bf16.mxu0 %v4507
    %5317 = vmatpush1.bf16.msra.mxu0 %v4506
    %5318 = vmatprep.subr.bf16.mxu0 %v4495
    %5319 = vmatpush1.bf16.msra.mxu0 %v4494
    %5320 = vmatprep.subr.bf16.mxu0 %v4483
    %5321 = vmatpush1.bf16.msra.mxu0 %v4482
    %5322 = vmatprep.subr.bf16.mxu0 %v4471
    %5323 = vmatpush1.bf16.msra.mxu0 %v4470
    %5324 = vmatprep.subr.bf16.mxu0 %v4459
    %5325 = vmatpush1.bf16.msra.mxu0 %v4458
    %5326 = vmatprep.subr.bf16.mxu0 %v4639
    %5327 = vmatpush2.bf16.msra.mxu0 %v4638
    %5328 = vmatprep.subr.bf16.mxu0 %v4627
    %5329 = vmatpush2.bf16.msra.mxu0 %v4626
    %5330 = vmatprep.subr.bf16.mxu0 %v4615
    %5331 = vmatpush2.bf16.msra.mxu0 %v4614
    %5332 = vmatprep.subr.bf16.mxu0 %v4603
    %5333 = vmatpush2.bf16.msra.mxu0 %v4602
    %5334 = vmatprep.subr.bf16.mxu0 %v4591
    %5335 = vmatpush2.bf16.msra.mxu0 %v4590
    %5336 = vmatprep.subr.bf16.mxu0 %v4579
    %5337 = vmatpush2.bf16.msra.mxu0 %v4578
    %5338 = vmatprep.subr.bf16.mxu0 %v4567
    %5339 = vmatpush2.bf16.msra.mxu0 %v4566
    %5340 = vmatprep.subr.bf16.mxu0 %v4555
    %5341 = vmatpush2.bf16.msra.mxu0 %v4554
    %5342 = vmatprep.mubr.bf16.mxu0 %v2917
    %5343 = vmatmul.mubr.bf16.gmra.mxu0 %v2916
    %v5344 = vpop.f32.mrf.mxu0
    %v5345 = vadd.f32 0.0, %v5344
    %v5346 = vpop.f32.mrf.mxu0
    %v5347 = vadd.f32 0.0, %v5346
    %v5348 = vpop.f32.mrf.mxu0
    %v5349 = vadd.f32 0.0, %v5348
    %v5350 = vpop.f32.mrf.mxu0
    %v5351 = vadd.f32 0.0, %v5350
    %5352 = vdwg.mxu0
    %5353 = vmatprep.subr.bf16.mxu0 %v4735
    %5354 = vmatpush1.bf16.msra.mxu0 %v4734
    %5355 = vmatprep.subr.bf16.mxu0 %v4723
    %5356 = vmatpush1.bf16.msra.mxu0 %v4722
    %5357 = vmatprep.subr.bf16.mxu0 %v4711
    %5358 = vmatpush1.bf16.msra.mxu0 %v4710
    %5359 = vmatprep.subr.bf16.mxu0 %v4699
    %5360 = vmatpush1.bf16.msra.mxu0 %v4698
    %5361 = vmatprep.subr.bf16.mxu0 %v4687
    %5362 = vmatpush1.bf16.msra.mxu0 %v4686
    %5363 = vmatprep.subr.bf16.mxu0 %v4675
    %5364 = vmatpush1.bf16.msra.mxu0 %v4674
    %5365 = vmatprep.subr.bf16.mxu0 %v4663
    %5366 = vmatpush1.bf16.msra.mxu0 %v4662
    %5367 = vmatprep.subr.bf16.mxu0 %v4651
    %5368 = vmatpush1.bf16.msra.mxu0 %v4650
    %5369 = vmatprep.subr.bf16.mxu0 %v4831
    %5370 = vmatpush2.bf16.msra.mxu0 %v4830
    %5371 = vmatprep.subr.bf16.mxu0 %v4819
    %5372 = vmatpush2.bf16.msra.mxu0 %v4818
    %5373 = vmatprep.subr.bf16.mxu0 %v4807
    %5374 = vmatpush2.bf16.msra.mxu0 %v4806
    %5375 = vmatprep.subr.bf16.mxu0 %v4795
    %5376 = vmatpush2.bf16.msra.mxu0 %v4794
    %5377 = vmatprep.subr.bf16.mxu0 %v4783
    %5378 = vmatpush2.bf16.msra.mxu0 %v4782
    %5379 = vmatprep.subr.bf16.mxu0 %v4771
    %5380 = vmatpush2.bf16.msra.mxu0 %v4770
    %5381 = vmatprep.subr.bf16.mxu0 %v4759
    %5382 = vmatpush2.bf16.msra.mxu0 %v4758
    %5383 = vmatprep.subr.bf16.mxu0 %v4747
    %5384 = vmatpush2.bf16.msra.mxu0 %v4746
    %5385 = vmatprep.mubr.bf16.mxu0 %v2919
    %5386 = vmatmul.mubr.bf16.gmra.mxu0 %v2918
    %v5387 = vpop.f32.mrf.mxu0
    %v5388 = vadd.f32 %v5345, %v5387
    %v5389 = vpop.f32.mrf.mxu0
    %v5390 = vadd.f32 %v5347, %v5389
    %v5391 = vpop.f32.mrf.mxu0
    %v5392 = vadd.f32 %v5349, %v5391
    %v5393 = vpop.f32.mrf.mxu0
    %v5394 = vadd.f32 %v5351, %v5393
    %5395 = vdwg.mxu0
    %5396 = vmatprep.subr.bf16.mxu0 %v4545
    %5397 = vmatpush1.bf16.msra.mxu0 %v4544
    %5398 = vmatprep.subr.bf16.mxu0 %v4533
    %5399 = vmatpush1.bf16.msra.mxu0 %v4532
    %5400 = vmatprep.subr.bf16.mxu0 %v4521
    %5401 = vmatpush1.bf16.msra.mxu0 %v4520
    %5402 = vmatprep.subr.bf16.mxu0 %v4509
    %5403 = vmatpush1.bf16.msra.mxu0 %v4508
    %5404 = vmatprep.subr.bf16.mxu0 %v4497
    %5405 = vmatpush1.bf16.msra.mxu0 %v4496
    %5406 = vmatprep.subr.bf16.mxu0 %v4485
    %5407 = vmatpush1.bf16.msra.mxu0 %v4484
    %5408 = vmatprep.subr.bf16.mxu0 %v4473
    %5409 = vmatpush1.bf16.msra.mxu0 %v4472
    %5410 = vmatprep.subr.bf16.mxu0 %v4461
    %5411 = vmatpush1.bf16.msra.mxu0 %v4460
    %5412 = vmatprep.subr.bf16.mxu0 %v4641
    %5413 = vmatpush2.bf16.msra.mxu0 %v4640
    %5414 = vmatprep.subr.bf16.mxu0 %v4629
    %5415 = vmatpush2.bf16.msra.mxu0 %v4628
    %5416 = vmatprep.subr.bf16.mxu0 %v4617
    %5417 = vmatpush2.bf16.msra.mxu0 %v4616
    %5418 = vmatprep.subr.bf16.mxu0 %v4605
    %5419 = vmatpush2.bf16.msra.mxu0 %v4604
    %5420 = vmatprep.subr.bf16.mxu0 %v4593
    %5421 = vmatpush2.bf16.msra.mxu0 %v4592
    %5422 = vmatprep.subr.bf16.mxu0 %v4581
    %5423 = vmatpush2.bf16.msra.mxu0 %v4580
    %5424 = vmatprep.subr.bf16.mxu0 %v4569
    %5425 = vmatpush2.bf16.msra.mxu0 %v4568
    %5426 = vmatprep.subr.bf16.mxu0 %v4557
    %5427 = vmatpush2.bf16.msra.mxu0 %v4556
    %5428 = vmatprep.mubr.bf16.mxu0 %v2917
    %5429 = vmatmul.mubr.bf16.gmra.mxu0 %v2916
    %v5430 = vpop.f32.mrf.mxu0
    %v5431 = vadd.f32 0.0, %v5430
    %v5432 = vpop.f32.mrf.mxu0
    %v5433 = vadd.f32 0.0, %v5432
    %v5434 = vpop.f32.mrf.mxu0
    %v5435 = vadd.f32 0.0, %v5434
    %v5436 = vpop.f32.mrf.mxu0
    %v5437 = vadd.f32 0.0, %v5436
    %5438 = vdwg.mxu0
    %5439 = vmatprep.subr.bf16.mxu0 %v4737
    %5440 = vmatpush1.bf16.msra.mxu0 %v4736
    %5441 = vmatprep.subr.bf16.mxu0 %v4725
    %5442 = vmatpush1.bf16.msra.mxu0 %v4724
    %5443 = vmatprep.subr.bf16.mxu0 %v4713
    %5444 = vmatpush1.bf16.msra.mxu0 %v4712
    %5445 = vmatprep.subr.bf16.mxu0 %v4701
    %5446 = vmatpush1.bf16.msra.mxu0 %v4700
    %5447 = vmatprep.subr.bf16.mxu0 %v4689
    %5448 = vmatpush1.bf16.msra.mxu0 %v4688
    %5449 = vmatprep.subr.bf16.mxu0 %v4677
    %5450 = vmatpush1.bf16.msra.mxu0 %v4676
    %5451 = vmatprep.subr.bf16.mxu0 %v4665
    %5452 = vmatpush1.bf16.msra.mxu0 %v4664
    %5453 = vmatprep.subr.bf16.mxu0 %v4653
    %5454 = vmatpush1.bf16.msra.mxu0 %v4652
    %5455 = vmatprep.subr.bf16.mxu0 %v4833
    %5456 = vmatpush2.bf16.msra.mxu0 %v4832
    %5457 = vmatprep.subr.bf16.mxu0 %v4821
    %5458 = vmatpush2.bf16.msra.mxu0 %v4820
    %5459 = vmatprep.subr.bf16.mxu0 %v4809
    %5460 = vmatpush2.bf16.msra.mxu0 %v4808
    %5461 = vmatprep.subr.bf16.mxu0 %v4797
    %5462 = vmatpush2.bf16.msra.mxu0 %v4796
    %5463 = vmatprep.subr.bf16.mxu0 %v4785
    %5464 = vmatpush2.bf16.msra.mxu0 %v4784
    %5465 = vmatprep.subr.bf16.mxu0 %v4773
    %5466 = vmatpush2.bf16.msra.mxu0 %v4772
    %5467 = vmatprep.subr.bf16.mxu0 %v4761
    %5468 = vmatpush2.bf16.msra.mxu0 %v4760
    %5469 = vmatprep.subr.bf16.mxu0 %v4749
    %5470 = vmatpush2.bf16.msra.mxu0 %v4748
    %5471 = vmatprep.mubr.bf16.mxu0 %v2919
    %5472 = vmatmul.mubr.bf16.gmra.mxu0 %v2918
    %v5473 = vpop.f32.mrf.mxu0
    %v5474 = vadd.f32 %v5431, %v5473
    %v5475 = vpop.f32.mrf.mxu0
    %v5476 = vadd.f32 %v5433, %v5475
    %v5477 = vpop.f32.mrf.mxu0
    %v5478 = vadd.f32 %v5435, %v5477
    %v5479 = vpop.f32.mrf.mxu0
    %v5480 = vadd.f32 %v5437, %v5479
    %5481 = vdwg.mxu0
    %5482 = vmatprep.subr.bf16.mxu0 %v4547
    %5483 = vmatpush1.bf16.msra.mxu0 %v4546
    %5484 = vmatprep.subr.bf16.mxu0 %v4535
    %5485 = vmatpush1.bf16.msra.mxu0 %v4534
    %5486 = vmatprep.subr.bf16.mxu0 %v4523
    %5487 = vmatpush1.bf16.msra.mxu0 %v4522
    %5488 = vmatprep.subr.bf16.mxu0 %v4511
    %5489 = vmatpush1.bf16.msra.mxu0 %v4510
    %5490 = vmatprep.subr.bf16.mxu0 %v4499
    %5491 = vmatpush1.bf16.msra.mxu0 %v4498
    %5492 = vmatprep.subr.bf16.mxu0 %v4487
    %5493 = vmatpush1.bf16.msra.mxu0 %v4486
    %5494 = vmatprep.subr.bf16.mxu0 %v4475
    %5495 = vmatpush1.bf16.msra.mxu0 %v4474
    %5496 = vmatprep.subr.bf16.mxu0 %v4463
    %5497 = vmatpush1.bf16.msra.mxu0 %v4462
    %5498 = vmatprep.subr.bf16.mxu0 %v4643
    %5499 = vmatpush2.bf16.msra.mxu0 %v4642
    %5500 = vmatprep.subr.bf16.mxu0 %v4631
    %5501 = vmatpush2.bf16.msra.mxu0 %v4630
    %5502 = vmatprep.subr.bf16.mxu0 %v4619
    %5503 = vmatpush2.bf16.msra.mxu0 %v4618
    %5504 = vmatprep.subr.bf16.mxu0 %v4607
    %5505 = vmatpush2.bf16.msra.mxu0 %v4606
    %5506 = vmatprep.subr.bf16.mxu0 %v4595
    %5507 = vmatpush2.bf16.msra.mxu0 %v4594
    %5508 = vmatprep.subr.bf16.mxu0 %v4583
    %5509 = vmatpush2.bf16.msra.mxu0 %v4582
    %5510 = vmatprep.subr.bf16.mxu0 %v4571
    %5511 = vmatpush2.bf16.msra.mxu0 %v4570
    %5512 = vmatprep.subr.bf16.mxu0 %v4559
    %5513 = vmatpush2.bf16.msra.mxu0 %v4558
    %5514 = vmatprep.mubr.bf16.mxu0 %v2917
    %5515 = vmatmul.mubr.bf16.gmra.mxu0 %v2916
    %v5516 = vpop.f32.mrf.mxu0
    %v5517 = vadd.f32 0.0, %v5516
    %v5518 = vpop.f32.mrf.mxu0
    %v5519 = vadd.f32 0.0, %v5518
    %v5520 = vpop.f32.mrf.mxu0
    %v5521 = vadd.f32 0.0, %v5520
    %v5522 = vpop.f32.mrf.mxu0
    %v5523 = vadd.f32 0.0, %v5522
    %5524 = vdwg.mxu0
    %5525 = vmatprep.subr.bf16.mxu0 %v4739
    %5526 = vmatpush1.bf16.msra.mxu0 %v4738
    %5527 = vmatprep.subr.bf16.mxu0 %v4727
    %5528 = vmatpush1.bf16.msra.mxu0 %v4726
    %5529 = vmatprep.subr.bf16.mxu0 %v4715
    %5530 = vmatpush1.bf16.msra.mxu0 %v4714
    %5531 = vmatprep.subr.bf16.mxu0 %v4703
    %5532 = vmatpush1.bf16.msra.mxu0 %v4702
    %5533 = vmatprep.subr.bf16.mxu0 %v4691
    %5534 = vmatpush1.bf16.msra.mxu0 %v4690
    %5535 = vmatprep.subr.bf16.mxu0 %v4679
    %5536 = vmatpush1.bf16.msra.mxu0 %v4678
    %5537 = vmatprep.subr.bf16.mxu0 %v4667
    %5538 = vmatpush1.bf16.msra.mxu0 %v4666
    %5539 = vmatprep.subr.bf16.mxu0 %v4655
    %5540 = vmatpush1.bf16.msra.mxu0 %v4654
    %5541 = vmatprep.subr.bf16.mxu0 %v4835
    %5542 = vmatpush2.bf16.msra.mxu0 %v4834
    %5543 = vmatprep.subr.bf16.mxu0 %v4823
    %5544 = vmatpush2.bf16.msra.mxu0 %v4822
    %5545 = vmatprep.subr.bf16.mxu0 %v4811
    %5546 = vmatpush2.bf16.msra.mxu0 %v4810
    %5547 = vmatprep.subr.bf16.mxu0 %v4799
    %5548 = vmatpush2.bf16.msra.mxu0 %v4798
    %5549 = vmatprep.subr.bf16.mxu0 %v4787
    %5550 = vmatpush2.bf16.msra.mxu0 %v4786
    %5551 = vmatprep.subr.bf16.mxu0 %v4775
    %5552 = vmatpush2.bf16.msra.mxu0 %v4774
    %5553 = vmatprep.subr.bf16.mxu0 %v4763
    %5554 = vmatpush2.bf16.msra.mxu0 %v4762
    %5555 = vmatprep.subr.bf16.mxu0 %v4751
    %5556 = vmatpush2.bf16.msra.mxu0 %v4750
    %5557 = vmatprep.mubr.bf16.mxu0 %v2919
    %5558 = vmatmul.mubr.bf16.gmra.mxu0 %v2918
    %v5559 = vpop.f32.mrf.mxu0
    %v5560 = vadd.f32 %v5517, %v5559
    %v5561 = vpop.f32.mrf.mxu0
    %v5562 = vadd.f32 %v5519, %v5561
    %v5563 = vpop.f32.mrf.mxu0
    %v5564 = vadd.f32 %v5521, %v5563
    %v5565 = vpop.f32.mrf.mxu0
    %v5566 = vadd.f32 %v5523, %v5565
    %5567 = vdwg.mxu0
    %5568 = vmatprep.subr.bf16.mxu0 %v4549
    %5569 = vmatpush1.bf16.msra.mxu0 %v4548
    %5570 = vmatprep.subr.bf16.mxu0 %v4537
    %5571 = vmatpush1.bf16.msra.mxu0 %v4536
    %5572 = vmatprep.subr.bf16.mxu0 %v4525
    %5573 = vmatpush1.bf16.msra.mxu0 %v4524
    %5574 = vmatprep.subr.bf16.mxu0 %v4513
    %5575 = vmatpush1.bf16.msra.mxu0 %v4512
    %5576 = vmatprep.subr.bf16.mxu0 %v4501
    %5577 = vmatpush1.bf16.msra.mxu0 %v4500
    %5578 = vmatprep.subr.bf16.mxu0 %v4489
    %5579 = vmatpush1.bf16.msra.mxu0 %v4488
    %5580 = vmatprep.subr.bf16.mxu0 %v4477
    %5581 = vmatpush1.bf16.msra.mxu0 %v4476
    %5582 = vmatprep.subr.bf16.mxu0 %v4465
    %5583 = vmatpush1.bf16.msra.mxu0 %v4464
    %5584 = vmatprep.subr.bf16.mxu0 %v4645
    %5585 = vmatpush2.bf16.msra.mxu0 %v4644
    %5586 = vmatprep.subr.bf16.mxu0 %v4633
    %5587 = vmatpush2.bf16.msra.mxu0 %v4632
    %5588 = vmatprep.subr.bf16.mxu0 %v4621
    %5589 = vmatpush2.bf16.msra.mxu0 %v4620
    %5590 = vmatprep.subr.bf16.mxu0 %v4609
    %5591 = vmatpush2.bf16.msra.mxu0 %v4608
    %5592 = vmatprep.subr.bf16.mxu0 %v4597
    %5593 = vmatpush2.bf16.msra.mxu0 %v4596
    %5594 = vmatprep.subr.bf16.mxu0 %v4585
    %5595 = vmatpush2.bf16.msra.mxu0 %v4584
    %5596 = vmatprep.subr.bf16.mxu0 %v4573
    %5597 = vmatpush2.bf16.msra.mxu0 %v4572
    %5598 = vmatprep.subr.bf16.mxu0 %v4561
    %5599 = vmatpush2.bf16.msra.mxu0 %v4560
    %5600 = vmatprep.mubr.bf16.mxu0 %v2917
    %5601 = vmatmul.mubr.bf16.gmra.mxu0 %v2916
    %v5602 = vpop.f32.mrf.mxu0
    %v5603 = vadd.f32 0.0, %v5602
    %v5604 = vpop.f32.mrf.mxu0
    %v5605 = vadd.f32 0.0, %v5604
    %v5606 = vpop.f32.mrf.mxu0
    %v5607 = vadd.f32 0.0, %v5606
    %v5608 = vpop.f32.mrf.mxu0
    %v5609 = vadd.f32 0.0, %v5608
    %5610 = vdwg.mxu0
    %5611 = vmatprep.subr.bf16.mxu0 %v4741
    %5612 = vmatpush1.bf16.msra.mxu0 %v4740
    %5613 = vmatprep.subr.bf16.mxu0 %v4729
    %5614 = vmatpush1.bf16.msra.mxu0 %v4728
    %5615 = vmatprep.subr.bf16.mxu0 %v4717
    %5616 = vmatpush1.bf16.msra.mxu0 %v4716
    %5617 = vmatprep.subr.bf16.mxu0 %v4705
    %5618 = vmatpush1.bf16.msra.mxu0 %v4704
    %5619 = vmatprep.subr.bf16.mxu0 %v4693
    %5620 = vmatpush1.bf16.msra.mxu0 %v4692
    %5621 = vmatprep.subr.bf16.mxu0 %v4681
    %5622 = vmatpush1.bf16.msra.mxu0 %v4680
    %5623 = vmatprep.subr.bf16.mxu0 %v4669
    %5624 = vmatpush1.bf16.msra.mxu0 %v4668
    %5625 = vmatprep.subr.bf16.mxu0 %v4657
    %5626 = vmatpush1.bf16.msra.mxu0 %v4656
    %5627 = vmatprep.subr.bf16.mxu0 %v4837
    %5628 = vmatpush2.bf16.msra.mxu0 %v4836
    %5629 = vmatprep.subr.bf16.mxu0 %v4825
    %5630 = vmatpush2.bf16.msra.mxu0 %v4824
    %5631 = vmatprep.subr.bf16.mxu0 %v4813
    %5632 = vmatpush2.bf16.msra.mxu0 %v4812
    %5633 = vmatprep.subr.bf16.mxu0 %v4801
    %5634 = vmatpush2.bf16.msra.mxu0 %v4800
    %5635 = vmatprep.subr.bf16.mxu0 %v4789
    %5636 = vmatpush2.bf16.msra.mxu0 %v4788
    %5637 = vmatprep.subr.bf16.mxu0 %v4777
    %5638 = vmatpush2.bf16.msra.mxu0 %v4776
    %5639 = vmatprep.subr.bf16.mxu0 %v4765
    %5640 = vmatpush2.bf16.msra.mxu0 %v4764
    %5641 = vmatprep.subr.bf16.mxu0 %v4753
    %5642 = vmatpush2.bf16.msra.mxu0 %v4752
    %5643 = vmatprep.mubr.bf16.mxu0 %v2919
    %5644 = vmatmul.mubr.bf16.gmra.mxu0 %v2918
    %v5645 = vpop.f32.mrf.mxu0
    %v5646 = vadd.f32 %v5603, %v5645
    %v5647 = vpop.f32.mrf.mxu0
    %v5648 = vadd.f32 %v5605, %v5647
    %v5649 = vpop.f32.mrf.mxu0
    %v5650 = vadd.f32 %v5607, %v5649
    %v5651 = vpop.f32.mrf.mxu0
    %v5652 = vadd.f32 %v5609, %v5651
    %5653 = vdwg.mxu0
    %5654 = vmatprep.subr.bf16.mxu0 %v4551
    %5655 = vmatpush1.bf16.msra.mxu0 %v4550
    %5656 = vmatprep.subr.bf16.mxu0 %v4539
    %5657 = vmatpush1.bf16.msra.mxu0 %v4538
    %5658 = vmatprep.subr.bf16.mxu0 %v4527
    %5659 = vmatpush1.bf16.msra.mxu0 %v4526
    %5660 = vmatprep.subr.bf16.mxu0 %v4515
    %5661 = vmatpush1.bf16.msra.mxu0 %v4514
    %5662 = vmatprep.subr.bf16.mxu0 %v4503
    %5663 = vmatpush1.bf16.msra.mxu0 %v4502
    %5664 = vmatprep.subr.bf16.mxu0 %v4491
    %5665 = vmatpush1.bf16.msra.mxu0 %v4490
    %5666 = vmatprep.subr.bf16.mxu0 %v4479
    %5667 = vmatpush1.bf16.msra.mxu0 %v4478
    %5668 = vmatprep.subr.bf16.mxu0 %v4467
    %5669 = vmatpush1.bf16.msra.mxu0 %v4466
    %5670 = vmatprep.subr.bf16.mxu0 %v4647
    %5671 = vmatpush2.bf16.msra.mxu0 %v4646
    %5672 = vmatprep.subr.bf16.mxu0 %v4635
    %5673 = vmatpush2.bf16.msra.mxu0 %v4634
    %5674 = vmatprep.subr.bf16.mxu0 %v4623
    %5675 = vmatpush2.bf16.msra.mxu0 %v4622
    %5676 = vmatprep.subr.bf16.mxu0 %v4611
    %5677 = vmatpush2.bf16.msra.mxu0 %v4610
    %5678 = vmatprep.subr.bf16.mxu0 %v4599
    %5679 = vmatpush2.bf16.msra.mxu0 %v4598
    %5680 = vmatprep.subr.bf16.mxu0 %v4587
    %5681 = vmatpush2.bf16.msra.mxu0 %v4586
    %5682 = vmatprep.subr.bf16.mxu0 %v4575
    %5683 = vmatpush2.bf16.msra.mxu0 %v4574
    %5684 = vmatprep.subr.bf16.mxu0 %v4563
    %5685 = vmatpush2.bf16.msra.mxu0 %v4562
    %5686 = vmatprep.mubr.bf16.mxu0 %v2917
    %5687 = vmatmul.mubr.bf16.gmra.mxu0 %v2916
    %v5688 = vpop.f32.mrf.mxu0
    %v5689 = vadd.f32 0.0, %v5688
    %v5690 = vpop.f32.mrf.mxu0
    %v5691 = vadd.f32 0.0, %v5690
    %v5692 = vpop.f32.mrf.mxu0
    %v5693 = vadd.f32 0.0, %v5692
    %v5694 = vpop.f32.mrf.mxu0
    %v5695 = vadd.f32 0.0, %v5694
    %5696 = vdwg.mxu0
    %5697 = vmatprep.subr.bf16.mxu0 %v4743
    %5698 = vmatpush1.bf16.msra.mxu0 %v4742
    %5699 = vmatprep.subr.bf16.mxu0 %v4731
    %5700 = vmatpush1.bf16.msra.mxu0 %v4730
    %5701 = vmatprep.subr.bf16.mxu0 %v4719
    %5702 = vmatpush1.bf16.msra.mxu0 %v4718
    %5703 = vmatprep.subr.bf16.mxu0 %v4707
    %5704 = vmatpush1.bf16.msra.mxu0 %v4706
    %5705 = vmatprep.subr.bf16.mxu0 %v4695
    %5706 = vmatpush1.bf16.msra.mxu0 %v4694
    %5707 = vmatprep.subr.bf16.mxu0 %v4683
    %5708 = vmatpush1.bf16.msra.mxu0 %v4682
    %5709 = vmatprep.subr.bf16.mxu0 %v4671
    %5710 = vmatpush1.bf16.msra.mxu0 %v4670
    %5711 = vmatprep.subr.bf16.mxu0 %v4659
    %5712 = vmatpush1.bf16.msra.mxu0 %v4658
    %5713 = vmatprep.subr.bf16.mxu0 %v4839
    %5714 = vmatpush2.bf16.msra.mxu0 %v4838
    %5715 = vmatprep.subr.bf16.mxu0 %v4827
    %5716 = vmatpush2.bf16.msra.mxu0 %v4826
    %5717 = vmatprep.subr.bf16.mxu0 %v4815
    %5718 = vmatpush2.bf16.msra.mxu0 %v4814
    %5719 = vmatprep.subr.bf16.mxu0 %v4803
    %5720 = vmatpush2.bf16.msra.mxu0 %v4802
    %5721 = vmatprep.subr.bf16.mxu0 %v4791
    %5722 = vmatpush2.bf16.msra.mxu0 %v4790
    %5723 = vmatprep.subr.bf16.mxu0 %v4779
    %5724 = vmatpush2.bf16.msra.mxu0 %v4778
    %5725 = vmatprep.subr.bf16.mxu0 %v4767
    %5726 = vmatpush2.bf16.msra.mxu0 %v4766
    %5727 = vmatprep.subr.bf16.mxu0 %v4755
    %5728 = vmatpush2.bf16.msra.mxu0 %v4754
    %5729 = vmatprep.mubr.bf16.mxu0 %v2919
    %5730 = vmatmul.mubr.bf16.gmra.mxu0 %v2918
    %v5731 = vpop.f32.mrf.mxu0
    %v5732 = vadd.f32 %v5689, %v5731
    %v5733 = vpop.f32.mrf.mxu0
    %v5734 = vadd.f32 %v5691, %v5733
    %v5735 = vpop.f32.mrf.mxu0
    %v5736 = vadd.f32 %v5693, %v5735
    %v5737 = vpop.f32.mrf.mxu0
    %v5738 = vadd.f32 %v5695, %v5737
    %5739 = vdwg.mxu0
    %5740 = vst [vmem:[#allocation4] sm:$0xff] %v5302
    %5741 = vst [vmem:[#allocation4 + $0x8] sm:$0xff] %v5304
    %5742 = vst [vmem:[#allocation4 + $0x10] sm:$0xff] %v5388
    %5743 = vst [vmem:[#allocation4 + $0x18] sm:$0xff] %v5390
    %5744 = vst [vmem:[#allocation4 + $0x20] sm:$0xff] %v5474
    %5745 = vst [vmem:[#allocation4 + $0x28] sm:$0xff] %v5476
    %5746 = vst [vmem:[#allocation4 + $0x30] sm:$0xff] %v5560
    %5747 = vst [vmem:[#allocation4 + $0x38] sm:$0xff] %v5562
    %5748 = vst [vmem:[#allocation4 + $0x40] sm:$0xff] %v5646
    %5749 = vst [vmem:[#allocation4 + $0x48] sm:$0xff] %v5648
    %5750 = vst [vmem:[#allocation4 + $0x50] sm:$0xff] %v5732
    %5751 = vst [vmem:[#allocation4 + $0x58] sm:$0xff] %v5734
    %5752 = vst [vmem:[#allocation4 + $0x60] sm:$0x3f] %v5306
    %5753 = vst [vmem:[#allocation4 + $0x68] sm:$0x3f] %v5308
    %5754 = vst [vmem:[#allocation4 + $0x70] sm:$0x3f] %v5392
    %5755 = vst [vmem:[#allocation4 + $0x78] sm:$0x3f] %v5394
    %5756 = vst [vmem:[#allocation4 + $0x80] sm:$0x3f] %v5478
    %5757 = vst [vmem:[#allocation4 + $0x88] sm:$0x3f] %v5480
    %5758 = vst [vmem:[#allocation4 + $0x90] sm:$0x3f] %v5564
    %5759 = vst [vmem:[#allocation4 + $0x98] sm:$0x3f] %v5566
    %5760 = vst [vmem:[#allocation4 + $0xa0] sm:$0x3f] %v5650
    %5761 = vst [vmem:[#allocation4 + $0xa8] sm:$0x3f] %v5652
    %5762 = vst [vmem:[#allocation4 + $0xb0] sm:$0x3f] %v5736
    %5763 = vst [vmem:[#allocation4 + $0xb8] sm:$0x3f] %v5738
    %v5764 = vld [vmem:[#allocation4] ss:$8 sm:$0xf]
    %5765 = vst.msk [vmem:[#allocation5] ss:$8 sm:$0xf] %vm2624, %v5764
    %5766 = vst.msk [vmem:[#allocation5] ss:$8 sm:$0x0] %vm2624, %v5764
    %s5767 = scalar_lea.vmem [#allocation4], 32
    %v5768 = vld [vmem:[%s5767] ss:$8 sm:$0xf]
    %s5769 = scalar_lea.vmem [#allocation5], 1
    %5770 = vst.msk [vmem:[%s5769] ss:$8 sm:$0xf] %vm2624, %v5768
    %5771 = vst.msk [vmem:[%s5769] ss:$8 sm:$0x0] %vm2624, %v5768
    %s5772 = scalar_lea.vmem [#allocation4], 1
    %v5773 = vld [vmem:[%s5772] ss:$8 sm:$0xf]
    %s5774 = scalar_lea.vmem [#allocation4], 64
    %v5775 = vld [vmem:[%s5774] ss:$8 sm:$0xf]
    %v5776 = vadd.f32 %v5773, %v5775
    %s5777 = scalar_lea.vmem [#allocation5], 2
    %5778 = vst.msk [vmem:[%s5777] ss:$8 sm:$0xf] %vm2624, %v5776
    %5779 = vst.msk [vmem:[%s5777] ss:$8 sm:$0x0] %vm2624, %v5776
    %s5780 = scalar_lea.vmem [#allocation4], 33
    %v5781 = vld [vmem:[%s5780] ss:$8 sm:$0xf]
    %s5782 = scalar_lea.vmem [#allocation5], 3
    %5783 = vst.msk [vmem:[%s5782] ss:$8 sm:$0xf] %vm2624, %v5781
    %5784 = vst.msk [vmem:[%s5782] ss:$8 sm:$0x0] %vm2624, %v5781
    %s5785 = scalar_lea.vmem [#allocation4], 2
    %v5786 = vld [vmem:[%s5785] ss:$8 sm:$0xf]
    %s5787 = scalar_lea.vmem [#allocation4], 65
    %v5788 = vld [vmem:[%s5787] ss:$8 sm:$0xf]
    %v5789 = vadd.f32 %v5786, %v5788
    %s5790 = scalar_lea.vmem [#allocation5], 4
    %5791 = vst.msk [vmem:[%s5790] ss:$8 sm:$0xf] %vm2624, %v5789
    %5792 = vst.msk [vmem:[%s5790] ss:$8 sm:$0x0] %vm2624, %v5789
    %s5793 = scalar_lea.vmem [#allocation4], 34
    %v5794 = vld [vmem:[%s5793] ss:$8 sm:$0xf]
    %s5795 = scalar_lea.vmem [#allocation5], 5
    %5796 = vst.msk [vmem:[%s5795] ss:$8 sm:$0xf] %vm2624, %v5794
    %5797 = vst.msk [vmem:[%s5795] ss:$8 sm:$0x0] %vm2624, %v5794
    %s5798 = scalar_lea.vmem [#allocation4], 3
    %v5799 = vld [vmem:[%s5798] ss:$8 sm:$0xf]
    %s5800 = scalar_lea.vmem [#allocation4], 66
    %v5801 = vld [vmem:[%s5800] ss:$8 sm:$0xf]
    %v5802 = vadd.f32 %v5799, %v5801
    %s5803 = scalar_lea.vmem [#allocation5], 6
    %5804 = vst.msk [vmem:[%s5803] ss:$8 sm:$0xf] %vm2624, %v5802
    %5805 = vst.msk [vmem:[%s5803] ss:$8 sm:$0x0] %vm2624, %v5802
    %s5806 = scalar_lea.vmem [#allocation4], 35
    %v5807 = vld [vmem:[%s5806] ss:$8 sm:$0xf]
    %s5808 = scalar_lea.vmem [#allocation5], 7
    %5809 = vst.msk [vmem:[%s5808] ss:$8 sm:$0xf] %vm2624, %v5807
    %5810 = vst.msk [vmem:[%s5808] ss:$8 sm:$0x0] %vm2624, %v5807
    %s5811 = scalar_lea.vmem [#allocation4], 4
    %v5812 = vld [vmem:[%s5811] ss:$8 sm:$0xf]
    %s5813 = scalar_lea.vmem [#allocation4], 67
    %v5814 = vld [vmem:[%s5813] ss:$8 sm:$0xf]
    %v5815 = vadd.f32 %v5812, %v5814
    %s5816 = scalar_lea.vmem [#allocation5], 32
    %5817 = vst.msk [vmem:[%s5816] ss:$8 sm:$0xf] %vm2624, %v5815
    %5818 = vst.msk [vmem:[%s5816] ss:$8 sm:$0x0] %vm2624, %v5815
    %s5819 = scalar_lea.vmem [#allocation4], 36
    %v5820 = vld [vmem:[%s5819] ss:$8 sm:$0xf]
    %s5821 = scalar_lea.vmem [#allocation5], 33
    %5822 = vst.msk [vmem:[%s5821] ss:$8 sm:$0xf] %vm2624, %v5820
    %5823 = vst.msk [vmem:[%s5821] ss:$8 sm:$0x0] %vm2624, %v5820
    %s5824 = scalar_lea.vmem [#allocation4], 5
    %v5825 = vld [vmem:[%s5824] ss:$8 sm:$0xf]
    %s5826 = scalar_lea.vmem [#allocation4], 68
    %v5827 = vld [vmem:[%s5826] ss:$8 sm:$0xf]
    %v5828 = vadd.f32 %v5825, %v5827
    %s5829 = scalar_lea.vmem [#allocation5], 34
    %5830 = vst.msk [vmem:[%s5829] ss:$8 sm:$0xf] %vm2624, %v5828
    %5831 = vst.msk [vmem:[%s5829] ss:$8 sm:$0x0] %vm2624, %v5828
    %s5832 = scalar_lea.vmem [#allocation4], 37
    %v5833 = vld [vmem:[%s5832] ss:$8 sm:$0xf]
    %s5834 = scalar_lea.vmem [#allocation5], 35
    %5835 = vst.msk [vmem:[%s5834] ss:$8 sm:$0xf] %vm2624, %v5833
    %5836 = vst.msk [vmem:[%s5834] ss:$8 sm:$0x0] %vm2624, %v5833
    %s5837 = scalar_lea.vmem [#allocation4], 6
    %v5838 = vld [vmem:[%s5837] ss:$8 sm:$0xf]
    %s5839 = scalar_lea.vmem [#allocation4], 69
    %v5840 = vld [vmem:[%s5839] ss:$8 sm:$0xf]
    %v5841 = vadd.f32 %v5838, %v5840
    %s5842 = scalar_lea.vmem [#allocation5], 36
    %5843 = vst.msk [vmem:[%s5842] ss:$8 sm:$0xf] %vm2624, %v5841
    %5844 = vst.msk [vmem:[%s5842] ss:$8 sm:$0x0] %vm2624, %v5841
    %s5845 = scalar_lea.vmem [#allocation4], 38
    %v5846 = vld [vmem:[%s5845] ss:$8 sm:$0xf]
    %s5847 = scalar_lea.vmem [#allocation5], 37
    %5848 = vst.msk [vmem:[%s5847] ss:$8 sm:$0xf] %vm2624, %v5846
    %5849 = vst.msk [vmem:[%s5847] ss:$8 sm:$0x0] %vm2624, %v5846
    %s5850 = scalar_lea.vmem [#allocation4], 70
    %v5851 = vld [vmem:[%s5850] ss:$8 sm:$0xf]
    %s5852 = scalar_lea.vmem [#allocation5], 38
    %5853 = vst.msk [vmem:[%s5852] ss:$8 sm:$0xf] %vm2624, %v5851
    %5854 = vst.msk [vmem:[%s5852] ss:$8 sm:$0x0] %vm2624, %v5851
    %s5855 = scalar_lea.vmem [#allocation4], 7
    %v5856 = vld [vmem:[%s5855] ss:$8 sm:$0xf]
    %s5857 = scalar_lea.vmem [#allocation5], 39
    %5858 = vst.msk [vmem:[%s5857] ss:$8 sm:$0xf] %vm2624, %v5856
    %5859 = vst.msk [vmem:[%s5857] ss:$8 sm:$0x0] %vm2624, %v5856
    %s5860 = scalar_lea.vmem [#allocation4], 39
    %v5861 = vld [vmem:[%s5860] ss:$8 sm:$0xf]
    %s5862 = scalar_lea.vmem [#allocation5], 64
    %5863 = vst.msk [vmem:[%s5862] ss:$8 sm:$0xf] %vm2624, %v5861
    %5864 = vst.msk [vmem:[%s5862] ss:$8 sm:$0x0] %vm2624, %v5861
    %s5865 = scalar_lea.vmem [#allocation4], 96
    %v5866 = vld [vmem:[%s5865] ss:$8 sm:$0xf]
    %s5867 = scalar_lea.vmem [#allocation4], 71
    %v5868 = vld [vmem:[%s5867] ss:$8 sm:$0xf]
    %v5869 = vadd.f32 %v5866, %v5868
    %s5870 = scalar_lea.vmem [#allocation5], 65
    %5871 = vst.msk [vmem:[%s5870] ss:$8 sm:$0xf] %vm2624, %v5869
    %5872 = vst.msk [vmem:[%s5870] ss:$8 sm:$0x0] %vm2624, %v5869
    %s5873 = scalar_lea.vmem [#allocation4], 128
    %v5874 = vld [vmem:[%s5873] ss:$8 sm:$0xf]
    %s5875 = scalar_lea.vmem [#allocation5], 66
    %5876 = vst.msk [vmem:[%s5875] ss:$8 sm:$0xf] %vm2624, %v5874
    %5877 = vst.msk [vmem:[%s5875] ss:$8 sm:$0x0] %vm2624, %v5874
    %s5878 = scalar_lea.vmem [#allocation4], 97
    %v5879 = vld [vmem:[%s5878] ss:$8 sm:$0xf]
    %s5880 = scalar_lea.vmem [#allocation4], 160
    %v5881 = vld [vmem:[%s5880] ss:$8 sm:$0xf]
    %v5882 = vadd.f32 %v5879, %v5881
    %s5883 = scalar_lea.vmem [#allocation5], 67
    %5884 = vst.msk [vmem:[%s5883] ss:$8 sm:$0xf] %vm2624, %v5882
    %5885 = vst.msk [vmem:[%s5883] ss:$8 sm:$0x0] %vm2624, %v5882
    %s5886 = scalar_lea.vmem [#allocation4], 129
    %v5887 = vld [vmem:[%s5886] ss:$8 sm:$0xf]
    %s5888 = scalar_lea.vmem [#allocation5], 68
    %5889 = vst.msk [vmem:[%s5888] ss:$8 sm:$0xf] %vm2624, %v5887
    %5890 = vst.msk [vmem:[%s5888] ss:$8 sm:$0x0] %vm2624, %v5887
    %s5891 = scalar_lea.vmem [#allocation4], 98
    %v5892 = vld [vmem:[%s5891] ss:$8 sm:$0xf]
    %s5893 = scalar_lea.vmem [#allocation4], 161
    %v5894 = vld [vmem:[%s5893] ss:$8 sm:$0xf]
    %v5895 = vadd.f32 %v5892, %v5894
    %s5896 = scalar_lea.vmem [#allocation5], 69
    %5897 = vst.msk [vmem:[%s5896] ss:$8 sm:$0xf] %vm2624, %v5895
    %5898 = vst.msk [vmem:[%s5896] ss:$8 sm:$0x0] %vm2624, %v5895
    %s5899 = scalar_lea.vmem [#allocation4], 130
    %v5900 = vld [vmem:[%s5899] ss:$8 sm:$0xf]
    %s5901 = scalar_lea.vmem [#allocation5], 70
    %5902 = vst.msk [vmem:[%s5901] ss:$8 sm:$0xf] %vm2624, %v5900
    %5903 = vst.msk [vmem:[%s5901] ss:$8 sm:$0x0] %vm2624, %v5900
    %s5904 = scalar_lea.vmem [#allocation4], 99
    %v5905 = vld [vmem:[%s5904] ss:$8 sm:$0xf]
    %s5906 = scalar_lea.vmem [#allocation4], 162
    %v5907 = vld [vmem:[%s5906] ss:$8 sm:$0xf]
    %v5908 = vadd.f32 %v5905, %v5907
    %s5909 = scalar_lea.vmem [#allocation5], 71
    %5910 = vst.msk [vmem:[%s5909] ss:$8 sm:$0xf] %vm2624, %v5908
    %5911 = vst.msk [vmem:[%s5909] ss:$8 sm:$0x0] %vm2624, %v5908
    %s5912 = scalar_lea.vmem [#allocation4], 131
    %v5913 = vld [vmem:[%s5912] ss:$8 sm:$0xf]
    %s5914 = scalar_lea.vmem [#allocation5], 96
    %5915 = vst.msk [vmem:[%s5914] ss:$8 sm:$0xf] %vm2624, %v5913
    %5916 = vst.msk [vmem:[%s5914] ss:$8 sm:$0x0] %vm2624, %v5913
    %s5917 = scalar_lea.vmem [#allocation4], 100
    %v5918 = vld [vmem:[%s5917] ss:$8 sm:$0xf]
    %s5919 = scalar_lea.vmem [#allocation4], 163
    %v5920 = vld [vmem:[%s5919] ss:$8 sm:$0xf]
    %v5921 = vadd.f32 %v5918, %v5920
    %s5922 = scalar_lea.vmem [#allocation5], 97
    %5923 = vst.msk [vmem:[%s5922] ss:$8 sm:$0xf] %vm2624, %v5921
    %5924 = vst.msk [vmem:[%s5922] ss:$8 sm:$0x0] %vm2624, %v5921
    %s5925 = scalar_lea.vmem [#allocation4], 132
    %v5926 = vld [vmem:[%s5925] ss:$8 sm:$0xf]
    %s5927 = scalar_lea.vmem [#allocation5], 98
    %5928 = vst.msk [vmem:[%s5927] ss:$8 sm:$0xf] %vm2624, %v5926
    %5929 = vst.msk [vmem:[%s5927] ss:$8 sm:$0x0] %vm2624, %v5926
    %s5930 = scalar_lea.vmem [#allocation4], 101
    %v5931 = vld [vmem:[%s5930] ss:$8 sm:$0xf]
    %s5932 = scalar_lea.vmem [#allocation4], 164
    %v5933 = vld [vmem:[%s5932] ss:$8 sm:$0xf]
    %v5934 = vadd.f32 %v5931, %v5933
    %s5935 = scalar_lea.vmem [#allocation5], 99
    %5936 = vst.msk [vmem:[%s5935] ss:$8 sm:$0xf] %vm2624, %v5934
    %5937 = vst.msk [vmem:[%s5935] ss:$8 sm:$0x0] %vm2624, %v5934
    %s5938 = scalar_lea.vmem [#allocation4], 133
    %v5939 = vld [vmem:[%s5938] ss:$8 sm:$0xf]
    %s5940 = scalar_lea.vmem [#allocation5], 100
    %5941 = vst.msk [vmem:[%s5940] ss:$8 sm:$0xf] %vm2624, %v5939
    %5942 = vst.msk [vmem:[%s5940] ss:$8 sm:$0x0] %vm2624, %v5939
    %s5943 = scalar_lea.vmem [#allocation4], 165
    %v5944 = vld [vmem:[%s5943] ss:$8 sm:$0xf]
    %s5945 = scalar_lea.vmem [#allocation5], 101
    %5946 = vst.msk [vmem:[%s5945] ss:$8 sm:$0xf] %vm2624, %v5944
    %5947 = vst.msk [vmem:[%s5945] ss:$8 sm:$0x0] %vm2624, %v5944
    %v5948 = vld [vmem:[#allocation5] sm:$0xff]
    %v5949 = vld [vmem:[#allocation5 + $0x8] sm:$0xff]
    %v5950 = vld [vmem:[#allocation5 + $0x10] sm:$0xff]
    %v5951 = vld [vmem:[#allocation5 + $0x18] sm:$0xff]
    %v5952 = vld [vmem:[#allocation5 + $0x20] sm:$0xff]
    %v5953 = vld [vmem:[#allocation5 + $0x28] sm:$0xff]
    %v5954 = vld [vmem:[#allocation5 + $0x30] sm:$0xff]
    %v5955 = vld [vmem:[#allocation5 + $0x38] sm:$0xff]
    %v5956 = vld [vmem:[#allocation5 + $0x40] sm:$0xff]
    %v5957 = vld [vmem:[#allocation5 + $0x48] sm:$0xff]
    %v5958 = vld [vmem:[#allocation5 + $0x50] sm:$0xff]
    %v5959 = vld [vmem:[#allocation5 + $0x58] sm:$0xff]
    %v5960 = vld [vmem:[#allocation5 + $0x60] sm:$0x3f]
    %v5961 = vld [vmem:[#allocation5 + $0x68] sm:$0x3f]
    %v5962 = vld [vmem:[#allocation5 + $0x70] sm:$0x3f]
    %v5963 = vld [vmem:[#allocation5 + $0x78] sm:$0x3f]
    %v5964 = vadd.f32 %v5948, %v5952
    %v5965 = vadd.f32 %v5964, %v5956
    %v5966 = vsel %vm302, %v5960, 0.0
    %v5967 = vadd.f32 %v5965, %v5966
    %v5968 = vrot.slane %v5967, 4
    %v5969 = vadd.f32 %v5967, %v5968
    %v5970 = vrot.slane %v5969, 2
    %v5971 = vadd.f32 %v5969, %v5970
    %v5972 = vrot.slane %v5971, 1
    %v5973 = vadd.f32 %v5971, %v5972
    %v5974 = vadd.f32 %v5949, %v5953
    %v5975 = vadd.f32 %v5974, %v5957
    %v5976 = vsel %vm302, %v5961, 0.0
    %v5977 = vadd.f32 %v5975, %v5976
    %v5978 = vrot.slane %v5977, 4
    %v5979 = vadd.f32 %v5977, %v5978
    %v5980 = vrot.slane %v5979, 2
    %v5981 = vadd.f32 %v5979, %v5980
    %v5982 = vrot.slane %v5981, 1
    %v5983 = vadd.f32 %v5981, %v5982
    %v5984 = vadd.f32 %v5950, %v5954
    %v5985 = vadd.f32 %v5984, %v5958
    %v5986 = vsel %vm302, %v5962, 0.0
    %v5987 = vadd.f32 %v5985, %v5986
    %v5988 = vrot.slane %v5987, 4
    %v5989 = vadd.f32 %v5987, %v5988
    %v5990 = vrot.slane %v5989, 2
    %v5991 = vadd.f32 %v5989, %v5990
    %v5992 = vrot.slane %v5991, 1
    %v5993 = vadd.f32 %v5991, %v5992
    %v5994 = vadd.f32 %v5951, %v5955
    %v5995 = vadd.f32 %v5994, %v5959
    %v5996 = vsel %vm302, %v5963, 0.0
    %v5997 = vadd.f32 %v5995, %v5996
    %v5998 = vrot.slane %v5997, 4
    %v5999 = vadd.f32 %v5997, %v5998
    %v6000 = vrot.slane %v5999, 2
    %v6001 = vadd.f32 %v5999, %v6000
    %v6002 = vrot.slane %v6001, 1
    %v6003 = vadd.f32 %v6001, %v6002
    %6005 = vrot.lane.b32.xlu0 %v5973, 96
    %v6006 = vpop.permute.xlu0 %6005
    %v6008 = vadd.f32 %v5973, %v6006
    %6009 = vrot.lane.b32.xlu0 %v5973, 64
    %v6010 = vpop.permute.xlu0 %6009
    %v6012 = vadd.f32 %v6008, %v6010
    %6013 = vrot.lane.b32.xlu0 %v5973, 32
    %v6014 = vpop.permute.xlu0 %6013
    %v6016 = vadd.f32 %v6012, %v6014
    %v6017 = vadd.f32 %v6016, %v5983
    %6019 = vrot.lane.b32.xlu0 %v5983, 96
    %v6020 = vpop.permute.xlu0 %6019
    %v6022 = vadd.f32 %v6017, %v6020
    %6023 = vrot.lane.b32.xlu0 %v5983, 64
    %v6024 = vpop.permute.xlu0 %6023
    %v6026 = vadd.f32 %v6022, %v6024
    %6027 = vrot.lane.b32.xlu0 %v5983, 32
    %v6028 = vpop.permute.xlu0 %6027
    %v6030 = vadd.f32 %v6026, %v6028
    %v6031 = vadd.f32 %v6030, %v5993
    %6033 = vrot.lane.b32.xlu0 %v5993, 96
    %v6034 = vpop.permute.xlu0 %6033
    %v6036 = vadd.f32 %v6031, %v6034
    %6037 = vrot.lane.b32.xlu0 %v5993, 64
    %v6038 = vpop.permute.xlu0 %6037
    %v6040 = vadd.f32 %v6036, %v6038
    %6041 = vrot.lane.b32.xlu0 %v5993, 32
    %v6042 = vpop.permute.xlu0 %6041
    %v6044 = vadd.f32 %v6040, %v6042
    %v6045 = vadd.f32 %v6044, %v6003
    %6047 = vrot.lane.b32.xlu0 %v6003, 96
    %v6048 = vpop.permute.xlu0 %6047
    %v6050 = vadd.f32 %v6045, %v6048
    %6051 = vrot.lane.b32.xlu0 %v6003, 64
    %v6052 = vpop.permute.xlu0 %6051
    %v6054 = vadd.f32 %v6050, %v6052
    %v6055 = vmul.f32 %v6054, 0.0022222223
    %6057 = vrot.lane.b32.xlu0 %v6055, 32
    %v6058 = vpop.permute.xlu0 %6057
    %6060 = vrot.lane.b32.xlu0 %v6055, 64
    %v6061 = vpop.permute.xlu0 %6060
    %6063 = vrot.lane.b32.xlu0 %v6055, 96
    %v6064 = vpop.permute.xlu0 %6063
    %vm6066 = vcmask 261120
    %v6067 = vsel %vm6066, %v6055, %v6058
    %v6068 = vsel %vm2767, %v6067, %v6061
    %vm6069 = vcmask 785408
    %v6070 = vsel %vm6069, %v6068, %v6064
    %v6071 = vsel %vm6069, %v6068, 0.0
    %v6072 = vlaneseq
    %v6073 = vshrl.u32 %v6072, 7
    %v6074 = vsub.s32 0, %v6073
    %v6075 = vrot.slane %v6070, %v6074
    %v6076 = vlaneseq
    %v6077 = vshrl.u32 %v6076, 7
    %v6078 = vsub.s32 0, %v6077
    %v6079 = vrot.slane %v6071, %v6078
    %v6080 = vsub.f32 %v5948, %v6075
    %v6081 = vsub.f32 %v5949, %v6075
    %v6082 = vsub.f32 %v5950, %v6075
    %v6083 = vsub.f32 %v5951, %v6079
    %v6084 = vsub.f32 %v5952, %v6075
    %v6085 = vsub.f32 %v5953, %v6075
    %v6086 = vsub.f32 %v5954, %v6075
    %v6087 = vsub.f32 %v5955, %v6079
    %v6088 = vsub.f32 %v5956, %v6075
    %v6089 = vsub.f32 %v5957, %v6075
    %v6090 = vsub.f32 %v5958, %v6075
    %v6091 = vsub.f32 %v5959, %v6079
    %v6092 = vsub.f32 %v5960, %v6075
    %v6093 = vsub.f32 %v5961, %v6075
    %v6094 = vsub.f32 %v5962, %v6075
    %v6095 = vsub.f32 %v5963, %v6079
    %v6096 = vmul.f32 %v6080, %v6080
    %v6097 = vmul.f32 %v6081, %v6081
    %v6098 = vmul.f32 %v6082, %v6082
    %v6099 = vmul.f32 %v6083, %v6083
    %v6100 = vmul.f32 %v6084, %v6084
    %v6101 = vmul.f32 %v6085, %v6085
    %v6102 = vmul.f32 %v6086, %v6086
    %v6103 = vmul.f32 %v6087, %v6087
    %v6104 = vmul.f32 %v6088, %v6088
    %v6105 = vmul.f32 %v6089, %v6089
    %v6106 = vmul.f32 %v6090, %v6090
    %v6107 = vmul.f32 %v6091, %v6091
    %v6108 = vmul.f32 %v6092, %v6092
    %v6109 = vmul.f32 %v6093, %v6093
    %v6110 = vmul.f32 %v6094, %v6094
    %v6111 = vmul.f32 %v6095, %v6095
    %v6112 = vadd.f32 %v6096, %v6100
    %v6113 = vadd.f32 %v6112, %v6104
    %v6114 = vsel %vm302, %v6108, 0.0
    %v6115 = vadd.f32 %v6113, %v6114
    %v6116 = vrot.slane %v6115, 4
    %v6117 = vadd.f32 %v6115, %v6116
    %v6118 = vrot.slane %v6117, 2
    %v6119 = vadd.f32 %v6117, %v6118
    %v6120 = vrot.slane %v6119, 1
    %v6121 = vadd.f32 %v6119, %v6120
    %v6122 = vadd.f32 %v6097, %v6101
    %v6123 = vadd.f32 %v6122, %v6105
    %v6124 = vsel %vm302, %v6109, 0.0
    %v6125 = vadd.f32 %v6123, %v6124
    %v6126 = vrot.slane %v6125, 4
    %v6127 = vadd.f32 %v6125, %v6126
    %v6128 = vrot.slane %v6127, 2
    %v6129 = vadd.f32 %v6127, %v6128
    %v6130 = vrot.slane %v6129, 1
    %v6131 = vadd.f32 %v6129, %v6130
    %v6132 = vadd.f32 %v6098, %v6102
    %v6133 = vadd.f32 %v6132, %v6106
    %v6134 = vsel %vm302, %v6110, 0.0
    %v6135 = vadd.f32 %v6133, %v6134
    %v6136 = vrot.slane %v6135, 4
    %v6137 = vadd.f32 %v6135, %v6136
    %v6138 = vrot.slane %v6137, 2
    %v6139 = vadd.f32 %v6137, %v6138
    %v6140 = vrot.slane %v6139, 1
    %v6141 = vadd.f32 %v6139, %v6140
    %v6142 = vadd.f32 %v6099, %v6103
    %v6143 = vadd.f32 %v6142, %v6107
    %v6144 = vsel %vm302, %v6111, 0.0
    %v6145 = vadd.f32 %v6143, %v6144
    %v6146 = vrot.slane %v6145, 4
    %v6147 = vadd.f32 %v6145, %v6146
    %v6148 = vrot.slane %v6147, 2
    %v6149 = vadd.f32 %v6147, %v6148
    %v6150 = vrot.slane %v6149, 1
    %v6151 = vadd.f32 %v6149, %v6150
    %6153 = vrot.lane.b32.xlu0 %v6121, 96
    %v6154 = vpop.permute.xlu0 %6153
    %v6156 = vadd.f32 %v6121, %v6154
    %6157 = vrot.lane.b32.xlu0 %v6121, 64
    %v6158 = vpop.permute.xlu0 %6157
    %v6160 = vadd.f32 %v6156, %v6158
    %6161 = vrot.lane.b32.xlu0 %v6121, 32
    %v6162 = vpop.permute.xlu0 %6161
    %v6164 = vadd.f32 %v6160, %v6162
    %v6165 = vadd.f32 %v6164, %v6131
    %6167 = vrot.lane.b32.xlu0 %v6131, 96
    %v6168 = vpop.permute.xlu0 %6167
    %v6170 = vadd.f32 %v6165, %v6168
    %6171 = vrot.lane.b32.xlu0 %v6131, 64
    %v6172 = vpop.permute.xlu0 %6171
    %v6174 = vadd.f32 %v6170, %v6172
    %6175 = vrot.lane.b32.xlu0 %v6131, 32
    %v6176 = vpop.permute.xlu0 %6175
    %v6178 = vadd.f32 %v6174, %v6176
    %v6179 = vadd.f32 %v6178, %v6141
    %6181 = vrot.lane.b32.xlu0 %v6141, 96
    %v6182 = vpop.permute.xlu0 %6181
    %v6184 = vadd.f32 %v6179, %v6182
    %6185 = vrot.lane.b32.xlu0 %v6141, 64
    %v6186 = vpop.permute.xlu0 %6185
    %v6188 = vadd.f32 %v6184, %v6186
    %6189 = vrot.lane.b32.xlu0 %v6141, 32
    %v6190 = vpop.permute.xlu0 %6189
    %v6192 = vadd.f32 %v6188, %v6190
    %v6193 = vadd.f32 %v6192, %v6151
    %6195 = vrot.lane.b32.xlu0 %v6151, 96
    %v6196 = vpop.permute.xlu0 %6195
    %v6198 = vadd.f32 %v6193, %v6196
    %6199 = vrot.lane.b32.xlu0 %v6151, 64
    %v6200 = vpop.permute.xlu0 %6199
    %v6202 = vadd.f32 %v6198, %v6200
    %v6203 = vmul.f32 %v6202, 0.0022222223
    %v6204 = vld [vmem:[#allocation20] sm:$0x1]
    %v6205 = vadd.f32 %v6203, 1e-05
    %v6206 = vrsqrt.pop %v6205
    %v6207 = vmul.f32 %v6204, %v6206
    %v6208 = vld [vmem:[#allocation21] sm:$0x1]
    %v6209 = vmul.f32 %v6055, %v6207
    %v6210 = vsub.f32 %v6208, %v6209
    %v6212 = vlaneseq
    %v6213 = vshrl.u32 %v6212, 7
    %v6214 = vsub.s32 0, %v6213
    %v6215 = vrot.slane %v6207, %v6214
    %6216 = vrot.lane.b32.xlu0 %v6215, 32
    %v6217 = vpop.permute.xlu0 %6216
    %6219 = vrot.lane.b32.xlu0 %v6215, 64
    %v6220 = vpop.permute.xlu0 %6219
    %6222 = vrot.lane.b32.xlu0 %v6215, 96
    %v6223 = vpop.permute.xlu0 %6222
    %v6225 = vsel %vm6066, %v6207, %v6217
    %v6226 = vsel %vm2767, %v6225, %v6220
    %v6227 = vsel %vm6069, %v6226, %v6223
    %v6228 = vsel %vm6069, %v6226, 0.0
    %v6230 = vlaneseq
    %v6231 = vshrl.u32 %v6230, 7
    %v6232 = vsub.s32 0, %v6231
    %v6233 = vrot.slane %v6210, %v6232
    %6234 = vrot.lane.b32.xlu0 %v6233, 32
    %v6235 = vpop.permute.xlu0 %6234
    %6237 = vrot.lane.b32.xlu0 %v6233, 64
    %v6238 = vpop.permute.xlu0 %6237
    %6240 = vrot.lane.b32.xlu0 %v6233, 96
    %v6241 = vpop.permute.xlu0 %6240
    %v6243 = vsel %vm6066, %v6210, %v6235
    %v6244 = vsel %vm2767, %v6243, %v6238
    %v6245 = vsel %vm6069, %v6244, %v6241
    %v6246 = vsel %vm6069, %v6244, 0.0
    %v6247 = vlaneseq
    %v6248 = vshrl.u32 %v6247, 7
    %v6249 = vsub.s32 0, %v6248
    %v6250 = vrot.slane %v6227, %v6249
    %v6251 = vlaneseq
    %v6252 = vshrl.u32 %v6251, 7
    %v6253 = vsub.s32 0, %v6252
    %v6254 = vrot.slane %v6228, %v6253
    %v6255 = vmul.f32 %v5948, %v6250
    %v6256 = vmul.f32 %v5949, %v6250
    %v6257 = vmul.f32 %v5950, %v6250
    %v6258 = vmul.f32 %v5951, %v6254
    %v6259 = vmul.f32 %v5952, %v6250
    %v6260 = vmul.f32 %v5953, %v6250
    %v6261 = vmul.f32 %v5954, %v6250
    %v6262 = vmul.f32 %v5955, %v6254
    %v6263 = vmul.f32 %v5956, %v6250
    %v6264 = vmul.f32 %v5957, %v6250
    %v6265 = vmul.f32 %v5958, %v6250
    %v6266 = vmul.f32 %v5959, %v6254
    %v6267 = vmul.f32 %v5960, %v6250
    %v6268 = vmul.f32 %v5961, %v6250
    %v6269 = vmul.f32 %v5962, %v6250
    %v6270 = vmul.f32 %v5963, %v6254
    %v6271 = vlaneseq
    %v6272 = vshrl.u32 %v6271, 7
    %v6273 = vsub.s32 0, %v6272
    %v6274 = vrot.slane %v6245, %v6273
    %v6275 = vlaneseq
    %v6276 = vshrl.u32 %v6275, 7
    %v6277 = vsub.s32 0, %v6276
    %v6278 = vrot.slane %v6246, %v6277
    %v6279 = vadd.f32 %v6255, %v6274
    %v6280 = vadd.f32 %v6256, %v6274
    %v6281 = vadd.f32 %v6257, %v6274
    %v6282 = vadd.f32 %v6258, %v6278
    %v6283 = vadd.f32 %v6259, %v6274
    %v6284 = vadd.f32 %v6260, %v6274
    %v6285 = vadd.f32 %v6261, %v6274
    %v6286 = vadd.f32 %v6262, %v6278
    %v6287 = vadd.f32 %v6263, %v6274
    %v6288 = vadd.f32 %v6264, %v6274
    %v6289 = vadd.f32 %v6265, %v6274
    %v6290 = vadd.f32 %v6266, %v6278
    %v6291 = vadd.f32 %v6267, %v6274
    %v6292 = vadd.f32 %v6268, %v6274
    %v6293 = vadd.f32 %v6269, %v6274
    %v6294 = vadd.f32 %v6270, %v6278
    %v6295 = vmax.f32 %v6279, 0.0
    %v6296 = vmax.f32 %v6280, 0.0
    %v6297 = vmax.f32 %v6281, 0.0
    %v6298 = vmax.f32 %v6282, 0.0
    %v6299 = vmax.f32 %v6283, 0.0
    %v6300 = vmax.f32 %v6284, 0.0
    %v6301 = vmax.f32 %v6285, 0.0
    %v6302 = vmax.f32 %v6286, 0.0
    %v6303 = vmax.f32 %v6287, 0.0
    %v6304 = vmax.f32 %v6288, 0.0
    %v6305 = vmax.f32 %v6289, 0.0
    %v6306 = vmax.f32 %v6290, 0.0
    %v6307 = vmax.f32 %v6291, 0.0
    %v6308 = vmax.f32 %v6292, 0.0
    %v6309 = vmax.f32 %v6293, 0.0
    %v6310 = vmax.f32 %v6294, 0.0
    %s6311 = smul.u32 %s2912, 3
    %s6312 = sshll.u32 %s6311, 4
    %6313 = dma.done %s143, %s6312
    %v6314 = vpack.c.bf16 %v6299, %v6295
    %v6315 = vpack.c.bf16 %v6300, %v6296
    %v6316 = vpack.c.bf16 %v6301, %v6297
    %v6317 = vpack.c.bf16 %v6302, %v6298
    %v6318 = vpack.c.bf16 %v6307, %v6303
    %v6319 = vpack.c.bf16 %v6308, %v6304
    %v6320 = vpack.c.bf16 %v6309, %v6305
    %v6321 = vpack.c.bf16 %v6310, %v6306
    %v6322 = vld [vmem:[#allocation8] sm:$0xff]
    %v6323 = vld [vmem:[#allocation8 + $0x8] sm:$0xf]
    %v6324 = vld [vmem:[#allocation8 + $0xc] sm:$0xff]
    %v6325 = vld [vmem:[#allocation8 + $0x14] sm:$0xf]
    %v6326 = vld [vmem:[#allocation8 + $0x18] sm:$0xff]
    %v6327 = vld [vmem:[#allocation8 + $0x20] sm:$0xf]
    %v6328 = vld [vmem:[#allocation8 + $0x24] sm:$0xff]
    %v6329 = vld [vmem:[#allocation8 + $0x2c] sm:$0xf]
    %v6330 = vld [vmem:[#allocation8 + $0x30] sm:$0xff]
    %v6331 = vld [vmem:[#allocation8 + $0x38] sm:$0xf]
    %v6332 = vld [vmem:[#allocation8 + $0x3c] sm:$0xff]
    %v6333 = vld [vmem:[#allocation8 + $0x44] sm:$0xf]
    %v6334 = vld [vmem:[#allocation8 + $0x48] sm:$0xff]
    %v6335 = vld [vmem:[#allocation8 + $0x50] sm:$0xf]
    %v6336 = vld [vmem:[#allocation8 + $0x54] sm:$0xff]
    %v6337 = vld [vmem:[#allocation8 + $0x5c] sm:$0xf]
    %v6338 = vld [vmem:[#allocation8 + $0x60] sm:$0xff]
    %v6339 = vld [vmem:[#allocation8 + $0x68] sm:$0xf]
    %v6340 = vld [vmem:[#allocation8 + $0x6c] sm:$0xff]
    %v6341 = vld [vmem:[#allocation8 + $0x74] sm:$0xf]
    %v6342 = vld [vmem:[#allocation8 + $0x78] sm:$0xff]
    %v6343 = vld [vmem:[#allocation8 + $0x80] sm:$0xf]
    %v6344 = vld [vmem:[#allocation8 + $0x84] sm:$0xff]
    %v6345 = vld [vmem:[#allocation8 + $0x8c] sm:$0xf]
    %v6346 = vld [vmem:[#allocation8 + $0x90] sm:$0xff]
    %v6347 = vld [vmem:[#allocation8 + $0x98] sm:$0xf]
    %v6348 = vld [vmem:[#allocation8 + $0x9c] sm:$0xff]
    %v6349 = vld [vmem:[#allocation8 + $0xa4] sm:$0xf]
    %v6350 = vld [vmem:[#allocation8 + $0xa8] sm:$0xff]
    %v6351 = vld [vmem:[#allocation8 + $0xb0] sm:$0xf]
    %v6352 = vld [vmem:[#allocation8 + $0xb4] sm:$0xff]
    %v6353 = vld [vmem:[#allocation8 + $0xbc] sm:$0xf]
    %v6354 = vld [vmem:[#allocation8 + $0xc0] sm:$0xff]
    %v6355 = vld [vmem:[#allocation8 + $0xc8] sm:$0xf]
    %v6356 = vld [vmem:[#allocation8 + $0xcc] sm:$0xff]
    %v6357 = vld [vmem:[#allocation8 + $0xd4] sm:$0xf]
    %v6358 = vld [vmem:[#allocation8 + $0xd8] sm:$0xff]
    %v6359 = vld [vmem:[#allocation8 + $0xe0] sm:$0xf]
    %v6360 = vld [vmem:[#allocation8 + $0xe4] sm:$0xff]
    %v6361 = vld [vmem:[#allocation8 + $0xec] sm:$0xf]
    %v6362 = vld [vmem:[#allocation8 + $0xf0] sm:$0xff]
    %v6363 = vld [vmem:[#allocation8 + $0xf8] sm:$0xf]
    %v6364 = vld [vmem:[#allocation8 + $0xfc] sm:$0xff]
    %v6365 = vld [vmem:[#allocation8 + $0x104] sm:$0xf]
    %v6366 = vld [vmem:[#allocation8 + $0x108] sm:$0xff]
    %v6367 = vld [vmem:[#allocation8 + $0x110] sm:$0xf]
    %v6368 = vld [vmem:[#allocation8 + $0x114] sm:$0xff]
    %v6369 = vld [vmem:[#allocation8 + $0x11c] sm:$0xf]
    %v6370 = vld [vmem:[#allocation8 + $0x120] sm:$0xff]
    %v6371 = vld [vmem:[#allocation8 + $0x128] sm:$0xf]
    %v6372 = vld [vmem:[#allocation8 + $0x12c] sm:$0xff]
    %v6373 = vld [vmem:[#allocation8 + $0x134] sm:$0xf]
    %v6374 = vld [vmem:[#allocation8 + $0x138] sm:$0xff]
    %v6375 = vld [vmem:[#allocation8 + $0x140] sm:$0xf]
    %v6376 = vld [vmem:[#allocation8 + $0x144] sm:$0xff]
    %v6377 = vld [vmem:[#allocation8 + $0x14c] sm:$0xf]
    %v6378 = vld [vmem:[#allocation8 + $0x150] sm:$0xff]
    %v6379 = vld [vmem:[#allocation8 + $0x158] sm:$0xf]
    %v6380 = vld [vmem:[#allocation8 + $0x15c] sm:$0xff]
    %v6381 = vld [vmem:[#allocation8 + $0x164] sm:$0xf]
    %v6382 = vld [vmem:[#allocation8 + $0x168] sm:$0xff]
    %v6383 = vld [vmem:[#allocation8 + $0x170] sm:$0xf]
    %v6384 = vld [vmem:[#allocation8 + $0x174] sm:$0xff]
    %v6385 = vld [vmem:[#allocation8 + $0x17c] sm:$0xf]
    %v6386 = vld [vmem:[#allocation8 + $0x180] sm:$0xff]
    %v6387 = vld [vmem:[#allocation8 + $0x188] sm:$0xf]
    %v6388 = vld [vmem:[#allocation8 + $0x18c] sm:$0xff]
    %v6389 = vld [vmem:[#allocation8 + $0x194] sm:$0xf]
    %v6390 = vld [vmem:[#allocation8 + $0x198] sm:$0xff]
    %v6391 = vld [vmem:[#allocation8 + $0x1a0] sm:$0xf]
    %v6392 = vld [vmem:[#allocation8 + $0x1a4] sm:$0xff]
    %v6393 = vld [vmem:[#allocation8 + $0x1ac] sm:$0xf]
    %v6394 = vld [vmem:[#allocation8 + $0x1b0] sm:$0xff]
    %v6395 = vld [vmem:[#allocation8 + $0x1b8] sm:$0xf]
    %v6396 = vld [vmem:[#allocation8 + $0x1bc] sm:$0xff]
    %v6397 = vld [vmem:[#allocation8 + $0x1c4] sm:$0xf]
    %v6398 = vld [vmem:[#allocation8 + $0x1c8] sm:$0xff]
    %v6399 = vld [vmem:[#allocation8 + $0x1d0] sm:$0xf]
    %v6400 = vld [vmem:[#allocation8 + $0x1d4] sm:$0xff]
    %v6401 = vld [vmem:[#allocation8 + $0x1dc] sm:$0xf]
    %v6402 = vld [vmem:[#allocation8 + $0x1e0] sm:$0xff]
    %v6403 = vld [vmem:[#allocation8 + $0x1e8] sm:$0xf]
    %v6404 = vld [vmem:[#allocation8 + $0x1ec] sm:$0xff]
    %v6405 = vld [vmem:[#allocation8 + $0x1f4] sm:$0xf]
    %v6406 = vld [vmem:[#allocation8 + $0x1f8] sm:$0xff]
    %v6407 = vld [vmem:[#allocation8 + $0x200] sm:$0xf]
    %v6408 = vld [vmem:[#allocation8 + $0x204] sm:$0xff]
    %v6409 = vld [vmem:[#allocation8 + $0x20c] sm:$0xf]
    %v6410 = vld [vmem:[#allocation8 + $0x210] sm:$0xff]
    %v6411 = vld [vmem:[#allocation8 + $0x218] sm:$0xf]
    %v6412 = vld [vmem:[#allocation8 + $0x21c] sm:$0xff]
    %v6413 = vld [vmem:[#allocation8 + $0x224] sm:$0xf]
    %v6414 = vld [vmem:[#allocation8 + $0x228] sm:$0xff]
    %v6415 = vld [vmem:[#allocation8 + $0x230] sm:$0xf]
    %v6416 = vld [vmem:[#allocation8 + $0x234] sm:$0xff]
    %v6417 = vld [vmem:[#allocation8 + $0x23c] sm:$0xf]
    %v6418 = vld [vmem:[#allocation8 + $0x240] sm:$0xff]
    %v6419 = vld [vmem:[#allocation8 + $0x248] sm:$0xf]
    %v6420 = vld [vmem:[#allocation8 + $0x24c] sm:$0xff]
    %v6421 = vld [vmem:[#allocation8 + $0x254] sm:$0xf]
    %v6422 = vld [vmem:[#allocation8 + $0x258] sm:$0xff]
    %v6423 = vld [vmem:[#allocation8 + $0x260] sm:$0xf]
    %v6424 = vld [vmem:[#allocation8 + $0x264] sm:$0xff]
    %v6425 = vld [vmem:[#allocation8 + $0x26c] sm:$0xf]
    %v6426 = vld [vmem:[#allocation8 + $0x270] sm:$0xff]
    %v6427 = vld [vmem:[#allocation8 + $0x278] sm:$0xf]
    %v6428 = vld [vmem:[#allocation8 + $0x27c] sm:$0xff]
    %v6429 = vld [vmem:[#allocation8 + $0x284] sm:$0xf]
    %v6430 = vld [vmem:[#allocation8 + $0x288] sm:$0xff]
    %v6431 = vld [vmem:[#allocation8 + $0x290] sm:$0xf]
    %v6432 = vld [vmem:[#allocation8 + $0x294] sm:$0xff]
    %v6433 = vld [vmem:[#allocation8 + $0x29c] sm:$0xf]
    %v6434 = vld [vmem:[#allocation8 + $0x2a0] sm:$0xff]
    %v6435 = vld [vmem:[#allocation8 + $0x2a8] sm:$0xf]
    %v6436 = vld [vmem:[#allocation8 + $0x2ac] sm:$0xff]
    %v6437 = vld [vmem:[#allocation8 + $0x2b4] sm:$0xf]
    %v6438 = vld [vmem:[#allocation8 + $0x2b8] sm:$0xff]
    %v6439 = vld [vmem:[#allocation8 + $0x2c0] sm:$0xf]
    %v6440 = vld [vmem:[#allocation8 + $0x2c4] sm:$0xff]
    %v6441 = vld [vmem:[#allocation8 + $0x2cc] sm:$0xf]
    %v6442 = vld [vmem:[#allocation8 + $0x2d0] sm:$0xff]
    %v6443 = vld [vmem:[#allocation8 + $0x2d8] sm:$0xf]
    %v6444 = vld [vmem:[#allocation8 + $0x2dc] sm:$0xff]
    %v6445 = vld [vmem:[#allocation8 + $0x2e4] sm:$0xf]
    %v6446 = vld [vmem:[#allocation8 + $0x2e8] sm:$0xff]
    %v6447 = vld [vmem:[#allocation8 + $0x2f0] sm:$0xf]
    %v6448 = vld [vmem:[#allocation8 + $0x2f4] sm:$0xff]
    %v6449 = vld [vmem:[#allocation8 + $0x2fc] sm:$0xf]
    %v6578 = vunpack.c.l.b16 %v6322
    %v6579 = vunpack.c.h.b16 %v6322
    %v6580 = vunpack.c.l.b16 %v6323
    %v6581 = vunpack.c.l.b16 %v6324
    %v6582 = vunpack.c.h.b16 %v6324
    %v6583 = vunpack.c.l.b16 %v6325
    %v6584 = vunpack.c.l.b16 %v6326
    %v6585 = vunpack.c.h.b16 %v6326
    %v6586 = vunpack.c.l.b16 %v6327
    %v6587 = vunpack.c.l.b16 %v6328
    %v6588 = vunpack.c.h.b16 %v6328
    %v6589 = vunpack.c.l.b16 %v6329
    %v6590 = vunpack.c.l.b16 %v6330
    %v6591 = vunpack.c.h.b16 %v6330
    %v6592 = vunpack.c.l.b16 %v6331
    %v6593 = vunpack.c.l.b16 %v6332
    %v6594 = vunpack.c.h.b16 %v6332
    %v6595 = vunpack.c.l.b16 %v6333
    %v6596 = vunpack.c.l.b16 %v6334
    %v6597 = vunpack.c.h.b16 %v6334
    %v6598 = vunpack.c.l.b16 %v6335
    %v6599 = vunpack.c.l.b16 %v6336
    %v6600 = vunpack.c.h.b16 %v6336
    %v6601 = vunpack.c.l.b16 %v6337
    %v6602 = vunpack.c.l.b16 %v6338
    %v6603 = vunpack.c.h.b16 %v6338
    %v6604 = vunpack.c.l.b16 %v6339
    %v6605 = vunpack.c.l.b16 %v6340
    %v6606 = vunpack.c.h.b16 %v6340
    %v6607 = vunpack.c.l.b16 %v6341
    %v6608 = vunpack.c.l.b16 %v6342
    %v6609 = vunpack.c.h.b16 %v6342
    %v6610 = vunpack.c.l.b16 %v6343
    %v6611 = vunpack.c.l.b16 %v6344
    %v6612 = vunpack.c.h.b16 %v6344
    %v6613 = vunpack.c.l.b16 %v6345
    %v6614 = vunpack.c.l.b16 %v6346
    %v6615 = vunpack.c.h.b16 %v6346
    %v6616 = vunpack.c.l.b16 %v6347
    %v6617 = vunpack.c.l.b16 %v6348
    %v6618 = vunpack.c.h.b16 %v6348
    %v6619 = vunpack.c.l.b16 %v6349
    %v6620 = vunpack.c.l.b16 %v6350
    %v6621 = vunpack.c.h.b16 %v6350
    %v6622 = vunpack.c.l.b16 %v6351
    %v6623 = vunpack.c.l.b16 %v6352
    %v6624 = vunpack.c.h.b16 %v6352
    %v6625 = vunpack.c.l.b16 %v6353
    %v6626 = vunpack.c.l.b16 %v6354
    %v6627 = vunpack.c.h.b16 %v6354
    %v6628 = vunpack.c.l.b16 %v6355
    %v6629 = vunpack.c.l.b16 %v6356
    %v6630 = vunpack.c.h.b16 %v6356
    %v6631 = vunpack.c.l.b16 %v6357
    %v6632 = vunpack.c.l.b16 %v6358
    %v6633 = vunpack.c.h.b16 %v6358
    %v6634 = vunpack.c.l.b16 %v6359
    %v6635 = vunpack.c.l.b16 %v6360
    %v6636 = vunpack.c.h.b16 %v6360
    %v6637 = vunpack.c.l.b16 %v6361
    %v6638 = vunpack.c.l.b16 %v6362
    %v6639 = vunpack.c.h.b16 %v6362
    %v6640 = vunpack.c.l.b16 %v6363
    %v6641 = vunpack.c.l.b16 %v6364
    %v6642 = vunpack.c.h.b16 %v6364
    %v6643 = vunpack.c.l.b16 %v6365
    %v6644 = vunpack.c.l.b16 %v6366
    %v6645 = vunpack.c.h.b16 %v6366
    %v6646 = vunpack.c.l.b16 %v6367
    %v6647 = vunpack.c.l.b16 %v6368
    %v6648 = vunpack.c.h.b16 %v6368
    %v6649 = vunpack.c.l.b16 %v6369
    %v6650 = vunpack.c.l.b16 %v6370
    %v6651 = vunpack.c.h.b16 %v6370
    %v6652 = vunpack.c.l.b16 %v6371
    %v6653 = vunpack.c.l.b16 %v6372
    %v6654 = vunpack.c.h.b16 %v6372
    %v6655 = vunpack.c.l.b16 %v6373
    %v6656 = vunpack.c.l.b16 %v6374
    %v6657 = vunpack.c.h.b16 %v6374
    %v6658 = vunpack.c.l.b16 %v6375
    %v6659 = vunpack.c.l.b16 %v6376
    %v6660 = vunpack.c.h.b16 %v6376
    %v6661 = vunpack.c.l.b16 %v6377
    %v6662 = vunpack.c.l.b16 %v6378
    %v6663 = vunpack.c.h.b16 %v6378
    %v6664 = vunpack.c.l.b16 %v6379
    %v6665 = vunpack.c.l.b16 %v6380
    %v6666 = vunpack.c.h.b16 %v6380
    %v6667 = vunpack.c.l.b16 %v6381
    %v6668 = vunpack.c.l.b16 %v6382
    %v6669 = vunpack.c.h.b16 %v6382
    %v6670 = vunpack.c.l.b16 %v6383
    %v6671 = vunpack.c.l.b16 %v6384
    %v6672 = vunpack.c.h.b16 %v6384
    %v6673 = vunpack.c.l.b16 %v6385
    %v6674 = vunpack.c.l.b16 %v6386
    %v6675 = vunpack.c.h.b16 %v6386
    %v6676 = vunpack.c.l.b16 %v6387
    %v6677 = vunpack.c.l.b16 %v6388
    %v6678 = vunpack.c.h.b16 %v6388
    %v6679 = vunpack.c.l.b16 %v6389
    %v6680 = vunpack.c.l.b16 %v6390
    %v6681 = vunpack.c.h.b16 %v6390
    %v6682 = vunpack.c.l.b16 %v6391
    %v6683 = vunpack.c.l.b16 %v6392
    %v6684 = vunpack.c.h.b16 %v6392
    %v6685 = vunpack.c.l.b16 %v6393
    %v6686 = vunpack.c.l.b16 %v6394
    %v6687 = vunpack.c.h.b16 %v6394
    %v6688 = vunpack.c.l.b16 %v6395
    %v6689 = vunpack.c.l.b16 %v6396
    %v6690 = vunpack.c.h.b16 %v6396
    %v6691 = vunpack.c.l.b16 %v6397
    %v6692 = vunpack.c.l.b16 %v6398
    %v6693 = vunpack.c.h.b16 %v6398
    %v6694 = vunpack.c.l.b16 %v6399
    %v6695 = vunpack.c.l.b16 %v6400
    %v6696 = vunpack.c.h.b16 %v6400
    %v6697 = vunpack.c.l.b16 %v6401
    %v6698 = vunpack.c.l.b16 %v6402
    %v6699 = vunpack.c.h.b16 %v6402
    %v6700 = vunpack.c.l.b16 %v6403
    %v6701 = vunpack.c.l.b16 %v6404
    %v6702 = vunpack.c.h.b16 %v6404
    %v6703 = vunpack.c.l.b16 %v6405
    %v6704 = vunpack.c.l.b16 %v6406
    %v6705 = vunpack.c.h.b16 %v6406
    %v6706 = vunpack.c.l.b16 %v6407
    %v6707 = vunpack.c.l.b16 %v6408
    %v6708 = vunpack.c.h.b16 %v6408
    %v6709 = vunpack.c.l.b16 %v6409
    %v6710 = vunpack.c.l.b16 %v6410
    %v6711 = vunpack.c.h.b16 %v6410
    %v6712 = vunpack.c.l.b16 %v6411
    %v6713 = vunpack.c.l.b16 %v6412
    %v6714 = vunpack.c.h.b16 %v6412
    %v6715 = vunpack.c.l.b16 %v6413
    %v6716 = vunpack.c.l.b16 %v6414
    %v6717 = vunpack.c.h.b16 %v6414
    %v6718 = vunpack.c.l.b16 %v6415
    %v6719 = vunpack.c.l.b16 %v6416
    %v6720 = vunpack.c.h.b16 %v6416
    %v6721 = vunpack.c.l.b16 %v6417
    %v6722 = vunpack.c.l.b16 %v6418
    %v6723 = vunpack.c.h.b16 %v6418
    %v6724 = vunpack.c.l.b16 %v6419
    %v6725 = vunpack.c.l.b16 %v6420
    %v6726 = vunpack.c.h.b16 %v6420
    %v6727 = vunpack.c.l.b16 %v6421
    %v6728 = vunpack.c.l.b16 %v6422
    %v6729 = vunpack.c.h.b16 %v6422
    %v6730 = vunpack.c.l.b16 %v6423
    %v6731 = vunpack.c.l.b16 %v6424
    %v6732 = vunpack.c.h.b16 %v6424
    %v6733 = vunpack.c.l.b16 %v6425
    %v6734 = vunpack.c.l.b16 %v6426
    %v6735 = vunpack.c.h.b16 %v6426
    %v6736 = vunpack.c.l.b16 %v6427
    %v6737 = vunpack.c.l.b16 %v6428
    %v6738 = vunpack.c.h.b16 %v6428
    %v6739 = vunpack.c.l.b16 %v6429
    %v6740 = vunpack.c.l.b16 %v6430
    %v6741 = vunpack.c.h.b16 %v6430
    %v6742 = vunpack.c.l.b16 %v6431
    %v6743 = vunpack.c.l.b16 %v6432
    %v6744 = vunpack.c.h.b16 %v6432
    %v6745 = vunpack.c.l.b16 %v6433
    %v6746 = vunpack.c.l.b16 %v6434
    %v6747 = vunpack.c.h.b16 %v6434
    %v6748 = vunpack.c.l.b16 %v6435
    %v6749 = vunpack.c.l.b16 %v6436
    %v6750 = vunpack.c.h.b16 %v6436
    %v6751 = vunpack.c.l.b16 %v6437
    %v6752 = vunpack.c.l.b16 %v6438
    %v6753 = vunpack.c.h.b16 %v6438
    %v6754 = vunpack.c.l.b16 %v6439
    %v6755 = vunpack.c.l.b16 %v6440
    %v6756 = vunpack.c.h.b16 %v6440
    %v6757 = vunpack.c.l.b16 %v6441
    %v6758 = vunpack.c.l.b16 %v6442
    %v6759 = vunpack.c.h.b16 %v6442
    %v6760 = vunpack.c.l.b16 %v6443
    %v6761 = vunpack.c.l.b16 %v6444
    %v6762 = vunpack.c.h.b16 %v6444
    %v6763 = vunpack.c.l.b16 %v6445
    %v6764 = vunpack.c.l.b16 %v6446
    %v6765 = vunpack.c.h.b16 %v6446
    %v6766 = vunpack.c.l.b16 %v6447
    %v6767 = vunpack.c.l.b16 %v6448
    %v6768 = vunpack.c.h.b16 %v6448
    %v6769 = vunpack.c.l.b16 %v6449
    %v6770 = vpack.c.b16 %v6581, %v6578
    %v6771 = vpack.c.b16 %v6582, %v6579
    %v6772 = vpack.c.b16 %v6583, %v6580
    %v6773 = vpack.c.b16 %v6587, %v6584
    %v6774 = vpack.c.b16 %v6588, %v6585
    %v6775 = vpack.c.b16 %v6589, %v6586
    %v6776 = vpack.c.b16 %v6593, %v6590
    %v6777 = vpack.c.b16 %v6594, %v6591
    %v6778 = vpack.c.b16 %v6595, %v6592
    %v6779 = vpack.c.b16 %v6599, %v6596
    %v6780 = vpack.c.b16 %v6600, %v6597
    %v6781 = vpack.c.b16 %v6601, %v6598
    %v6782 = vpack.c.b16 %v6605, %v6602
    %v6783 = vpack.c.b16 %v6606, %v6603
    %v6784 = vpack.c.b16 %v6607, %v6604
    %v6785 = vpack.c.b16 %v6611, %v6608
    %v6786 = vpack.c.b16 %v6612, %v6609
    %v6787 = vpack.c.b16 %v6613, %v6610
    %v6788 = vpack.c.b16 %v6617, %v6614
    %v6789 = vpack.c.b16 %v6618, %v6615
    %v6790 = vpack.c.b16 %v6619, %v6616
    %v6791 = vpack.c.b16 %v6623, %v6620
    %v6792 = vpack.c.b16 %v6624, %v6621
    %v6793 = vpack.c.b16 %v6625, %v6622
    %v6794 = vpack.c.b16 %v6629, %v6626
    %v6795 = vpack.c.b16 %v6630, %v6627
    %v6796 = vpack.c.b16 %v6631, %v6628
    %v6797 = vpack.c.b16 %v6635, %v6632
    %v6798 = vpack.c.b16 %v6636, %v6633
    %v6799 = vpack.c.b16 %v6637, %v6634
    %v6800 = vpack.c.b16 %v6641, %v6638
    %v6801 = vpack.c.b16 %v6642, %v6639
    %v6802 = vpack.c.b16 %v6643, %v6640
    %v6803 = vpack.c.b16 %v6647, %v6644
    %v6804 = vpack.c.b16 %v6648, %v6645
    %v6805 = vpack.c.b16 %v6649, %v6646
    %v6806 = vpack.c.b16 %v6653, %v6650
    %v6807 = vpack.c.b16 %v6654, %v6651
    %v6808 = vpack.c.b16 %v6655, %v6652
    %v6809 = vpack.c.b16 %v6659, %v6656
    %v6810 = vpack.c.b16 %v6660, %v6657
    %v6811 = vpack.c.b16 %v6661, %v6658
    %v6812 = vpack.c.b16 %v6665, %v6662
    %v6813 = vpack.c.b16 %v6666, %v6663
    %v6814 = vpack.c.b16 %v6667, %v6664
    %v6815 = vpack.c.b16 %v6671, %v6668
    %v6816 = vpack.c.b16 %v6672, %v6669
    %v6817 = vpack.c.b16 %v6673, %v6670
    %v6818 = vpack.c.b16 %v6677, %v6674
    %v6819 = vpack.c.b16 %v6678, %v6675
    %v6820 = vpack.c.b16 %v6679, %v6676
    %v6821 = vpack.c.b16 %v6683, %v6680
    %v6822 = vpack.c.b16 %v6684, %v6681
    %v6823 = vpack.c.b16 %v6685, %v6682
    %v6824 = vpack.c.b16 %v6689, %v6686
    %v6825 = vpack.c.b16 %v6690, %v6687
    %v6826 = vpack.c.b16 %v6691, %v6688
    %v6827 = vpack.c.b16 %v6695, %v6692
    %v6828 = vpack.c.b16 %v6696, %v6693
    %v6829 = vpack.c.b16 %v6697, %v6694
    %v6830 = vpack.c.b16 %v6701, %v6698
    %v6831 = vpack.c.b16 %v6702, %v6699
    %v6832 = vpack.c.b16 %v6703, %v6700
    %v6833 = vpack.c.b16 %v6707, %v6704
    %v6834 = vpack.c.b16 %v6708, %v6705
    %v6835 = vpack.c.b16 %v6709, %v6706
    %v6836 = vpack.c.b16 %v6713, %v6710
    %v6837 = vpack.c.b16 %v6714, %v6711
    %v6838 = vpack.c.b16 %v6715, %v6712
    %v6839 = vpack.c.b16 %v6719, %v6716
    %v6840 = vpack.c.b16 %v6720, %v6717
    %v6841 = vpack.c.b16 %v6721, %v6718
    %v6842 = vpack.c.b16 %v6725, %v6722
    %v6843 = vpack.c.b16 %v6726, %v6723
    %v6844 = vpack.c.b16 %v6727, %v6724
    %v6845 = vpack.c.b16 %v6731, %v6728
    %v6846 = vpack.c.b16 %v6732, %v6729
    %v6847 = vpack.c.b16 %v6733, %v6730
    %v6848 = vpack.c.b16 %v6737, %v6734
    %v6849 = vpack.c.b16 %v6738, %v6735
    %v6850 = vpack.c.b16 %v6739, %v6736
    %v6851 = vpack.c.b16 %v6743, %v6740
    %v6852 = vpack.c.b16 %v6744, %v6741
    %v6853 = vpack.c.b16 %v6745, %v6742
    %v6854 = vpack.c.b16 %v6749, %v6746
    %v6855 = vpack.c.b16 %v6750, %v6747
    %v6856 = vpack.c.b16 %v6751, %v6748
    %v6857 = vpack.c.b16 %v6755, %v6752
    %v6858 = vpack.c.b16 %v6756, %v6753
    %v6859 = vpack.c.b16 %v6757, %v6754
    %v6860 = vpack.c.b16 %v6761, %v6758
    %v6861 = vpack.c.b16 %v6762, %v6759
    %v6862 = vpack.c.b16 %v6763, %v6760
    %v6863 = vpack.c.b16 %v6767, %v6764
    %v6864 = vpack.c.b16 %v6768, %v6765
    %v6865 = vpack.c.b16 %v6769, %v6766
    %6962 = vmatprep.subr.bf16.mxu0 %v6792
    %6963 = vmatpush1.bf16.msra.mxu0 %v6791
    %6964 = vmatprep.subr.bf16.mxu0 %v6789
    %6965 = vmatpush1.bf16.msra.mxu0 %v6788
    %6966 = vmatprep.subr.bf16.mxu0 %v6786
    %6967 = vmatpush1.bf16.msra.mxu0 %v6785
    %6968 = vmatprep.subr.bf16.mxu0 %v6783
    %6969 = vmatpush1.bf16.msra.mxu0 %v6782
    %6970 = vmatprep.subr.bf16.mxu0 %v6780
    %6971 = vmatpush1.bf16.msra.mxu0 %v6779
    %6972 = vmatprep.subr.bf16.mxu0 %v6777
    %6973 = vmatpush1.bf16.msra.mxu0 %v6776
    %6974 = vmatprep.subr.bf16.mxu0 %v6774
    %6975 = vmatpush1.bf16.msra.mxu0 %v6773
    %6976 = vmatprep.subr.bf16.mxu0 %v6771
    %6977 = vmatpush1.bf16.msra.mxu0 %v6770
    %6978 = vmatprep.subr.bf16.mxu0 %v6816
    %6979 = vmatpush2.bf16.msra.mxu0 %v6815
    %6980 = vmatprep.subr.bf16.mxu0 %v6813
    %6981 = vmatpush2.bf16.msra.mxu0 %v6812
    %6982 = vmatprep.subr.bf16.mxu0 %v6810
    %6983 = vmatpush2.bf16.msra.mxu0 %v6809
    %6984 = vmatprep.subr.bf16.mxu0 %v6807
    %6985 = vmatpush2.bf16.msra.mxu0 %v6806
    %6986 = vmatprep.subr.bf16.mxu0 %v6804
    %6987 = vmatpush2.bf16.msra.mxu0 %v6803
    %6988 = vmatprep.subr.bf16.mxu0 %v6801
    %6989 = vmatpush2.bf16.msra.mxu0 %v6800
    %6990 = vmatprep.subr.bf16.mxu0 %v6798
    %6991 = vmatpush2.bf16.msra.mxu0 %v6797
    %6992 = vmatprep.subr.bf16.mxu0 %v6795
    %6993 = vmatpush2.bf16.msra.mxu0 %v6794
    %6994 = vmatprep.mubr.bf16.mxu0 %v6315
    %6995 = vmatmul.mubr.bf16.gmra.mxu0 %v6314
    %v6996 = vpop.f32.mrf.mxu0
    %v6997 = vadd.f32 0.0, %v6996
    %v6998 = vpop.f32.mrf.mxu0
    %v6999 = vadd.f32 0.0, %v6998
    %v7000 = vpop.f32.mrf.mxu0
    %v7001 = vadd.f32 0.0, %v7000
    %v7002 = vpop.f32.mrf.mxu0
    %v7003 = vadd.f32 0.0, %v7002
    %7004 = vmatprep.mubr.bf16.mxu0 %v6319
    %7005 = vmatmul.mubr.bf16.gmra.mxu0 %v6318
    %v7006 = vpop.f32.mrf.mxu0
    %v7007 = vadd.f32 0.0, %v7006
    %v7008 = vpop.f32.mrf.mxu0
    %v7009 = vadd.f32 0.0, %v7008
    %v7010 = vpop.f32.mrf.mxu0
    %v7011 = vadd.f32 0.0, %v7010
    %v7012 = vpop.f32.mrf.mxu0
    %v7013 = vadd.f32 0.0, %v7012
    %7014 = vdwg.mxu0
    %7015 = vmatprep.subr.bf16.mxu0 %v6840
    %7016 = vmatpush1.bf16.msra.mxu0 %v6839
    %7017 = vmatprep.subr.bf16.mxu0 %v6837
    %7018 = vmatpush1.bf16.msra.mxu0 %v6836
    %7019 = vmatprep.subr.bf16.mxu0 %v6834
    %7020 = vmatpush1.bf16.msra.mxu0 %v6833
    %7021 = vmatprep.subr.bf16.mxu0 %v6831
    %7022 = vmatpush1.bf16.msra.mxu0 %v6830
    %7023 = vmatprep.subr.bf16.mxu0 %v6828
    %7024 = vmatpush1.bf16.msra.mxu0 %v6827
    %7025 = vmatprep.subr.bf16.mxu0 %v6825
    %7026 = vmatpush1.bf16.msra.mxu0 %v6824
    %7027 = vmatprep.subr.bf16.mxu0 %v6822
    %7028 = vmatpush1.bf16.msra.mxu0 %v6821
    %7029 = vmatprep.subr.bf16.mxu0 %v6819
    %7030 = vmatpush1.bf16.msra.mxu0 %v6818
    %7031 = vmatprep.subr.bf16.mxu0 %v6864
    %7032 = vmatpush2.bf16.msra.mxu0 %v6863
    %7033 = vmatprep.subr.bf16.mxu0 %v6861
    %7034 = vmatpush2.bf16.msra.mxu0 %v6860
    %7035 = vmatprep.subr.bf16.mxu0 %v6858
    %7036 = vmatpush2.bf16.msra.mxu0 %v6857
    %7037 = vmatprep.subr.bf16.mxu0 %v6855
    %7038 = vmatpush2.bf16.msra.mxu0 %v6854
    %7039 = vmatprep.subr.bf16.mxu0 %v6852
    %7040 = vmatpush2.bf16.msra.mxu0 %v6851
    %7041 = vmatprep.subr.bf16.mxu0 %v6849
    %7042 = vmatpush2.bf16.msra.mxu0 %v6848
    %7043 = vmatprep.subr.bf16.mxu0 %v6846
    %7044 = vmatpush2.bf16.msra.mxu0 %v6845
    %7045 = vmatprep.subr.bf16.mxu0 %v6843
    %7046 = vmatpush2.bf16.msra.mxu0 %v6842
    %7047 = vmatprep.mubr.bf16.mxu0 %v6317
    %7048 = vmatmul.mubr.bf16.gmra.mxu0 %v6316
    %v7049 = vpop.f32.mrf.mxu0
    %v7050 = vadd.f32 %v6997, %v7049
    %v7051 = vpop.f32.mrf.mxu0
    %v7052 = vadd.f32 %v6999, %v7051
    %v7053 = vpop.f32.mrf.mxu0
    %v7054 = vadd.f32 %v7001, %v7053
    %v7055 = vpop.f32.mrf.mxu0
    %v7056 = vadd.f32 %v7003, %v7055
    %7057 = vmatprep.mubr.bf16.mxu0 %v6321
    %7058 = vmatmul.mubr.bf16.gmra.mxu0 %v6320
    %v7059 = vpop.f32.mrf.mxu0
    %v7060 = vadd.f32 %v7007, %v7059
    %v7061 = vpop.f32.mrf.mxu0
    %v7062 = vadd.f32 %v7009, %v7061
    %v7063 = vpop.f32.mrf.mxu0
    %v7064 = vadd.f32 %v7011, %v7063
    %v7065 = vpop.f32.mrf.mxu0
    %v7066 = vadd.f32 %v7013, %v7065
    %7067 = vdwg.mxu0
    %7068 = vmatprep.subr.bf16.mxu0 0
    %7069 = vmatpush1.bf16.msra.mxu0 %v6793
    %7070 = vmatprep.subr.bf16.mxu0 0
    %7071 = vmatpush1.bf16.msra.mxu0 %v6790
    %7072 = vmatprep.subr.bf16.mxu0 0
    %7073 = vmatpush1.bf16.msra.mxu0 %v6787
    %7074 = vmatprep.subr.bf16.mxu0 0
    %7075 = vmatpush1.bf16.msra.mxu0 %v6784
    %7076 = vmatprep.subr.bf16.mxu0 0
    %7077 = vmatpush1.bf16.msra.mxu0 %v6781
    %7078 = vmatprep.subr.bf16.mxu0 0
    %7079 = vmatpush1.bf16.msra.mxu0 %v6778
    %7080 = vmatprep.subr.bf16.mxu0 0
    %7081 = vmatpush1.bf16.msra.mxu0 %v6775
    %7082 = vmatprep.subr.bf16.mxu0 0
    %7083 = vmatpush1.bf16.msra.mxu0 %v6772
    %7084 = vmatprep.subr.bf16.mxu0 0
    %7085 = vmatpush2.bf16.msra.mxu0 %v6817
    %7086 = vmatprep.subr.bf16.mxu0 0
    %7087 = vmatpush2.bf16.msra.mxu0 %v6814
    %7088 = vmatprep.subr.bf16.mxu0 0
    %7089 = vmatpush2.bf16.msra.mxu0 %v6811
    %7090 = vmatprep.subr.bf16.mxu0 0
    %7091 = vmatpush2.bf16.msra.mxu0 %v6808
    %7092 = vmatprep.subr.bf16.mxu0 0
    %7093 = vmatpush2.bf16.msra.mxu0 %v6805
    %7094 = vmatprep.subr.bf16.mxu0 0
    %7095 = vmatpush2.bf16.msra.mxu0 %v6802
    %7096 = vmatprep.subr.bf16.mxu0 0
    %7097 = vmatpush2.bf16.msra.mxu0 %v6799
    %7098 = vmatprep.subr.bf16.mxu0 0
    %7099 = vmatpush2.bf16.msra.mxu0 %v6796
    %7100 = vmatprep.mubr.bf16.mxu0 %v6315
    %7101 = vmatmul.mubr.bf16.gmra.mxu0 %v6314
    %v7102 = vpop.f32.mrf.mxu0
    %v7103 = vadd.f32 0.0, %v7102
    %v7104 = vpop.f32.mrf.mxu0
    %v7105 = vpop.f32.mrf.mxu0
    %v7106 = vadd.f32 0.0, %v7105
    %v7107 = vpop.f32.mrf.mxu0
    %7108 = vmatprep.mubr.bf16.mxu0 %v6319
    %7109 = vmatmul.mubr.bf16.gmra.mxu0 %v6318
    %v7110 = vpop.f32.mrf.mxu0
    %v7111 = vadd.f32 0.0, %v7110
    %v7112 = vpop.f32.mrf.mxu0
    %v7113 = vpop.f32.mrf.mxu0
    %v7114 = vadd.f32 0.0, %v7113
    %v7115 = vpop.f32.mrf.mxu0
    %7116 = vdwg.mxu0
    %7117 = vmatprep.subr.bf16.mxu0 0
    %7118 = vmatpush1.bf16.msra.mxu0 %v6841
    %7119 = vmatprep.subr.bf16.mxu0 0
    %7120 = vmatpush1.bf16.msra.mxu0 %v6838
    %7121 = vmatprep.subr.bf16.mxu0 0
    %7122 = vmatpush1.bf16.msra.mxu0 %v6835
    %7123 = vmatprep.subr.bf16.mxu0 0
    %7124 = vmatpush1.bf16.msra.mxu0 %v6832
    %7125 = vmatprep.subr.bf16.mxu0 0
    %7126 = vmatpush1.bf16.msra.mxu0 %v6829
    %7127 = vmatprep.subr.bf16.mxu0 0
    %7128 = vmatpush1.bf16.msra.mxu0 %v6826
    %7129 = vmatprep.subr.bf16.mxu0 0
    %7130 = vmatpush1.bf16.msra.mxu0 %v6823
    %7131 = vmatprep.subr.bf16.mxu0 0
    %7132 = vmatpush1.bf16.msra.mxu0 %v6820
    %7133 = vmatprep.subr.bf16.mxu0 0
    %7134 = vmatpush2.bf16.msra.mxu0 %v6865
    %7135 = vmatprep.subr.bf16.mxu0 0
    %7136 = vmatpush2.bf16.msra.mxu0 %v6862
    %7137 = vmatprep.subr.bf16.mxu0 0
    %7138 = vmatpush2.bf16.msra.mxu0 %v6859
    %7139 = vmatprep.subr.bf16.mxu0 0
    %7140 = vmatpush2.bf16.msra.mxu0 %v6856
    %7141 = vmatprep.subr.bf16.mxu0 0
    %7142 = vmatpush2.bf16.msra.mxu0 %v6853
    %7143 = vmatprep.subr.bf16.mxu0 0
    %7144 = vmatpush2.bf16.msra.mxu0 %v6850
    %7145 = vmatprep.subr.bf16.mxu0 0
    %7146 = vmatpush2.bf16.msra.mxu0 %v6847
    %7147 = vmatprep.subr.bf16.mxu0 0
    %7148 = vmatpush2.bf16.msra.mxu0 %v6844
    %7149 = vmatprep.mubr.bf16.mxu0 %v6317
    %7150 = vmatmul.mubr.bf16.gmra.mxu0 %v6316
    %v7151 = vpop.f32.mrf.mxu0
    %v7152 = vadd.f32 %v7103, %v7151
    %v7153 = vpop.f32.mrf.mxu0
    %v7154 = vpop.f32.mrf.mxu0
    %v7155 = vadd.f32 %v7106, %v7154
    %v7156 = vpop.f32.mrf.mxu0
    %7157 = vmatprep.mubr.bf16.mxu0 %v6321
    %7158 = vmatmul.mubr.bf16.gmra.mxu0 %v6320
    %v7159 = vpop.f32.mrf.mxu0
    %v7160 = vadd.f32 %v7111, %v7159
    %v7161 = vpop.f32.mrf.mxu0
    %v7162 = vpop.f32.mrf.mxu0
    %v7163 = vadd.f32 %v7114, %v7162
    %v7164 = vpop.f32.mrf.mxu0
    %7165 = vdwg.mxu0
    %7166 = vst [vmem:[#allocation6] sm:$0xff] %v7050
    %7167 = vst [vmem:[#allocation6 + $0x8] sm:$0xff] %v7052
    %7168 = vst [vmem:[#allocation6 + $0x10] sm:$0xff] %v7152
    %7169 = vst [vmem:[#allocation6 + $0x18] sm:$0xff] %v7054
    %7170 = vst [vmem:[#allocation6 + $0x20] sm:$0xff] %v7056
    %7171 = vst [vmem:[#allocation6 + $0x28] sm:$0xff] %v7155
    %7172 = vst [vmem:[#allocation6 + $0x30] sm:$0xff] %v7060
    %7173 = vst [vmem:[#allocation6 + $0x38] sm:$0xff] %v7062
    %7174 = vst [vmem:[#allocation6 + $0x40] sm:$0xff] %v7160
    %7175 = vst [vmem:[#allocation6 + $0x48] sm:$0x3f] %v7064
    %7176 = vst [vmem:[#allocation6 + $0x50] sm:$0x3f] %v7066
    %7177 = vst [vmem:[#allocation6 + $0x58] sm:$0x3f] %v7163
    %v7178 = vld [vmem:[#allocation6 + $0x1] ss:$0 sm:$0xff]
    %v7179 = vld [vmem:[#allocation6 + $0x10] ss:$0 sm:$0xff]
    %v7180 = vadd.f32 %v7178, %v7179
    %v7181 = vtanh.pop %v7180
    %7182 = vst [vmem:[%s11] sm:$0x1] %v7181
    %v7183 = vld [vmem:[#allocation6 + $0x9] ss:$0 sm:$0xff]
    %v7184 = vtanh.pop %v7183
    %7185 = vst [vmem:[%s11 + $0x1] sm:$0x1] %v7184
    %v7186 = vld [vmem:[#allocation6 + $0x2] ss:$0 sm:$0xff]
    %v7187 = vld [vmem:[#allocation6 + $0x11] ss:$0 sm:$0xff]
    %v7188 = vadd.f32 %v7186, %v7187
    %v7189 = vtanh.pop %v7188
    %7190 = vst [vmem:[%s11 + $0x2] sm:$0x1] %v7189
    %v7191 = vld [vmem:[#allocation6 + $0xa] ss:$0 sm:$0xff]
    %v7192 = vtanh.pop %v7191
    %7193 = vst [vmem:[%s11 + $0x3] sm:$0x1] %v7192
    %v7194 = vld [vmem:[#allocation6 + $0x3] ss:$0 sm:$0xff]
    %v7195 = vld [vmem:[#allocation6 + $0x12] ss:$0 sm:$0xff]
    %v7196 = vadd.f32 %v7194, %v7195
    %v7197 = vtanh.pop %v7196
    %7198 = vst [vmem:[%s11 + $0x4] sm:$0x1] %v7197
    %v7199 = vld [vmem:[#allocation6 + $0xb] ss:$0 sm:$0xff]
    %v7200 = vtanh.pop %v7199
    %7201 = vst [vmem:[%s11 + $0x5] sm:$0x1] %v7200
    %v7202 = vld [vmem:[#allocation6 + $0x4] ss:$0 sm:$0xff]
    %v7203 = vld [vmem:[#allocation6 + $0x13] ss:$0 sm:$0xff]
    %v7204 = vadd.f32 %v7202, %v7203
    %v7205 = vtanh.pop %v7204
    %7206 = vst [vmem:[%s11 + $0x6] sm:$0x1] %v7205
    %v7207 = vld [vmem:[#allocation6 + $0xc] ss:$0 sm:$0xff]
    %v7208 = vtanh.pop %v7207
    %7209 = vst [vmem:[%s11 + $0x7] sm:$0x1] %v7208
    %v7210 = vld [vmem:[#allocation6 + $0x5] ss:$0 sm:$0xff]
    %v7211 = vld [vmem:[#allocation6 + $0x14] ss:$0 sm:$0xff]
    %v7212 = vadd.f32 %v7210, %v7211
    %v7213 = vtanh.pop %v7212
    %7214 = vst [vmem:[%s11 + $0x8] sm:$0x1] %v7213
    %v7215 = vld [vmem:[#allocation6 + $0xd] ss:$0 sm:$0xff]
    %v7216 = vtanh.pop %v7215
    %7217 = vst [vmem:[%s11 + $0x9] sm:$0x1] %v7216
    %v7218 = vld [vmem:[#allocation6 + $0x6] ss:$0 sm:$0xff]
    %v7219 = vld [vmem:[#allocation6 + $0x15] ss:$0 sm:$0xff]
    %v7220 = vadd.f32 %v7218, %v7219
    %v7221 = vtanh.pop %v7220
    %7222 = vst [vmem:[%s11 + $0xa] sm:$0x1] %v7221
    %v7223 = vld [vmem:[#allocation6 + $0xe] ss:$0 sm:$0xff]
    %v7224 = vtanh.pop %v7223
    %7225 = vst [vmem:[%s11 + $0xb] sm:$0x1] %v7224
    %v7226 = vld [vmem:[#allocation6 + $0x7] ss:$0 sm:$0xff]
    %v7227 = vld [vmem:[#allocation6 + $0x16] ss:$0 sm:$0xff]
    %v7228 = vadd.f32 %v7226, %v7227
    %v7229 = vtanh.pop %v7228
    %7230 = vst [vmem:[%s11 + $0xc] sm:$0x1] %v7229
    %v7231 = vld [vmem:[#allocation6 + $0xf] ss:$0 sm:$0xff]
    %v7232 = vtanh.pop %v7231
    %7233 = vst [vmem:[%s11 + $0xd] sm:$0x1] %v7232
    %v7234 = vld [vmem:[#allocation6 + $0x18] ss:$0 sm:$0xff]
    %v7235 = vld [vmem:[#allocation6 + $0x17] ss:$0 sm:$0xff]
    %v7236 = vadd.f32 %v7234, %v7235
    %v7237 = vtanh.pop %v7236
    %7238 = vst [vmem:[%s11 + $0xe] sm:$0x1] %v7237
    %v7239 = vld [vmem:[#allocation6 + $0x20] ss:$0 sm:$0xff]
    %v7240 = vtanh.pop %v7239
    %7241 = vst [vmem:[%s11 + $0xf] sm:$0x1] %v7240
    %v7242 = vld [vmem:[#allocation6 + $0x19] ss:$0 sm:$0xff]
    %v7243 = vld [vmem:[#allocation6 + $0x28] ss:$0 sm:$0xff]
    %v7244 = vadd.f32 %v7242, %v7243
    %v7245 = vtanh.pop %v7244
    %7246 = vst [vmem:[%s11 + $0x10] sm:$0x1] %v7245
    %v7247 = vld [vmem:[#allocation6 + $0x21] ss:$0 sm:$0xff]
    %v7248 = vtanh.pop %v7247
    %7249 = vst [vmem:[%s11 + $0x11] sm:$0x1] %v7248
    %v7250 = vld [vmem:[#allocation6 + $0x1a] ss:$0 sm:$0xff]
    %v7251 = vld [vmem:[#allocation6 + $0x29] ss:$0 sm:$0xff]
    %v7252 = vadd.f32 %v7250, %v7251
    %v7253 = vtanh.pop %v7252
    %7254 = vst [vmem:[%s11 + $0x12] sm:$0x1] %v7253
    %v7255 = vld [vmem:[#allocation6 + $0x22] ss:$0 sm:$0xff]
    %v7256 = vtanh.pop %v7255
    %7257 = vst [vmem:[%s11 + $0x13] sm:$0x1] %v7256
    %v7258 = vld [vmem:[#allocation6 + $0x1b] ss:$0 sm:$0xff]
    %v7259 = vld [vmem:[#allocation6 + $0x2a] ss:$0 sm:$0xff]
    %v7260 = vadd.f32 %v7258, %v7259
    %v7261 = vtanh.pop %v7260
    %7262 = vst [vmem:[%s11 + $0x14] sm:$0x1] %v7261
    %v7263 = vld [vmem:[#allocation6 + $0x23] ss:$0 sm:$0xff]
    %v7264 = vtanh.pop %v7263
    %7265 = vst [vmem:[%s11 + $0x15] sm:$0x1] %v7264
    %v7266 = vld [vmem:[#allocation6 + $0x1c] ss:$0 sm:$0xff]
    %v7267 = vld [vmem:[#allocation6 + $0x2b] ss:$0 sm:$0xff]
    %v7268 = vadd.f32 %v7266, %v7267
    %v7269 = vtanh.pop %v7268
    %7270 = vst [vmem:[%s11 + $0x16] sm:$0x1] %v7269
    %v7271 = vld [vmem:[#allocation6 + $0x24] ss:$0 sm:$0xff]
    %v7272 = vtanh.pop %v7271
    %7273 = vst [vmem:[%s11 + $0x17] sm:$0x1] %v7272
    %v7274 = vld [vmem:[#allocation6 + $0x1d] ss:$0 sm:$0xff]
    %v7275 = vld [vmem:[#allocation6 + $0x2c] ss:$0 sm:$0xff]
    %v7276 = vadd.f32 %v7274, %v7275
    %v7277 = vtanh.pop %v7276
    %7278 = vst [vmem:[%s11 + $0x18] sm:$0x1] %v7277
    %v7279 = vld [vmem:[#allocation6 + $0x25] ss:$0 sm:$0xff]
    %v7280 = vtanh.pop %v7279
    %7281 = vst [vmem:[%s11 + $0x19] sm:$0x1] %v7280
    %v7282 = vld [vmem:[#allocation6 + $0x1e] ss:$0 sm:$0xff]
    %v7283 = vld [vmem:[#allocation6 + $0x2d] ss:$0 sm:$0xff]
    %v7284 = vadd.f32 %v7282, %v7283
    %v7285 = vtanh.pop %v7284
    %7286 = vst [vmem:[%s11 + $0x1a] sm:$0x1] %v7285
    %v7287 = vld [vmem:[#allocation6 + $0x30] ss:$0 sm:$0xff]
    %v7288 = vld [vmem:[#allocation6 + $0x2f] ss:$0 sm:$0xff]
    %v7289 = vadd.f32 %v7287, %v7288
    %v7290 = vtanh.pop %v7289
    %7291 = vst [vmem:[%s11 + $0x1b] sm:$0x1] %v7290
    %v7292 = vld [vmem:[#allocation6 + $0x38] ss:$0 sm:$0xff]
    %v7293 = vtanh.pop %v7292
    %7294 = vst [vmem:[%s11 + $0x1c] sm:$0x1] %v7293
    %v7295 = vld [vmem:[#allocation6 + $0x31] ss:$0 sm:$0xff]
    %v7296 = vld [vmem:[#allocation6 + $0x40] ss:$0 sm:$0xff]
    %v7297 = vadd.f32 %v7295, %v7296
    %v7298 = vtanh.pop %v7297
    %7299 = vst [vmem:[%s11 + $0x1d] sm:$0x1] %v7298
    %v7300 = vld [vmem:[#allocation6 + $0x39] ss:$0 sm:$0xff]
    %v7301 = vtanh.pop %v7300
    %7302 = vst [vmem:[%s11 + $0x1e] sm:$0x1] %v7301
    %v7303 = vld [vmem:[#allocation6 + $0x32] ss:$0 sm:$0xff]
    %v7304 = vld [vmem:[#allocation6 + $0x41] ss:$0 sm:$0xff]
    %v7305 = vadd.f32 %v7303, %v7304
    %v7306 = vtanh.pop %v7305
    %7307 = vst [vmem:[%s11 + $0x1f] sm:$0x1] %v7306
    %v7308 = vld [vmem:[#allocation6 + $0x3a] ss:$0 sm:$0xff]
    %v7309 = vtanh.pop %v7308
    %7310 = vst [vmem:[%s11 + $0x20] sm:$0x1] %v7309
    %v7311 = vld [vmem:[#allocation6 + $0x33] ss:$0 sm:$0xff]
    %v7312 = vld [vmem:[#allocation6 + $0x42] ss:$0 sm:$0xff]
    %v7313 = vadd.f32 %v7311, %v7312
    %v7314 = vtanh.pop %v7313
    %7315 = vst [vmem:[%s11 + $0x21] sm:$0x1] %v7314
    %v7316 = vld [vmem:[#allocation6 + $0x3b] ss:$0 sm:$0xff]
    %v7317 = vtanh.pop %v7316
    %7318 = vst [vmem:[%s11 + $0x22] sm:$0x1] %v7317
    %v7319 = vld [vmem:[#allocation6 + $0x34] ss:$0 sm:$0xff]
    %v7320 = vld [vmem:[#allocation6 + $0x43] ss:$0 sm:$0xff]
    %v7321 = vadd.f32 %v7319, %v7320
    %v7322 = vtanh.pop %v7321
    %7323 = vst [vmem:[%s11 + $0x23] sm:$0x1] %v7322
    %v7324 = vld [vmem:[#allocation6 + $0x3c] ss:$0 sm:$0xff]
    %v7325 = vtanh.pop %v7324
    %7326 = vst [vmem:[%s11 + $0x24] sm:$0x1] %v7325
    %v7327 = vld [vmem:[#allocation6 + $0x35] ss:$0 sm:$0xff]
    %v7328 = vld [vmem:[#allocation6 + $0x44] ss:$0 sm:$0xff]
    %v7329 = vadd.f32 %v7327, %v7328
    %v7330 = vtanh.pop %v7329
    %7331 = vst [vmem:[%s11 + $0x25] sm:$0x1] %v7330
    %v7332 = vld [vmem:[#allocation6 + $0x3d] ss:$0 sm:$0xff]
    %v7333 = vtanh.pop %v7332
    %7334 = vst [vmem:[%s11 + $0x26] sm:$0x1] %v7333
    %v7335 = vld [vmem:[#allocation6 + $0x36] ss:$0 sm:$0xff]
    %v7336 = vld [vmem:[#allocation6 + $0x45] ss:$0 sm:$0xff]
    %v7337 = vadd.f32 %v7335, %v7336
    %v7338 = vtanh.pop %v7337
    %7339 = vst [vmem:[%s11 + $0x27] sm:$0x1] %v7338
    %v7340 = vld [vmem:[#allocation6 + $0x3e] ss:$0 sm:$0xff]
    %v7341 = vtanh.pop %v7340
    %7342 = vst [vmem:[%s11 + $0x28] sm:$0x1] %v7341
    %v7343 = vld [vmem:[#allocation6 + $0x37] ss:$0 sm:$0xff]
    %v7344 = vld [vmem:[#allocation6 + $0x46] ss:$0 sm:$0xff]
    %v7345 = vadd.f32 %v7343, %v7344
    %v7346 = vtanh.pop %v7345
    %7347 = vst [vmem:[%s11 + $0x29] sm:$0x1] %v7346
    %v7348 = vld [vmem:[#allocation6 + $0x3f] ss:$0 sm:$0xff]
    %v7349 = vtanh.pop %v7348
    %7350 = vst [vmem:[%s11 + $0x2a] sm:$0x1] %v7349
    %v7351 = vld [vmem:[#allocation6 + $0x48] ss:$0 sm:$0xff]
    %v7352 = vld [vmem:[#allocation6 + $0x47] ss:$0 sm:$0xff]
    %v7353 = vadd.f32 %v7351, %v7352
    %v7354 = vtanh.pop %v7353
    %7355 = vst [vmem:[%s11 + $0x2b] sm:$0x1] %v7354
    %v7356 = vld [vmem:[#allocation6 + $0x50] ss:$0 sm:$0xff]
    %v7357 = vtanh.pop %v7356
    %7358 = vst [vmem:[%s11 + $0x2c] sm:$0x1] %v7357
    %v7359 = vld [vmem:[#allocation6 + $0x49] ss:$0 sm:$0xff]
    %v7360 = vld [vmem:[#allocation6 + $0x58] ss:$0 sm:$0xff]
    %v7361 = vadd.f32 %v7359, %v7360
    %v7362 = vtanh.pop %v7361
    %7363 = vst [vmem:[%s11 + $0x2d] sm:$0x1] %v7362
    %v7364 = vld [vmem:[#allocation6 + $0x51] ss:$0 sm:$0xff]
    %v7365 = vtanh.pop %v7364
    %7366 = vst [vmem:[%s11 + $0x2e] sm:$0x1] %v7365
    %v7367 = vld [vmem:[#allocation6 + $0x4a] ss:$0 sm:$0xff]
    %v7368 = vld [vmem:[#allocation6 + $0x59] ss:$0 sm:$0xff]
    %v7369 = vadd.f32 %v7367, %v7368
    %v7370 = vtanh.pop %v7369
    %7371 = vst [vmem:[%s11 + $0x2f] sm:$0x1] %v7370
    %v7372 = vld [vmem:[#allocation6 + $0x52] ss:$0 sm:$0xff]
    %v7373 = vtanh.pop %v7372
    %7374 = vst [vmem:[%s11 + $0x30] sm:$0x1] %v7373
    %v7375 = vld [vmem:[#allocation6 + $0x4b] ss:$0 sm:$0xff]
    %v7376 = vld [vmem:[#allocation6 + $0x5a] ss:$0 sm:$0xff]
    %v7377 = vadd.f32 %v7375, %v7376
    %v7378 = vtanh.pop %v7377
    %7379 = vst [vmem:[%s11 + $0x31] sm:$0x1] %v7378
    %v7380 = vld [vmem:[#allocation6 + $0x53] ss:$0 sm:$0xff]
    %v7381 = vtanh.pop %v7380
    %7382 = vst [vmem:[%s11 + $0x32] sm:$0x1] %v7381
    %v7383 = vld [vmem:[#allocation6 + $0x4c] ss:$0 sm:$0xff]
    %v7384 = vld [vmem:[#allocation6 + $0x5b] ss:$0 sm:$0xff]
    %v7385 = vadd.f32 %v7383, %v7384
    %v7386 = vtanh.pop %v7385
    %7387 = vst [vmem:[%s11 + $0x33] sm:$0x1] %v7386
    %v7388 = vld [vmem:[#allocation6 + $0x54] ss:$0 sm:$0xff]
    %v7389 = vtanh.pop %v7388
    %7390 = vst [vmem:[%s11 + $0x34] sm:$0x1] %v7389
    %v7391 = vld [vmem:[#allocation6 + $0x4d] ss:$0 sm:$0xff]
    %v7392 = vld [vmem:[#allocation6 + $0x5c] ss:$0 sm:$0xff]
    %v7393 = vadd.f32 %v7391, %v7392
    %v7394 = vtanh.pop %v7393
    %7395 = vst [vmem:[%s11 + $0x35] sm:$0x1] %v7394
    // Predicated region
    $region78: #{dcgan_generator_forward.1} parent=1 // pred_check
      _
    $region79: #{dcgan_generator_forward.1} parent=1 // pred_check_branch
      %7397 = sbr.rel (0) target = $region81
    $region80: #{dcgan_generator_forward.1} parent=1 // pred_region
      _
    $region81: #{dcgan_generator_forward.1} parent=1 // pred_fallthru
      _
    // Predicated region
    $region82: #{dcgan_generator_forward.1} parent=1 // pred_check
      _
    $region83: #{dcgan_generator_forward.1} parent=1 // pred_check_branch
      %7399 = sbr.rel (0) target = $region85
    $region84: #{dcgan_generator_forward.1} parent=1 // pred_region
      _
    $region85: #{dcgan_generator_forward.1} parent=1 // pred_fallthru
      _
    %7400 = vsyncpa [#allocation11], 1
    %7401 = vsyncpa [#allocation13], 1
    %7402 = vsyncpa [#allocation16], 1
    %7403 = vsyncpa [#allocation19], 1
    %7404 = vsyncpa [#allocation22], 1
  %7405 = vsyncmov [#allocation9]
  %s7406 = vpop.sfrf %7405
  %p7407 = scmp.eq.s32.totalorder %s7406, 0
  %p7408 = pneg %p7407
  %7410 = shalt.err (%p7408)
  %s7411 = scalar_lea.sflag [#allocation9], 1
  %7412 = vsyncmov %s7411
  %s7413 = vpop.sfrf %7412
  %p7414 = scmp.eq.s32.totalorder %s7413, 0
  %p7415 = pneg %p7414
  %7417 = shalt.err (%p7415)

</llo_original>
